<compile_context>
chip_gen: v7x
topology: tpu7x:2x2x1
jax: 0.10.0
libtpu: 0.0.40
codegen_flags: <defaults>
</compile_context>

<pallas_src>
import functools

import jax
import jax.numpy as jnp
from jax.experimental import pallas as pl
from jax.experimental.pallas import tpu as pltpu


_VMEM = pl.BlockSpec(memory_space=pltpu.MemorySpace.VMEM)
_SMEM = pl.BlockSpec(memory_space=pltpu.MemorySpace.SMEM)


# ----------------------------------------------------------------------------
# In-kernel conv helpers (channels carried as lists of (B, L) lane-dense tiles)
# ----------------------------------------------------------------------------
def _make_conv_ops(w_ref, pack):
    """Conv/activation helpers over a flat SMEM weight vector.

    `pack[name] = (offset, cout, cin, K)` with weights stored as
    [w.reshape(-1), b] starting at `offset`.
    """

    def getw(name, co, ci, k):
        off, cout, cin, K = pack[name]
        return w_ref[off + (co * cin + ci) * K + k]

    def getb(name, co):
        off, cout, cin, K = pack[name]
        return w_ref[off + cout * cin * K + co]

    def act(v, kind):
        if kind == "swish":
            return v * jax.nn.sigmoid(v)
        if kind == "relu":
            return jnp.maximum(v, 0.0)
        if kind == "sigmoid":
            return jax.nn.sigmoid(v)
        return v

    def conv3(chs, name, out_act=None):
        """'same' Conv1d(kernel=3, pad=1) over a list of (B, L) channels."""
        off, cout, cin, K = pack[name]
        assert cin == len(chs) and K == 3, (name, cin, len(chs), K)
        taps = []
        for c in chs:
            zc = jnp.zeros_like(c[:, :1])
            prev = jnp.concatenate([zc, c[:, :-1]], axis=1)   # x[l-1], zero pad
            nxt = jnp.concatenate([c[:, 1:], zc], axis=1)     # x[l+1], zero pad
            taps.append((prev, c, nxt))
        outs = []
        for co in range(cout):
            acc = None
            for ci in range(cin):
                for k in range(3):
                    t = taps[ci][k] * getw(name, co, ci, k)
                    acc = t if acc is None else acc + t
            acc = acc + getb(name, co)
            outs.append(act(acc, out_act))
        return outs

    return conv3, act


# ----------------------------------------------------------------------------
# Kernel 1: full encoder (+ reparameterize + encoder KL)
# ----------------------------------------------------------------------------
def _encoder_kernel(w_ref, x_ref, nz_ref, e0_ref, e1_ref, e2_ref, e3_ref,
                    z0_ref, xs4_ref, xs8_ref, xs16_ref, kl_ref,
                    *, pack, z_dim):
    f32 = jnp.float32
    B = x_ref.shape[1]
    conv3, act = _make_conv_ops(w_ref, pack)

    e_refs = [e0_ref, e1_ref, e2_ref, e3_ref]
    xs_store = [xs16_ref, xs8_ref, xs4_ref]      # level 0 -> L/2, 1 -> L/4, 2 -> L/8

    chs = [x_ref[c].astype(f32) for c in range(z_dim)]
    for i in range(4):
        # TODO(synk): DownsamplingConvBlock4L assumed Swish(Conv1d(k=3, s=2, p=1)).
        y = conv3(chs, f"down{i}")                                   # stride-1 conv
        y = [jnp.dot(c, e_refs[i][...], preferred_element_type=f32)  # keep even taps
             for c in y]
        y = [act(c, "swish") for c in y]
        # TODO(synk): EncoderResidualBlock4L assumed x + Swish(Conv1d(k=3, p=1)).
        r = conv3(y, f"res{i}", out_act="swish")
        chs = [a + b for a, b in zip(y, r)]
        if i < 3:
            for c in range(z_dim):
                xs_store[i][c] = chs[c]

    # condition_mean / condition_var: Conv -> Swish -> Conv -> ReLU
    h = conv3(chs, "cm0", out_act="swish")
    mu = conv3(h, "cm1", out_act="relu")
    h = conv3(chs, "cv0", out_act="swish")
    log_var = conv3(h, "cv1", out_act="relu")

    # z0 = mu + exp(0.5 * log_var) * noise
    for c in range(z_dim):
        std = jnp.exp(0.5 * log_var[c])
        z0_ref[c] = mu[c] + std * nz_ref[c].astype(f32)

    # enc_kl = mean_B( -0.5 * sum_{C,L}(1 + lv - mu^2 - exp(lv)) )
    per_b = None
    for c in range(z_dim):
        t = 1.0 + log_var[c] - mu[c] * mu[c] - jnp.exp(log_var[c])
        s = jnp.sum(t, axis=1, keepdims=True)                       # (B, 1)
        per_b = s if per_b is None else per_b + s
    kl_ref[...] = jnp.sum(-0.5 * per_b, axis=0, keepdims=True) / B  # (1, 1)


# ----------------------------------------------------------------------------
# Kernel 2: full decoder + recon + all losses
# ----------------------------------------------------------------------------
def _decoder_kernel(w_ref, z0_ref, xs4_ref, xs8_ref, xs16_ref,
                    n4_ref, n8_ref, n16_ref, xt_ref, enc_kl_ref,
                    u0_ref, u1_ref, u2_ref, u3_ref,
                    xhat_ref, scal_ref, *, pack, z_dim):
    f32 = jnp.float32
    B = z0_ref.shape[1]
    D = z_dim
    conv3, act = _make_conv_ops(w_ref, pack)

    u_refs = [u0_ref, u1_ref, u2_ref, u3_ref]
    xs_refs = [xs4_ref, xs8_ref, xs16_ref]
    n_refs = [n4_ref, n8_ref, n16_ref]

    z = [z0_ref[c].astype(f32) for c in range(D)]
    dec_out = [jnp.zeros_like(z[c]) for c in range(D)]
    kl2_vals = []

    for i in range(4):
        # z_sample = cat([decoder_out, z], dim=1) -- pure list concat (no copy)
        z_sample = dec_out + z
        # TODO(synk): UpsamplingConvBlock4L assumed nearest x2 + Swish(Conv1d(k=3, p=1)).
        up = [jnp.dot(c, u_refs[i][...], preferred_element_type=f32)
              for c in z_sample]
        h = conv3(up, f"up{i}", out_act="swish")
        # TODO(synk): DecoderResidualBlock4L assumed Swish(Conv1d(2z -> z, k=3, p=1)).
        dec_out = conv3(h, f"dres{i}", out_act="swish")
        if i == 3:
            break

        # condition_z_{mean,var}: ResidualBlock -> Swish -> Conv
        def cond_z(prefix):
            r = conv3(dec_out, f"{prefix}_res", out_act="swish")
            hh = [a + b for a, b in zip(dec_out, r)]
            hh = [act(c, "swish") for c in hh]
            return conv3(hh, f"{prefix}_conv")

        mu = cond_z(f"czm{i}")
        log_var = cond_z(f"czv{i}")

        # condition_xz_{mean,var}: ResidualBlock(2) -> Conv(2->1) -> Swish -> Conv(1->1)
        xs_i = [xs_refs[i][c].astype(f32) for c in range(D)]
        cxz = xs_i + dec_out

        def cond_xz(prefix):
            r = conv3(cxz, f"{prefix}_res", out_act="swish")
            hh = [a + b for a, b in zip(cxz, r)]
            hh = conv3(hh, f"{prefix}_c1")
            hh = [act(c, "swish") for c in hh]
            return conv3(hh, f"{prefix}_c2")

        dmu = cond_xz(f"cxm{i}")
        dlv = cond_xz(f"cxv{i}")

        # kl_2 (standard NVAE formulation, same as reference implementation)
        per_b = None
        for c in range(D):
            dmu_c = dmu[0] if len(dmu) == 1 else dmu[c]
            dlv_c = dlv[0] if len(dlv) == 1 else dlv[c]
            var_c = jnp.exp(log_var[c])
            t = 1.0 + dlv_c - (dmu_c * dmu_c) / var_c - jnp.exp(dlv_c)
            s = jnp.sum(t, axis=1, keepdims=True)                    # (B, 1)
            per_b = s if per_b is None else per_b + s
        kl2_vals.append(jnp.sum(-0.5 * per_b, axis=0, keepdims=True) / B)

        mu = [m + (dmu[0] if len(dmu) == 1 else dmu[c]) for c, m in enumerate(mu)]
        log_var = [lv + (dlv[0] if len(dlv) == 1 else dlv[c])
                   for c, lv in enumerate(log_var)]
        # reparameterize with pre-drawn noise
        z = [mu[c] + jnp.exp(0.5 * log_var[c]) * n_refs[i][c].astype(f32)
             for c in range(D)]

    # recon head: ResidualBlock -> Conv -> Swish -> Conv  (then sigmoid for BCE)
    r = conv3(dec_out, "recon_res", out_act="swish")
    hh = [a + b for a, b in zip(dec_out, r)]
    hh = conv3(hh, "recon_c1")
    hh = [act(c, "swish") for c in hh]
    y = conv3(hh, "recon_c2")                       # x_hat channels

    # ------------------------------- losses --------------------------------
    xt = [xt_ref[c].astype(f32) for c in range(D)]
    L = xt[0].shape[1]

    bce_sum = se_sum = ae_sum = None
    num = sq1 = sq2 = None
    for c in range(D):
        p = jax.nn.sigmoid(y[c])
        log_p = jnp.maximum(jnp.log(p), -100.0)        # BCE clamp (as in torch)
        log_1mp = jnp.maximum(jnp.log(1.0 - p), -100.0)
        bce = -(xt[c] * log_p + (1.0 - xt[c]) * log_1mp)
        b_s = jnp.sum(bce, axis=1, keepdims=True)

        d = y[c] - xt[c]
        se = jnp.sum(d * d, axis=1, keepdims=True)
        ae = jnp.sum(jnp.abs(d), axis=1, keepdims=True)

        bce_sum = b_s if bce_sum is None else bce_sum + b_s
        se_sum = se if se_sum is None else se_sum + se
        ae_sum = ae if ae_sum is None else ae_sum + ae

        nm, s1, s2 = y[c] * xt[c], y[c] * y[c], xt[c] * xt[c]
        num = nm if num is None else num + nm
        sq1 = s1 if sq1 is None else sq1 + s1
        sq2 = s2 if sq2 is None else sq2 + s2

    sigmoid_loss_b = bce_sum / float(D * L)                          # (B, 1)
    # TODO(synk): robust_loss_pytorch AdaptiveLossFunction approximated by its
    # init point (alpha=1, scale=1): Charbonnier sqrt(x^2+1)-1.
    charb = jnp.sqrt(sigmoid_loss_b * sigmoid_loss_b + 1.0) - 1.0
    recon_sigmoid = jnp.sum(charb, axis=0, keepdims=True) / B        # (1, 1)

    total = float(B * D * L)
    mse = jnp.sum(se_sum, axis=0, keepdims=True) / total
    l1 = jnp.sum(ae_sum, axis=0, keepdims=True) / total

    cos = num / jnp.maximum(jnp.sqrt(sq1) * jnp.sqrt(sq2), 1e-8)     # (B, L)
    cos_mean = jnp.sum(jnp.sum(cos, axis=1, keepdims=True),
                       axis=0, keepdims=True) / float(B * L)
    mix = 0.1 * l1 + 1.0 - cos_mean + 0.1 * mse

    enc_kl = enc_kl_ref[...]
    kl_sum = enc_kl + kl2_vals[0] + kl2_vals[1] + kl2_vals[2]
    kl_avg = kl_sum * 0.25

    for c in range(D):
        xhat_ref[c] = y[c]

    vals = [kl2_vals[0], kl2_vals[1], kl2_vals[2],
            mse, mix, recon_sigmoid, kl_avg, kl_sum]
    lane = jax.lax.broadcasted_iota(jnp.int32, (1, len(vals)), 1)
    packed = None
    for idx, v in enumerate(vals):
        contrib = jnp.where(lane == idx, v, 0.0)
        packed = contrib if packed is None else packed + contrib
    scal_ref[...] = packed


# ----------------------------------------------------------------------------
# Weight packing (flat SMEM vector + static offsets) and resample matrices
# ----------------------------------------------------------------------------
def _pack_convs(named_convs):
    pack, pieces, off = {}, [], 0
    for name, c in named_convs:
        cout, cin, k = c["w"].shape
        pack[name] = (off, cout, cin, k)
        off += cout * cin * k + cout
        pieces.append(c["w"].reshape(-1).astype(jnp.float32))
        pieces.append(c["b"].reshape(-1).astype(jnp.float32))
    return pack, jnp.concatenate(pieces)


def _encoder_named_convs(p):
    out = []
    for i in range(4):
        out.append((f"down{i}", p["enc_blocks"][i]["conv"]))
        out.append((f"res{i}", p["enc_res"][i]["conv"]))
    out += [("cm0", p["cond_mean"][0]), ("cm1", p["cond_mean"][1]),
            ("cv0", p["cond_var"][0]), ("cv1", p["cond_var"][1])]
    return out


def _decoder_named_convs(p):
    out = []
    for i in range(4):
        out.append((f"up{i}", p["dec_blocks"][i]["conv"]))
        out.append((f"dres{i}", p["dec_res"][i]["conv"]))
    for i in range(3):
        out.append((f"czm{i}_res", p["cond_z_mean"][i]["res"]["conv"]))
        out.append((f"czm{i}_conv", p["cond_z_mean"][i]["conv"]))
        out.append((f"czv{i}_res", p["cond_z_var"][i]["res"]["conv"]))
        out.append((f"czv{i}_conv", p["cond_z_var"][i]["conv"]))
        out.append((f"cxm{i}_res", p["cond_xz_mean"][i]["res"]["conv"]))
        out.append((f"cxm{i}_c1", p["cond_xz_mean"][i]["conv1"]))
        out.append((f"cxm{i}_c2", p["cond_xz_mean"][i]["conv2"]))
        out.append((f"cxv{i}_res", p["cond_xz_var"][i]["res"]["conv"]))
        out.append((f"cxv{i}_c1", p["cond_xz_var"][i]["conv1"]))
        out.append((f"cxv{i}_c2", p["cond_xz_var"][i]["conv2"]))
    out += [("recon_res", p["recon"]["res"]["conv"]),
            ("recon_c1", p["recon"]["conv1"]),
            ("recon_c2", p["recon"]["conv2"])]
    return out


def _downsample_matrix(L):
    rows = jnp.arange(L)[:, None]
    cols = jnp.arange(L // 2)[None, :]
    return (rows == 2 * cols).astype(jnp.float32)           # (L, L//2) pick even


def _upsample_matrix(L):
    rows = jnp.arange(L)[:, None]
    cols = jnp.arange(2 * L)[None, :]
    return (rows == cols // 2).astype(jnp.float32)           # (L, 2L) nearest x2


# ----------------------------------------------------------------------------
# NVAE_L4 forward: two fused pallas_calls
# ----------------------------------------------------------------------------
def nvae_l4_forward(params, x, key):
    B, C, L = x.shape
    assert L % 32 == 0, "length must be divisible by 2**5 for 4 down/upsamples"
    f32 = jnp.float32

    x_t = jnp.transpose(x, (1, 0, 2)).astype(f32)            # (C, B, L), boundary only

    k_z, k0, k1, k2 = jax.random.split(key, 4)
    nz = jax.random.normal(k_z, (C, B, L // 16), f32)
    n4 = jax.random.normal(k0, (C, B, L // 8), f32)
    n8 = jax.random.normal(k1, (C, B, L // 4), f32)
    n16 = jax.random.normal(k2, (C, B, L // 2), f32)

    enc_pack, w_enc = _pack_convs(_encoder_named_convs(params["encoder"]))
    dec_pack, w_dec = _pack_convs(_decoder_named_convs(params["decoder"]))

    e_mats = [_downsample_matrix(L // (2 ** i)) for i in range(4)]       # 32->16 ... 4->2
    u_mats = [_upsample_matrix(L // (2 ** (4 - i))) for i in range(4)]   # 2->4 ... 16->32

    # --------------------------- encoder kernel ----------------------------
    enc_out_shape = (
        jax.ShapeDtypeStruct((C, B, L // 16), f32),   # z0
        jax.ShapeDtypeStruct((C, B, L // 8), f32),    # xs (deepest, L/8)
        jax.ShapeDtypeStruct((C, B, L // 4), f32),    # xs (L/4)
        jax.ShapeDtypeStruct((C, B, L // 2), f32),    # xs (L/2)
        jax.ShapeDtypeStruct((1, 1), f32),            # enc KL
    )
    z0, xs4, xs8, xs16, enc_kl_arr = pl.pallas_call(
        functools.partial(_encoder_kernel, pack=enc_pack, z_dim=C),
        out_shape=enc_out_shape,
        in_specs=[_SMEM] + [_VMEM] * 6,
        out_specs=(_VMEM,) * 5,
    )(w_enc, x_t, nz, e_mats[0], e_mats[1], e_mats[2], e_mats[3])

    # ----------------------- decoder + losses kernel -----------------------
    dec_out_shape = (
        jax.ShapeDtypeStruct((C, B, L), f32),         # x_hat (channel-major)
        jax.ShapeDtypeStruct((1, 8), f32),            # scalar losses
    )
    xhat_t, scal = pl.pallas_call(
        functools.partial(_decoder_kernel, pack=dec_pack, z_dim=C),
        out_shape=dec_out_shape,
        in_specs=[_SMEM] + [_VMEM] * 13,
        out_specs=(_VMEM, _VMEM),
    )(w_dec, z0, xs4, xs8, xs16, n4, n8, n16, x_t, enc_kl_arr,
      u_mats[0], u_mats[1], u_mats[2], u_mats[3])

    x_hat = jnp.transpose(xhat_t, (1, 0, 2)).astype(x.dtype)

    enc_kl_loss = enc_kl_arr[0, 0]
    kl_losses = [scal[0, 0], scal[0, 1], scal[0, 2]]
    recon_mse_loss = scal[0, 3]
    recon_mix_loss = scal[0, 4]
    recon_sigmoid_loss = scal[0, 5]
    kl_avg_loss = scal[0, 6]
    kl_sum_loss = scal[0, 7]
    enc_hier_kl = [enc_kl_loss] + kl_losses

    return (x_hat, recon_mse_loss, recon_mix_loss, recon_sigmoid_loss,
            kl_avg_loss, kl_sum_loss, enc_hier_kl, enc_kl_loss)


# ----------------------------------------------------------------------------
# Deterministic parameter initialization
# ----------------------------------------------------------------------------
class _KeyGen:
    def __init__(self, seed):
        self._key = jax.random.PRNGKey(seed)
        self._i = 0

    def __call__(self):
        self._i += 1
        return jax.random.fold_in(self._key, self._i)


def _init_conv(kg, cout, cin, k):
    scale = 0.3 / jnp.sqrt(float(cin * k))
    w = jax.random.normal(kg(), (cout, cin, k), jnp.float32) * scale
    b = jnp.zeros((cout,), jnp.float32)
    return {"w": w, "b": b}


def init_params(z_dim, seed=42):
    kg = _KeyGen(seed)
    enc = {
        "enc_blocks": [{"conv": _init_conv(kg, z_dim, z_dim, 3)} for _ in range(4)],
        "enc_res": [{"conv": _init_conv(kg, z_dim, z_dim, 3)} for _ in range(4)],
        "cond_mean": [_init_conv(kg, z_dim, z_dim, 3), _init_conv(kg, z_dim, z_dim, 3)],
        "cond_var": [_init_conv(kg, z_dim, z_dim, 3), _init_conv(kg, z_dim, z_dim, 3)],
    }
    dec = {
        "dec_blocks": [{"conv": _init_conv(kg, 2 * z_dim, 2 * z_dim, 3)} for _ in range(4)],
        "dec_res": [{"conv": _init_conv(kg, z_dim, 2 * z_dim, 3)} for _ in range(4)],
        "cond_z_mean": [{"res": {"conv": _init_conv(kg, z_dim, z_dim, 3)},
                         "conv": _init_conv(kg, z_dim, z_dim, 3)} for _ in range(3)],
        "cond_z_var": [{"res": {"conv": _init_conv(kg, z_dim, z_dim, 3)},
                        "conv": _init_conv(kg, z_dim, z_dim, 3)} for _ in range(3)],
        "cond_xz_mean": [{"res": {"conv": _init_conv(kg, 2, 2, 3)},
                          "conv1": _init_conv(kg, 1, 2, 3),
                          "conv2": _init_conv(kg, 1, 1, 3)} for _ in range(3)],
        "cond_xz_var": [{"res": {"conv": _init_conv(kg, 2, 2, 3)},
                         "conv1": _init_conv(kg, 1, 2, 3),
                         "conv2": _init_conv(kg, 1, 1, 3)} for _ in range(3)],
        "recon": {"res": {"conv": _init_conv(kg, z_dim, z_dim, 3)},
                  "conv1": _init_conv(kg, z_dim, z_dim, 3),
                  "conv2": _init_conv(kg, z_dim, z_dim, 3)},
    }
    return {"encoder": enc, "decoder": dec}


# ----------------------------------------------------------------------------
# Main
# ----------------------------------------------------------------------------
if __name__ == "__main__":
    # z_dim must be 1 for the condition_xz branch (ResidualBlock4L(2)) to be
    # shape-consistent, matching the original module's docstring (B, 1, 64).
    Z_DIM = 1
    B, C, L = 2, Z_DIM, 32   # length divisible by 2**5 (4 down/upsampling levels)

    key = jax.random.PRNGKey(0)
    k_x, k_noise = jax.random.split(key)
    # x must lie in [0, 1] because of binary_cross_entropy against it.
    x = jax.random.uniform(k_x, (B, C, L), jnp.float32)

    params = init_params(Z_DIM, seed=42)

    fwd = jax.jit(nvae_l4_forward)
    outputs = fwd(params, x, k_noise)
    outputs = jax.block_until_ready(outputs)

    x_hat = outputs[0]
    assert x_hat.shape == (B, C, L)
    print("KERNEL_OK")
</pallas_src>

<mosaic_0001>
module attributes {stable_mosaic.version = 11 : i64} {
  func.func @_encoder_kernel(%arg0: memref<48xf32, #tpu.memory_space<smem>>, %arg1: memref<1x2x32xf32, #tpu.memory_space<vmem>>, %arg2: memref<1x2x2xf32, #tpu.memory_space<vmem>>, %arg3: memref<32x16xf32, #tpu.memory_space<vmem>>, %arg4: memref<16x8xf32, #tpu.memory_space<vmem>>, %arg5: memref<8x4xf32, #tpu.memory_space<vmem>>, %arg6: memref<4x2xf32, #tpu.memory_space<vmem>>, %arg7: memref<1x2x2xf32, #tpu.memory_space<vmem>>, %arg8: memref<1x2x4xf32, #tpu.memory_space<vmem>>, %arg9: memref<1x2x8xf32, #tpu.memory_space<vmem>>, %arg10: memref<1x2x16xf32, #tpu.memory_space<vmem>>, %arg11: memref<1x1xf32, #tpu.memory_space<vmem>>) attributes {dimension_semantics = [], scalar_prefetch = 0 : i64, scratch_operands = 0 : i64, tpu.core_type = #tpu.core_type<tc>} {
    %c0 = arith.constant 0 : index
    %c0_0 = arith.constant 0 : index
    %c0_1 = arith.constant 0 : index
    %0 = vector.load %arg1[%c0, %c0_0, %c0_1] : memref<1x2x32xf32, #tpu.memory_space<vmem>>, vector<1x2x32xf32>
    %1 = vector.shape_cast %0 : vector<1x2x32xf32> to vector<2x32xf32>
    %cst = arith.constant 0.000000e+00 : f32
    %2 = vector.broadcast %cst : f32 to vector<2x1xf32>
    %3 = vector.extract_strided_slice %1 {offsets = [0, 0], sizes = [2, 31], strides = [1, 1]} : vector<2x32xf32> to vector<2x31xf32>
    %4 = tpu.concatenate %2, %3 in 1 : vector<2x1xf32>, vector<2x31xf32> -> vector<2x32xf32>
    %5 = vector.extract_strided_slice %1 {offsets = [0, 1], sizes = [2, 31], strides = [1, 1]} : vector<2x32xf32> to vector<2x31xf32>
    %6 = tpu.concatenate %5, %2 in 1 : vector<2x31xf32>, vector<2x1xf32> -> vector<2x32xf32>
    %c0_2 = arith.constant 0 : index
    %7 = memref.load %arg0[%c0_2] : memref<48xf32, #tpu.memory_space<smem>>
    %8 = vector.broadcast %7 : f32 to vector<2x32xf32>
    %9 = arith.mulf %4, %8 : vector<2x32xf32>
    %c1 = arith.constant 1 : index
    %10 = memref.load %arg0[%c1] : memref<48xf32, #tpu.memory_space<smem>>
    %11 = vector.broadcast %10 : f32 to vector<2x32xf32>
    %12 = arith.mulf %1, %11 : vector<2x32xf32>
    %13 = arith.addf %9, %12 : vector<2x32xf32>
    %c2 = arith.constant 2 : index
    %14 = memref.load %arg0[%c2] : memref<48xf32, #tpu.memory_space<smem>>
    %15 = vector.broadcast %14 : f32 to vector<2x32xf32>
    %16 = arith.mulf %6, %15 : vector<2x32xf32>
    %17 = arith.addf %13, %16 : vector<2x32xf32>
    %c3 = arith.constant 3 : index
    %18 = memref.load %arg0[%c3] : memref<48xf32, #tpu.memory_space<smem>>
    %19 = vector.broadcast %18 : f32 to vector<2x32xf32>
    %20 = arith.addf %17, %19 : vector<2x32xf32>
    %c0_3 = arith.constant 0 : index
    %c0_4 = arith.constant 0 : index
    %21 = vector.load %arg3[%c0_3, %c0_4] : memref<32x16xf32, #tpu.memory_space<vmem>>, vector<32x16xf32>
    %cst_5 = arith.constant dense<0.000000e+00> : vector<2x16xf32>
    %22 = tpu.matmul %20, %21, %cst_5 {dimension_numbers = #tpu.dot_dimension_numbers<[1], [0], [0], [1], [0, 0, 1, 1], [], []>} : vector<2x32xf32>, vector<32x16xf32>, vector<2x16xf32> -> vector<2x16xf32>
    %23 = arith.negf %22 : vector<2x16xf32>
    %24 = math.exp %23 : vector<2x16xf32>
    %cst_6 = arith.constant 1.000000e+00 : f32
    %25 = vector.broadcast %cst_6 : f32 to vector<2x16xf32>
    %26 = arith.addf %25, %24 : vector<2x16xf32>
    %27 = arith.divf %25, %26 : vector<2x16xf32>
    %28 = arith.mulf %22, %27 : vector<2x16xf32>
    %cst_7 = arith.constant 0.000000e+00 : f32
    %29 = vector.broadcast %cst_7 : f32 to vector<2x1xf32>
    %30 = vector.extract_strided_slice %28 {offsets = [0, 0], sizes = [2, 15], strides = [1, 1]} : vector<2x16xf32> to vector<2x15xf32>
    %31 = tpu.concatenate %29, %30 in 1 : vector<2x1xf32>, vector<2x15xf32> -> vector<2x16xf32>
    %32 = vector.extract_strided_slice %28 {offsets = [0, 1], sizes = [2, 15], strides = [1, 1]} : vector<2x16xf32> to vector<2x15xf32>
    %33 = tpu.concatenate %32, %29 in 1 : vector<2x15xf32>, vector<2x1xf32> -> vector<2x16xf32>
    %c4 = arith.constant 4 : index
    %34 = memref.load %arg0[%c4] : memref<48xf32, #tpu.memory_space<smem>>
    %35 = vector.broadcast %34 : f32 to vector<2x16xf32>
    %36 = arith.mulf %31, %35 : vector<2x16xf32>
    %c5 = arith.constant 5 : index
    %37 = memref.load %arg0[%c5] : memref<48xf32, #tpu.memory_space<smem>>
    %38 = vector.broadcast %37 : f32 to vector<2x16xf32>
    %39 = arith.mulf %28, %38 : vector<2x16xf32>
    %40 = arith.addf %36, %39 : vector<2x16xf32>
    %c6 = arith.constant 6 : index
    %41 = memref.load %arg0[%c6] : memref<48xf32, #tpu.memory_space<smem>>
    %42 = vector.broadcast %41 : f32 to vector<2x16xf32>
    %43 = arith.mulf %33, %42 : vector<2x16xf32>
    %44 = arith.addf %40, %43 : vector<2x16xf32>
    %c7 = arith.constant 7 : index
    %45 = memref.load %arg0[%c7] : memref<48xf32, #tpu.memory_space<smem>>
    %46 = vector.broadcast %45 : f32 to vector<2x16xf32>
    %47 = arith.addf %44, %46 : vector<2x16xf32>
    %48 = arith.negf %47 : vector<2x16xf32>
    %49 = math.exp %48 : vector<2x16xf32>
    %cst_8 = arith.constant 1.000000e+00 : f32
    %50 = vector.broadcast %cst_8 : f32 to vector<2x16xf32>
    %51 = arith.addf %50, %49 : vector<2x16xf32>
    %52 = arith.divf %50, %51 : vector<2x16xf32>
    %53 = arith.mulf %47, %52 : vector<2x16xf32>
    %54 = arith.addf %28, %53 : vector<2x16xf32>
    %c0_9 = arith.constant 0 : index
    %c0_10 = arith.constant 0 : index
    %c0_11 = arith.constant 0 : index
    %55 = vector.load %arg10[%c0_9, %c0_10, %c0_11] : memref<1x2x16xf32, #tpu.memory_space<vmem>>, vector<1x2x16xf32>
    %56 = vector.shape_cast %55 : vector<1x2x16xf32> to vector<2x16xf32>
    %57 = vector.shape_cast %54 : vector<2x16xf32> to vector<1x2x16xf32>
    tpu.vector_store %arg10[%c0_9, %c0_10, %c0_11], %57 {strides = array<i32>} : memref<1x2x16xf32, #tpu.memory_space<vmem>>, vector<1x2x16xf32>,
    %cst_12 = arith.constant 0.000000e+00 : f32
    %58 = vector.broadcast %cst_12 : f32 to vector<2x1xf32>
    %59 = vector.extract_strided_slice %54 {offsets = [0, 0], sizes = [2, 15], strides = [1, 1]} : vector<2x16xf32> to vector<2x15xf32>
    %60 = tpu.concatenate %58, %59 in 1 : vector<2x1xf32>, vector<2x15xf32> -> vector<2x16xf32>
    %61 = vector.extract_strided_slice %54 {offsets = [0, 1], sizes = [2, 15], strides = [1, 1]} : vector<2x16xf32> to vector<2x15xf32>
    %62 = tpu.concatenate %61, %58 in 1 : vector<2x15xf32>, vector<2x1xf32> -> vector<2x16xf32>
    %c8 = arith.constant 8 : index
    %63 = memref.load %arg0[%c8] : memref<48xf32, #tpu.memory_space<smem>>
    %64 = vector.broadcast %63 : f32 to vector<2x16xf32>
    %65 = arith.mulf %60, %64 : vector<2x16xf32>
    %c9 = arith.constant 9 : index
    %66 = memref.load %arg0[%c9] : memref<48xf32, #tpu.memory_space<smem>>
    %67 = vector.broadcast %66 : f32 to vector<2x16xf32>
    %68 = arith.mulf %54, %67 : vector<2x16xf32>
    %69 = arith.addf %65, %68 : vector<2x16xf32>
    %c10 = arith.constant 10 : index
    %70 = memref.load %arg0[%c10] : memref<48xf32, #tpu.memory_space<smem>>
    %71 = vector.broadcast %70 : f32 to vector<2x16xf32>
    %72 = arith.mulf %62, %71 : vector<2x16xf32>
    %73 = arith.addf %69, %72 : vector<2x16xf32>
    %c11 = arith.constant 11 : index
    %74 = memref.load %arg0[%c11] : memref<48xf32, #tpu.memory_space<smem>>
    %75 = vector.broadcast %74 : f32 to vector<2x16xf32>
    %76 = arith.addf %73, %75 : vector<2x16xf32>
    %c0_13 = arith.constant 0 : index
    %c0_14 = arith.constant 0 : index
    %77 = vector.load %arg4[%c0_13, %c0_14] : memref<16x8xf32, #tpu.memory_space<vmem>>, vector<16x8xf32>
    %cst_15 = arith.constant dense<0.000000e+00> : vector<2x8xf32>
    %78 = tpu.matmul %76, %77, %cst_15 {dimension_numbers = #tpu.dot_dimension_numbers<[1], [0], [0], [1], [0, 0, 1, 1], [], []>} : vector<2x16xf32>, vector<16x8xf32>, vector<2x8xf32> -> vector<2x8xf32>
    %79 = arith.negf %78 : vector<2x8xf32>
    %80 = math.exp %79 : vector<2x8xf32>
    %cst_16 = arith.constant 1.000000e+00 : f32
    %81 = vector.broadcast %cst_16 : f32 to vector<2x8xf32>
    %82 = arith.addf %81, %80 : vector<2x8xf32>
    %83 = arith.divf %81, %82 : vector<2x8xf32>
    %84 = arith.mulf %78, %83 : vector<2x8xf32>
    %cst_17 = arith.constant 0.000000e+00 : f32
    %85 = vector.broadcast %cst_17 : f32 to vector<2x1xf32>
    %86 = vector.extract_strided_slice %84 {offsets = [0, 0], sizes = [2, 7], strides = [1, 1]} : vector<2x8xf32> to vector<2x7xf32>
    %87 = tpu.concatenate %85, %86 in 1 : vector<2x1xf32>, vector<2x7xf32> -> vector<2x8xf32>
    %88 = vector.extract_strided_slice %84 {offsets = [0, 1], sizes = [2, 7], strides = [1, 1]} : vector<2x8xf32> to vector<2x7xf32>
    %89 = tpu.concatenate %88, %85 in 1 : vector<2x7xf32>, vector<2x1xf32> -> vector<2x8xf32>
    %c12 = arith.constant 12 : index
    %90 = memref.load %arg0[%c12] : memref<48xf32, #tpu.memory_space<smem>>
    %91 = vector.broadcast %90 : f32 to vector<2x8xf32>
    %92 = arith.mulf %87, %91 : vector<2x8xf32>
    %c13 = arith.constant 13 : index
    %93 = memref.load %arg0[%c13] : memref<48xf32, #tpu.memory_space<smem>>
    %94 = vector.broadcast %93 : f32 to vector<2x8xf32>
    %95 = arith.mulf %84, %94 : vector<2x8xf32>
    %96 = arith.addf %92, %95 : vector<2x8xf32>
    %c14 = arith.constant 14 : index
    %97 = memref.load %arg0[%c14] : memref<48xf32, #tpu.memory_space<smem>>
    %98 = vector.broadcast %97 : f32 to vector<2x8xf32>
    %99 = arith.mulf %89, %98 : vector<2x8xf32>
    %100 = arith.addf %96, %99 : vector<2x8xf32>
    %c15 = arith.constant 15 : index
    %101 = memref.load %arg0[%c15] : memref<48xf32, #tpu.memory_space<smem>>
    %102 = vector.broadcast %101 : f32 to vector<2x8xf32>
    %103 = arith.addf %100, %102 : vector<2x8xf32>
    %104 = arith.negf %103 : vector<2x8xf32>
    %105 = math.exp %104 : vector<2x8xf32>
    %cst_18 = arith.constant 1.000000e+00 : f32
    %106 = vector.broadcast %cst_18 : f32 to vector<2x8xf32>
    %107 = arith.addf %106, %105 : vector<2x8xf32>
    %108 = arith.divf %106, %107 : vector<2x8xf32>
    %109 = arith.mulf %103, %108 : vector<2x8xf32>
    %110 = arith.addf %84, %109 : vector<2x8xf32>
    %c0_19 = arith.constant 0 : index
    %c0_20 = arith.constant 0 : index
    %c0_21 = arith.constant 0 : index
    %111 = vector.load %arg9[%c0_19, %c0_20, %c0_21] : memref<1x2x8xf32, #tpu.memory_space<vmem>>, vector<1x2x8xf32>
    %112 = vector.shape_cast %111 : vector<1x2x8xf32> to vector<2x8xf32>
    %113 = vector.shape_cast %110 : vector<2x8xf32> to vector<1x2x8xf32>
    tpu.vector_store %arg9[%c0_19, %c0_20, %c0_21], %113 {strides = array<i32>} : memref<1x2x8xf32, #tpu.memory_space<vmem>>, vector<1x2x8xf32>,
    %cst_22 = arith.constant 0.000000e+00 : f32
    %114 = vector.broadcast %cst_22 : f32 to vector<2x1xf32>
    %115 = vector.extract_strided_slice %110 {offsets = [0, 0], sizes = [2, 7], strides = [1, 1]} : vector<2x8xf32> to vector<2x7xf32>
    %116 = tpu.concatenate %114, %115 in 1 : vector<2x1xf32>, vector<2x7xf32> -> vector<2x8xf32>
    %117 = vector.extract_strided_slice %110 {offsets = [0, 1], sizes = [2, 7], strides = [1, 1]} : vector<2x8xf32> to vector<2x7xf32>
    %118 = tpu.concatenate %117, %114 in 1 : vector<2x7xf32>, vector<2x1xf32> -> vector<2x8xf32>
    %c16 = arith.constant 16 : index
    %119 = memref.load %arg0[%c16] : memref<48xf32, #tpu.memory_space<smem>>
    %120 = vector.broadcast %119 : f32 to vector<2x8xf32>
    %121 = arith.mulf %116, %120 : vector<2x8xf32>
    %c17 = arith.constant 17 : index
    %122 = memref.load %arg0[%c17] : memref<48xf32, #tpu.memory_space<smem>>
    %123 = vector.broadcast %122 : f32 to vector<2x8xf32>
    %124 = arith.mulf %110, %123 : vector<2x8xf32>
    %125 = arith.addf %121, %124 : vector<2x8xf32>
    %c18 = arith.constant 18 : index
    %126 = memref.load %arg0[%c18] : memref<48xf32, #tpu.memory_space<smem>>
    %127 = vector.broadcast %126 : f32 to vector<2x8xf32>
    %128 = arith.mulf %118, %127 : vector<2x8xf32>
    %129 = arith.addf %125, %128 : vector<2x8xf32>
    %c19 = arith.constant 19 : index
    %130 = memref.load %arg0[%c19] : memref<48xf32, #tpu.memory_space<smem>>
    %131 = vector.broadcast %130 : f32 to vector<2x8xf32>
    %132 = arith.addf %129, %131 : vector<2x8xf32>
    %c0_23 = arith.constant 0 : index
    %c0_24 = arith.constant 0 : index
    %133 = vector.load %arg5[%c0_23, %c0_24] : memref<8x4xf32, #tpu.memory_space<vmem>>, vector<8x4xf32>
    %cst_25 = arith.constant dense<0.000000e+00> : vector<2x4xf32>
    %134 = tpu.matmul %132, %133, %cst_25 {dimension_numbers = #tpu.dot_dimension_numbers<[1], [0], [0], [1], [0, 0, 1, 1], [], []>} : vector<2x8xf32>, vector<8x4xf32>, vector<2x4xf32> -> vector<2x4xf32>
    %135 = arith.negf %134 : vector<2x4xf32>
    %136 = math.exp %135 : vector<2x4xf32>
    %cst_26 = arith.constant 1.000000e+00 : f32
    %137 = vector.broadcast %cst_26 : f32 to vector<2x4xf32>
    %138 = arith.addf %137, %136 : vector<2x4xf32>
    %139 = arith.divf %137, %138 : vector<2x4xf32>
    %140 = arith.mulf %134, %139 : vector<2x4xf32>
    %cst_27 = arith.constant 0.000000e+00 : f32
    %141 = vector.broadcast %cst_27 : f32 to vector<2x1xf32>
    %142 = vector.extract_strided_slice %140 {offsets = [0, 0], sizes = [2, 3], strides = [1, 1]} : vector<2x4xf32> to vector<2x3xf32>
    %143 = tpu.concatenate %141, %142 in 1 : vector<2x1xf32>, vector<2x3xf32> -> vector<2x4xf32>
    %144 = vector.extract_strided_slice %140 {offsets = [0, 1], sizes = [2, 3], strides = [1, 1]} : vector<2x4xf32> to vector<2x3xf32>
    %145 = tpu.concatenate %144, %141 in 1 : vector<2x3xf32>, vector<2x1xf32> -> vector<2x4xf32>
    %c20 = arith.constant 20 : index
    %146 = memref.load %arg0[%c20] : memref<48xf32, #tpu.memory_space<smem>>
    %147 = vector.broadcast %146 : f32 to vector<2x4xf32>
    %148 = arith.mulf %143, %147 : vector<2x4xf32>
    %c21 = arith.constant 21 : index
    %149 = memref.load %arg0[%c21] : memref<48xf32, #tpu.memory_space<smem>>
    %150 = vector.broadcast %149 : f32 to vector<2x4xf32>
    %151 = arith.mulf %140, %150 : vector<2x4xf32>
    %152 = arith.addf %148, %151 : vector<2x4xf32>
    %c22 = arith.constant 22 : index
    %153 = memref.load %arg0[%c22] : memref<48xf32, #tpu.memory_space<smem>>
    %154 = vector.broadcast %153 : f32 to vector<2x4xf32>
    %155 = arith.mulf %145, %154 : vector<2x4xf32>
    %156 = arith.addf %152, %155 : vector<2x4xf32>
    %c23 = arith.constant 23 : index
    %157 = memref.load %arg0[%c23] : memref<48xf32, #tpu.memory_space<smem>>
    %158 = vector.broadcast %157 : f32 to vector<2x4xf32>
    %159 = arith.addf %156, %158 : vector<2x4xf32>
    %160 = arith.negf %159 : vector<2x4xf32>
    %161 = math.exp %160 : vector<2x4xf32>
    %cst_28 = arith.constant 1.000000e+00 : f32
    %162 = vector.broadcast %cst_28 : f32 to vector<2x4xf32>
    %163 = arith.addf %162, %161 : vector<2x4xf32>
    %164 = arith.divf %162, %163 : vector<2x4xf32>
    %165 = arith.mulf %159, %164 : vector<2x4xf32>
    %166 = arith.addf %140, %165 : vector<2x4xf32>
    %c0_29 = arith.constant 0 : index
    %c0_30 = arith.constant 0 : index
    %c0_31 = arith.constant 0 : index
    %167 = vector.load %arg8[%c0_29, %c0_30, %c0_31] : memref<1x2x4xf32, #tpu.memory_space<vmem>>, vector<1x2x4xf32>
    %168 = vector.shape_cast %167 : vector<1x2x4xf32> to vector<2x4xf32>
    %169 = vector.shape_cast %166 : vector<2x4xf32> to vector<1x2x4xf32>
    tpu.vector_store %arg8[%c0_29, %c0_30, %c0_31], %169 {strides = array<i32>} : memref<1x2x4xf32, #tpu.memory_space<vmem>>, vector<1x2x4xf32>,
    %cst_32 = arith.constant 0.000000e+00 : f32
    %170 = vector.broadcast %cst_32 : f32 to vector<2x1xf32>
    %171 = vector.extract_strided_slice %166 {offsets = [0, 0], sizes = [2, 3], strides = [1, 1]} : vector<2x4xf32> to vector<2x3xf32>
    %172 = tpu.concatenate %170, %171 in 1 : vector<2x1xf32>, vector<2x3xf32> -> vector<2x4xf32>
    %173 = vector.extract_strided_slice %166 {offsets = [0, 1], sizes = [2, 3], strides = [1, 1]} : vector<2x4xf32> to vector<2x3xf32>
    %174 = tpu.concatenate %173, %170 in 1 : vector<2x3xf32>, vector<2x1xf32> -> vector<2x4xf32>
    %c24 = arith.constant 24 : index
    %175 = memref.load %arg0[%c24] : memref<48xf32, #tpu.memory_space<smem>>
    %176 = vector.broadcast %175 : f32 to vector<2x4xf32>
    %177 = arith.mulf %172, %176 : vector<2x4xf32>
    %c25 = arith.constant 25 : index
    %178 = memref.load %arg0[%c25] : memref<48xf32, #tpu.memory_space<smem>>
    %179 = vector.broadcast %178 : f32 to vector<2x4xf32>
    %180 = arith.mulf %166, %179 : vector<2x4xf32>
    %181 = arith.addf %177, %180 : vector<2x4xf32>
    %c26 = arith.constant 26 : index
    %182 = memref.load %arg0[%c26] : memref<48xf32, #tpu.memory_space<smem>>
    %183 = vector.broadcast %182 : f32 to vector<2x4xf32>
    %184 = arith.mulf %174, %183 : vector<2x4xf32>
    %185 = arith.addf %181, %184 : vector<2x4xf32>
    %c27 = arith.constant 27 : index
    %186 = memref.load %arg0[%c27] : memref<48xf32, #tpu.memory_space<smem>>
    %187 = vector.broadcast %186 : f32 to vector<2x4xf32>
    %188 = arith.addf %185, %187 : vector<2x4xf32>
    %c0_33 = arith.constant 0 : index
    %c0_34 = arith.constant 0 : index
    %189 = vector.load %arg6[%c0_33, %c0_34] : memref<4x2xf32, #tpu.memory_space<vmem>>, vector<4x2xf32>
    %cst_35 = arith.constant dense<0.000000e+00> : vector<2x2xf32>
    %190 = tpu.matmul %188, %189, %cst_35 {dimension_numbers = #tpu.dot_dimension_numbers<[1], [0], [0], [1], [0, 0, 1, 1], [], []>} : vector<2x4xf32>, vector<4x2xf32>, vector<2x2xf32> -> vector<2x2xf32>
    %191 = arith.negf %190 : vector<2x2xf32>
    %192 = math.exp %191 : vector<2x2xf32>
    %cst_36 = arith.constant 1.000000e+00 : f32
    %193 = vector.broadcast %cst_36 : f32 to vector<2x2xf32>
    %194 = arith.addf %193, %192 : vector<2x2xf32>
    %195 = arith.divf %193, %194 : vector<2x2xf32>
    %196 = arith.mulf %190, %195 : vector<2x2xf32>
    %cst_37 = arith.constant 0.000000e+00 : f32
    %197 = vector.broadcast %cst_37 : f32 to vector<2x1xf32>
    %198 = vector.extract_strided_slice %196 {offsets = [0, 0], sizes = [2, 1], strides = [1, 1]} : vector<2x2xf32> to vector<2x1xf32>
    %199 = tpu.concatenate %197, %198 in 1 : vector<2x1xf32>, vector<2x1xf32> -> vector<2x2xf32>
    %200 = vector.extract_strided_slice %196 {offsets = [0, 1], sizes = [2, 1], strides = [1, 1]} : vector<2x2xf32> to vector<2x1xf32>
    %201 = tpu.concatenate %200, %197 in 1 : vector<2x1xf32>, vector<2x1xf32> -> vector<2x2xf32>
    %c28 = arith.constant 28 : index
    %202 = memref.load %arg0[%c28] : memref<48xf32, #tpu.memory_space<smem>>
    %203 = vector.broadcast %202 : f32 to vector<2x2xf32>
    %204 = arith.mulf %199, %203 : vector<2x2xf32>
    %c29 = arith.constant 29 : index
    %205 = memref.load %arg0[%c29] : memref<48xf32, #tpu.memory_space<smem>>
    %206 = vector.broadcast %205 : f32 to vector<2x2xf32>
    %207 = arith.mulf %196, %206 : vector<2x2xf32>
    %208 = arith.addf %204, %207 : vector<2x2xf32>
    %c30 = arith.constant 30 : index
    %209 = memref.load %arg0[%c30] : memref<48xf32, #tpu.memory_space<smem>>
    %210 = vector.broadcast %209 : f32 to vector<2x2xf32>
    %211 = arith.mulf %201, %210 : vector<2x2xf32>
    %212 = arith.addf %208, %211 : vector<2x2xf32>
    %c31 = arith.constant 31 : index
    %213 = memref.load %arg0[%c31] : memref<48xf32, #tpu.memory_space<smem>>
    %214 = vector.broadcast %213 : f32 to vector<2x2xf32>
    %215 = arith.addf %212, %214 : vector<2x2xf32>
    %216 = arith.negf %215 : vector<2x2xf32>
    %217 = math.exp %216 : vector<2x2xf32>
    %cst_38 = arith.constant 1.000000e+00 : f32
    %218 = vector.broadcast %cst_38 : f32 to vector<2x2xf32>
    %219 = arith.addf %218, %217 : vector<2x2xf32>
    %220 = arith.divf %218, %219 : vector<2x2xf32>
    %221 = arith.mulf %215, %220 : vector<2x2xf32>
    %222 = arith.addf %196, %221 : vector<2x2xf32>
    %cst_39 = arith.constant 0.000000e+00 : f32
    %223 = vector.broadcast %cst_39 : f32 to vector<2x1xf32>
    %224 = vector.extract_strided_slice %222 {offsets = [0, 0], sizes = [2, 1], strides = [1, 1]} : vector<2x2xf32> to vector<2x1xf32>
    %225 = tpu.concatenate %223, %224 in 1 : vector<2x1xf32>, vector<2x1xf32> -> vector<2x2xf32>
    %226 = vector.extract_strided_slice %222 {offsets = [0, 1], sizes = [2, 1], strides = [1, 1]} : vector<2x2xf32> to vector<2x1xf32>
    %227 = tpu.concatenate %226, %223 in 1 : vector<2x1xf32>, vector<2x1xf32> -> vector<2x2xf32>
    %c32 = arith.constant 32 : index
    %228 = memref.load %arg0[%c32] : memref<48xf32, #tpu.memory_space<smem>>
    %229 = vector.broadcast %228 : f32 to vector<2x2xf32>
    %230 = arith.mulf %225, %229 : vector<2x2xf32>
    %c33 = arith.constant 33 : index
    %231 = memref.load %arg0[%c33] : memref<48xf32, #tpu.memory_space<smem>>
    %232 = vector.broadcast %231 : f32 to vector<2x2xf32>
    %233 = arith.mulf %222, %232 : vector<2x2xf32>
    %234 = arith.addf %230, %233 : vector<2x2xf32>
    %c34 = arith.constant 34 : index
    %235 = memref.load %arg0[%c34] : memref<48xf32, #tpu.memory_space<smem>>
    %236 = vector.broadcast %235 : f32 to vector<2x2xf32>
    %237 = arith.mulf %227, %236 : vector<2x2xf32>
    %238 = arith.addf %234, %237 : vector<2x2xf32>
    %c35 = arith.constant 35 : index
    %239 = memref.load %arg0[%c35] : memref<48xf32, #tpu.memory_space<smem>>
    %240 = vector.broadcast %239 : f32 to vector<2x2xf32>
    %241 = arith.addf %238, %240 : vector<2x2xf32>
    %242 = arith.negf %241 : vector<2x2xf32>
    %243 = math.exp %242 : vector<2x2xf32>
    %cst_40 = arith.constant 1.000000e+00 : f32
    %244 = vector.broadcast %cst_40 : f32 to vector<2x2xf32>
    %245 = arith.addf %244, %243 : vector<2x2xf32>
    %246 = arith.divf %244, %245 : vector<2x2xf32>
    %247 = arith.mulf %241, %246 : vector<2x2xf32>
    %cst_41 = arith.constant 0.000000e+00 : f32
    %248 = vector.broadcast %cst_41 : f32 to vector<2x1xf32>
    %249 = vector.extract_strided_slice %247 {offsets = [0, 0], sizes = [2, 1], strides = [1, 1]} : vector<2x2xf32> to vector<2x1xf32>
    %250 = tpu.concatenate %248, %249 in 1 : vector<2x1xf32>, vector<2x1xf32> -> vector<2x2xf32>
    %251 = vector.extract_strided_slice %247 {offsets = [0, 1], sizes = [2, 1], strides = [1, 1]} : vector<2x2xf32> to vector<2x1xf32>
    %252 = tpu.concatenate %251, %248 in 1 : vector<2x1xf32>, vector<2x1xf32> -> vector<2x2xf32>
    %c36 = arith.constant 36 : index
    %253 = memref.load %arg0[%c36] : memref<48xf32, #tpu.memory_space<smem>>
    %254 = vector.broadcast %253 : f32 to vector<2x2xf32>
    %255 = arith.mulf %250, %254 : vector<2x2xf32>
    %c37 = arith.constant 37 : index
    %256 = memref.load %arg0[%c37] : memref<48xf32, #tpu.memory_space<smem>>
    %257 = vector.broadcast %256 : f32 to vector<2x2xf32>
    %258 = arith.mulf %247, %257 : vector<2x2xf32>
    %259 = arith.addf %255, %258 : vector<2x2xf32>
    %c38 = arith.constant 38 : index
    %260 = memref.load %arg0[%c38] : memref<48xf32, #tpu.memory_space<smem>>
    %261 = vector.broadcast %260 : f32 to vector<2x2xf32>
    %262 = arith.mulf %252, %261 : vector<2x2xf32>
    %263 = arith.addf %259, %262 : vector<2x2xf32>
    %c39 = arith.constant 39 : index
    %264 = memref.load %arg0[%c39] : memref<48xf32, #tpu.memory_space<smem>>
    %265 = vector.broadcast %264 : f32 to vector<2x2xf32>
    %266 = arith.addf %263, %265 : vector<2x2xf32>
    %cst_42 = arith.constant 0.000000e+00 : f32
    %267 = vector.broadcast %cst_42 : f32 to vector<2x2xf32>
    %268 = arith.maximumf %266, %267 : vector<2x2xf32>
    %cst_43 = arith.constant 0.000000e+00 : f32
    %269 = vector.broadcast %cst_43 : f32 to vector<2x1xf32>
    %270 = vector.extract_strided_slice %222 {offsets = [0, 0], sizes = [2, 1], strides = [1, 1]} : vector<2x2xf32> to vector<2x1xf32>
    %271 = tpu.concatenate %269, %270 in 1 : vector<2x1xf32>, vector<2x1xf32> -> vector<2x2xf32>
    %272 = vector.extract_strided_slice %222 {offsets = [0, 1], sizes = [2, 1], strides = [1, 1]} : vector<2x2xf32> to vector<2x1xf32>
    %273 = tpu.concatenate %272, %269 in 1 : vector<2x1xf32>, vector<2x1xf32> -> vector<2x2xf32>
    %c40 = arith.constant 40 : index
    %274 = memref.load %arg0[%c40] : memref<48xf32, #tpu.memory_space<smem>>
    %275 = vector.broadcast %274 : f32 to vector<2x2xf32>
    %276 = arith.mulf %271, %275 : vector<2x2xf32>
    %c41 = arith.constant 41 : index
    %277 = memref.load %arg0[%c41] : memref<48xf32, #tpu.memory_space<smem>>
    %278 = vector.broadcast %277 : f32 to vector<2x2xf32>
    %279 = arith.mulf %222, %278 : vector<2x2xf32>
    %280 = arith.addf %276, %279 : vector<2x2xf32>
    %c42 = arith.constant 42 : index
    %281 = memref.load %arg0[%c42] : memref<48xf32, #tpu.memory_space<smem>>
    %282 = vector.broadcast %281 : f32 to vector<2x2xf32>
    %283 = arith.mulf %273, %282 : vector<2x2xf32>
    %284 = arith.addf %280, %283 : vector<2x2xf32>
    %c43 = arith.constant 43 : index
    %285 = memref.load %arg0[%c43] : memref<48xf32, #tpu.memory_space<smem>>
    %286 = vector.broadcast %285 : f32 to vector<2x2xf32>
    %287 = arith.addf %284, %286 : vector<2x2xf32>
    %288 = arith.negf %287 : vector<2x2xf32>
    %289 = math.exp %288 : vector<2x2xf32>
    %cst_44 = arith.constant 1.000000e+00 : f32
    %290 = vector.broadcast %cst_44 : f32 to vector<2x2xf32>
    %291 = arith.addf %290, %289 : vector<2x2xf32>
    %292 = arith.divf %290, %291 : vector<2x2xf32>
    %293 = arith.mulf %287, %292 : vector<2x2xf32>
    %cst_45 = arith.constant 0.000000e+00 : f32
    %294 = vector.broadcast %cst_45 : f32 to vector<2x1xf32>
    %295 = vector.extract_strided_slice %293 {offsets = [0, 0], sizes = [2, 1], strides = [1, 1]} : vector<2x2xf32> to vector<2x1xf32>
    %296 = tpu.concatenate %294, %295 in 1 : vector<2x1xf32>, vector<2x1xf32> -> vector<2x2xf32>
    %297 = vector.extract_strided_slice %293 {offsets = [0, 1], sizes = [2, 1], strides = [1, 1]} : vector<2x2xf32> to vector<2x1xf32>
    %298 = tpu.concatenate %297, %294 in 1 : vector<2x1xf32>, vector<2x1xf32> -> vector<2x2xf32>
    %c44 = arith.constant 44 : index
    %299 = memref.load %arg0[%c44] : memref<48xf32, #tpu.memory_space<smem>>
    %300 = vector.broadcast %299 : f32 to vector<2x2xf32>
    %301 = arith.mulf %296, %300 : vector<2x2xf32>
    %c45 = arith.constant 45 : index
    %302 = memref.load %arg0[%c45] : memref<48xf32, #tpu.memory_space<smem>>
    %303 = vector.broadcast %302 : f32 to vector<2x2xf32>
    %304 = arith.mulf %293, %303 : vector<2x2xf32>
    %305 = arith.addf %301, %304 : vector<2x2xf32>
    %c46 = arith.constant 46 : index
    %306 = memref.load %arg0[%c46] : memref<48xf32, #tpu.memory_space<smem>>
    %307 = vector.broadcast %306 : f32 to vector<2x2xf32>
    %308 = arith.mulf %298, %307 : vector<2x2xf32>
    %309 = arith.addf %305, %308 : vector<2x2xf32>
    %c47 = arith.constant 47 : index
    %310 = memref.load %arg0[%c47] : memref<48xf32, #tpu.memory_space<smem>>
    %311 = vector.broadcast %310 : f32 to vector<2x2xf32>
    %312 = arith.addf %309, %311 : vector<2x2xf32>
    %cst_46 = arith.constant 0.000000e+00 : f32
    %313 = vector.broadcast %cst_46 : f32 to vector<2x2xf32>
    %314 = arith.maximumf %312, %313 : vector<2x2xf32>
    %cst_47 = arith.constant 5.000000e-01 : f32
    %315 = vector.broadcast %cst_47 : f32 to vector<2x2xf32>
    %316 = arith.mulf %315, %314 : vector<2x2xf32>
    %317 = math.exp %316 : vector<2x2xf32>
    %c0_48 = arith.constant 0 : index
    %c0_49 = arith.constant 0 : index
    %c0_50 = arith.constant 0 : index
    %318 = vector.load %arg2[%c0_48, %c0_49, %c0_50] : memref<1x2x2xf32, #tpu.memory_space<vmem>>, vector<1x2x2xf32>
    %319 = vector.shape_cast %318 : vector<1x2x2xf32> to vector<2x2xf32>
    %320 = arith.mulf %317, %319 : vector<2x2xf32>
    %321 = arith.addf %268, %320 : vector<2x2xf32>
    %c0_51 = arith.constant 0 : index
    %c0_52 = arith.constant 0 : index
    %c0_53 = arith.constant 0 : index
    %322 = vector.load %arg7[%c0_51, %c0_52, %c0_53] : memref<1x2x2xf32, #tpu.memory_space<vmem>>, vector<1x2x2xf32>
    %323 = vector.shape_cast %322 : vector<1x2x2xf32> to vector<2x2xf32>
    %324 = vector.shape_cast %321 : vector<2x2xf32> to vector<1x2x2xf32>
    tpu.vector_store %arg7[%c0_51, %c0_52, %c0_53], %324 {strides = array<i32>} : memref<1x2x2xf32, #tpu.memory_space<vmem>>, vector<1x2x2xf32>,
    %cst_54 = arith.constant 1.000000e+00 : f32
    %325 = vector.broadcast %cst_54 : f32 to vector<2x2xf32>
    %326 = arith.addf %325, %314 : vector<2x2xf32>
    %327 = arith.mulf %268, %268 : vector<2x2xf32>
    %328 = arith.subf %326, %327 : vector<2x2xf32>
    %329 = math.exp %314 : vector<2x2xf32>
    %330 = arith.subf %328, %329 : vector<2x2xf32>
    %cst_55 = arith.constant dense<0.000000e+00> : vector<2xf32>
    %331 = vector.multi_reduction <add>, %330, %cst_55 [1] : vector<2x2xf32> to vector<2xf32>
    %332 = vector.shape_cast %331 : vector<2xf32> to vector<2x1xf32>
    %cst_56 = arith.constant -5.000000e-01 : f32
    %333 = vector.broadcast %cst_56 : f32 to vector<2x1xf32>
    %334 = arith.mulf %333, %332 : vector<2x1xf32>
    %cst_57 = arith.constant dense<0.000000e+00> : vector<1xf32>
    %335 = vector.multi_reduction <add>, %334, %cst_57 [0] : vector<2x1xf32> to vector<1xf32>
    %336 = vector.shape_cast %335 : vector<1xf32> to vector<1x1xf32>
    %cst_58 = arith.constant 2.000000e+00 : f32
    %337 = vector.broadcast %cst_58 : f32 to vector<1x1xf32>
    %338 = arith.divf %336, %337 : vector<1x1xf32>
    %c0_59 = arith.constant 0 : index
    %c0_60 = arith.constant 0 : index
    %339 = vector.load %arg11[%c0_59, %c0_60] : memref<1x1xf32, #tpu.memory_space<vmem>>, vector<1x1xf32>
    tpu.vector_store %arg11[%c0_59, %c0_60], %338 {strides = array<i32>} : memref<1x1xf32, #tpu.memory_space<vmem>>, vector<1x1xf32>,
    return
  }
}

module attributes {stable_mosaic.version = 11 : i64} {
  func.func @_decoder_kernel(%arg0: memref<294xf32, #tpu.memory_space<smem>>, %arg1: memref<1x2x2xf32, #tpu.memory_space<vmem>>, %arg2: memref<1x2x4xf32, #tpu.memory_space<vmem>>, %arg3: memref<1x2x8xf32, #tpu.memory_space<vmem>>, %arg4: memref<1x2x16xf32, #tpu.memory_space<vmem>>, %arg5: memref<1x2x4xf32, #tpu.memory_space<vmem>>, %arg6: memref<1x2x8xf32, #tpu.memory_space<vmem>>, %arg7: memref<1x2x16xf32, #tpu.memory_space<vmem>>, %arg8: memref<1x2x32xf32, #tpu.memory_space<vmem>>, %arg9: memref<1x1xf32, #tpu.memory_space<vmem>>, %arg10: memref<2x4xf32, #tpu.memory_space<vmem>>, %arg11: memref<4x8xf32, #tpu.memory_space<vmem>>, %arg12: memref<8x16xf32, #tpu.memory_space<vmem>>, %arg13: memref<16x32xf32, #tpu.memory_space<vmem>>, %arg14: memref<1x2x32xf32, #tpu.memory_space<vmem>>, %arg15: memref<1x8xf32, #tpu.memory_space<vmem>>) attributes {dimension_semantics = [], scalar_prefetch = 0 : i64, scratch_operands = 0 : i64, tpu.core_type = #tpu.core_type<tc>} {
    %c0 = arith.constant 0 : index
    %c0_0 = arith.constant 0 : index
    %c0_1 = arith.constant 0 : index
    %0 = vector.load %arg1[%c0, %c0_0, %c0_1] : memref<1x2x2xf32, #tpu.memory_space<vmem>>, vector<1x2x2xf32>
    %1 = vector.shape_cast %0 : vector<1x2x2xf32> to vector<2x2xf32>
    %cst = arith.constant 0.000000e+00 : f32
    %2 = vector.broadcast %cst : f32 to vector<2x2xf32>
    %c0_2 = arith.constant 0 : index
    %c0_3 = arith.constant 0 : index
    %3 = vector.load %arg10[%c0_2, %c0_3] : memref<2x4xf32, #tpu.memory_space<vmem>>, vector<2x4xf32>
    %cst_4 = arith.constant dense<0.000000e+00> : vector<2x4xf32>
    %4 = tpu.matmul %2, %3, %cst_4 {dimension_numbers = #tpu.dot_dimension_numbers<[1], [0], [0], [1], [0, 0, 1, 1], [], []>} : vector<2x2xf32>, vector<2x4xf32>, vector<2x4xf32> -> vector<2x4xf32>
    %c0_5 = arith.constant 0 : index
    %c0_6 = arith.constant 0 : index
    %5 = vector.load %arg10[%c0_5, %c0_6] : memref<2x4xf32, #tpu.memory_space<vmem>>, vector<2x4xf32>
    %cst_7 = arith.constant dense<0.000000e+00> : vector<2x4xf32>
    %6 = tpu.matmul %1, %5, %cst_7 {dimension_numbers = #tpu.dot_dimension_numbers<[1], [0], [0], [1], [0, 0, 1, 1], [], []>} : vector<2x2xf32>, vector<2x4xf32>, vector<2x4xf32> -> vector<2x4xf32>
    %cst_8 = arith.constant 0.000000e+00 : f32
    %7 = vector.broadcast %cst_8 : f32 to vector<2x1xf32>
    %8 = vector.extract_strided_slice %4 {offsets = [0, 0], sizes = [2, 3], strides = [1, 1]} : vector<2x4xf32> to vector<2x3xf32>
    %9 = tpu.concatenate %7, %8 in 1 : vector<2x1xf32>, vector<2x3xf32> -> vector<2x4xf32>
    %10 = vector.extract_strided_slice %4 {offsets = [0, 1], sizes = [2, 3], strides = [1, 1]} : vector<2x4xf32> to vector<2x3xf32>
    %11 = tpu.concatenate %10, %7 in 1 : vector<2x3xf32>, vector<2x1xf32> -> vector<2x4xf32>
    %cst_9 = arith.constant 0.000000e+00 : f32
    %12 = vector.broadcast %cst_9 : f32 to vector<2x1xf32>
    %13 = vector.extract_strided_slice %6 {offsets = [0, 0], sizes = [2, 3], strides = [1, 1]} : vector<2x4xf32> to vector<2x3xf32>
    %14 = tpu.concatenate %12, %13 in 1 : vector<2x1xf32>, vector<2x3xf32> -> vector<2x4xf32>
    %15 = vector.extract_strided_slice %6 {offsets = [0, 1], sizes = [2, 3], strides = [1, 1]} : vector<2x4xf32> to vector<2x3xf32>
    %16 = tpu.concatenate %15, %12 in 1 : vector<2x3xf32>, vector<2x1xf32> -> vector<2x4xf32>
    %c0_10 = arith.constant 0 : index
    %17 = memref.load %arg0[%c0_10] : memref<294xf32, #tpu.memory_space<smem>>
    %18 = vector.broadcast %17 : f32 to vector<2x4xf32>
    %19 = arith.mulf %9, %18 : vector<2x4xf32>
    %c1 = arith.constant 1 : index
    %20 = memref.load %arg0[%c1] : memref<294xf32, #tpu.memory_space<smem>>
    %21 = vector.broadcast %20 : f32 to vector<2x4xf32>
    %22 = arith.mulf %4, %21 : vector<2x4xf32>
    %23 = arith.addf %19, %22 : vector<2x4xf32>
    %c2 = arith.constant 2 : index
    %24 = memref.load %arg0[%c2] : memref<294xf32, #tpu.memory_space<smem>>
    %25 = vector.broadcast %24 : f32 to vector<2x4xf32>
    %26 = arith.mulf %11, %25 : vector<2x4xf32>
    %27 = arith.addf %23, %26 : vector<2x4xf32>
    %c3 = arith.constant 3 : index
    %28 = memref.load %arg0[%c3] : memref<294xf32, #tpu.memory_space<smem>>
    %29 = vector.broadcast %28 : f32 to vector<2x4xf32>
    %30 = arith.mulf %14, %29 : vector<2x4xf32>
    %31 = arith.addf %27, %30 : vector<2x4xf32>
    %c4 = arith.constant 4 : index
    %32 = memref.load %arg0[%c4] : memref<294xf32, #tpu.memory_space<smem>>
    %33 = vector.broadcast %32 : f32 to vector<2x4xf32>
    %34 = arith.mulf %6, %33 : vector<2x4xf32>
    %35 = arith.addf %31, %34 : vector<2x4xf32>
    %c5 = arith.constant 5 : index
    %36 = memref.load %arg0[%c5] : memref<294xf32, #tpu.memory_space<smem>>
    %37 = vector.broadcast %36 : f32 to vector<2x4xf32>
    %38 = arith.mulf %16, %37 : vector<2x4xf32>
    %39 = arith.addf %35, %38 : vector<2x4xf32>
    %c12 = arith.constant 12 : index
    %40 = memref.load %arg0[%c12] : memref<294xf32, #tpu.memory_space<smem>>
    %41 = vector.broadcast %40 : f32 to vector<2x4xf32>
    %42 = arith.addf %39, %41 : vector<2x4xf32>
    %43 = arith.negf %42 : vector<2x4xf32>
    %44 = math.exp %43 : vector<2x4xf32>
    %cst_11 = arith.constant 1.000000e+00 : f32
    %45 = vector.broadcast %cst_11 : f32 to vector<2x4xf32>
    %46 = arith.addf %45, %44 : vector<2x4xf32>
    %47 = arith.divf %45, %46 : vector<2x4xf32>
    %48 = arith.mulf %42, %47 : vector<2x4xf32>
    %c6 = arith.constant 6 : index
    %49 = memref.load %arg0[%c6] : memref<294xf32, #tpu.memory_space<smem>>
    %50 = vector.broadcast %49 : f32 to vector<2x4xf32>
    %51 = arith.mulf %9, %50 : vector<2x4xf32>
    %c7 = arith.constant 7 : index
    %52 = memref.load %arg0[%c7] : memref<294xf32, #tpu.memory_space<smem>>
    %53 = vector.broadcast %52 : f32 to vector<2x4xf32>
    %54 = arith.mulf %4, %53 : vector<2x4xf32>
    %55 = arith.addf %51, %54 : vector<2x4xf32>
    %c8 = arith.constant 8 : index
    %56 = memref.load %arg0[%c8] : memref<294xf32, #tpu.memory_space<smem>>
    %57 = vector.broadcast %56 : f32 to vector<2x4xf32>
    %58 = arith.mulf %11, %57 : vector<2x4xf32>
    %59 = arith.addf %55, %58 : vector<2x4xf32>
    %c9 = arith.constant 9 : index
    %60 = memref.load %arg0[%c9] : memref<294xf32, #tpu.memory_space<smem>>
    %61 = vector.broadcast %60 : f32 to vector<2x4xf32>
    %62 = arith.mulf %14, %61 : vector<2x4xf32>
    %63 = arith.addf %59, %62 : vector<2x4xf32>
    %c10 = arith.constant 10 : index
    %64 = memref.load %arg0[%c10] : memref<294xf32, #tpu.memory_space<smem>>
    %65 = vector.broadcast %64 : f32 to vector<2x4xf32>
    %66 = arith.mulf %6, %65 : vector<2x4xf32>
    %67 = arith.addf %63, %66 : vector<2x4xf32>
    %c11 = arith.constant 11 : index
    %68 = memref.load %arg0[%c11] : memref<294xf32, #tpu.memory_space<smem>>
    %69 = vector.broadcast %68 : f32 to vector<2x4xf32>
    %70 = arith.mulf %16, %69 : vector<2x4xf32>
    %71 = arith.addf %67, %70 : vector<2x4xf32>
    %c13 = arith.constant 13 : index
    %72 = memref.load %arg0[%c13] : memref<294xf32, #tpu.memory_space<smem>>
    %73 = vector.broadcast %72 : f32 to vector<2x4xf32>
    %74 = arith.addf %71, %73 : vector<2x4xf32>
    %75 = arith.negf %74 : vector<2x4xf32>
    %76 = math.exp %75 : vector<2x4xf32>
    %cst_12 = arith.constant 1.000000e+00 : f32
    %77 = vector.broadcast %cst_12 : f32 to vector<2x4xf32>
    %78 = arith.addf %77, %76 : vector<2x4xf32>
    %79 = arith.divf %77, %78 : vector<2x4xf32>
    %80 = arith.mulf %74, %79 : vector<2x4xf32>
    %cst_13 = arith.constant 0.000000e+00 : f32
    %81 = vector.broadcast %cst_13 : f32 to vector<2x1xf32>
    %82 = vector.extract_strided_slice %48 {offsets = [0, 0], sizes = [2, 3], strides = [1, 1]} : vector<2x4xf32> to vector<2x3xf32>
    %83 = tpu.concatenate %81, %82 in 1 : vector<2x1xf32>, vector<2x3xf32> -> vector<2x4xf32>
    %84 = vector.extract_strided_slice %48 {offsets = [0, 1], sizes = [2, 3], strides = [1, 1]} : vector<2x4xf32> to vector<2x3xf32>
    %85 = tpu.concatenate %84, %81 in 1 : vector<2x3xf32>, vector<2x1xf32> -> vector<2x4xf32>
    %cst_14 = arith.constant 0.000000e+00 : f32
    %86 = vector.broadcast %cst_14 : f32 to vector<2x1xf32>
    %87 = vector.extract_strided_slice %80 {offsets = [0, 0], sizes = [2, 3], strides = [1, 1]} : vector<2x4xf32> to vector<2x3xf32>
    %88 = tpu.concatenate %86, %87 in 1 : vector<2x1xf32>, vector<2x3xf32> -> vector<2x4xf32>
    %89 = vector.extract_strided_slice %80 {offsets = [0, 1], sizes = [2, 3], strides = [1, 1]} : vector<2x4xf32> to vector<2x3xf32>
    %90 = tpu.concatenate %89, %86 in 1 : vector<2x3xf32>, vector<2x1xf32> -> vector<2x4xf32>
    %c14 = arith.constant 14 : index
    %91 = memref.load %arg0[%c14] : memref<294xf32, #tpu.memory_space<smem>>
    %92 = vector.broadcast %91 : f32 to vector<2x4xf32>
    %93 = arith.mulf %83, %92 : vector<2x4xf32>
    %c15 = arith.constant 15 : index
    %94 = memref.load %arg0[%c15] : memref<294xf32, #tpu.memory_space<smem>>
    %95 = vector.broadcast %94 : f32 to vector<2x4xf32>
    %96 = arith.mulf %48, %95 : vector<2x4xf32>
    %97 = arith.addf %93, %96 : vector<2x4xf32>
    %c16 = arith.constant 16 : index
    %98 = memref.load %arg0[%c16] : memref<294xf32, #tpu.memory_space<smem>>
    %99 = vector.broadcast %98 : f32 to vector<2x4xf32>
    %100 = arith.mulf %85, %99 : vector<2x4xf32>
    %101 = arith.addf %97, %100 : vector<2x4xf32>
    %c17 = arith.constant 17 : index
    %102 = memref.load %arg0[%c17] : memref<294xf32, #tpu.memory_space<smem>>
    %103 = vector.broadcast %102 : f32 to vector<2x4xf32>
    %104 = arith.mulf %88, %103 : vector<2x4xf32>
    %105 = arith.addf %101, %104 : vector<2x4xf32>
    %c18 = arith.constant 18 : index
    %106 = memref.load %arg0[%c18] : memref<294xf32, #tpu.memory_space<smem>>
    %107 = vector.broadcast %106 : f32 to vector<2x4xf32>
    %108 = arith.mulf %80, %107 : vector<2x4xf32>
    %109 = arith.addf %105, %108 : vector<2x4xf32>
    %c19 = arith.constant 19 : index
    %110 = memref.load %arg0[%c19] : memref<294xf32, #tpu.memory_space<smem>>
    %111 = vector.broadcast %110 : f32 to vector<2x4xf32>
    %112 = arith.mulf %90, %111 : vector<2x4xf32>
    %113 = arith.addf %109, %112 : vector<2x4xf32>
    %c20 = arith.constant 20 : index
    %114 = memref.load %arg0[%c20] : memref<294xf32, #tpu.memory_space<smem>>
    %115 = vector.broadcast %114 : f32 to vector<2x4xf32>
    %116 = arith.addf %113, %115 : vector<2x4xf32>
    %117 = arith.negf %116 : vector<2x4xf32>
    %118 = math.exp %117 : vector<2x4xf32>
    %cst_15 = arith.constant 1.000000e+00 : f32
    %119 = vector.broadcast %cst_15 : f32 to vector<2x4xf32>
    %120 = arith.addf %119, %118 : vector<2x4xf32>
    %121 = arith.divf %119, %120 : vector<2x4xf32>
    %122 = arith.mulf %116, %121 : vector<2x4xf32>
    %cst_16 = arith.constant 0.000000e+00 : f32
    %123 = vector.broadcast %cst_16 : f32 to vector<2x1xf32>
    %124 = vector.extract_strided_slice %122 {offsets = [0, 0], sizes = [2, 3], strides = [1, 1]} : vector<2x4xf32> to vector<2x3xf32>
    %125 = tpu.concatenate %123, %124 in 1 : vector<2x1xf32>, vector<2x3xf32> -> vector<2x4xf32>
    %126 = vector.extract_strided_slice %122 {offsets = [0, 1], sizes = [2, 3], strides = [1, 1]} : vector<2x4xf32> to vector<2x3xf32>
    %127 = tpu.concatenate %126, %123 in 1 : vector<2x3xf32>, vector<2x1xf32> -> vector<2x4xf32>
    %c84 = arith.constant 84 : index
    %128 = memref.load %arg0[%c84] : memref<294xf32, #tpu.memory_space<smem>>
    %129 = vector.broadcast %128 : f32 to vector<2x4xf32>
    %130 = arith.mulf %125, %129 : vector<2x4xf32>
    %c85 = arith.constant 85 : index
    %131 = memref.load %arg0[%c85] : memref<294xf32, #tpu.memory_space<smem>>
    %132 = vector.broadcast %131 : f32 to vector<2x4xf32>
    %133 = arith.mulf %122, %132 : vector<2x4xf32>
    %134 = arith.addf %130, %133 : vector<2x4xf32>
    %c86 = arith.constant 86 : index
    %135 = memref.load %arg0[%c86] : memref<294xf32, #tpu.memory_space<smem>>
    %136 = vector.broadcast %135 : f32 to vector<2x4xf32>
    %137 = arith.mulf %127, %136 : vector<2x4xf32>
    %138 = arith.addf %134, %137 : vector<2x4xf32>
    %c87 = arith.constant 87 : index
    %139 = memref.load %arg0[%c87] : memref<294xf32, #tpu.memory_space<smem>>
    %140 = vector.broadcast %139 : f32 to vector<2x4xf32>
    %141 = arith.addf %138, %140 : vector<2x4xf32>
    %142 = arith.negf %141 : vector<2x4xf32>
    %143 = math.exp %142 : vector<2x4xf32>
    %cst_17 = arith.constant 1.000000e+00 : f32
    %144 = vector.broadcast %cst_17 : f32 to vector<2x4xf32>
    %145 = arith.addf %144, %143 : vector<2x4xf32>
    %146 = arith.divf %144, %145 : vector<2x4xf32>
    %147 = arith.mulf %141, %146 : vector<2x4xf32>
    %148 = arith.addf %122, %147 : vector<2x4xf32>
    %149 = arith.negf %148 : vector<2x4xf32>
    %150 = math.exp %149 : vector<2x4xf32>
    %cst_18 = arith.constant 1.000000e+00 : f32
    %151 = vector.broadcast %cst_18 : f32 to vector<2x4xf32>
    %152 = arith.addf %151, %150 : vector<2x4xf32>
    %153 = arith.divf %151, %152 : vector<2x4xf32>
    %154 = arith.mulf %148, %153 : vector<2x4xf32>
    %cst_19 = arith.constant 0.000000e+00 : f32
    %155 = vector.broadcast %cst_19 : f32 to vector<2x1xf32>
    %156 = vector.extract_strided_slice %154 {offsets = [0, 0], sizes = [2, 3], strides = [1, 1]} : vector<2x4xf32> to vector<2x3xf32>
    %157 = tpu.concatenate %155, %156 in 1 : vector<2x1xf32>, vector<2x3xf32> -> vector<2x4xf32>
    %158 = vector.extract_strided_slice %154 {offsets = [0, 1], sizes = [2, 3], strides = [1, 1]} : vector<2x4xf32> to vector<2x3xf32>
    %159 = tpu.concatenate %158, %155 in 1 : vector<2x3xf32>, vector<2x1xf32> -> vector<2x4xf32>
    %c88 = arith.constant 88 : index
    %160 = memref.load %arg0[%c88] : memref<294xf32, #tpu.memory_space<smem>>
    %161 = vector.broadcast %160 : f32 to vector<2x4xf32>
    %162 = arith.mulf %157, %161 : vector<2x4xf32>
    %c89 = arith.constant 89 : index
    %163 = memref.load %arg0[%c89] : memref<294xf32, #tpu.memory_space<smem>>
    %164 = vector.broadcast %163 : f32 to vector<2x4xf32>
    %165 = arith.mulf %154, %164 : vector<2x4xf32>
    %166 = arith.addf %162, %165 : vector<2x4xf32>
    %c90 = arith.constant 90 : index
    %167 = memref.load %arg0[%c90] : memref<294xf32, #tpu.memory_space<smem>>
    %168 = vector.broadcast %167 : f32 to vector<2x4xf32>
    %169 = arith.mulf %159, %168 : vector<2x4xf32>
    %170 = arith.addf %166, %169 : vector<2x4xf32>
    %c91 = arith.constant 91 : index
    %171 = memref.load %arg0[%c91] : memref<294xf32, #tpu.memory_space<smem>>
    %172 = vector.broadcast %171 : f32 to vector<2x4xf32>
    %173 = arith.addf %170, %172 : vector<2x4xf32>
    %cst_20 = arith.constant 0.000000e+00 : f32
    %174 = vector.broadcast %cst_20 : f32 to vector<2x1xf32>
    %175 = vector.extract_strided_slice %122 {offsets = [0, 0], sizes = [2, 3], strides = [1, 1]} : vector<2x4xf32> to vector<2x3xf32>
    %176 = tpu.concatenate %174, %175 in 1 : vector<2x1xf32>, vector<2x3xf32> -> vector<2x4xf32>
    %177 = vector.extract_strided_slice %122 {offsets = [0, 1], sizes = [2, 3], strides = [1, 1]} : vector<2x4xf32> to vector<2x3xf32>
    %178 = tpu.concatenate %177, %174 in 1 : vector<2x3xf32>, vector<2x1xf32> -> vector<2x4xf32>
    %c92 = arith.constant 92 : index
    %179 = memref.load %arg0[%c92] : memref<294xf32, #tpu.memory_space<smem>>
    %180 = vector.broadcast %179 : f32 to vector<2x4xf32>
    %181 = arith.mulf %176, %180 : vector<2x4xf32>
    %c93 = arith.constant 93 : index
    %182 = memref.load %arg0[%c93] : memref<294xf32, #tpu.memory_space<smem>>
    %183 = vector.broadcast %182 : f32 to vector<2x4xf32>
    %184 = arith.mulf %122, %183 : vector<2x4xf32>
    %185 = arith.addf %181, %184 : vector<2x4xf32>
    %c94 = arith.constant 94 : index
    %186 = memref.load %arg0[%c94] : memref<294xf32, #tpu.memory_space<smem>>
    %187 = vector.broadcast %186 : f32 to vector<2x4xf32>
    %188 = arith.mulf %178, %187 : vector<2x4xf32>
    %189 = arith.addf %185, %188 : vector<2x4xf32>
    %c95 = arith.constant 95 : index
    %190 = memref.load %arg0[%c95] : memref<294xf32, #tpu.memory_space<smem>>
    %191 = vector.broadcast %190 : f32 to vector<2x4xf32>
    %192 = arith.addf %189, %191 : vector<2x4xf32>
    %193 = arith.negf %192 : vector<2x4xf32>
    %194 = math.exp %193 : vector<2x4xf32>
    %cst_21 = arith.constant 1.000000e+00 : f32
    %195 = vector.broadcast %cst_21 : f32 to vector<2x4xf32>
    %196 = arith.addf %195, %194 : vector<2x4xf32>
    %197 = arith.divf %195, %196 : vector<2x4xf32>
    %198 = arith.mulf %192, %197 : vector<2x4xf32>
    %199 = arith.addf %122, %198 : vector<2x4xf32>
    %200 = arith.negf %199 : vector<2x4xf32>
    %201 = math.exp %200 : vector<2x4xf32>
    %cst_22 = arith.constant 1.000000e+00 : f32
    %202 = vector.broadcast %cst_22 : f32 to vector<2x4xf32>
    %203 = arith.addf %202, %201 : vector<2x4xf32>
    %204 = arith.divf %202, %203 : vector<2x4xf32>
    %205 = arith.mulf %199, %204 : vector<2x4xf32>
    %cst_23 = arith.constant 0.000000e+00 : f32
    %206 = vector.broadcast %cst_23 : f32 to vector<2x1xf32>
    %207 = vector.extract_strided_slice %205 {offsets = [0, 0], sizes = [2, 3], strides = [1, 1]} : vector<2x4xf32> to vector<2x3xf32>
    %208 = tpu.concatenate %206, %207 in 1 : vector<2x1xf32>, vector<2x3xf32> -> vector<2x4xf32>
    %209 = vector.extract_strided_slice %205 {offsets = [0, 1], sizes = [2, 3], strides = [1, 1]} : vector<2x4xf32> to vector<2x3xf32>
    %210 = tpu.concatenate %209, %206 in 1 : vector<2x3xf32>, vector<2x1xf32> -> vector<2x4xf32>
    %c96 = arith.constant 96 : index
    %211 = memref.load %arg0[%c96] : memref<294xf32, #tpu.memory_space<smem>>
    %212 = vector.broadcast %211 : f32 to vector<2x4xf32>
    %213 = arith.mulf %208, %212 : vector<2x4xf32>
    %c97 = arith.constant 97 : index
    %214 = memref.load %arg0[%c97] : memref<294xf32, #tpu.memory_space<smem>>
    %215 = vector.broadcast %214 : f32 to vector<2x4xf32>
    %216 = arith.mulf %205, %215 : vector<2x4xf32>
    %217 = arith.addf %213, %216 : vector<2x4xf32>
    %c98 = arith.constant 98 : index
    %218 = memref.load %arg0[%c98] : memref<294xf32, #tpu.memory_space<smem>>
    %219 = vector.broadcast %218 : f32 to vector<2x4xf32>
    %220 = arith.mulf %210, %219 : vector<2x4xf32>
    %221 = arith.addf %217, %220 : vector<2x4xf32>
    %c99 = arith.constant 99 : index
    %222 = memref.load %arg0[%c99] : memref<294xf32, #tpu.memory_space<smem>>
    %223 = vector.broadcast %222 : f32 to vector<2x4xf32>
    %224 = arith.addf %221, %223 : vector<2x4xf32>
    %c0_24 = arith.constant 0 : index
    %c0_25 = arith.constant 0 : index
    %c0_26 = arith.constant 0 : index
    %225 = vector.load %arg2[%c0_24, %c0_25, %c0_26] : memref<1x2x4xf32, #tpu.memory_space<vmem>>, vector<1x2x4xf32>
    %226 = vector.shape_cast %225 : vector<1x2x4xf32> to vector<2x4xf32>
    %cst_27 = arith.constant 0.000000e+00 : f32
    %227 = vector.broadcast %cst_27 : f32 to vector<2x1xf32>
    %228 = vector.extract_strided_slice %226 {offsets = [0, 0], sizes = [2, 3], strides = [1, 1]} : vector<2x4xf32> to vector<2x3xf32>
    %229 = tpu.concatenate %227, %228 in 1 : vector<2x1xf32>, vector<2x3xf32> -> vector<2x4xf32>
    %230 = vector.extract_strided_slice %226 {offsets = [0, 1], sizes = [2, 3], strides = [1, 1]} : vector<2x4xf32> to vector<2x3xf32>
    %231 = tpu.concatenate %230, %227 in 1 : vector<2x3xf32>, vector<2x1xf32> -> vector<2x4xf32>
    %cst_28 = arith.constant 0.000000e+00 : f32
    %232 = vector.broadcast %cst_28 : f32 to vector<2x1xf32>
    %233 = vector.extract_strided_slice %122 {offsets = [0, 0], sizes = [2, 3], strides = [1, 1]} : vector<2x4xf32> to vector<2x3xf32>
    %234 = tpu.concatenate %232, %233 in 1 : vector<2x1xf32>, vector<2x3xf32> -> vector<2x4xf32>
    %235 = vector.extract_strided_slice %122 {offsets = [0, 1], sizes = [2, 3], strides = [1, 1]} : vector<2x4xf32> to vector<2x3xf32>
    %236 = tpu.concatenate %235, %232 in 1 : vector<2x3xf32>, vector<2x1xf32> -> vector<2x4xf32>
    %c100 = arith.constant 100 : index
    %237 = memref.load %arg0[%c100] : memref<294xf32, #tpu.memory_space<smem>>
    %238 = vector.broadcast %237 : f32 to vector<2x4xf32>
    %239 = arith.mulf %229, %238 : vector<2x4xf32>
    %c101 = arith.constant 101 : index
    %240 = memref.load %arg0[%c101] : memref<294xf32, #tpu.memory_space<smem>>
    %241 = vector.broadcast %240 : f32 to vector<2x4xf32>
    %242 = arith.mulf %226, %241 : vector<2x4xf32>
    %243 = arith.addf %239, %242 : vector<2x4xf32>
    %c102 = arith.constant 102 : index
    %244 = memref.load %arg0[%c102] : memref<294xf32, #tpu.memory_space<smem>>
    %245 = vector.broadcast %244 : f32 to vector<2x4xf32>
    %246 = arith.mulf %231, %245 : vector<2x4xf32>
    %247 = arith.addf %243, %246 : vector<2x4xf32>
    %c103 = arith.constant 103 : index
    %248 = memref.load %arg0[%c103] : memref<294xf32, #tpu.memory_space<smem>>
    %249 = vector.broadcast %248 : f32 to vector<2x4xf32>
    %250 = arith.mulf %234, %249 : vector<2x4xf32>
    %251 = arith.addf %247, %250 : vector<2x4xf32>
    %c104 = arith.constant 104 : index
    %252 = memref.load %arg0[%c104] : memref<294xf32, #tpu.memory_space<smem>>
    %253 = vector.broadcast %252 : f32 to vector<2x4xf32>
    %254 = arith.mulf %122, %253 : vector<2x4xf32>
    %255 = arith.addf %251, %254 : vector<2x4xf32>
    %c105 = arith.constant 105 : index
    %256 = memref.load %arg0[%c105] : memref<294xf32, #tpu.memory_space<smem>>
    %257 = vector.broadcast %256 : f32 to vector<2x4xf32>
    %258 = arith.mulf %236, %257 : vector<2x4xf32>
    %259 = arith.addf %255, %258 : vector<2x4xf32>
    %c112 = arith.constant 112 : index
    %260 = memref.load %arg0[%c112] : memref<294xf32, #tpu.memory_space<smem>>
    %261 = vector.broadcast %260 : f32 to vector<2x4xf32>
    %262 = arith.addf %259, %261 : vector<2x4xf32>
    %263 = arith.negf %262 : vector<2x4xf32>
    %264 = math.exp %263 : vector<2x4xf32>
    %cst_29 = arith.constant 1.000000e+00 : f32
    %265 = vector.broadcast %cst_29 : f32 to vector<2x4xf32>
    %266 = arith.addf %265, %264 : vector<2x4xf32>
    %267 = arith.divf %265, %266 : vector<2x4xf32>
    %268 = arith.mulf %262, %267 : vector<2x4xf32>
    %c106 = arith.constant 106 : index
    %269 = memref.load %arg0[%c106] : memref<294xf32, #tpu.memory_space<smem>>
    %270 = vector.broadcast %269 : f32 to vector<2x4xf32>
    %271 = arith.mulf %229, %270 : vector<2x4xf32>
    %c107 = arith.constant 107 : index
    %272 = memref.load %arg0[%c107] : memref<294xf32, #tpu.memory_space<smem>>
    %273 = vector.broadcast %272 : f32 to vector<2x4xf32>
    %274 = arith.mulf %226, %273 : vector<2x4xf32>
    %275 = arith.addf %271, %274 : vector<2x4xf32>
    %c108 = arith.constant 108 : index
    %276 = memref.load %arg0[%c108] : memref<294xf32, #tpu.memory_space<smem>>
    %277 = vector.broadcast %276 : f32 to vector<2x4xf32>
    %278 = arith.mulf %231, %277 : vector<2x4xf32>
    %279 = arith.addf %275, %278 : vector<2x4xf32>
    %c109 = arith.constant 109 : index
    %280 = memref.load %arg0[%c109] : memref<294xf32, #tpu.memory_space<smem>>
    %281 = vector.broadcast %280 : f32 to vector<2x4xf32>
    %282 = arith.mulf %234, %281 : vector<2x4xf32>
    %283 = arith.addf %279, %282 : vector<2x4xf32>
    %c110 = arith.constant 110 : index
    %284 = memref.load %arg0[%c110] : memref<294xf32, #tpu.memory_space<smem>>
    %285 = vector.broadcast %284 : f32 to vector<2x4xf32>
    %286 = arith.mulf %122, %285 : vector<2x4xf32>
    %287 = arith.addf %283, %286 : vector<2x4xf32>
    %c111 = arith.constant 111 : index
    %288 = memref.load %arg0[%c111] : memref<294xf32, #tpu.memory_space<smem>>
    %289 = vector.broadcast %288 : f32 to vector<2x4xf32>
    %290 = arith.mulf %236, %289 : vector<2x4xf32>
    %291 = arith.addf %287, %290 : vector<2x4xf32>
    %c113 = arith.constant 113 : index
    %292 = memref.load %arg0[%c113] : memref<294xf32, #tpu.memory_space<smem>>
    %293 = vector.broadcast %292 : f32 to vector<2x4xf32>
    %294 = arith.addf %291, %293 : vector<2x4xf32>
    %295 = arith.negf %294 : vector<2x4xf32>
    %296 = math.exp %295 : vector<2x4xf32>
    %cst_30 = arith.constant 1.000000e+00 : f32
    %297 = vector.broadcast %cst_30 : f32 to vector<2x4xf32>
    %298 = arith.addf %297, %296 : vector<2x4xf32>
    %299 = arith.divf %297, %298 : vector<2x4xf32>
    %300 = arith.mulf %294, %299 : vector<2x4xf32>
    %301 = arith.addf %226, %268 : vector<2x4xf32>
    %302 = arith.addf %122, %300 : vector<2x4xf32>
    %cst_31 = arith.constant 0.000000e+00 : f32
    %303 = vector.broadcast %cst_31 : f32 to vector<2x1xf32>
    %304 = vector.extract_strided_slice %301 {offsets = [0, 0], sizes = [2, 3], strides = [1, 1]} : vector<2x4xf32> to vector<2x3xf32>
    %305 = tpu.concatenate %303, %304 in 1 : vector<2x1xf32>, vector<2x3xf32> -> vector<2x4xf32>
    %306 = vector.extract_strided_slice %301 {offsets = [0, 1], sizes = [2, 3], strides = [1, 1]} : vector<2x4xf32> to vector<2x3xf32>
    %307 = tpu.concatenate %306, %303 in 1 : vector<2x3xf32>, vector<2x1xf32> -> vector<2x4xf32>
    %cst_32 = arith.constant 0.000000e+00 : f32
    %308 = vector.broadcast %cst_32 : f32 to vector<2x1xf32>
    %309 = vector.extract_strided_slice %302 {offsets = [0, 0], sizes = [2, 3], strides = [1, 1]} : vector<2x4xf32> to vector<2x3xf32>
    %310 = tpu.concatenate %308, %309 in 1 : vector<2x1xf32>, vector<2x3xf32> -> vector<2x4xf32>
    %311 = vector.extract_strided_slice %302 {offsets = [0, 1], sizes = [2, 3], strides = [1, 1]} : vector<2x4xf32> to vector<2x3xf32>
    %312 = tpu.concatenate %311, %308 in 1 : vector<2x3xf32>, vector<2x1xf32> -> vector<2x4xf32>
    %c114 = arith.constant 114 : index
    %313 = memref.load %arg0[%c114] : memref<294xf32, #tpu.memory_space<smem>>
    %314 = vector.broadcast %313 : f32 to vector<2x4xf32>
    %315 = arith.mulf %305, %314 : vector<2x4xf32>
    %c115 = arith.constant 115 : index
    %316 = memref.load %arg0[%c115] : memref<294xf32, #tpu.memory_space<smem>>
    %317 = vector.broadcast %316 : f32 to vector<2x4xf32>
    %318 = arith.mulf %301, %317 : vector<2x4xf32>
    %319 = arith.addf %315, %318 : vector<2x4xf32>
    %c116 = arith.constant 116 : index
    %320 = memref.load %arg0[%c116] : memref<294xf32, #tpu.memory_space<smem>>
    %321 = vector.broadcast %320 : f32 to vector<2x4xf32>
    %322 = arith.mulf %307, %321 : vector<2x4xf32>
    %323 = arith.addf %319, %322 : vector<2x4xf32>
    %c117 = arith.constant 117 : index
    %324 = memref.load %arg0[%c117] : memref<294xf32, #tpu.memory_space<smem>>
    %325 = vector.broadcast %324 : f32 to vector<2x4xf32>
    %326 = arith.mulf %310, %325 : vector<2x4xf32>
    %327 = arith.addf %323, %326 : vector<2x4xf32>
    %c118 = arith.constant 118 : index
    %328 = memref.load %arg0[%c118] : memref<294xf32, #tpu.memory_space<smem>>
    %329 = vector.broadcast %328 : f32 to vector<2x4xf32>
    %330 = arith.mulf %302, %329 : vector<2x4xf32>
    %331 = arith.addf %327, %330 : vector<2x4xf32>
    %c119 = arith.constant 119 : index
    %332 = memref.load %arg0[%c119] : memref<294xf32, #tpu.memory_space<smem>>
    %333 = vector.broadcast %332 : f32 to vector<2x4xf32>
    %334 = arith.mulf %312, %333 : vector<2x4xf32>
    %335 = arith.addf %331, %334 : vector<2x4xf32>
    %c120 = arith.constant 120 : index
    %336 = memref.load %arg0[%c120] : memref<294xf32, #tpu.memory_space<smem>>
    %337 = vector.broadcast %336 : f32 to vector<2x4xf32>
    %338 = arith.addf %335, %337 : vector<2x4xf32>
    %339 = arith.negf %338 : vector<2x4xf32>
    %340 = math.exp %339 : vector<2x4xf32>
    %cst_33 = arith.constant 1.000000e+00 : f32
    %341 = vector.broadcast %cst_33 : f32 to vector<2x4xf32>
    %342 = arith.addf %341, %340 : vector<2x4xf32>
    %343 = arith.divf %341, %342 : vector<2x4xf32>
    %344 = arith.mulf %338, %343 : vector<2x4xf32>
    %cst_34 = arith.constant 0.000000e+00 : f32
    %345 = vector.broadcast %cst_34 : f32 to vector<2x1xf32>
    %346 = vector.extract_strided_slice %344 {offsets = [0, 0], sizes = [2, 3], strides = [1, 1]} : vector<2x4xf32> to vector<2x3xf32>
    %347 = tpu.concatenate %345, %346 in 1 : vector<2x1xf32>, vector<2x3xf32> -> vector<2x4xf32>
    %348 = vector.extract_strided_slice %344 {offsets = [0, 1], sizes = [2, 3], strides = [1, 1]} : vector<2x4xf32> to vector<2x3xf32>
    %349 = tpu.concatenate %348, %345 in 1 : vector<2x3xf32>, vector<2x1xf32> -> vector<2x4xf32>
    %c121 = arith.constant 121 : index
    %350 = memref.load %arg0[%c121] : memref<294xf32, #tpu.memory_space<smem>>
    %351 = vector.broadcast %350 : f32 to vector<2x4xf32>
    %352 = arith.mulf %347, %351 : vector<2x4xf32>
    %c122 = arith.constant 122 : index
    %353 = memref.load %arg0[%c122] : memref<294xf32, #tpu.memory_space<smem>>
    %354 = vector.broadcast %353 : f32 to vector<2x4xf32>
    %355 = arith.mulf %344, %354 : vector<2x4xf32>
    %356 = arith.addf %352, %355 : vector<2x4xf32>
    %c123 = arith.constant 123 : index
    %357 = memref.load %arg0[%c123] : memref<294xf32, #tpu.memory_space<smem>>
    %358 = vector.broadcast %357 : f32 to vector<2x4xf32>
    %359 = arith.mulf %349, %358 : vector<2x4xf32>
    %360 = arith.addf %356, %359 : vector<2x4xf32>
    %c124 = arith.constant 124 : index
    %361 = memref.load %arg0[%c124] : memref<294xf32, #tpu.memory_space<smem>>
    %362 = vector.broadcast %361 : f32 to vector<2x4xf32>
    %363 = arith.addf %360, %362 : vector<2x4xf32>
    %cst_35 = arith.constant 0.000000e+00 : f32
    %364 = vector.broadcast %cst_35 : f32 to vector<2x1xf32>
    %365 = vector.extract_strided_slice %226 {offsets = [0, 0], sizes = [2, 3], strides = [1, 1]} : vector<2x4xf32> to vector<2x3xf32>
    %366 = tpu.concatenate %364, %365 in 1 : vector<2x1xf32>, vector<2x3xf32> -> vector<2x4xf32>
    %367 = vector.extract_strided_slice %226 {offsets = [0, 1], sizes = [2, 3], strides = [1, 1]} : vector<2x4xf32> to vector<2x3xf32>
    %368 = tpu.concatenate %367, %364 in 1 : vector<2x3xf32>, vector<2x1xf32> -> vector<2x4xf32>
    %cst_36 = arith.constant 0.000000e+00 : f32
    %369 = vector.broadcast %cst_36 : f32 to vector<2x1xf32>
    %370 = vector.extract_strided_slice %122 {offsets = [0, 0], sizes = [2, 3], strides = [1, 1]} : vector<2x4xf32> to vector<2x3xf32>
    %371 = tpu.concatenate %369, %370 in 1 : vector<2x1xf32>, vector<2x3xf32> -> vector<2x4xf32>
    %372 = vector.extract_strided_slice %122 {offsets = [0, 1], sizes = [2, 3], strides = [1, 1]} : vector<2x4xf32> to vector<2x3xf32>
    %373 = tpu.concatenate %372, %369 in 1 : vector<2x3xf32>, vector<2x1xf32> -> vector<2x4xf32>
    %c125 = arith.constant 125 : index
    %374 = memref.load %arg0[%c125] : memref<294xf32, #tpu.memory_space<smem>>
    %375 = vector.broadcast %374 : f32 to vector<2x4xf32>
    %376 = arith.mulf %366, %375 : vector<2x4xf32>
    %c126 = arith.constant 126 : index
    %377 = memref.load %arg0[%c126] : memref<294xf32, #tpu.memory_space<smem>>
    %378 = vector.broadcast %377 : f32 to vector<2x4xf32>
    %379 = arith.mulf %226, %378 : vector<2x4xf32>
    %380 = arith.addf %376, %379 : vector<2x4xf32>
    %c127 = arith.constant 127 : index
    %381 = memref.load %arg0[%c127] : memref<294xf32, #tpu.memory_space<smem>>
    %382 = vector.broadcast %381 : f32 to vector<2x4xf32>
    %383 = arith.mulf %368, %382 : vector<2x4xf32>
    %384 = arith.addf %380, %383 : vector<2x4xf32>
    %c128 = arith.constant 128 : index
    %385 = memref.load %arg0[%c128] : memref<294xf32, #tpu.memory_space<smem>>
    %386 = vector.broadcast %385 : f32 to vector<2x4xf32>
    %387 = arith.mulf %371, %386 : vector<2x4xf32>
    %388 = arith.addf %384, %387 : vector<2x4xf32>
    %c129 = arith.constant 129 : index
    %389 = memref.load %arg0[%c129] : memref<294xf32, #tpu.memory_space<smem>>
    %390 = vector.broadcast %389 : f32 to vector<2x4xf32>
    %391 = arith.mulf %122, %390 : vector<2x4xf32>
    %392 = arith.addf %388, %391 : vector<2x4xf32>
    %c130 = arith.constant 130 : index
    %393 = memref.load %arg0[%c130] : memref<294xf32, #tpu.memory_space<smem>>
    %394 = vector.broadcast %393 : f32 to vector<2x4xf32>
    %395 = arith.mulf %373, %394 : vector<2x4xf32>
    %396 = arith.addf %392, %395 : vector<2x4xf32>
    %c137 = arith.constant 137 : index
    %397 = memref.load %arg0[%c137] : memref<294xf32, #tpu.memory_space<smem>>
    %398 = vector.broadcast %397 : f32 to vector<2x4xf32>
    %399 = arith.addf %396, %398 : vector<2x4xf32>
    %400 = arith.negf %399 : vector<2x4xf32>
    %401 = math.exp %400 : vector<2x4xf32>
    %cst_37 = arith.constant 1.000000e+00 : f32
    %402 = vector.broadcast %cst_37 : f32 to vector<2x4xf32>
    %403 = arith.addf %402, %401 : vector<2x4xf32>
    %404 = arith.divf %402, %403 : vector<2x4xf32>
    %405 = arith.mulf %399, %404 : vector<2x4xf32>
    %c131 = arith.constant 131 : index
    %406 = memref.load %arg0[%c131] : memref<294xf32, #tpu.memory_space<smem>>
    %407 = vector.broadcast %406 : f32 to vector<2x4xf32>
    %408 = arith.mulf %366, %407 : vector<2x4xf32>
    %c132 = arith.constant 132 : index
    %409 = memref.load %arg0[%c132] : memref<294xf32, #tpu.memory_space<smem>>
    %410 = vector.broadcast %409 : f32 to vector<2x4xf32>
    %411 = arith.mulf %226, %410 : vector<2x4xf32>
    %412 = arith.addf %408, %411 : vector<2x4xf32>
    %c133 = arith.constant 133 : index
    %413 = memref.load %arg0[%c133] : memref<294xf32, #tpu.memory_space<smem>>
    %414 = vector.broadcast %413 : f32 to vector<2x4xf32>
    %415 = arith.mulf %368, %414 : vector<2x4xf32>
    %416 = arith.addf %412, %415 : vector<2x4xf32>
    %c134 = arith.constant 134 : index
    %417 = memref.load %arg0[%c134] : memref<294xf32, #tpu.memory_space<smem>>
    %418 = vector.broadcast %417 : f32 to vector<2x4xf32>
    %419 = arith.mulf %371, %418 : vector<2x4xf32>
    %420 = arith.addf %416, %419 : vector<2x4xf32>
    %c135 = arith.constant 135 : index
    %421 = memref.load %arg0[%c135] : memref<294xf32, #tpu.memory_space<smem>>
    %422 = vector.broadcast %421 : f32 to vector<2x4xf32>
    %423 = arith.mulf %122, %422 : vector<2x4xf32>
    %424 = arith.addf %420, %423 : vector<2x4xf32>
    %c136 = arith.constant 136 : index
    %425 = memref.load %arg0[%c136] : memref<294xf32, #tpu.memory_space<smem>>
    %426 = vector.broadcast %425 : f32 to vector<2x4xf32>
    %427 = arith.mulf %373, %426 : vector<2x4xf32>
    %428 = arith.addf %424, %427 : vector<2x4xf32>
    %c138 = arith.constant 138 : index
    %429 = memref.load %arg0[%c138] : memref<294xf32, #tpu.memory_space<smem>>
    %430 = vector.broadcast %429 : f32 to vector<2x4xf32>
    %431 = arith.addf %428, %430 : vector<2x4xf32>
    %432 = arith.negf %431 : vector<2x4xf32>
    %433 = math.exp %432 : vector<2x4xf32>
    %cst_38 = arith.constant 1.000000e+00 : f32
    %434 = vector.broadcast %cst_38 : f32 to vector<2x4xf32>
    %435 = arith.addf %434, %433 : vector<2x4xf32>
    %436 = arith.divf %434, %435 : vector<2x4xf32>
    %437 = arith.mulf %431, %436 : vector<2x4xf32>
    %438 = arith.addf %226, %405 : vector<2x4xf32>
    %439 = arith.addf %122, %437 : vector<2x4xf32>
    %cst_39 = arith.constant 0.000000e+00 : f32
    %440 = vector.broadcast %cst_39 : f32 to vector<2x1xf32>
    %441 = vector.extract_strided_slice %438 {offsets = [0, 0], sizes = [2, 3], strides = [1, 1]} : vector<2x4xf32> to vector<2x3xf32>
    %442 = tpu.concatenate %440, %441 in 1 : vector<2x1xf32>, vector<2x3xf32> -> vector<2x4xf32>
    %443 = vector.extract_strided_slice %438 {offsets = [0, 1], sizes = [2, 3], strides = [1, 1]} : vector<2x4xf32> to vector<2x3xf32>
    %444 = tpu.concatenate %443, %440 in 1 : vector<2x3xf32>, vector<2x1xf32> -> vector<2x4xf32>
    %cst_40 = arith.constant 0.000000e+00 : f32
    %445 = vector.broadcast %cst_40 : f32 to vector<2x1xf32>
    %446 = vector.extract_strided_slice %439 {offsets = [0, 0], sizes = [2, 3], strides = [1, 1]} : vector<2x4xf32> to vector<2x3xf32>
    %447 = tpu.concatenate %445, %446 in 1 : vector<2x1xf32>, vector<2x3xf32> -> vector<2x4xf32>
    %448 = vector.extract_strided_slice %439 {offsets = [0, 1], sizes = [2, 3], strides = [1, 1]} : vector<2x4xf32> to vector<2x3xf32>
    %449 = tpu.concatenate %448, %445 in 1 : vector<2x3xf32>, vector<2x1xf32> -> vector<2x4xf32>
    %c139 = arith.constant 139 : index
    %450 = memref.load %arg0[%c139] : memref<294xf32, #tpu.memory_space<smem>>
    %451 = vector.broadcast %450 : f32 to vector<2x4xf32>
    %452 = arith.mulf %442, %451 : vector<2x4xf32>
    %c140 = arith.constant 140 : index
    %453 = memref.load %arg0[%c140] : memref<294xf32, #tpu.memory_space<smem>>
    %454 = vector.broadcast %453 : f32 to vector<2x4xf32>
    %455 = arith.mulf %438, %454 : vector<2x4xf32>
    %456 = arith.addf %452, %455 : vector<2x4xf32>
    %c141 = arith.constant 141 : index
    %457 = memref.load %arg0[%c141] : memref<294xf32, #tpu.memory_space<smem>>
    %458 = vector.broadcast %457 : f32 to vector<2x4xf32>
    %459 = arith.mulf %444, %458 : vector<2x4xf32>
    %460 = arith.addf %456, %459 : vector<2x4xf32>
    %c142 = arith.constant 142 : index
    %461 = memref.load %arg0[%c142] : memref<294xf32, #tpu.memory_space<smem>>
    %462 = vector.broadcast %461 : f32 to vector<2x4xf32>
    %463 = arith.mulf %447, %462 : vector<2x4xf32>
    %464 = arith.addf %460, %463 : vector<2x4xf32>
    %c143 = arith.constant 143 : index
    %465 = memref.load %arg0[%c143] : memref<294xf32, #tpu.memory_space<smem>>
    %466 = vector.broadcast %465 : f32 to vector<2x4xf32>
    %467 = arith.mulf %439, %466 : vector<2x4xf32>
    %468 = arith.addf %464, %467 : vector<2x4xf32>
    %c144 = arith.constant 144 : index
    %469 = memref.load %arg0[%c144] : memref<294xf32, #tpu.memory_space<smem>>
    %470 = vector.broadcast %469 : f32 to vector<2x4xf32>
    %471 = arith.mulf %449, %470 : vector<2x4xf32>
    %472 = arith.addf %468, %471 : vector<2x4xf32>
    %c145 = arith.constant 145 : index
    %473 = memref.load %arg0[%c145] : memref<294xf32, #tpu.memory_space<smem>>
    %474 = vector.broadcast %473 : f32 to vector<2x4xf32>
    %475 = arith.addf %472, %474 : vector<2x4xf32>
    %476 = arith.negf %475 : vector<2x4xf32>
    %477 = math.exp %476 : vector<2x4xf32>
    %cst_41 = arith.constant 1.000000e+00 : f32
    %478 = vector.broadcast %cst_41 : f32 to vector<2x4xf32>
    %479 = arith.addf %478, %477 : vector<2x4xf32>
    %480 = arith.divf %478, %479 : vector<2x4xf32>
    %481 = arith.mulf %475, %480 : vector<2x4xf32>
    %cst_42 = arith.constant 0.000000e+00 : f32
    %482 = vector.broadcast %cst_42 : f32 to vector<2x1xf32>
    %483 = vector.extract_strided_slice %481 {offsets = [0, 0], sizes = [2, 3], strides = [1, 1]} : vector<2x4xf32> to vector<2x3xf32>
    %484 = tpu.concatenate %482, %483 in 1 : vector<2x1xf32>, vector<2x3xf32> -> vector<2x4xf32>
    %485 = vector.extract_strided_slice %481 {offsets = [0, 1], sizes = [2, 3], strides = [1, 1]} : vector<2x4xf32> to vector<2x3xf32>
    %486 = tpu.concatenate %485, %482 in 1 : vector<2x3xf32>, vector<2x1xf32> -> vector<2x4xf32>
    %c146 = arith.constant 146 : index
    %487 = memref.load %arg0[%c146] : memref<294xf32, #tpu.memory_space<smem>>
    %488 = vector.broadcast %487 : f32 to vector<2x4xf32>
    %489 = arith.mulf %484, %488 : vector<2x4xf32>
    %c147 = arith.constant 147 : index
    %490 = memref.load %arg0[%c147] : memref<294xf32, #tpu.memory_space<smem>>
    %491 = vector.broadcast %490 : f32 to vector<2x4xf32>
    %492 = arith.mulf %481, %491 : vector<2x4xf32>
    %493 = arith.addf %489, %492 : vector<2x4xf32>
    %c148 = arith.constant 148 : index
    %494 = memref.load %arg0[%c148] : memref<294xf32, #tpu.memory_space<smem>>
    %495 = vector.broadcast %494 : f32 to vector<2x4xf32>
    %496 = arith.mulf %486, %495 : vector<2x4xf32>
    %497 = arith.addf %493, %496 : vector<2x4xf32>
    %c149 = arith.constant 149 : index
    %498 = memref.load %arg0[%c149] : memref<294xf32, #tpu.memory_space<smem>>
    %499 = vector.broadcast %498 : f32 to vector<2x4xf32>
    %500 = arith.addf %497, %499 : vector<2x4xf32>
    %501 = math.exp %224 : vector<2x4xf32>
    %cst_43 = arith.constant 1.000000e+00 : f32
    %502 = vector.broadcast %cst_43 : f32 to vector<2x4xf32>
    %503 = arith.addf %502, %500 : vector<2x4xf32>
    %504 = arith.mulf %363, %363 : vector<2x4xf32>
    %505 = arith.divf %504, %501 : vector<2x4xf32>
    %506 = arith.subf %503, %505 : vector<2x4xf32>
    %507 = math.exp %500 : vector<2x4xf32>
    %508 = arith.subf %506, %507 : vector<2x4xf32>
    %cst_44 = arith.constant dense<0.000000e+00> : vector<2xf32>
    %509 = vector.multi_reduction <add>, %508, %cst_44 [1] : vector<2x4xf32> to vector<2xf32>
    %510 = vector.shape_cast %509 : vector<2xf32> to vector<2x1xf32>
    %cst_45 = arith.constant -5.000000e-01 : f32
    %511 = vector.broadcast %cst_45 : f32 to vector<2x1xf32>
    %512 = arith.mulf %511, %510 : vector<2x1xf32>
    %cst_46 = arith.constant dense<0.000000e+00> : vector<1xf32>
    %513 = vector.multi_reduction <add>, %512, %cst_46 [0] : vector<2x1xf32> to vector<1xf32>
    %514 = vector.shape_cast %513 : vector<1xf32> to vector<1x1xf32>
    %cst_47 = arith.constant 2.000000e+00 : f32
    %515 = vector.broadcast %cst_47 : f32 to vector<1x1xf32>
    %516 = arith.divf %514, %515 : vector<1x1xf32>
    %517 = arith.addf %173, %363 : vector<2x4xf32>
    %518 = arith.addf %224, %500 : vector<2x4xf32>
    %cst_48 = arith.constant 5.000000e-01 : f32
    %519 = vector.broadcast %cst_48 : f32 to vector<2x4xf32>
    %520 = arith.mulf %519, %518 : vector<2x4xf32>
    %521 = math.exp %520 : vector<2x4xf32>
    %c0_49 = arith.constant 0 : index
    %c0_50 = arith.constant 0 : index
    %c0_51 = arith.constant 0 : index
    %522 = vector.load %arg5[%c0_49, %c0_50, %c0_51] : memref<1x2x4xf32, #tpu.memory_space<vmem>>, vector<1x2x4xf32>
    %523 = vector.shape_cast %522 : vector<1x2x4xf32> to vector<2x4xf32>
    %524 = arith.mulf %521, %523 : vector<2x4xf32>
    %525 = arith.addf %517, %524 : vector<2x4xf32>
    %c0_52 = arith.constant 0 : index
    %c0_53 = arith.constant 0 : index
    %526 = vector.load %arg11[%c0_52, %c0_53] : memref<4x8xf32, #tpu.memory_space<vmem>>, vector<4x8xf32>
    %cst_54 = arith.constant dense<0.000000e+00> : vector<2x8xf32>
    %527 = tpu.matmul %122, %526, %cst_54 {dimension_numbers = #tpu.dot_dimension_numbers<[1], [0], [0], [1], [0, 0, 1, 1], [], []>} : vector<2x4xf32>, vector<4x8xf32>, vector<2x8xf32> -> vector<2x8xf32>
    %c0_55 = arith.constant 0 : index
    %c0_56 = arith.constant 0 : index
    %528 = vector.load %arg11[%c0_55, %c0_56] : memref<4x8xf32, #tpu.memory_space<vmem>>, vector<4x8xf32>
    %cst_57 = arith.constant dense<0.000000e+00> : vector<2x8xf32>
    %529 = tpu.matmul %525, %528, %cst_57 {dimension_numbers = #tpu.dot_dimension_numbers<[1], [0], [0], [1], [0, 0, 1, 1], [], []>} : vector<2x4xf32>, vector<4x8xf32>, vector<2x8xf32> -> vector<2x8xf32>
    %cst_58 = arith.constant 0.000000e+00 : f32
    %530 = vector.broadcast %cst_58 : f32 to vector<2x1xf32>
    %531 = vector.extract_strided_slice %527 {offsets = [0, 0], sizes = [2, 7], strides = [1, 1]} : vector<2x8xf32> to vector<2x7xf32>
    %532 = tpu.concatenate %530, %531 in 1 : vector<2x1xf32>, vector<2x7xf32> -> vector<2x8xf32>
    %533 = vector.extract_strided_slice %527 {offsets = [0, 1], sizes = [2, 7], strides = [1, 1]} : vector<2x8xf32> to vector<2x7xf32>
    %534 = tpu.concatenate %533, %530 in 1 : vector<2x7xf32>, vector<2x1xf32> -> vector<2x8xf32>
    %cst_59 = arith.constant 0.000000e+00 : f32
    %535 = vector.broadcast %cst_59 : f32 to vector<2x1xf32>
    %536 = vector.extract_strided_slice %529 {offsets = [0, 0], sizes = [2, 7], strides = [1, 1]} : vector<2x8xf32> to vector<2x7xf32>
    %537 = tpu.concatenate %535, %536 in 1 : vector<2x1xf32>, vector<2x7xf32> -> vector<2x8xf32>
    %538 = vector.extract_strided_slice %529 {offsets = [0, 1], sizes = [2, 7], strides = [1, 1]} : vector<2x8xf32> to vector<2x7xf32>
    %539 = tpu.concatenate %538, %535 in 1 : vector<2x7xf32>, vector<2x1xf32> -> vector<2x8xf32>
    %c21 = arith.constant 21 : index
    %540 = memref.load %arg0[%c21] : memref<294xf32, #tpu.memory_space<smem>>
    %541 = vector.broadcast %540 : f32 to vector<2x8xf32>
    %542 = arith.mulf %532, %541 : vector<2x8xf32>
    %c22 = arith.constant 22 : index
    %543 = memref.load %arg0[%c22] : memref<294xf32, #tpu.memory_space<smem>>
    %544 = vector.broadcast %543 : f32 to vector<2x8xf32>
    %545 = arith.mulf %527, %544 : vector<2x8xf32>
    %546 = arith.addf %542, %545 : vector<2x8xf32>
    %c23 = arith.constant 23 : index
    %547 = memref.load %arg0[%c23] : memref<294xf32, #tpu.memory_space<smem>>
    %548 = vector.broadcast %547 : f32 to vector<2x8xf32>
    %549 = arith.mulf %534, %548 : vector<2x8xf32>
    %550 = arith.addf %546, %549 : vector<2x8xf32>
    %c24 = arith.constant 24 : index
    %551 = memref.load %arg0[%c24] : memref<294xf32, #tpu.memory_space<smem>>
    %552 = vector.broadcast %551 : f32 to vector<2x8xf32>
    %553 = arith.mulf %537, %552 : vector<2x8xf32>
    %554 = arith.addf %550, %553 : vector<2x8xf32>
    %c25 = arith.constant 25 : index
    %555 = memref.load %arg0[%c25] : memref<294xf32, #tpu.memory_space<smem>>
    %556 = vector.broadcast %555 : f32 to vector<2x8xf32>
    %557 = arith.mulf %529, %556 : vector<2x8xf32>
    %558 = arith.addf %554, %557 : vector<2x8xf32>
    %c26 = arith.constant 26 : index
    %559 = memref.load %arg0[%c26] : memref<294xf32, #tpu.memory_space<smem>>
    %560 = vector.broadcast %559 : f32 to vector<2x8xf32>
    %561 = arith.mulf %539, %560 : vector<2x8xf32>
    %562 = arith.addf %558, %561 : vector<2x8xf32>
    %c33 = arith.constant 33 : index
    %563 = memref.load %arg0[%c33] : memref<294xf32, #tpu.memory_space<smem>>
    %564 = vector.broadcast %563 : f32 to vector<2x8xf32>
    %565 = arith.addf %562, %564 : vector<2x8xf32>
    %566 = arith.negf %565 : vector<2x8xf32>
    %567 = math.exp %566 : vector<2x8xf32>
    %cst_60 = arith.constant 1.000000e+00 : f32
    %568 = vector.broadcast %cst_60 : f32 to vector<2x8xf32>
    %569 = arith.addf %568, %567 : vector<2x8xf32>
    %570 = arith.divf %568, %569 : vector<2x8xf32>
    %571 = arith.mulf %565, %570 : vector<2x8xf32>
    %c27 = arith.constant 27 : index
    %572 = memref.load %arg0[%c27] : memref<294xf32, #tpu.memory_space<smem>>
    %573 = vector.broadcast %572 : f32 to vector<2x8xf32>
    %574 = arith.mulf %532, %573 : vector<2x8xf32>
    %c28 = arith.constant 28 : index
    %575 = memref.load %arg0[%c28] : memref<294xf32, #tpu.memory_space<smem>>
    %576 = vector.broadcast %575 : f32 to vector<2x8xf32>
    %577 = arith.mulf %527, %576 : vector<2x8xf32>
    %578 = arith.addf %574, %577 : vector<2x8xf32>
    %c29 = arith.constant 29 : index
    %579 = memref.load %arg0[%c29] : memref<294xf32, #tpu.memory_space<smem>>
    %580 = vector.broadcast %579 : f32 to vector<2x8xf32>
    %581 = arith.mulf %534, %580 : vector<2x8xf32>
    %582 = arith.addf %578, %581 : vector<2x8xf32>
    %c30 = arith.constant 30 : index
    %583 = memref.load %arg0[%c30] : memref<294xf32, #tpu.memory_space<smem>>
    %584 = vector.broadcast %583 : f32 to vector<2x8xf32>
    %585 = arith.mulf %537, %584 : vector<2x8xf32>
    %586 = arith.addf %582, %585 : vector<2x8xf32>
    %c31 = arith.constant 31 : index
    %587 = memref.load %arg0[%c31] : memref<294xf32, #tpu.memory_space<smem>>
    %588 = vector.broadcast %587 : f32 to vector<2x8xf32>
    %589 = arith.mulf %529, %588 : vector<2x8xf32>
    %590 = arith.addf %586, %589 : vector<2x8xf32>
    %c32 = arith.constant 32 : index
    %591 = memref.load %arg0[%c32] : memref<294xf32, #tpu.memory_space<smem>>
    %592 = vector.broadcast %591 : f32 to vector<2x8xf32>
    %593 = arith.mulf %539, %592 : vector<2x8xf32>
    %594 = arith.addf %590, %593 : vector<2x8xf32>
    %c34 = arith.constant 34 : index
    %595 = memref.load %arg0[%c34] : memref<294xf32, #tpu.memory_space<smem>>
    %596 = vector.broadcast %595 : f32 to vector<2x8xf32>
    %597 = arith.addf %594, %596 : vector<2x8xf32>
    %598 = arith.negf %597 : vector<2x8xf32>
    %599 = math.exp %598 : vector<2x8xf32>
    %cst_61 = arith.constant 1.000000e+00 : f32
    %600 = vector.broadcast %cst_61 : f32 to vector<2x8xf32>
    %601 = arith.addf %600, %599 : vector<2x8xf32>
    %602 = arith.divf %600, %601 : vector<2x8xf32>
    %603 = arith.mulf %597, %602 : vector<2x8xf32>
    %cst_62 = arith.constant 0.000000e+00 : f32
    %604 = vector.broadcast %cst_62 : f32 to vector<2x1xf32>
    %605 = vector.extract_strided_slice %571 {offsets = [0, 0], sizes = [2, 7], strides = [1, 1]} : vector<2x8xf32> to vector<2x7xf32>
    %606 = tpu.concatenate %604, %605 in 1 : vector<2x1xf32>, vector<2x7xf32> -> vector<2x8xf32>
    %607 = vector.extract_strided_slice %571 {offsets = [0, 1], sizes = [2, 7], strides = [1, 1]} : vector<2x8xf32> to vector<2x7xf32>
    %608 = tpu.concatenate %607, %604 in 1 : vector<2x7xf32>, vector<2x1xf32> -> vector<2x8xf32>
    %cst_63 = arith.constant 0.000000e+00 : f32
    %609 = vector.broadcast %cst_63 : f32 to vector<2x1xf32>
    %610 = vector.extract_strided_slice %603 {offsets = [0, 0], sizes = [2, 7], strides = [1, 1]} : vector<2x8xf32> to vector<2x7xf32>
    %611 = tpu.concatenate %609, %610 in 1 : vector<2x1xf32>, vector<2x7xf32> -> vector<2x8xf32>
    %612 = vector.extract_strided_slice %603 {offsets = [0, 1], sizes = [2, 7], strides = [1, 1]} : vector<2x8xf32> to vector<2x7xf32>
    %613 = tpu.concatenate %612, %609 in 1 : vector<2x7xf32>, vector<2x1xf32> -> vector<2x8xf32>
    %c35 = arith.constant 35 : index
    %614 = memref.load %arg0[%c35] : memref<294xf32, #tpu.memory_space<smem>>
    %615 = vector.broadcast %614 : f32 to vector<2x8xf32>
    %616 = arith.mulf %606, %615 : vector<2x8xf32>
    %c36 = arith.constant 36 : index
    %617 = memref.load %arg0[%c36] : memref<294xf32, #tpu.memory_space<smem>>
    %618 = vector.broadcast %617 : f32 to vector<2x8xf32>
    %619 = arith.mulf %571, %618 : vector<2x8xf32>
    %620 = arith.addf %616, %619 : vector<2x8xf32>
    %c37 = arith.constant 37 : index
    %621 = memref.load %arg0[%c37] : memref<294xf32, #tpu.memory_space<smem>>
    %622 = vector.broadcast %621 : f32 to vector<2x8xf32>
    %623 = arith.mulf %608, %622 : vector<2x8xf32>
    %624 = arith.addf %620, %623 : vector<2x8xf32>
    %c38 = arith.constant 38 : index
    %625 = memref.load %arg0[%c38] : memref<294xf32, #tpu.memory_space<smem>>
    %626 = vector.broadcast %625 : f32 to vector<2x8xf32>
    %627 = arith.mulf %611, %626 : vector<2x8xf32>
    %628 = arith.addf %624, %627 : vector<2x8xf32>
    %c39 = arith.constant 39 : index
    %629 = memref.load %arg0[%c39] : memref<294xf32, #tpu.memory_space<smem>>
    %630 = vector.broadcast %629 : f32 to vector<2x8xf32>
    %631 = arith.mulf %603, %630 : vector<2x8xf32>
    %632 = arith.addf %628, %631 : vector<2x8xf32>
    %c40 = arith.constant 40 : index
    %633 = memref.load %arg0[%c40] : memref<294xf32, #tpu.memory_space<smem>>
    %634 = vector.broadcast %633 : f32 to vector<2x8xf32>
    %635 = arith.mulf %613, %634 : vector<2x8xf32>
    %636 = arith.addf %632, %635 : vector<2x8xf32>
    %c41 = arith.constant 41 : index
    %637 = memref.load %arg0[%c41] : memref<294xf32, #tpu.memory_space<smem>>
    %638 = vector.broadcast %637 : f32 to vector<2x8xf32>
    %639 = arith.addf %636, %638 : vector<2x8xf32>
    %640 = arith.negf %639 : vector<2x8xf32>
    %641 = math.exp %640 : vector<2x8xf32>
    %cst_64 = arith.constant 1.000000e+00 : f32
    %642 = vector.broadcast %cst_64 : f32 to vector<2x8xf32>
    %643 = arith.addf %642, %641 : vector<2x8xf32>
    %644 = arith.divf %642, %643 : vector<2x8xf32>
    %645 = arith.mulf %639, %644 : vector<2x8xf32>
    %cst_65 = arith.constant 0.000000e+00 : f32
    %646 = vector.broadcast %cst_65 : f32 to vector<2x1xf32>
    %647 = vector.extract_strided_slice %645 {offsets = [0, 0], sizes = [2, 7], strides = [1, 1]} : vector<2x8xf32> to vector<2x7xf32>
    %648 = tpu.concatenate %646, %647 in 1 : vector<2x1xf32>, vector<2x7xf32> -> vector<2x8xf32>
    %649 = vector.extract_strided_slice %645 {offsets = [0, 1], sizes = [2, 7], strides = [1, 1]} : vector<2x8xf32> to vector<2x7xf32>
    %650 = tpu.concatenate %649, %646 in 1 : vector<2x7xf32>, vector<2x1xf32> -> vector<2x8xf32>
    %c150 = arith.constant 150 : index
    %651 = memref.load %arg0[%c150] : memref<294xf32, #tpu.memory_space<smem>>
    %652 = vector.broadcast %651 : f32 to vector<2x8xf32>
    %653 = arith.mulf %648, %652 : vector<2x8xf32>
    %c151 = arith.constant 151 : index
    %654 = memref.load %arg0[%c151] : memref<294xf32, #tpu.memory_space<smem>>
    %655 = vector.broadcast %654 : f32 to vector<2x8xf32>
    %656 = arith.mulf %645, %655 : vector<2x8xf32>
    %657 = arith.addf %653, %656 : vector<2x8xf32>
    %c152 = arith.constant 152 : index
    %658 = memref.load %arg0[%c152] : memref<294xf32, #tpu.memory_space<smem>>
    %659 = vector.broadcast %658 : f32 to vector<2x8xf32>
    %660 = arith.mulf %650, %659 : vector<2x8xf32>
    %661 = arith.addf %657, %660 : vector<2x8xf32>
    %c153 = arith.constant 153 : index
    %662 = memref.load %arg0[%c153] : memref<294xf32, #tpu.memory_space<smem>>
    %663 = vector.broadcast %662 : f32 to vector<2x8xf32>
    %664 = arith.addf %661, %663 : vector<2x8xf32>
    %665 = arith.negf %664 : vector<2x8xf32>
    %666 = math.exp %665 : vector<2x8xf32>
    %cst_66 = arith.constant 1.000000e+00 : f32
    %667 = vector.broadcast %cst_66 : f32 to vector<2x8xf32>
    %668 = arith.addf %667, %666 : vector<2x8xf32>
    %669 = arith.divf %667, %668 : vector<2x8xf32>
    %670 = arith.mulf %664, %669 : vector<2x8xf32>
    %671 = arith.addf %645, %670 : vector<2x8xf32>
    %672 = arith.negf %671 : vector<2x8xf32>
    %673 = math.exp %672 : vector<2x8xf32>
    %cst_67 = arith.constant 1.000000e+00 : f32
    %674 = vector.broadcast %cst_67 : f32 to vector<2x8xf32>
    %675 = arith.addf %674, %673 : vector<2x8xf32>
    %676 = arith.divf %674, %675 : vector<2x8xf32>
    %677 = arith.mulf %671, %676 : vector<2x8xf32>
    %cst_68 = arith.constant 0.000000e+00 : f32
    %678 = vector.broadcast %cst_68 : f32 to vector<2x1xf32>
    %679 = vector.extract_strided_slice %677 {offsets = [0, 0], sizes = [2, 7], strides = [1, 1]} : vector<2x8xf32> to vector<2x7xf32>
    %680 = tpu.concatenate %678, %679 in 1 : vector<2x1xf32>, vector<2x7xf32> -> vector<2x8xf32>
    %681 = vector.extract_strided_slice %677 {offsets = [0, 1], sizes = [2, 7], strides = [1, 1]} : vector<2x8xf32> to vector<2x7xf32>
    %682 = tpu.concatenate %681, %678 in 1 : vector<2x7xf32>, vector<2x1xf32> -> vector<2x8xf32>
    %c154 = arith.constant 154 : index
    %683 = memref.load %arg0[%c154] : memref<294xf32, #tpu.memory_space<smem>>
    %684 = vector.broadcast %683 : f32 to vector<2x8xf32>
    %685 = arith.mulf %680, %684 : vector<2x8xf32>
    %c155 = arith.constant 155 : index
    %686 = memref.load %arg0[%c155] : memref<294xf32, #tpu.memory_space<smem>>
    %687 = vector.broadcast %686 : f32 to vector<2x8xf32>
    %688 = arith.mulf %677, %687 : vector<2x8xf32>
    %689 = arith.addf %685, %688 : vector<2x8xf32>
    %c156 = arith.constant 156 : index
    %690 = memref.load %arg0[%c156] : memref<294xf32, #tpu.memory_space<smem>>
    %691 = vector.broadcast %690 : f32 to vector<2x8xf32>
    %692 = arith.mulf %682, %691 : vector<2x8xf32>
    %693 = arith.addf %689, %692 : vector<2x8xf32>
    %c157 = arith.constant 157 : index
    %694 = memref.load %arg0[%c157] : memref<294xf32, #tpu.memory_space<smem>>
    %695 = vector.broadcast %694 : f32 to vector<2x8xf32>
    %696 = arith.addf %693, %695 : vector<2x8xf32>
    %cst_69 = arith.constant 0.000000e+00 : f32
    %697 = vector.broadcast %cst_69 : f32 to vector<2x1xf32>
    %698 = vector.extract_strided_slice %645 {offsets = [0, 0], sizes = [2, 7], strides = [1, 1]} : vector<2x8xf32> to vector<2x7xf32>
    %699 = tpu.concatenate %697, %698 in 1 : vector<2x1xf32>, vector<2x7xf32> -> vector<2x8xf32>
    %700 = vector.extract_strided_slice %645 {offsets = [0, 1], sizes = [2, 7], strides = [1, 1]} : vector<2x8xf32> to vector<2x7xf32>
    %701 = tpu.concatenate %700, %697 in 1 : vector<2x7xf32>, vector<2x1xf32> -> vector<2x8xf32>
    %c158 = arith.constant 158 : index
    %702 = memref.load %arg0[%c158] : memref<294xf32, #tpu.memory_space<smem>>
    %703 = vector.broadcast %702 : f32 to vector<2x8xf32>
    %704 = arith.mulf %699, %703 : vector<2x8xf32>
    %c159 = arith.constant 159 : index
    %705 = memref.load %arg0[%c159] : memref<294xf32, #tpu.memory_space<smem>>
    %706 = vector.broadcast %705 : f32 to vector<2x8xf32>
    %707 = arith.mulf %645, %706 : vector<2x8xf32>
    %708 = arith.addf %704, %707 : vector<2x8xf32>
    %c160 = arith.constant 160 : index
    %709 = memref.load %arg0[%c160] : memref<294xf32, #tpu.memory_space<smem>>
    %710 = vector.broadcast %709 : f32 to vector<2x8xf32>
    %711 = arith.mulf %701, %710 : vector<2x8xf32>
    %712 = arith.addf %708, %711 : vector<2x8xf32>
    %c161 = arith.constant 161 : index
    %713 = memref.load %arg0[%c161] : memref<294xf32, #tpu.memory_space<smem>>
    %714 = vector.broadcast %713 : f32 to vector<2x8xf32>
    %715 = arith.addf %712, %714 : vector<2x8xf32>
    %716 = arith.negf %715 : vector<2x8xf32>
    %717 = math.exp %716 : vector<2x8xf32>
    %cst_70 = arith.constant 1.000000e+00 : f32
    %718 = vector.broadcast %cst_70 : f32 to vector<2x8xf32>
    %719 = arith.addf %718, %717 : vector<2x8xf32>
    %720 = arith.divf %718, %719 : vector<2x8xf32>
    %721 = arith.mulf %715, %720 : vector<2x8xf32>
    %722 = arith.addf %645, %721 : vector<2x8xf32>
    %723 = arith.negf %722 : vector<2x8xf32>
    %724 = math.exp %723 : vector<2x8xf32>
    %cst_71 = arith.constant 1.000000e+00 : f32
    %725 = vector.broadcast %cst_71 : f32 to vector<2x8xf32>
    %726 = arith.addf %725, %724 : vector<2x8xf32>
    %727 = arith.divf %725, %726 : vector<2x8xf32>
    %728 = arith.mulf %722, %727 : vector<2x8xf32>
    %cst_72 = arith.constant 0.000000e+00 : f32
    %729 = vector.broadcast %cst_72 : f32 to vector<2x1xf32>
    %730 = vector.extract_strided_slice %728 {offsets = [0, 0], sizes = [2, 7], strides = [1, 1]} : vector<2x8xf32> to vector<2x7xf32>
    %731 = tpu.concatenate %729, %730 in 1 : vector<2x1xf32>, vector<2x7xf32> -> vector<2x8xf32>
    %732 = vector.extract_strided_slice %728 {offsets = [0, 1], sizes = [2, 7], strides = [1, 1]} : vector<2x8xf32> to vector<2x7xf32>
    %733 = tpu.concatenate %732, %729 in 1 : vector<2x7xf32>, vector<2x1xf32> -> vector<2x8xf32>
    %c162 = arith.constant 162 : index
    %734 = memref.load %arg0[%c162] : memref<294xf32, #tpu.memory_space<smem>>
    %735 = vector.broadcast %734 : f32 to vector<2x8xf32>
    %736 = arith.mulf %731, %735 : vector<2x8xf32>
    %c163 = arith.constant 163 : index
    %737 = memref.load %arg0[%c163] : memref<294xf32, #tpu.memory_space<smem>>
    %738 = vector.broadcast %737 : f32 to vector<2x8xf32>
    %739 = arith.mulf %728, %738 : vector<2x8xf32>
    %740 = arith.addf %736, %739 : vector<2x8xf32>
    %c164 = arith.constant 164 : index
    %741 = memref.load %arg0[%c164] : memref<294xf32, #tpu.memory_space<smem>>
    %742 = vector.broadcast %741 : f32 to vector<2x8xf32>
    %743 = arith.mulf %733, %742 : vector<2x8xf32>
    %744 = arith.addf %740, %743 : vector<2x8xf32>
    %c165 = arith.constant 165 : index
    %745 = memref.load %arg0[%c165] : memref<294xf32, #tpu.memory_space<smem>>
    %746 = vector.broadcast %745 : f32 to vector<2x8xf32>
    %747 = arith.addf %744, %746 : vector<2x8xf32>
    %c0_73 = arith.constant 0 : index
    %c0_74 = arith.constant 0 : index
    %c0_75 = arith.constant 0 : index
    %748 = vector.load %arg3[%c0_73, %c0_74, %c0_75] : memref<1x2x8xf32, #tpu.memory_space<vmem>>, vector<1x2x8xf32>
    %749 = vector.shape_cast %748 : vector<1x2x8xf32> to vector<2x8xf32>
    %cst_76 = arith.constant 0.000000e+00 : f32
    %750 = vector.broadcast %cst_76 : f32 to vector<2x1xf32>
    %751 = vector.extract_strided_slice %749 {offsets = [0, 0], sizes = [2, 7], strides = [1, 1]} : vector<2x8xf32> to vector<2x7xf32>
    %752 = tpu.concatenate %750, %751 in 1 : vector<2x1xf32>, vector<2x7xf32> -> vector<2x8xf32>
    %753 = vector.extract_strided_slice %749 {offsets = [0, 1], sizes = [2, 7], strides = [1, 1]} : vector<2x8xf32> to vector<2x7xf32>
    %754 = tpu.concatenate %753, %750 in 1 : vector<2x7xf32>, vector<2x1xf32> -> vector<2x8xf32>
    %cst_77 = arith.constant 0.000000e+00 : f32
    %755 = vector.broadcast %cst_77 : f32 to vector<2x1xf32>
    %756 = vector.extract_strided_slice %645 {offsets = [0, 0], sizes = [2, 7], strides = [1, 1]} : vector<2x8xf32> to vector<2x7xf32>
    %757 = tpu.concatenate %755, %756 in 1 : vector<2x1xf32>, vector<2x7xf32> -> vector<2x8xf32>
    %758 = vector.extract_strided_slice %645 {offsets = [0, 1], sizes = [2, 7], strides = [1, 1]} : vector<2x8xf32> to vector<2x7xf32>
    %759 = tpu.concatenate %758, %755 in 1 : vector<2x7xf32>, vector<2x1xf32> -> vector<2x8xf32>
    %c166 = arith.constant 166 : index
    %760 = memref.load %arg0[%c166] : memref<294xf32, #tpu.memory_space<smem>>
    %761 = vector.broadcast %760 : f32 to vector<2x8xf32>
    %762 = arith.mulf %752, %761 : vector<2x8xf32>
    %c167 = arith.constant 167 : index
    %763 = memref.load %arg0[%c167] : memref<294xf32, #tpu.memory_space<smem>>
    %764 = vector.broadcast %763 : f32 to vector<2x8xf32>
    %765 = arith.mulf %749, %764 : vector<2x8xf32>
    %766 = arith.addf %762, %765 : vector<2x8xf32>
    %c168 = arith.constant 168 : index
    %767 = memref.load %arg0[%c168] : memref<294xf32, #tpu.memory_space<smem>>
    %768 = vector.broadcast %767 : f32 to vector<2x8xf32>
    %769 = arith.mulf %754, %768 : vector<2x8xf32>
    %770 = arith.addf %766, %769 : vector<2x8xf32>
    %c169 = arith.constant 169 : index
    %771 = memref.load %arg0[%c169] : memref<294xf32, #tpu.memory_space<smem>>
    %772 = vector.broadcast %771 : f32 to vector<2x8xf32>
    %773 = arith.mulf %757, %772 : vector<2x8xf32>
    %774 = arith.addf %770, %773 : vector<2x8xf32>
    %c170 = arith.constant 170 : index
    %775 = memref.load %arg0[%c170] : memref<294xf32, #tpu.memory_space<smem>>
    %776 = vector.broadcast %775 : f32 to vector<2x8xf32>
    %777 = arith.mulf %645, %776 : vector<2x8xf32>
    %778 = arith.addf %774, %777 : vector<2x8xf32>
    %c171 = arith.constant 171 : index
    %779 = memref.load %arg0[%c171] : memref<294xf32, #tpu.memory_space<smem>>
    %780 = vector.broadcast %779 : f32 to vector<2x8xf32>
    %781 = arith.mulf %759, %780 : vector<2x8xf32>
    %782 = arith.addf %778, %781 : vector<2x8xf32>
    %c178 = arith.constant 178 : index
    %783 = memref.load %arg0[%c178] : memref<294xf32, #tpu.memory_space<smem>>
    %784 = vector.broadcast %783 : f32 to vector<2x8xf32>
    %785 = arith.addf %782, %784 : vector<2x8xf32>
    %786 = arith.negf %785 : vector<2x8xf32>
    %787 = math.exp %786 : vector<2x8xf32>
    %cst_78 = arith.constant 1.000000e+00 : f32
    %788 = vector.broadcast %cst_78 : f32 to vector<2x8xf32>
    %789 = arith.addf %788, %787 : vector<2x8xf32>
    %790 = arith.divf %788, %789 : vector<2x8xf32>
    %791 = arith.mulf %785, %790 : vector<2x8xf32>
    %c172 = arith.constant 172 : index
    %792 = memref.load %arg0[%c172] : memref<294xf32, #tpu.memory_space<smem>>
    %793 = vector.broadcast %792 : f32 to vector<2x8xf32>
    %794 = arith.mulf %752, %793 : vector<2x8xf32>
    %c173 = arith.constant 173 : index
    %795 = memref.load %arg0[%c173] : memref<294xf32, #tpu.memory_space<smem>>
    %796 = vector.broadcast %795 : f32 to vector<2x8xf32>
    %797 = arith.mulf %749, %796 : vector<2x8xf32>
    %798 = arith.addf %794, %797 : vector<2x8xf32>
    %c174 = arith.constant 174 : index
    %799 = memref.load %arg0[%c174] : memref<294xf32, #tpu.memory_space<smem>>
    %800 = vector.broadcast %799 : f32 to vector<2x8xf32>
    %801 = arith.mulf %754, %800 : vector<2x8xf32>
    %802 = arith.addf %798, %801 : vector<2x8xf32>
    %c175 = arith.constant 175 : index
    %803 = memref.load %arg0[%c175] : memref<294xf32, #tpu.memory_space<smem>>
    %804 = vector.broadcast %803 : f32 to vector<2x8xf32>
    %805 = arith.mulf %757, %804 : vector<2x8xf32>
    %806 = arith.addf %802, %805 : vector<2x8xf32>
    %c176 = arith.constant 176 : index
    %807 = memref.load %arg0[%c176] : memref<294xf32, #tpu.memory_space<smem>>
    %808 = vector.broadcast %807 : f32 to vector<2x8xf32>
    %809 = arith.mulf %645, %808 : vector<2x8xf32>
    %810 = arith.addf %806, %809 : vector<2x8xf32>
    %c177 = arith.constant 177 : index
    %811 = memref.load %arg0[%c177] : memref<294xf32, #tpu.memory_space<smem>>
    %812 = vector.broadcast %811 : f32 to vector<2x8xf32>
    %813 = arith.mulf %759, %812 : vector<2x8xf32>
    %814 = arith.addf %810, %813 : vector<2x8xf32>
    %c179 = arith.constant 179 : index
    %815 = memref.load %arg0[%c179] : memref<294xf32, #tpu.memory_space<smem>>
    %816 = vector.broadcast %815 : f32 to vector<2x8xf32>
    %817 = arith.addf %814, %816 : vector<2x8xf32>
    %818 = arith.negf %817 : vector<2x8xf32>
    %819 = math.exp %818 : vector<2x8xf32>
    %cst_79 = arith.constant 1.000000e+00 : f32
    %820 = vector.broadcast %cst_79 : f32 to vector<2x8xf32>
    %821 = arith.addf %820, %819 : vector<2x8xf32>
    %822 = arith.divf %820, %821 : vector<2x8xf32>
    %823 = arith.mulf %817, %822 : vector<2x8xf32>
    %824 = arith.addf %749, %791 : vector<2x8xf32>
    %825 = arith.addf %645, %823 : vector<2x8xf32>
    %cst_80 = arith.constant 0.000000e+00 : f32
    %826 = vector.broadcast %cst_80 : f32 to vector<2x1xf32>
    %827 = vector.extract_strided_slice %824 {offsets = [0, 0], sizes = [2, 7], strides = [1, 1]} : vector<2x8xf32> to vector<2x7xf32>
    %828 = tpu.concatenate %826, %827 in 1 : vector<2x1xf32>, vector<2x7xf32> -> vector<2x8xf32>
    %829 = vector.extract_strided_slice %824 {offsets = [0, 1], sizes = [2, 7], strides = [1, 1]} : vector<2x8xf32> to vector<2x7xf32>
    %830 = tpu.concatenate %829, %826 in 1 : vector<2x7xf32>, vector<2x1xf32> -> vector<2x8xf32>
    %cst_81 = arith.constant 0.000000e+00 : f32
    %831 = vector.broadcast %cst_81 : f32 to vector<2x1xf32>
    %832 = vector.extract_strided_slice %825 {offsets = [0, 0], sizes = [2, 7], strides = [1, 1]} : vector<2x8xf32> to vector<2x7xf32>
    %833 = tpu.concatenate %831, %832 in 1 : vector<2x1xf32>, vector<2x7xf32> -> vector<2x8xf32>
    %834 = vector.extract_strided_slice %825 {offsets = [0, 1], sizes = [2, 7], strides = [1, 1]} : vector<2x8xf32> to vector<2x7xf32>
    %835 = tpu.concatenate %834, %831 in 1 : vector<2x7xf32>, vector<2x1xf32> -> vector<2x8xf32>
    %c180 = arith.constant 180 : index
    %836 = memref.load %arg0[%c180] : memref<294xf32, #tpu.memory_space<smem>>
    %837 = vector.broadcast %836 : f32 to vector<2x8xf32>
    %838 = arith.mulf %828, %837 : vector<2x8xf32>
    %c181 = arith.constant 181 : index
    %839 = memref.load %arg0[%c181] : memref<294xf32, #tpu.memory_space<smem>>
    %840 = vector.broadcast %839 : f32 to vector<2x8xf32>
    %841 = arith.mulf %824, %840 : vector<2x8xf32>
    %842 = arith.addf %838, %841 : vector<2x8xf32>
    %c182 = arith.constant 182 : index
    %843 = memref.load %arg0[%c182] : memref<294xf32, #tpu.memory_space<smem>>
    %844 = vector.broadcast %843 : f32 to vector<2x8xf32>
    %845 = arith.mulf %830, %844 : vector<2x8xf32>
    %846 = arith.addf %842, %845 : vector<2x8xf32>
    %c183 = arith.constant 183 : index
    %847 = memref.load %arg0[%c183] : memref<294xf32, #tpu.memory_space<smem>>
    %848 = vector.broadcast %847 : f32 to vector<2x8xf32>
    %849 = arith.mulf %833, %848 : vector<2x8xf32>
    %850 = arith.addf %846, %849 : vector<2x8xf32>
    %c184 = arith.constant 184 : index
    %851 = memref.load %arg0[%c184] : memref<294xf32, #tpu.memory_space<smem>>
    %852 = vector.broadcast %851 : f32 to vector<2x8xf32>
    %853 = arith.mulf %825, %852 : vector<2x8xf32>
    %854 = arith.addf %850, %853 : vector<2x8xf32>
    %c185 = arith.constant 185 : index
    %855 = memref.load %arg0[%c185] : memref<294xf32, #tpu.memory_space<smem>>
    %856 = vector.broadcast %855 : f32 to vector<2x8xf32>
    %857 = arith.mulf %835, %856 : vector<2x8xf32>
    %858 = arith.addf %854, %857 : vector<2x8xf32>
    %c186 = arith.constant 186 : index
    %859 = memref.load %arg0[%c186] : memref<294xf32, #tpu.memory_space<smem>>
    %860 = vector.broadcast %859 : f32 to vector<2x8xf32>
    %861 = arith.addf %858, %860 : vector<2x8xf32>
    %862 = arith.negf %861 : vector<2x8xf32>
    %863 = math.exp %862 : vector<2x8xf32>
    %cst_82 = arith.constant 1.000000e+00 : f32
    %864 = vector.broadcast %cst_82 : f32 to vector<2x8xf32>
    %865 = arith.addf %864, %863 : vector<2x8xf32>
    %866 = arith.divf %864, %865 : vector<2x8xf32>
    %867 = arith.mulf %861, %866 : vector<2x8xf32>
    %cst_83 = arith.constant 0.000000e+00 : f32
    %868 = vector.broadcast %cst_83 : f32 to vector<2x1xf32>
    %869 = vector.extract_strided_slice %867 {offsets = [0, 0], sizes = [2, 7], strides = [1, 1]} : vector<2x8xf32> to vector<2x7xf32>
    %870 = tpu.concatenate %868, %869 in 1 : vector<2x1xf32>, vector<2x7xf32> -> vector<2x8xf32>
    %871 = vector.extract_strided_slice %867 {offsets = [0, 1], sizes = [2, 7], strides = [1, 1]} : vector<2x8xf32> to vector<2x7xf32>
    %872 = tpu.concatenate %871, %868 in 1 : vector<2x7xf32>, vector<2x1xf32> -> vector<2x8xf32>
    %c187 = arith.constant 187 : index
    %873 = memref.load %arg0[%c187] : memref<294xf32, #tpu.memory_space<smem>>
    %874 = vector.broadcast %873 : f32 to vector<2x8xf32>
    %875 = arith.mulf %870, %874 : vector<2x8xf32>
    %c188 = arith.constant 188 : index
    %876 = memref.load %arg0[%c188] : memref<294xf32, #tpu.memory_space<smem>>
    %877 = vector.broadcast %876 : f32 to vector<2x8xf32>
    %878 = arith.mulf %867, %877 : vector<2x8xf32>
    %879 = arith.addf %875, %878 : vector<2x8xf32>
    %c189 = arith.constant 189 : index
    %880 = memref.load %arg0[%c189] : memref<294xf32, #tpu.memory_space<smem>>
    %881 = vector.broadcast %880 : f32 to vector<2x8xf32>
    %882 = arith.mulf %872, %881 : vector<2x8xf32>
    %883 = arith.addf %879, %882 : vector<2x8xf32>
    %c190 = arith.constant 190 : index
    %884 = memref.load %arg0[%c190] : memref<294xf32, #tpu.memory_space<smem>>
    %885 = vector.broadcast %884 : f32 to vector<2x8xf32>
    %886 = arith.addf %883, %885 : vector<2x8xf32>
    %cst_84 = arith.constant 0.000000e+00 : f32
    %887 = vector.broadcast %cst_84 : f32 to vector<2x1xf32>
    %888 = vector.extract_strided_slice %749 {offsets = [0, 0], sizes = [2, 7], strides = [1, 1]} : vector<2x8xf32> to vector<2x7xf32>
    %889 = tpu.concatenate %887, %888 in 1 : vector<2x1xf32>, vector<2x7xf32> -> vector<2x8xf32>
    %890 = vector.extract_strided_slice %749 {offsets = [0, 1], sizes = [2, 7], strides = [1, 1]} : vector<2x8xf32> to vector<2x7xf32>
    %891 = tpu.concatenate %890, %887 in 1 : vector<2x7xf32>, vector<2x1xf32> -> vector<2x8xf32>
    %cst_85 = arith.constant 0.000000e+00 : f32
    %892 = vector.broadcast %cst_85 : f32 to vector<2x1xf32>
    %893 = vector.extract_strided_slice %645 {offsets = [0, 0], sizes = [2, 7], strides = [1, 1]} : vector<2x8xf32> to vector<2x7xf32>
    %894 = tpu.concatenate %892, %893 in 1 : vector<2x1xf32>, vector<2x7xf32> -> vector<2x8xf32>
    %895 = vector.extract_strided_slice %645 {offsets = [0, 1], sizes = [2, 7], strides = [1, 1]} : vector<2x8xf32> to vector<2x7xf32>
    %896 = tpu.concatenate %895, %892 in 1 : vector<2x7xf32>, vector<2x1xf32> -> vector<2x8xf32>
    %c191 = arith.constant 191 : index
    %897 = memref.load %arg0[%c191] : memref<294xf32, #tpu.memory_space<smem>>
    %898 = vector.broadcast %897 : f32 to vector<2x8xf32>
    %899 = arith.mulf %889, %898 : vector<2x8xf32>
    %c192 = arith.constant 192 : index
    %900 = memref.load %arg0[%c192] : memref<294xf32, #tpu.memory_space<smem>>
    %901 = vector.broadcast %900 : f32 to vector<2x8xf32>
    %902 = arith.mulf %749, %901 : vector<2x8xf32>
    %903 = arith.addf %899, %902 : vector<2x8xf32>
    %c193 = arith.constant 193 : index
    %904 = memref.load %arg0[%c193] : memref<294xf32, #tpu.memory_space<smem>>
    %905 = vector.broadcast %904 : f32 to vector<2x8xf32>
    %906 = arith.mulf %891, %905 : vector<2x8xf32>
    %907 = arith.addf %903, %906 : vector<2x8xf32>
    %c194 = arith.constant 194 : index
    %908 = memref.load %arg0[%c194] : memref<294xf32, #tpu.memory_space<smem>>
    %909 = vector.broadcast %908 : f32 to vector<2x8xf32>
    %910 = arith.mulf %894, %909 : vector<2x8xf32>
    %911 = arith.addf %907, %910 : vector<2x8xf32>
    %c195 = arith.constant 195 : index
    %912 = memref.load %arg0[%c195] : memref<294xf32, #tpu.memory_space<smem>>
    %913 = vector.broadcast %912 : f32 to vector<2x8xf32>
    %914 = arith.mulf %645, %913 : vector<2x8xf32>
    %915 = arith.addf %911, %914 : vector<2x8xf32>
    %c196 = arith.constant 196 : index
    %916 = memref.load %arg0[%c196] : memref<294xf32, #tpu.memory_space<smem>>
    %917 = vector.broadcast %916 : f32 to vector<2x8xf32>
    %918 = arith.mulf %896, %917 : vector<2x8xf32>
    %919 = arith.addf %915, %918 : vector<2x8xf32>
    %c203 = arith.constant 203 : index
    %920 = memref.load %arg0[%c203] : memref<294xf32, #tpu.memory_space<smem>>
    %921 = vector.broadcast %920 : f32 to vector<2x8xf32>
    %922 = arith.addf %919, %921 : vector<2x8xf32>
    %923 = arith.negf %922 : vector<2x8xf32>
    %924 = math.exp %923 : vector<2x8xf32>
    %cst_86 = arith.constant 1.000000e+00 : f32
    %925 = vector.broadcast %cst_86 : f32 to vector<2x8xf32>
    %926 = arith.addf %925, %924 : vector<2x8xf32>
    %927 = arith.divf %925, %926 : vector<2x8xf32>
    %928 = arith.mulf %922, %927 : vector<2x8xf32>
    %c197 = arith.constant 197 : index
    %929 = memref.load %arg0[%c197] : memref<294xf32, #tpu.memory_space<smem>>
    %930 = vector.broadcast %929 : f32 to vector<2x8xf32>
    %931 = arith.mulf %889, %930 : vector<2x8xf32>
    %c198 = arith.constant 198 : index
    %932 = memref.load %arg0[%c198] : memref<294xf32, #tpu.memory_space<smem>>
    %933 = vector.broadcast %932 : f32 to vector<2x8xf32>
    %934 = arith.mulf %749, %933 : vector<2x8xf32>
    %935 = arith.addf %931, %934 : vector<2x8xf32>
    %c199 = arith.constant 199 : index
    %936 = memref.load %arg0[%c199] : memref<294xf32, #tpu.memory_space<smem>>
    %937 = vector.broadcast %936 : f32 to vector<2x8xf32>
    %938 = arith.mulf %891, %937 : vector<2x8xf32>
    %939 = arith.addf %935, %938 : vector<2x8xf32>
    %c200 = arith.constant 200 : index
    %940 = memref.load %arg0[%c200] : memref<294xf32, #tpu.memory_space<smem>>
    %941 = vector.broadcast %940 : f32 to vector<2x8xf32>
    %942 = arith.mulf %894, %941 : vector<2x8xf32>
    %943 = arith.addf %939, %942 : vector<2x8xf32>
    %c201 = arith.constant 201 : index
    %944 = memref.load %arg0[%c201] : memref<294xf32, #tpu.memory_space<smem>>
    %945 = vector.broadcast %944 : f32 to vector<2x8xf32>
    %946 = arith.mulf %645, %945 : vector<2x8xf32>
    %947 = arith.addf %943, %946 : vector<2x8xf32>
    %c202 = arith.constant 202 : index
    %948 = memref.load %arg0[%c202] : memref<294xf32, #tpu.memory_space<smem>>
    %949 = vector.broadcast %948 : f32 to vector<2x8xf32>
    %950 = arith.mulf %896, %949 : vector<2x8xf32>
    %951 = arith.addf %947, %950 : vector<2x8xf32>
    %c204 = arith.constant 204 : index
    %952 = memref.load %arg0[%c204] : memref<294xf32, #tpu.memory_space<smem>>
    %953 = vector.broadcast %952 : f32 to vector<2x8xf32>
    %954 = arith.addf %951, %953 : vector<2x8xf32>
    %955 = arith.negf %954 : vector<2x8xf32>
    %956 = math.exp %955 : vector<2x8xf32>
    %cst_87 = arith.constant 1.000000e+00 : f32
    %957 = vector.broadcast %cst_87 : f32 to vector<2x8xf32>
    %958 = arith.addf %957, %956 : vector<2x8xf32>
    %959 = arith.divf %957, %958 : vector<2x8xf32>
    %960 = arith.mulf %954, %959 : vector<2x8xf32>
    %961 = arith.addf %749, %928 : vector<2x8xf32>
    %962 = arith.addf %645, %960 : vector<2x8xf32>
    %cst_88 = arith.constant 0.000000e+00 : f32
    %963 = vector.broadcast %cst_88 : f32 to vector<2x1xf32>
    %964 = vector.extract_strided_slice %961 {offsets = [0, 0], sizes = [2, 7], strides = [1, 1]} : vector<2x8xf32> to vector<2x7xf32>
    %965 = tpu.concatenate %963, %964 in 1 : vector<2x1xf32>, vector<2x7xf32> -> vector<2x8xf32>
    %966 = vector.extract_strided_slice %961 {offsets = [0, 1], sizes = [2, 7], strides = [1, 1]} : vector<2x8xf32> to vector<2x7xf32>
    %967 = tpu.concatenate %966, %963 in 1 : vector<2x7xf32>, vector<2x1xf32> -> vector<2x8xf32>
    %cst_89 = arith.constant 0.000000e+00 : f32
    %968 = vector.broadcast %cst_89 : f32 to vector<2x1xf32>
    %969 = vector.extract_strided_slice %962 {offsets = [0, 0], sizes = [2, 7], strides = [1, 1]} : vector<2x8xf32> to vector<2x7xf32>
    %970 = tpu.concatenate %968, %969 in 1 : vector<2x1xf32>, vector<2x7xf32> -> vector<2x8xf32>
    %971 = vector.extract_strided_slice %962 {offsets = [0, 1], sizes = [2, 7], strides = [1, 1]} : vector<2x8xf32> to vector<2x7xf32>
    %972 = tpu.concatenate %971, %968 in 1 : vector<2x7xf32>, vector<2x1xf32> -> vector<2x8xf32>
    %c205 = arith.constant 205 : index
    %973 = memref.load %arg0[%c205] : memref<294xf32, #tpu.memory_space<smem>>
    %974 = vector.broadcast %973 : f32 to vector<2x8xf32>
    %975 = arith.mulf %965, %974 : vector<2x8xf32>
    %c206 = arith.constant 206 : index
    %976 = memref.load %arg0[%c206] : memref<294xf32, #tpu.memory_space<smem>>
    %977 = vector.broadcast %976 : f32 to vector<2x8xf32>
    %978 = arith.mulf %961, %977 : vector<2x8xf32>
    %979 = arith.addf %975, %978 : vector<2x8xf32>
    %c207 = arith.constant 207 : index
    %980 = memref.load %arg0[%c207] : memref<294xf32, #tpu.memory_space<smem>>
    %981 = vector.broadcast %980 : f32 to vector<2x8xf32>
    %982 = arith.mulf %967, %981 : vector<2x8xf32>
    %983 = arith.addf %979, %982 : vector<2x8xf32>
    %c208 = arith.constant 208 : index
    %984 = memref.load %arg0[%c208] : memref<294xf32, #tpu.memory_space<smem>>
    %985 = vector.broadcast %984 : f32 to vector<2x8xf32>
    %986 = arith.mulf %970, %985 : vector<2x8xf32>
    %987 = arith.addf %983, %986 : vector<2x8xf32>
    %c209 = arith.constant 209 : index
    %988 = memref.load %arg0[%c209] : memref<294xf32, #tpu.memory_space<smem>>
    %989 = vector.broadcast %988 : f32 to vector<2x8xf32>
    %990 = arith.mulf %962, %989 : vector<2x8xf32>
    %991 = arith.addf %987, %990 : vector<2x8xf32>
    %c210 = arith.constant 210 : index
    %992 = memref.load %arg0[%c210] : memref<294xf32, #tpu.memory_space<smem>>
    %993 = vector.broadcast %992 : f32 to vector<2x8xf32>
    %994 = arith.mulf %972, %993 : vector<2x8xf32>
    %995 = arith.addf %991, %994 : vector<2x8xf32>
    %c211 = arith.constant 211 : index
    %996 = memref.load %arg0[%c211] : memref<294xf32, #tpu.memory_space<smem>>
    %997 = vector.broadcast %996 : f32 to vector<2x8xf32>
    %998 = arith.addf %995, %997 : vector<2x8xf32>
    %999 = arith.negf %998 : vector<2x8xf32>
    %1000 = math.exp %999 : vector<2x8xf32>
    %cst_90 = arith.constant 1.000000e+00 : f32
    %1001 = vector.broadcast %cst_90 : f32 to vector<2x8xf32>
    %1002 = arith.addf %1001, %1000 : vector<2x8xf32>
    %1003 = arith.divf %1001, %1002 : vector<2x8xf32>
    %1004 = arith.mulf %998, %1003 : vector<2x8xf32>
    %cst_91 = arith.constant 0.000000e+00 : f32
    %1005 = vector.broadcast %cst_91 : f32 to vector<2x1xf32>
    %1006 = vector.extract_strided_slice %1004 {offsets = [0, 0], sizes = [2, 7], strides = [1, 1]} : vector<2x8xf32> to vector<2x7xf32>
    %1007 = tpu.concatenate %1005, %1006 in 1 : vector<2x1xf32>, vector<2x7xf32> -> vector<2x8xf32>
    %1008 = vector.extract_strided_slice %1004 {offsets = [0, 1], sizes = [2, 7], strides = [1, 1]} : vector<2x8xf32> to vector<2x7xf32>
    %1009 = tpu.concatenate %1008, %1005 in 1 : vector<2x7xf32>, vector<2x1xf32> -> vector<2x8xf32>
    %c212 = arith.constant 212 : index
    %1010 = memref.load %arg0[%c212] : memref<294xf32, #tpu.memory_space<smem>>
    %1011 = vector.broadcast %1010 : f32 to vector<2x8xf32>
    %1012 = arith.mulf %1007, %1011 : vector<2x8xf32>
    %c213 = arith.constant 213 : index
    %1013 = memref.load %arg0[%c213] : memref<294xf32, #tpu.memory_space<smem>>
    %1014 = vector.broadcast %1013 : f32 to vector<2x8xf32>
    %1015 = arith.mulf %1004, %1014 : vector<2x8xf32>
    %1016 = arith.addf %1012, %1015 : vector<2x8xf32>
    %c214 = arith.constant 214 : index
    %1017 = memref.load %arg0[%c214] : memref<294xf32, #tpu.memory_space<smem>>
    %1018 = vector.broadcast %1017 : f32 to vector<2x8xf32>
    %1019 = arith.mulf %1009, %1018 : vector<2x8xf32>
    %1020 = arith.addf %1016, %1019 : vector<2x8xf32>
    %c215 = arith.constant 215 : index
    %1021 = memref.load %arg0[%c215] : memref<294xf32, #tpu.memory_space<smem>>
    %1022 = vector.broadcast %1021 : f32 to vector<2x8xf32>
    %1023 = arith.addf %1020, %1022 : vector<2x8xf32>
    %1024 = math.exp %747 : vector<2x8xf32>
    %cst_92 = arith.constant 1.000000e+00 : f32
    %1025 = vector.broadcast %cst_92 : f32 to vector<2x8xf32>
    %1026 = arith.addf %1025, %1023 : vector<2x8xf32>
    %1027 = arith.mulf %886, %886 : vector<2x8xf32>
    %1028 = arith.divf %1027, %1024 : vector<2x8xf32>
    %1029 = arith.subf %1026, %1028 : vector<2x8xf32>
    %1030 = math.exp %1023 : vector<2x8xf32>
    %1031 = arith.subf %1029, %1030 : vector<2x8xf32>
    %cst_93 = arith.constant dense<0.000000e+00> : vector<2xf32>
    %1032 = vector.multi_reduction <add>, %1031, %cst_93 [1] : vector<2x8xf32> to vector<2xf32>
    %1033 = vector.shape_cast %1032 : vector<2xf32> to vector<2x1xf32>
    %cst_94 = arith.constant -5.000000e-01 : f32
    %1034 = vector.broadcast %cst_94 : f32 to vector<2x1xf32>
    %1035 = arith.mulf %1034, %1033 : vector<2x1xf32>
    %cst_95 = arith.constant dense<0.000000e+00> : vector<1xf32>
    %1036 = vector.multi_reduction <add>, %1035, %cst_95 [0] : vector<2x1xf32> to vector<1xf32>
    %1037 = vector.shape_cast %1036 : vector<1xf32> to vector<1x1xf32>
    %cst_96 = arith.constant 2.000000e+00 : f32
    %1038 = vector.broadcast %cst_96 : f32 to vector<1x1xf32>
    %1039 = arith.divf %1037, %1038 : vector<1x1xf32>
    %1040 = arith.addf %696, %886 : vector<2x8xf32>
    %1041 = arith.addf %747, %1023 : vector<2x8xf32>
    %cst_97 = arith.constant 5.000000e-01 : f32
    %1042 = vector.broadcast %cst_97 : f32 to vector<2x8xf32>
    %1043 = arith.mulf %1042, %1041 : vector<2x8xf32>
    %1044 = math.exp %1043 : vector<2x8xf32>
    %c0_98 = arith.constant 0 : index
    %c0_99 = arith.constant 0 : index
    %c0_100 = arith.constant 0 : index
    %1045 = vector.load %arg6[%c0_98, %c0_99, %c0_100] : memref<1x2x8xf32, #tpu.memory_space<vmem>>, vector<1x2x8xf32>
    %1046 = vector.shape_cast %1045 : vector<1x2x8xf32> to vector<2x8xf32>
    %1047 = arith.mulf %1044, %1046 : vector<2x8xf32>
    %1048 = arith.addf %1040, %1047 : vector<2x8xf32>
    %c0_101 = arith.constant 0 : index
    %c0_102 = arith.constant 0 : index
    %1049 = vector.load %arg12[%c0_101, %c0_102] : memref<8x16xf32, #tpu.memory_space<vmem>>, vector<8x16xf32>
    %cst_103 = arith.constant dense<0.000000e+00> : vector<2x16xf32>
    %1050 = tpu.matmul %645, %1049, %cst_103 {dimension_numbers = #tpu.dot_dimension_numbers<[1], [0], [0], [1], [0, 0, 1, 1], [], []>} : vector<2x8xf32>, vector<8x16xf32>, vector<2x16xf32> -> vector<2x16xf32>
    %c0_104 = arith.constant 0 : index
    %c0_105 = arith.constant 0 : index
    %1051 = vector.load %arg12[%c0_104, %c0_105] : memref<8x16xf32, #tpu.memory_space<vmem>>, vector<8x16xf32>
    %cst_106 = arith.constant dense<0.000000e+00> : vector<2x16xf32>
    %1052 = tpu.matmul %1048, %1051, %cst_106 {dimension_numbers = #tpu.dot_dimension_numbers<[1], [0], [0], [1], [0, 0, 1, 1], [], []>} : vector<2x8xf32>, vector<8x16xf32>, vector<2x16xf32> -> vector<2x16xf32>
    %cst_107 = arith.constant 0.000000e+00 : f32
    %1053 = vector.broadcast %cst_107 : f32 to vector<2x1xf32>
    %1054 = vector.extract_strided_slice %1050 {offsets = [0, 0], sizes = [2, 15], strides = [1, 1]} : vector<2x16xf32> to vector<2x15xf32>
    %1055 = tpu.concatenate %1053, %1054 in 1 : vector<2x1xf32>, vector<2x15xf32> -> vector<2x16xf32>
    %1056 = vector.extract_strided_slice %1050 {offsets = [0, 1], sizes = [2, 15], strides = [1, 1]} : vector<2x16xf32> to vector<2x15xf32>
    %1057 = tpu.concatenate %1056, %1053 in 1 : vector<2x15xf32>, vector<2x1xf32> -> vector<2x16xf32>
    %cst_108 = arith.constant 0.000000e+00 : f32
    %1058 = vector.broadcast %cst_108 : f32 to vector<2x1xf32>
    %1059 = vector.extract_strided_slice %1052 {offsets = [0, 0], sizes = [2, 15], strides = [1, 1]} : vector<2x16xf32> to vector<2x15xf32>
    %1060 = tpu.concatenate %1058, %1059 in 1 : vector<2x1xf32>, vector<2x15xf32> -> vector<2x16xf32>
    %1061 = vector.extract_strided_slice %1052 {offsets = [0, 1], sizes = [2, 15], strides = [1, 1]} : vector<2x16xf32> to vector<2x15xf32>
    %1062 = tpu.concatenate %1061, %1058 in 1 : vector<2x15xf32>, vector<2x1xf32> -> vector<2x16xf32>
    %c42 = arith.constant 42 : index
    %1063 = memref.load %arg0[%c42] : memref<294xf32, #tpu.memory_space<smem>>
    %1064 = vector.broadcast %1063 : f32 to vector<2x16xf32>
    %1065 = arith.mulf %1055, %1064 : vector<2x16xf32>
    %c43 = arith.constant 43 : index
    %1066 = memref.load %arg0[%c43] : memref<294xf32, #tpu.memory_space<smem>>
    %1067 = vector.broadcast %1066 : f32 to vector<2x16xf32>
    %1068 = arith.mulf %1050, %1067 : vector<2x16xf32>
    %1069 = arith.addf %1065, %1068 : vector<2x16xf32>
    %c44 = arith.constant 44 : index
    %1070 = memref.load %arg0[%c44] : memref<294xf32, #tpu.memory_space<smem>>
    %1071 = vector.broadcast %1070 : f32 to vector<2x16xf32>
    %1072 = arith.mulf %1057, %1071 : vector<2x16xf32>
    %1073 = arith.addf %1069, %1072 : vector<2x16xf32>
    %c45 = arith.constant 45 : index
    %1074 = memref.load %arg0[%c45] : memref<294xf32, #tpu.memory_space<smem>>
    %1075 = vector.broadcast %1074 : f32 to vector<2x16xf32>
    %1076 = arith.mulf %1060, %1075 : vector<2x16xf32>
    %1077 = arith.addf %1073, %1076 : vector<2x16xf32>
    %c46 = arith.constant 46 : index
    %1078 = memref.load %arg0[%c46] : memref<294xf32, #tpu.memory_space<smem>>
    %1079 = vector.broadcast %1078 : f32 to vector<2x16xf32>
    %1080 = arith.mulf %1052, %1079 : vector<2x16xf32>
    %1081 = arith.addf %1077, %1080 : vector<2x16xf32>
    %c47 = arith.constant 47 : index
    %1082 = memref.load %arg0[%c47] : memref<294xf32, #tpu.memory_space<smem>>
    %1083 = vector.broadcast %1082 : f32 to vector<2x16xf32>
    %1084 = arith.mulf %1062, %1083 : vector<2x16xf32>
    %1085 = arith.addf %1081, %1084 : vector<2x16xf32>
    %c54 = arith.constant 54 : index
    %1086 = memref.load %arg0[%c54] : memref<294xf32, #tpu.memory_space<smem>>
    %1087 = vector.broadcast %1086 : f32 to vector<2x16xf32>
    %1088 = arith.addf %1085, %1087 : vector<2x16xf32>
    %1089 = arith.negf %1088 : vector<2x16xf32>
    %1090 = math.exp %1089 : vector<2x16xf32>
    %cst_109 = arith.constant 1.000000e+00 : f32
    %1091 = vector.broadcast %cst_109 : f32 to vector<2x16xf32>
    %1092 = arith.addf %1091, %1090 : vector<2x16xf32>
    %1093 = arith.divf %1091, %1092 : vector<2x16xf32>
    %1094 = arith.mulf %1088, %1093 : vector<2x16xf32>
    %c48 = arith.constant 48 : index
    %1095 = memref.load %arg0[%c48] : memref<294xf32, #tpu.memory_space<smem>>
    %1096 = vector.broadcast %1095 : f32 to vector<2x16xf32>
    %1097 = arith.mulf %1055, %1096 : vector<2x16xf32>
    %c49 = arith.constant 49 : index
    %1098 = memref.load %arg0[%c49] : memref<294xf32, #tpu.memory_space<smem>>
    %1099 = vector.broadcast %1098 : f32 to vector<2x16xf32>
    %1100 = arith.mulf %1050, %1099 : vector<2x16xf32>
    %1101 = arith.addf %1097, %1100 : vector<2x16xf32>
    %c50 = arith.constant 50 : index
    %1102 = memref.load %arg0[%c50] : memref<294xf32, #tpu.memory_space<smem>>
    %1103 = vector.broadcast %1102 : f32 to vector<2x16xf32>
    %1104 = arith.mulf %1057, %1103 : vector<2x16xf32>
    %1105 = arith.addf %1101, %1104 : vector<2x16xf32>
    %c51 = arith.constant 51 : index
    %1106 = memref.load %arg0[%c51] : memref<294xf32, #tpu.memory_space<smem>>
    %1107 = vector.broadcast %1106 : f32 to vector<2x16xf32>
    %1108 = arith.mulf %1060, %1107 : vector<2x16xf32>
    %1109 = arith.addf %1105, %1108 : vector<2x16xf32>
    %c52 = arith.constant 52 : index
    %1110 = memref.load %arg0[%c52] : memref<294xf32, #tpu.memory_space<smem>>
    %1111 = vector.broadcast %1110 : f32 to vector<2x16xf32>
    %1112 = arith.mulf %1052, %1111 : vector<2x16xf32>
    %1113 = arith.addf %1109, %1112 : vector<2x16xf32>
    %c53 = arith.constant 53 : index
    %1114 = memref.load %arg0[%c53] : memref<294xf32, #tpu.memory_space<smem>>
    %1115 = vector.broadcast %1114 : f32 to vector<2x16xf32>
    %1116 = arith.mulf %1062, %1115 : vector<2x16xf32>
    %1117 = arith.addf %1113, %1116 : vector<2x16xf32>
    %c55 = arith.constant 55 : index
    %1118 = memref.load %arg0[%c55] : memref<294xf32, #tpu.memory_space<smem>>
    %1119 = vector.broadcast %1118 : f32 to vector<2x16xf32>
    %1120 = arith.addf %1117, %1119 : vector<2x16xf32>
    %1121 = arith.negf %1120 : vector<2x16xf32>
    %1122 = math.exp %1121 : vector<2x16xf32>
    %cst_110 = arith.constant 1.000000e+00 : f32
    %1123 = vector.broadcast %cst_110 : f32 to vector<2x16xf32>
    %1124 = arith.addf %1123, %1122 : vector<2x16xf32>
    %1125 = arith.divf %1123, %1124 : vector<2x16xf32>
    %1126 = arith.mulf %1120, %1125 : vector<2x16xf32>
    %cst_111 = arith.constant 0.000000e+00 : f32
    %1127 = vector.broadcast %cst_111 : f32 to vector<2x1xf32>
    %1128 = vector.extract_strided_slice %1094 {offsets = [0, 0], sizes = [2, 15], strides = [1, 1]} : vector<2x16xf32> to vector<2x15xf32>
    %1129 = tpu.concatenate %1127, %1128 in 1 : vector<2x1xf32>, vector<2x15xf32> -> vector<2x16xf32>
    %1130 = vector.extract_strided_slice %1094 {offsets = [0, 1], sizes = [2, 15], strides = [1, 1]} : vector<2x16xf32> to vector<2x15xf32>
    %1131 = tpu.concatenate %1130, %1127 in 1 : vector<2x15xf32>, vector<2x1xf32> -> vector<2x16xf32>
    %cst_112 = arith.constant 0.000000e+00 : f32
    %1132 = vector.broadcast %cst_112 : f32 to vector<2x1xf32>
    %1133 = vector.extract_strided_slice %1126 {offsets = [0, 0], sizes = [2, 15], strides = [1, 1]} : vector<2x16xf32> to vector<2x15xf32>
    %1134 = tpu.concatenate %1132, %1133 in 1 : vector<2x1xf32>, vector<2x15xf32> -> vector<2x16xf32>
    %1135 = vector.extract_strided_slice %1126 {offsets = [0, 1], sizes = [2, 15], strides = [1, 1]} : vector<2x16xf32> to vector<2x15xf32>
    %1136 = tpu.concatenate %1135, %1132 in 1 : vector<2x15xf32>, vector<2x1xf32> -> vector<2x16xf32>
    %c56 = arith.constant 56 : index
    %1137 = memref.load %arg0[%c56] : memref<294xf32, #tpu.memory_space<smem>>
    %1138 = vector.broadcast %1137 : f32 to vector<2x16xf32>
    %1139 = arith.mulf %1129, %1138 : vector<2x16xf32>
    %c57 = arith.constant 57 : index
    %1140 = memref.load %arg0[%c57] : memref<294xf32, #tpu.memory_space<smem>>
    %1141 = vector.broadcast %1140 : f32 to vector<2x16xf32>
    %1142 = arith.mulf %1094, %1141 : vector<2x16xf32>
    %1143 = arith.addf %1139, %1142 : vector<2x16xf32>
    %c58 = arith.constant 58 : index
    %1144 = memref.load %arg0[%c58] : memref<294xf32, #tpu.memory_space<smem>>
    %1145 = vector.broadcast %1144 : f32 to vector<2x16xf32>
    %1146 = arith.mulf %1131, %1145 : vector<2x16xf32>
    %1147 = arith.addf %1143, %1146 : vector<2x16xf32>
    %c59 = arith.constant 59 : index
    %1148 = memref.load %arg0[%c59] : memref<294xf32, #tpu.memory_space<smem>>
    %1149 = vector.broadcast %1148 : f32 to vector<2x16xf32>
    %1150 = arith.mulf %1134, %1149 : vector<2x16xf32>
    %1151 = arith.addf %1147, %1150 : vector<2x16xf32>
    %c60 = arith.constant 60 : index
    %1152 = memref.load %arg0[%c60] : memref<294xf32, #tpu.memory_space<smem>>
    %1153 = vector.broadcast %1152 : f32 to vector<2x16xf32>
    %1154 = arith.mulf %1126, %1153 : vector<2x16xf32>
    %1155 = arith.addf %1151, %1154 : vector<2x16xf32>
    %c61 = arith.constant 61 : index
    %1156 = memref.load %arg0[%c61] : memref<294xf32, #tpu.memory_space<smem>>
    %1157 = vector.broadcast %1156 : f32 to vector<2x16xf32>
    %1158 = arith.mulf %1136, %1157 : vector<2x16xf32>
    %1159 = arith.addf %1155, %1158 : vector<2x16xf32>
    %c62 = arith.constant 62 : index
    %1160 = memref.load %arg0[%c62] : memref<294xf32, #tpu.memory_space<smem>>
    %1161 = vector.broadcast %1160 : f32 to vector<2x16xf32>
    %1162 = arith.addf %1159, %1161 : vector<2x16xf32>
    %1163 = arith.negf %1162 : vector<2x16xf32>
    %1164 = math.exp %1163 : vector<2x16xf32>
    %cst_113 = arith.constant 1.000000e+00 : f32
    %1165 = vector.broadcast %cst_113 : f32 to vector<2x16xf32>
    %1166 = arith.addf %1165, %1164 : vector<2x16xf32>
    %1167 = arith.divf %1165, %1166 : vector<2x16xf32>
    %1168 = arith.mulf %1162, %1167 : vector<2x16xf32>
    %cst_114 = arith.constant 0.000000e+00 : f32
    %1169 = vector.broadcast %cst_114 : f32 to vector<2x1xf32>
    %1170 = vector.extract_strided_slice %1168 {offsets = [0, 0], sizes = [2, 15], strides = [1, 1]} : vector<2x16xf32> to vector<2x15xf32>
    %1171 = tpu.concatenate %1169, %1170 in 1 : vector<2x1xf32>, vector<2x15xf32> -> vector<2x16xf32>
    %1172 = vector.extract_strided_slice %1168 {offsets = [0, 1], sizes = [2, 15], strides = [1, 1]} : vector<2x16xf32> to vector<2x15xf32>
    %1173 = tpu.concatenate %1172, %1169 in 1 : vector<2x15xf32>, vector<2x1xf32> -> vector<2x16xf32>
    %c216 = arith.constant 216 : index
    %1174 = memref.load %arg0[%c216] : memref<294xf32, #tpu.memory_space<smem>>
    %1175 = vector.broadcast %1174 : f32 to vector<2x16xf32>
    %1176 = arith.mulf %1171, %1175 : vector<2x16xf32>
    %c217 = arith.constant 217 : index
    %1177 = memref.load %arg0[%c217] : memref<294xf32, #tpu.memory_space<smem>>
    %1178 = vector.broadcast %1177 : f32 to vector<2x16xf32>
    %1179 = arith.mulf %1168, %1178 : vector<2x16xf32>
    %1180 = arith.addf %1176, %1179 : vector<2x16xf32>
    %c218 = arith.constant 218 : index
    %1181 = memref.load %arg0[%c218] : memref<294xf32, #tpu.memory_space<smem>>
    %1182 = vector.broadcast %1181 : f32 to vector<2x16xf32>
    %1183 = arith.mulf %1173, %1182 : vector<2x16xf32>
    %1184 = arith.addf %1180, %1183 : vector<2x16xf32>
    %c219 = arith.constant 219 : index
    %1185 = memref.load %arg0[%c219] : memref<294xf32, #tpu.memory_space<smem>>
    %1186 = vector.broadcast %1185 : f32 to vector<2x16xf32>
    %1187 = arith.addf %1184, %1186 : vector<2x16xf32>
    %1188 = arith.negf %1187 : vector<2x16xf32>
    %1189 = math.exp %1188 : vector<2x16xf32>
    %cst_115 = arith.constant 1.000000e+00 : f32
    %1190 = vector.broadcast %cst_115 : f32 to vector<2x16xf32>
    %1191 = arith.addf %1190, %1189 : vector<2x16xf32>
    %1192 = arith.divf %1190, %1191 : vector<2x16xf32>
    %1193 = arith.mulf %1187, %1192 : vector<2x16xf32>
    %1194 = arith.addf %1168, %1193 : vector<2x16xf32>
    %1195 = arith.negf %1194 : vector<2x16xf32>
    %1196 = math.exp %1195 : vector<2x16xf32>
    %cst_116 = arith.constant 1.000000e+00 : f32
    %1197 = vector.broadcast %cst_116 : f32 to vector<2x16xf32>
    %1198 = arith.addf %1197, %1196 : vector<2x16xf32>
    %1199 = arith.divf %1197, %1198 : vector<2x16xf32>
    %1200 = arith.mulf %1194, %1199 : vector<2x16xf32>
    %cst_117 = arith.constant 0.000000e+00 : f32
    %1201 = vector.broadcast %cst_117 : f32 to vector<2x1xf32>
    %1202 = vector.extract_strided_slice %1200 {offsets = [0, 0], sizes = [2, 15], strides = [1, 1]} : vector<2x16xf32> to vector<2x15xf32>
    %1203 = tpu.concatenate %1201, %1202 in 1 : vector<2x1xf32>, vector<2x15xf32> -> vector<2x16xf32>
    %1204 = vector.extract_strided_slice %1200 {offsets = [0, 1], sizes = [2, 15], strides = [1, 1]} : vector<2x16xf32> to vector<2x15xf32>
    %1205 = tpu.concatenate %1204, %1201 in 1 : vector<2x15xf32>, vector<2x1xf32> -> vector<2x16xf32>
    %c220 = arith.constant 220 : index
    %1206 = memref.load %arg0[%c220] : memref<294xf32, #tpu.memory_space<smem>>
    %1207 = vector.broadcast %1206 : f32 to vector<2x16xf32>
    %1208 = arith.mulf %1203, %1207 : vector<2x16xf32>
    %c221 = arith.constant 221 : index
    %1209 = memref.load %arg0[%c221] : memref<294xf32, #tpu.memory_space<smem>>
    %1210 = vector.broadcast %1209 : f32 to vector<2x16xf32>
    %1211 = arith.mulf %1200, %1210 : vector<2x16xf32>
    %1212 = arith.addf %1208, %1211 : vector<2x16xf32>
    %c222 = arith.constant 222 : index
    %1213 = memref.load %arg0[%c222] : memref<294xf32, #tpu.memory_space<smem>>
    %1214 = vector.broadcast %1213 : f32 to vector<2x16xf32>
    %1215 = arith.mulf %1205, %1214 : vector<2x16xf32>
    %1216 = arith.addf %1212, %1215 : vector<2x16xf32>
    %c223 = arith.constant 223 : index
    %1217 = memref.load %arg0[%c223] : memref<294xf32, #tpu.memory_space<smem>>
    %1218 = vector.broadcast %1217 : f32 to vector<2x16xf32>
    %1219 = arith.addf %1216, %1218 : vector<2x16xf32>
    %cst_118 = arith.constant 0.000000e+00 : f32
    %1220 = vector.broadcast %cst_118 : f32 to vector<2x1xf32>
    %1221 = vector.extract_strided_slice %1168 {offsets = [0, 0], sizes = [2, 15], strides = [1, 1]} : vector<2x16xf32> to vector<2x15xf32>
    %1222 = tpu.concatenate %1220, %1221 in 1 : vector<2x1xf32>, vector<2x15xf32> -> vector<2x16xf32>
    %1223 = vector.extract_strided_slice %1168 {offsets = [0, 1], sizes = [2, 15], strides = [1, 1]} : vector<2x16xf32> to vector<2x15xf32>
    %1224 = tpu.concatenate %1223, %1220 in 1 : vector<2x15xf32>, vector<2x1xf32> -> vector<2x16xf32>
    %c224 = arith.constant 224 : index
    %1225 = memref.load %arg0[%c224] : memref<294xf32, #tpu.memory_space<smem>>
    %1226 = vector.broadcast %1225 : f32 to vector<2x16xf32>
    %1227 = arith.mulf %1222, %1226 : vector<2x16xf32>
    %c225 = arith.constant 225 : index
    %1228 = memref.load %arg0[%c225] : memref<294xf32, #tpu.memory_space<smem>>
    %1229 = vector.broadcast %1228 : f32 to vector<2x16xf32>
    %1230 = arith.mulf %1168, %1229 : vector<2x16xf32>
    %1231 = arith.addf %1227, %1230 : vector<2x16xf32>
    %c226 = arith.constant 226 : index
    %1232 = memref.load %arg0[%c226] : memref<294xf32, #tpu.memory_space<smem>>
    %1233 = vector.broadcast %1232 : f32 to vector<2x16xf32>
    %1234 = arith.mulf %1224, %1233 : vector<2x16xf32>
    %1235 = arith.addf %1231, %1234 : vector<2x16xf32>
    %c227 = arith.constant 227 : index
    %1236 = memref.load %arg0[%c227] : memref<294xf32, #tpu.memory_space<smem>>
    %1237 = vector.broadcast %1236 : f32 to vector<2x16xf32>
    %1238 = arith.addf %1235, %1237 : vector<2x16xf32>
    %1239 = arith.negf %1238 : vector<2x16xf32>
    %1240 = math.exp %1239 : vector<2x16xf32>
    %cst_119 = arith.constant 1.000000e+00 : f32
    %1241 = vector.broadcast %cst_119 : f32 to vector<2x16xf32>
    %1242 = arith.addf %1241, %1240 : vector<2x16xf32>
    %1243 = arith.divf %1241, %1242 : vector<2x16xf32>
    %1244 = arith.mulf %1238, %1243 : vector<2x16xf32>
    %1245 = arith.addf %1168, %1244 : vector<2x16xf32>
    %1246 = arith.negf %1245 : vector<2x16xf32>
    %1247 = math.exp %1246 : vector<2x16xf32>
    %cst_120 = arith.constant 1.000000e+00 : f32
    %1248 = vector.broadcast %cst_120 : f32 to vector<2x16xf32>
    %1249 = arith.addf %1248, %1247 : vector<2x16xf32>
    %1250 = arith.divf %1248, %1249 : vector<2x16xf32>
    %1251 = arith.mulf %1245, %1250 : vector<2x16xf32>
    %cst_121 = arith.constant 0.000000e+00 : f32
    %1252 = vector.broadcast %cst_121 : f32 to vector<2x1xf32>
    %1253 = vector.extract_strided_slice %1251 {offsets = [0, 0], sizes = [2, 15], strides = [1, 1]} : vector<2x16xf32> to vector<2x15xf32>
    %1254 = tpu.concatenate %1252, %1253 in 1 : vector<2x1xf32>, vector<2x15xf32> -> vector<2x16xf32>
    %1255 = vector.extract_strided_slice %1251 {offsets = [0, 1], sizes = [2, 15], strides = [1, 1]} : vector<2x16xf32> to vector<2x15xf32>
    %1256 = tpu.concatenate %1255, %1252 in 1 : vector<2x15xf32>, vector<2x1xf32> -> vector<2x16xf32>
    %c228 = arith.constant 228 : index
    %1257 = memref.load %arg0[%c228] : memref<294xf32, #tpu.memory_space<smem>>
    %1258 = vector.broadcast %1257 : f32 to vector<2x16xf32>
    %1259 = arith.mulf %1254, %1258 : vector<2x16xf32>
    %c229 = arith.constant 229 : index
    %1260 = memref.load %arg0[%c229] : memref<294xf32, #tpu.memory_space<smem>>
    %1261 = vector.broadcast %1260 : f32 to vector<2x16xf32>
    %1262 = arith.mulf %1251, %1261 : vector<2x16xf32>
    %1263 = arith.addf %1259, %1262 : vector<2x16xf32>
    %c230 = arith.constant 230 : index
    %1264 = memref.load %arg0[%c230] : memref<294xf32, #tpu.memory_space<smem>>
    %1265 = vector.broadcast %1264 : f32 to vector<2x16xf32>
    %1266 = arith.mulf %1256, %1265 : vector<2x16xf32>
    %1267 = arith.addf %1263, %1266 : vector<2x16xf32>
    %c231 = arith.constant 231 : index
    %1268 = memref.load %arg0[%c231] : memref<294xf32, #tpu.memory_space<smem>>
    %1269 = vector.broadcast %1268 : f32 to vector<2x16xf32>
    %1270 = arith.addf %1267, %1269 : vector<2x16xf32>
    %c0_122 = arith.constant 0 : index
    %c0_123 = arith.constant 0 : index
    %c0_124 = arith.constant 0 : index
    %1271 = vector.load %arg4[%c0_122, %c0_123, %c0_124] : memref<1x2x16xf32, #tpu.memory_space<vmem>>, vector<1x2x16xf32>
    %1272 = vector.shape_cast %1271 : vector<1x2x16xf32> to vector<2x16xf32>
    %cst_125 = arith.constant 0.000000e+00 : f32
    %1273 = vector.broadcast %cst_125 : f32 to vector<2x1xf32>
    %1274 = vector.extract_strided_slice %1272 {offsets = [0, 0], sizes = [2, 15], strides = [1, 1]} : vector<2x16xf32> to vector<2x15xf32>
    %1275 = tpu.concatenate %1273, %1274 in 1 : vector<2x1xf32>, vector<2x15xf32> -> vector<2x16xf32>
    %1276 = vector.extract_strided_slice %1272 {offsets = [0, 1], sizes = [2, 15], strides = [1, 1]} : vector<2x16xf32> to vector<2x15xf32>
    %1277 = tpu.concatenate %1276, %1273 in 1 : vector<2x15xf32>, vector<2x1xf32> -> vector<2x16xf32>
    %cst_126 = arith.constant 0.000000e+00 : f32
    %1278 = vector.broadcast %cst_126 : f32 to vector<2x1xf32>
    %1279 = vector.extract_strided_slice %1168 {offsets = [0, 0], sizes = [2, 15], strides = [1, 1]} : vector<2x16xf32> to vector<2x15xf32>
    %1280 = tpu.concatenate %1278, %1279 in 1 : vector<2x1xf32>, vector<2x15xf32> -> vector<2x16xf32>
    %1281 = vector.extract_strided_slice %1168 {offsets = [0, 1], sizes = [2, 15], strides = [1, 1]} : vector<2x16xf32> to vector<2x15xf32>
    %1282 = tpu.concatenate %1281, %1278 in 1 : vector<2x15xf32>, vector<2x1xf32> -> vector<2x16xf32>
    %c232 = arith.constant 232 : index
    %1283 = memref.load %arg0[%c232] : memref<294xf32, #tpu.memory_space<smem>>
    %1284 = vector.broadcast %1283 : f32 to vector<2x16xf32>
    %1285 = arith.mulf %1275, %1284 : vector<2x16xf32>
    %c233 = arith.constant 233 : index
    %1286 = memref.load %arg0[%c233] : memref<294xf32, #tpu.memory_space<smem>>
    %1287 = vector.broadcast %1286 : f32 to vector<2x16xf32>
    %1288 = arith.mulf %1272, %1287 : vector<2x16xf32>
    %1289 = arith.addf %1285, %1288 : vector<2x16xf32>
    %c234 = arith.constant 234 : index
    %1290 = memref.load %arg0[%c234] : memref<294xf32, #tpu.memory_space<smem>>
    %1291 = vector.broadcast %1290 : f32 to vector<2x16xf32>
    %1292 = arith.mulf %1277, %1291 : vector<2x16xf32>
    %1293 = arith.addf %1289, %1292 : vector<2x16xf32>
    %c235 = arith.constant 235 : index
    %1294 = memref.load %arg0[%c235] : memref<294xf32, #tpu.memory_space<smem>>
    %1295 = vector.broadcast %1294 : f32 to vector<2x16xf32>
    %1296 = arith.mulf %1280, %1295 : vector<2x16xf32>
    %1297 = arith.addf %1293, %1296 : vector<2x16xf32>
    %c236 = arith.constant 236 : index
    %1298 = memref.load %arg0[%c236] : memref<294xf32, #tpu.memory_space<smem>>
    %1299 = vector.broadcast %1298 : f32 to vector<2x16xf32>
    %1300 = arith.mulf %1168, %1299 : vector<2x16xf32>
    %1301 = arith.addf %1297, %1300 : vector<2x16xf32>
    %c237 = arith.constant 237 : index
    %1302 = memref.load %arg0[%c237] : memref<294xf32, #tpu.memory_space<smem>>
    %1303 = vector.broadcast %1302 : f32 to vector<2x16xf32>
    %1304 = arith.mulf %1282, %1303 : vector<2x16xf32>
    %1305 = arith.addf %1301, %1304 : vector<2x16xf32>
    %c244 = arith.constant 244 : index
    %1306 = memref.load %arg0[%c244] : memref<294xf32, #tpu.memory_space<smem>>
    %1307 = vector.broadcast %1306 : f32 to vector<2x16xf32>
    %1308 = arith.addf %1305, %1307 : vector<2x16xf32>
    %1309 = arith.negf %1308 : vector<2x16xf32>
    %1310 = math.exp %1309 : vector<2x16xf32>
    %cst_127 = arith.constant 1.000000e+00 : f32
    %1311 = vector.broadcast %cst_127 : f32 to vector<2x16xf32>
    %1312 = arith.addf %1311, %1310 : vector<2x16xf32>
    %1313 = arith.divf %1311, %1312 : vector<2x16xf32>
    %1314 = arith.mulf %1308, %1313 : vector<2x16xf32>
    %c238 = arith.constant 238 : index
    %1315 = memref.load %arg0[%c238] : memref<294xf32, #tpu.memory_space<smem>>
    %1316 = vector.broadcast %1315 : f32 to vector<2x16xf32>
    %1317 = arith.mulf %1275, %1316 : vector<2x16xf32>
    %c239 = arith.constant 239 : index
    %1318 = memref.load %arg0[%c239] : memref<294xf32, #tpu.memory_space<smem>>
    %1319 = vector.broadcast %1318 : f32 to vector<2x16xf32>
    %1320 = arith.mulf %1272, %1319 : vector<2x16xf32>
    %1321 = arith.addf %1317, %1320 : vector<2x16xf32>
    %c240 = arith.constant 240 : index
    %1322 = memref.load %arg0[%c240] : memref<294xf32, #tpu.memory_space<smem>>
    %1323 = vector.broadcast %1322 : f32 to vector<2x16xf32>
    %1324 = arith.mulf %1277, %1323 : vector<2x16xf32>
    %1325 = arith.addf %1321, %1324 : vector<2x16xf32>
    %c241 = arith.constant 241 : index
    %1326 = memref.load %arg0[%c241] : memref<294xf32, #tpu.memory_space<smem>>
    %1327 = vector.broadcast %1326 : f32 to vector<2x16xf32>
    %1328 = arith.mulf %1280, %1327 : vector<2x16xf32>
    %1329 = arith.addf %1325, %1328 : vector<2x16xf32>
    %c242 = arith.constant 242 : index
    %1330 = memref.load %arg0[%c242] : memref<294xf32, #tpu.memory_space<smem>>
    %1331 = vector.broadcast %1330 : f32 to vector<2x16xf32>
    %1332 = arith.mulf %1168, %1331 : vector<2x16xf32>
    %1333 = arith.addf %1329, %1332 : vector<2x16xf32>
    %c243 = arith.constant 243 : index
    %1334 = memref.load %arg0[%c243] : memref<294xf32, #tpu.memory_space<smem>>
    %1335 = vector.broadcast %1334 : f32 to vector<2x16xf32>
    %1336 = arith.mulf %1282, %1335 : vector<2x16xf32>
    %1337 = arith.addf %1333, %1336 : vector<2x16xf32>
    %c245 = arith.constant 245 : index
    %1338 = memref.load %arg0[%c245] : memref<294xf32, #tpu.memory_space<smem>>
    %1339 = vector.broadcast %1338 : f32 to vector<2x16xf32>
    %1340 = arith.addf %1337, %1339 : vector<2x16xf32>
    %1341 = arith.negf %1340 : vector<2x16xf32>
    %1342 = math.exp %1341 : vector<2x16xf32>
    %cst_128 = arith.constant 1.000000e+00 : f32
    %1343 = vector.broadcast %cst_128 : f32 to vector<2x16xf32>
    %1344 = arith.addf %1343, %1342 : vector<2x16xf32>
    %1345 = arith.divf %1343, %1344 : vector<2x16xf32>
    %1346 = arith.mulf %1340, %1345 : vector<2x16xf32>
    %1347 = arith.addf %1272, %1314 : vector<2x16xf32>
    %1348 = arith.addf %1168, %1346 : vector<2x16xf32>
    %cst_129 = arith.constant 0.000000e+00 : f32
    %1349 = vector.broadcast %cst_129 : f32 to vector<2x1xf32>
    %1350 = vector.extract_strided_slice %1347 {offsets = [0, 0], sizes = [2, 15], strides = [1, 1]} : vector<2x16xf32> to vector<2x15xf32>
    %1351 = tpu.concatenate %1349, %1350 in 1 : vector<2x1xf32>, vector<2x15xf32> -> vector<2x16xf32>
    %1352 = vector.extract_strided_slice %1347 {offsets = [0, 1], sizes = [2, 15], strides = [1, 1]} : vector<2x16xf32> to vector<2x15xf32>
    %1353 = tpu.concatenate %1352, %1349 in 1 : vector<2x15xf32>, vector<2x1xf32> -> vector<2x16xf32>
    %cst_130 = arith.constant 0.000000e+00 : f32
    %1354 = vector.broadcast %cst_130 : f32 to vector<2x1xf32>
    %1355 = vector.extract_strided_slice %1348 {offsets = [0, 0], sizes = [2, 15], strides = [1, 1]} : vector<2x16xf32> to vector<2x15xf32>
    %1356 = tpu.concatenate %1354, %1355 in 1 : vector<2x1xf32>, vector<2x15xf32> -> vector<2x16xf32>
    %1357 = vector.extract_strided_slice %1348 {offsets = [0, 1], sizes = [2, 15], strides = [1, 1]} : vector<2x16xf32> to vector<2x15xf32>
    %1358 = tpu.concatenate %1357, %1354 in 1 : vector<2x15xf32>, vector<2x1xf32> -> vector<2x16xf32>
    %c246 = arith.constant 246 : index
    %1359 = memref.load %arg0[%c246] : memref<294xf32, #tpu.memory_space<smem>>
    %1360 = vector.broadcast %1359 : f32 to vector<2x16xf32>
    %1361 = arith.mulf %1351, %1360 : vector<2x16xf32>
    %c247 = arith.constant 247 : index
    %1362 = memref.load %arg0[%c247] : memref<294xf32, #tpu.memory_space<smem>>
    %1363 = vector.broadcast %1362 : f32 to vector<2x16xf32>
    %1364 = arith.mulf %1347, %1363 : vector<2x16xf32>
    %1365 = arith.addf %1361, %1364 : vector<2x16xf32>
    %c248 = arith.constant 248 : index
    %1366 = memref.load %arg0[%c248] : memref<294xf32, #tpu.memory_space<smem>>
    %1367 = vector.broadcast %1366 : f32 to vector<2x16xf32>
    %1368 = arith.mulf %1353, %1367 : vector<2x16xf32>
    %1369 = arith.addf %1365, %1368 : vector<2x16xf32>
    %c249 = arith.constant 249 : index
    %1370 = memref.load %arg0[%c249] : memref<294xf32, #tpu.memory_space<smem>>
    %1371 = vector.broadcast %1370 : f32 to vector<2x16xf32>
    %1372 = arith.mulf %1356, %1371 : vector<2x16xf32>
    %1373 = arith.addf %1369, %1372 : vector<2x16xf32>
    %c250 = arith.constant 250 : index
    %1374 = memref.load %arg0[%c250] : memref<294xf32, #tpu.memory_space<smem>>
    %1375 = vector.broadcast %1374 : f32 to vector<2x16xf32>
    %1376 = arith.mulf %1348, %1375 : vector<2x16xf32>
    %1377 = arith.addf %1373, %1376 : vector<2x16xf32>
    %c251 = arith.constant 251 : index
    %1378 = memref.load %arg0[%c251] : memref<294xf32, #tpu.memory_space<smem>>
    %1379 = vector.broadcast %1378 : f32 to vector<2x16xf32>
    %1380 = arith.mulf %1358, %1379 : vector<2x16xf32>
    %1381 = arith.addf %1377, %1380 : vector<2x16xf32>
    %c252 = arith.constant 252 : index
    %1382 = memref.load %arg0[%c252] : memref<294xf32, #tpu.memory_space<smem>>
    %1383 = vector.broadcast %1382 : f32 to vector<2x16xf32>
    %1384 = arith.addf %1381, %1383 : vector<2x16xf32>
    %1385 = arith.negf %1384 : vector<2x16xf32>
    %1386 = math.exp %1385 : vector<2x16xf32>
    %cst_131 = arith.constant 1.000000e+00 : f32
    %1387 = vector.broadcast %cst_131 : f32 to vector<2x16xf32>
    %1388 = arith.addf %1387, %1386 : vector<2x16xf32>
    %1389 = arith.divf %1387, %1388 : vector<2x16xf32>
    %1390 = arith.mulf %1384, %1389 : vector<2x16xf32>
    %cst_132 = arith.constant 0.000000e+00 : f32
    %1391 = vector.broadcast %cst_132 : f32 to vector<2x1xf32>
    %1392 = vector.extract_strided_slice %1390 {offsets = [0, 0], sizes = [2, 15], strides = [1, 1]} : vector<2x16xf32> to vector<2x15xf32>
    %1393 = tpu.concatenate %1391, %1392 in 1 : vector<2x1xf32>, vector<2x15xf32> -> vector<2x16xf32>
    %1394 = vector.extract_strided_slice %1390 {offsets = [0, 1], sizes = [2, 15], strides = [1, 1]} : vector<2x16xf32> to vector<2x15xf32>
    %1395 = tpu.concatenate %1394, %1391 in 1 : vector<2x15xf32>, vector<2x1xf32> -> vector<2x16xf32>
    %c253 = arith.constant 253 : index
    %1396 = memref.load %arg0[%c253] : memref<294xf32, #tpu.memory_space<smem>>
    %1397 = vector.broadcast %1396 : f32 to vector<2x16xf32>
    %1398 = arith.mulf %1393, %1397 : vector<2x16xf32>
    %c254 = arith.constant 254 : index
    %1399 = memref.load %arg0[%c254] : memref<294xf32, #tpu.memory_space<smem>>
    %1400 = vector.broadcast %1399 : f32 to vector<2x16xf32>
    %1401 = arith.mulf %1390, %1400 : vector<2x16xf32>
    %1402 = arith.addf %1398, %1401 : vector<2x16xf32>
    %c255 = arith.constant 255 : index
    %1403 = memref.load %arg0[%c255] : memref<294xf32, #tpu.memory_space<smem>>
    %1404 = vector.broadcast %1403 : f32 to vector<2x16xf32>
    %1405 = arith.mulf %1395, %1404 : vector<2x16xf32>
    %1406 = arith.addf %1402, %1405 : vector<2x16xf32>
    %c256 = arith.constant 256 : index
    %1407 = memref.load %arg0[%c256] : memref<294xf32, #tpu.memory_space<smem>>
    %1408 = vector.broadcast %1407 : f32 to vector<2x16xf32>
    %1409 = arith.addf %1406, %1408 : vector<2x16xf32>
    %cst_133 = arith.constant 0.000000e+00 : f32
    %1410 = vector.broadcast %cst_133 : f32 to vector<2x1xf32>
    %1411 = vector.extract_strided_slice %1272 {offsets = [0, 0], sizes = [2, 15], strides = [1, 1]} : vector<2x16xf32> to vector<2x15xf32>
    %1412 = tpu.concatenate %1410, %1411 in 1 : vector<2x1xf32>, vector<2x15xf32> -> vector<2x16xf32>
    %1413 = vector.extract_strided_slice %1272 {offsets = [0, 1], sizes = [2, 15], strides = [1, 1]} : vector<2x16xf32> to vector<2x15xf32>
    %1414 = tpu.concatenate %1413, %1410 in 1 : vector<2x15xf32>, vector<2x1xf32> -> vector<2x16xf32>
    %cst_134 = arith.constant 0.000000e+00 : f32
    %1415 = vector.broadcast %cst_134 : f32 to vector<2x1xf32>
    %1416 = vector.extract_strided_slice %1168 {offsets = [0, 0], sizes = [2, 15], strides = [1, 1]} : vector<2x16xf32> to vector<2x15xf32>
    %1417 = tpu.concatenate %1415, %1416 in 1 : vector<2x1xf32>, vector<2x15xf32> -> vector<2x16xf32>
    %1418 = vector.extract_strided_slice %1168 {offsets = [0, 1], sizes = [2, 15], strides = [1, 1]} : vector<2x16xf32> to vector<2x15xf32>
    %1419 = tpu.concatenate %1418, %1415 in 1 : vector<2x15xf32>, vector<2x1xf32> -> vector<2x16xf32>
    %c257 = arith.constant 257 : index
    %1420 = memref.load %arg0[%c257] : memref<294xf32, #tpu.memory_space<smem>>
    %1421 = vector.broadcast %1420 : f32 to vector<2x16xf32>
    %1422 = arith.mulf %1412, %1421 : vector<2x16xf32>
    %c258 = arith.constant 258 : index
    %1423 = memref.load %arg0[%c258] : memref<294xf32, #tpu.memory_space<smem>>
    %1424 = vector.broadcast %1423 : f32 to vector<2x16xf32>
    %1425 = arith.mulf %1272, %1424 : vector<2x16xf32>
    %1426 = arith.addf %1422, %1425 : vector<2x16xf32>
    %c259 = arith.constant 259 : index
    %1427 = memref.load %arg0[%c259] : memref<294xf32, #tpu.memory_space<smem>>
    %1428 = vector.broadcast %1427 : f32 to vector<2x16xf32>
    %1429 = arith.mulf %1414, %1428 : vector<2x16xf32>
    %1430 = arith.addf %1426, %1429 : vector<2x16xf32>
    %c260 = arith.constant 260 : index
    %1431 = memref.load %arg0[%c260] : memref<294xf32, #tpu.memory_space<smem>>
    %1432 = vector.broadcast %1431 : f32 to vector<2x16xf32>
    %1433 = arith.mulf %1417, %1432 : vector<2x16xf32>
    %1434 = arith.addf %1430, %1433 : vector<2x16xf32>
    %c261 = arith.constant 261 : index
    %1435 = memref.load %arg0[%c261] : memref<294xf32, #tpu.memory_space<smem>>
    %1436 = vector.broadcast %1435 : f32 to vector<2x16xf32>
    %1437 = arith.mulf %1168, %1436 : vector<2x16xf32>
    %1438 = arith.addf %1434, %1437 : vector<2x16xf32>
    %c262 = arith.constant 262 : index
    %1439 = memref.load %arg0[%c262] : memref<294xf32, #tpu.memory_space<smem>>
    %1440 = vector.broadcast %1439 : f32 to vector<2x16xf32>
    %1441 = arith.mulf %1419, %1440 : vector<2x16xf32>
    %1442 = arith.addf %1438, %1441 : vector<2x16xf32>
    %c269 = arith.constant 269 : index
    %1443 = memref.load %arg0[%c269] : memref<294xf32, #tpu.memory_space<smem>>
    %1444 = vector.broadcast %1443 : f32 to vector<2x16xf32>
    %1445 = arith.addf %1442, %1444 : vector<2x16xf32>
    %1446 = arith.negf %1445 : vector<2x16xf32>
    %1447 = math.exp %1446 : vector<2x16xf32>
    %cst_135 = arith.constant 1.000000e+00 : f32
    %1448 = vector.broadcast %cst_135 : f32 to vector<2x16xf32>
    %1449 = arith.addf %1448, %1447 : vector<2x16xf32>
    %1450 = arith.divf %1448, %1449 : vector<2x16xf32>
    %1451 = arith.mulf %1445, %1450 : vector<2x16xf32>
    %c263 = arith.constant 263 : index
    %1452 = memref.load %arg0[%c263] : memref<294xf32, #tpu.memory_space<smem>>
    %1453 = vector.broadcast %1452 : f32 to vector<2x16xf32>
    %1454 = arith.mulf %1412, %1453 : vector<2x16xf32>
    %c264 = arith.constant 264 : index
    %1455 = memref.load %arg0[%c264] : memref<294xf32, #tpu.memory_space<smem>>
    %1456 = vector.broadcast %1455 : f32 to vector<2x16xf32>
    %1457 = arith.mulf %1272, %1456 : vector<2x16xf32>
    %1458 = arith.addf %1454, %1457 : vector<2x16xf32>
    %c265 = arith.constant 265 : index
    %1459 = memref.load %arg0[%c265] : memref<294xf32, #tpu.memory_space<smem>>
    %1460 = vector.broadcast %1459 : f32 to vector<2x16xf32>
    %1461 = arith.mulf %1414, %1460 : vector<2x16xf32>
    %1462 = arith.addf %1458, %1461 : vector<2x16xf32>
    %c266 = arith.constant 266 : index
    %1463 = memref.load %arg0[%c266] : memref<294xf32, #tpu.memory_space<smem>>
    %1464 = vector.broadcast %1463 : f32 to vector<2x16xf32>
    %1465 = arith.mulf %1417, %1464 : vector<2x16xf32>
    %1466 = arith.addf %1462, %1465 : vector<2x16xf32>
    %c267 = arith.constant 267 : index
    %1467 = memref.load %arg0[%c267] : memref<294xf32, #tpu.memory_space<smem>>
    %1468 = vector.broadcast %1467 : f32 to vector<2x16xf32>
    %1469 = arith.mulf %1168, %1468 : vector<2x16xf32>
    %1470 = arith.addf %1466, %1469 : vector<2x16xf32>
    %c268 = arith.constant 268 : index
    %1471 = memref.load %arg0[%c268] : memref<294xf32, #tpu.memory_space<smem>>
    %1472 = vector.broadcast %1471 : f32 to vector<2x16xf32>
    %1473 = arith.mulf %1419, %1472 : vector<2x16xf32>
    %1474 = arith.addf %1470, %1473 : vector<2x16xf32>
    %c270 = arith.constant 270 : index
    %1475 = memref.load %arg0[%c270] : memref<294xf32, #tpu.memory_space<smem>>
    %1476 = vector.broadcast %1475 : f32 to vector<2x16xf32>
    %1477 = arith.addf %1474, %1476 : vector<2x16xf32>
    %1478 = arith.negf %1477 : vector<2x16xf32>
    %1479 = math.exp %1478 : vector<2x16xf32>
    %cst_136 = arith.constant 1.000000e+00 : f32
    %1480 = vector.broadcast %cst_136 : f32 to vector<2x16xf32>
    %1481 = arith.addf %1480, %1479 : vector<2x16xf32>
    %1482 = arith.divf %1480, %1481 : vector<2x16xf32>
    %1483 = arith.mulf %1477, %1482 : vector<2x16xf32>
    %1484 = arith.addf %1272, %1451 : vector<2x16xf32>
    %1485 = arith.addf %1168, %1483 : vector<2x16xf32>
    %cst_137 = arith.constant 0.000000e+00 : f32
    %1486 = vector.broadcast %cst_137 : f32 to vector<2x1xf32>
    %1487 = vector.extract_strided_slice %1484 {offsets = [0, 0], sizes = [2, 15], strides = [1, 1]} : vector<2x16xf32> to vector<2x15xf32>
    %1488 = tpu.concatenate %1486, %1487 in 1 : vector<2x1xf32>, vector<2x15xf32> -> vector<2x16xf32>
    %1489 = vector.extract_strided_slice %1484 {offsets = [0, 1], sizes = [2, 15], strides = [1, 1]} : vector<2x16xf32> to vector<2x15xf32>
    %1490 = tpu.concatenate %1489, %1486 in 1 : vector<2x15xf32>, vector<2x1xf32> -> vector<2x16xf32>
    %cst_138 = arith.constant 0.000000e+00 : f32
    %1491 = vector.broadcast %cst_138 : f32 to vector<2x1xf32>
    %1492 = vector.extract_strided_slice %1485 {offsets = [0, 0], sizes = [2, 15], strides = [1, 1]} : vector<2x16xf32> to vector<2x15xf32>
    %1493 = tpu.concatenate %1491, %1492 in 1 : vector<2x1xf32>, vector<2x15xf32> -> vector<2x16xf32>
    %1494 = vector.extract_strided_slice %1485 {offsets = [0, 1], sizes = [2, 15], strides = [1, 1]} : vector<2x16xf32> to vector<2x15xf32>
    %1495 = tpu.concatenate %1494, %1491 in 1 : vector<2x15xf32>, vector<2x1xf32> -> vector<2x16xf32>
    %c271 = arith.constant 271 : index
    %1496 = memref.load %arg0[%c271] : memref<294xf32, #tpu.memory_space<smem>>
    %1497 = vector.broadcast %1496 : f32 to vector<2x16xf32>
    %1498 = arith.mulf %1488, %1497 : vector<2x16xf32>
    %c272 = arith.constant 272 : index
    %1499 = memref.load %arg0[%c272] : memref<294xf32, #tpu.memory_space<smem>>
    %1500 = vector.broadcast %1499 : f32 to vector<2x16xf32>
    %1501 = arith.mulf %1484, %1500 : vector<2x16xf32>
    %1502 = arith.addf %1498, %1501 : vector<2x16xf32>
    %c273 = arith.constant 273 : index
    %1503 = memref.load %arg0[%c273] : memref<294xf32, #tpu.memory_space<smem>>
    %1504 = vector.broadcast %1503 : f32 to vector<2x16xf32>
    %1505 = arith.mulf %1490, %1504 : vector<2x16xf32>
    %1506 = arith.addf %1502, %1505 : vector<2x16xf32>
    %c274 = arith.constant 274 : index
    %1507 = memref.load %arg0[%c274] : memref<294xf32, #tpu.memory_space<smem>>
    %1508 = vector.broadcast %1507 : f32 to vector<2x16xf32>
    %1509 = arith.mulf %1493, %1508 : vector<2x16xf32>
    %1510 = arith.addf %1506, %1509 : vector<2x16xf32>
    %c275 = arith.constant 275 : index
    %1511 = memref.load %arg0[%c275] : memref<294xf32, #tpu.memory_space<smem>>
    %1512 = vector.broadcast %1511 : f32 to vector<2x16xf32>
    %1513 = arith.mulf %1485, %1512 : vector<2x16xf32>
    %1514 = arith.addf %1510, %1513 : vector<2x16xf32>
    %c276 = arith.constant 276 : index
    %1515 = memref.load %arg0[%c276] : memref<294xf32, #tpu.memory_space<smem>>
    %1516 = vector.broadcast %1515 : f32 to vector<2x16xf32>
    %1517 = arith.mulf %1495, %1516 : vector<2x16xf32>
    %1518 = arith.addf %1514, %1517 : vector<2x16xf32>
    %c277 = arith.constant 277 : index
    %1519 = memref.load %arg0[%c277] : memref<294xf32, #tpu.memory_space<smem>>
    %1520 = vector.broadcast %1519 : f32 to vector<2x16xf32>
    %1521 = arith.addf %1518, %1520 : vector<2x16xf32>
    %1522 = arith.negf %1521 : vector<2x16xf32>
    %1523 = math.exp %1522 : vector<2x16xf32>
    %cst_139 = arith.constant 1.000000e+00 : f32
    %1524 = vector.broadcast %cst_139 : f32 to vector<2x16xf32>
    %1525 = arith.addf %1524, %1523 : vector<2x16xf32>
    %1526 = arith.divf %1524, %1525 : vector<2x16xf32>
    %1527 = arith.mulf %1521, %1526 : vector<2x16xf32>
    %cst_140 = arith.constant 0.000000e+00 : f32
    %1528 = vector.broadcast %cst_140 : f32 to vector<2x1xf32>
    %1529 = vector.extract_strided_slice %1527 {offsets = [0, 0], sizes = [2, 15], strides = [1, 1]} : vector<2x16xf32> to vector<2x15xf32>
    %1530 = tpu.concatenate %1528, %1529 in 1 : vector<2x1xf32>, vector<2x15xf32> -> vector<2x16xf32>
    %1531 = vector.extract_strided_slice %1527 {offsets = [0, 1], sizes = [2, 15], strides = [1, 1]} : vector<2x16xf32> to vector<2x15xf32>
    %1532 = tpu.concatenate %1531, %1528 in 1 : vector<2x15xf32>, vector<2x1xf32> -> vector<2x16xf32>
    %c278 = arith.constant 278 : index
    %1533 = memref.load %arg0[%c278] : memref<294xf32, #tpu.memory_space<smem>>
    %1534 = vector.broadcast %1533 : f32 to vector<2x16xf32>
    %1535 = arith.mulf %1530, %1534 : vector<2x16xf32>
    %c279 = arith.constant 279 : index
    %1536 = memref.load %arg0[%c279] : memref<294xf32, #tpu.memory_space<smem>>
    %1537 = vector.broadcast %1536 : f32 to vector<2x16xf32>
    %1538 = arith.mulf %1527, %1537 : vector<2x16xf32>
    %1539 = arith.addf %1535, %1538 : vector<2x16xf32>
    %c280 = arith.constant 280 : index
    %1540 = memref.load %arg0[%c280] : memref<294xf32, #tpu.memory_space<smem>>
    %1541 = vector.broadcast %1540 : f32 to vector<2x16xf32>
    %1542 = arith.mulf %1532, %1541 : vector<2x16xf32>
    %1543 = arith.addf %1539, %1542 : vector<2x16xf32>
    %c281 = arith.constant 281 : index
    %1544 = memref.load %arg0[%c281] : memref<294xf32, #tpu.memory_space<smem>>
    %1545 = vector.broadcast %1544 : f32 to vector<2x16xf32>
    %1546 = arith.addf %1543, %1545 : vector<2x16xf32>
    %1547 = math.exp %1270 : vector<2x16xf32>
    %cst_141 = arith.constant 1.000000e+00 : f32
    %1548 = vector.broadcast %cst_141 : f32 to vector<2x16xf32>
    %1549 = arith.addf %1548, %1546 : vector<2x16xf32>
    %1550 = arith.mulf %1409, %1409 : vector<2x16xf32>
    %1551 = arith.divf %1550, %1547 : vector<2x16xf32>
    %1552 = arith.subf %1549, %1551 : vector<2x16xf32>
    %1553 = math.exp %1546 : vector<2x16xf32>
    %1554 = arith.subf %1552, %1553 : vector<2x16xf32>
    %cst_142 = arith.constant dense<0.000000e+00> : vector<2xf32>
    %1555 = vector.multi_reduction <add>, %1554, %cst_142 [1] : vector<2x16xf32> to vector<2xf32>
    %1556 = vector.shape_cast %1555 : vector<2xf32> to vector<2x1xf32>
    %cst_143 = arith.constant -5.000000e-01 : f32
    %1557 = vector.broadcast %cst_143 : f32 to vector<2x1xf32>
    %1558 = arith.mulf %1557, %1556 : vector<2x1xf32>
    %cst_144 = arith.constant dense<0.000000e+00> : vector<1xf32>
    %1559 = vector.multi_reduction <add>, %1558, %cst_144 [0] : vector<2x1xf32> to vector<1xf32>
    %1560 = vector.shape_cast %1559 : vector<1xf32> to vector<1x1xf32>
    %cst_145 = arith.constant 2.000000e+00 : f32
    %1561 = vector.broadcast %cst_145 : f32 to vector<1x1xf32>
    %1562 = arith.divf %1560, %1561 : vector<1x1xf32>
    %1563 = arith.addf %1219, %1409 : vector<2x16xf32>
    %1564 = arith.addf %1270, %1546 : vector<2x16xf32>
    %cst_146 = arith.constant 5.000000e-01 : f32
    %1565 = vector.broadcast %cst_146 : f32 to vector<2x16xf32>
    %1566 = arith.mulf %1565, %1564 : vector<2x16xf32>
    %1567 = math.exp %1566 : vector<2x16xf32>
    %c0_147 = arith.constant 0 : index
    %c0_148 = arith.constant 0 : index
    %c0_149 = arith.constant 0 : index
    %1568 = vector.load %arg7[%c0_147, %c0_148, %c0_149] : memref<1x2x16xf32, #tpu.memory_space<vmem>>, vector<1x2x16xf32>
    %1569 = vector.shape_cast %1568 : vector<1x2x16xf32> to vector<2x16xf32>
    %1570 = arith.mulf %1567, %1569 : vector<2x16xf32>
    %1571 = arith.addf %1563, %1570 : vector<2x16xf32>
    %c0_150 = arith.constant 0 : index
    %c0_151 = arith.constant 0 : index
    %1572 = vector.load %arg13[%c0_150, %c0_151] : memref<16x32xf32, #tpu.memory_space<vmem>>, vector<16x32xf32>
    %cst_152 = arith.constant dense<0.000000e+00> : vector<2x32xf32>
    %1573 = tpu.matmul %1168, %1572, %cst_152 {dimension_numbers = #tpu.dot_dimension_numbers<[1], [0], [0], [1], [0, 0, 1, 1], [], []>} : vector<2x16xf32>, vector<16x32xf32>, vector<2x32xf32> -> vector<2x32xf32>
    %c0_153 = arith.constant 0 : index
    %c0_154 = arith.constant 0 : index
    %1574 = vector.load %arg13[%c0_153, %c0_154] : memref<16x32xf32, #tpu.memory_space<vmem>>, vector<16x32xf32>
    %cst_155 = arith.constant dense<0.000000e+00> : vector<2x32xf32>
    %1575 = tpu.matmul %1571, %1574, %cst_155 {dimension_numbers = #tpu.dot_dimension_numbers<[1], [0], [0], [1], [0, 0, 1, 1], [], []>} : vector<2x16xf32>, vector<16x32xf32>, vector<2x32xf32> -> vector<2x32xf32>
    %cst_156 = arith.constant 0.000000e+00 : f32
    %1576 = vector.broadcast %cst_156 : f32 to vector<2x1xf32>
    %1577 = vector.extract_strided_slice %1573 {offsets = [0, 0], sizes = [2, 31], strides = [1, 1]} : vector<2x32xf32> to vector<2x31xf32>
    %1578 = tpu.concatenate %1576, %1577 in 1 : vector<2x1xf32>, vector<2x31xf32> -> vector<2x32xf32>
    %1579 = vector.extract_strided_slice %1573 {offsets = [0, 1], sizes = [2, 31], strides = [1, 1]} : vector<2x32xf32> to vector<2x31xf32>
    %1580 = tpu.concatenate %1579, %1576 in 1 : vector<2x31xf32>, vector<2x1xf32> -> vector<2x32xf32>
    %cst_157 = arith.constant 0.000000e+00 : f32
    %1581 = vector.broadcast %cst_157 : f32 to vector<2x1xf32>
    %1582 = vector.extract_strided_slice %1575 {offsets = [0, 0], sizes = [2, 31], strides = [1, 1]} : vector<2x32xf32> to vector<2x31xf32>
    %1583 = tpu.concatenate %1581, %1582 in 1 : vector<2x1xf32>, vector<2x31xf32> -> vector<2x32xf32>
    %1584 = vector.extract_strided_slice %1575 {offsets = [0, 1], sizes = [2, 31], strides = [1, 1]} : vector<2x32xf32> to vector<2x31xf32>
    %1585 = tpu.concatenate %1584, %1581 in 1 : vector<2x31xf32>, vector<2x1xf32> -> vector<2x32xf32>
    %c63 = arith.constant 63 : index
    %1586 = memref.load %arg0[%c63] : memref<294xf32, #tpu.memory_space<smem>>
    %1587 = vector.broadcast %1586 : f32 to vector<2x32xf32>
    %1588 = arith.mulf %1578, %1587 : vector<2x32xf32>
    %c64 = arith.constant 64 : index
    %1589 = memref.load %arg0[%c64] : memref<294xf32, #tpu.memory_space<smem>>
    %1590 = vector.broadcast %1589 : f32 to vector<2x32xf32>
    %1591 = arith.mulf %1573, %1590 : vector<2x32xf32>
    %1592 = arith.addf %1588, %1591 : vector<2x32xf32>
    %c65 = arith.constant 65 : index
    %1593 = memref.load %arg0[%c65] : memref<294xf32, #tpu.memory_space<smem>>
    %1594 = vector.broadcast %1593 : f32 to vector<2x32xf32>
    %1595 = arith.mulf %1580, %1594 : vector<2x32xf32>
    %1596 = arith.addf %1592, %1595 : vector<2x32xf32>
    %c66 = arith.constant 66 : index
    %1597 = memref.load %arg0[%c66] : memref<294xf32, #tpu.memory_space<smem>>
    %1598 = vector.broadcast %1597 : f32 to vector<2x32xf32>
    %1599 = arith.mulf %1583, %1598 : vector<2x32xf32>
    %1600 = arith.addf %1596, %1599 : vector<2x32xf32>
    %c67 = arith.constant 67 : index
    %1601 = memref.load %arg0[%c67] : memref<294xf32, #tpu.memory_space<smem>>
    %1602 = vector.broadcast %1601 : f32 to vector<2x32xf32>
    %1603 = arith.mulf %1575, %1602 : vector<2x32xf32>
    %1604 = arith.addf %1600, %1603 : vector<2x32xf32>
    %c68 = arith.constant 68 : index
    %1605 = memref.load %arg0[%c68] : memref<294xf32, #tpu.memory_space<smem>>
    %1606 = vector.broadcast %1605 : f32 to vector<2x32xf32>
    %1607 = arith.mulf %1585, %1606 : vector<2x32xf32>
    %1608 = arith.addf %1604, %1607 : vector<2x32xf32>
    %c75 = arith.constant 75 : index
    %1609 = memref.load %arg0[%c75] : memref<294xf32, #tpu.memory_space<smem>>
    %1610 = vector.broadcast %1609 : f32 to vector<2x32xf32>
    %1611 = arith.addf %1608, %1610 : vector<2x32xf32>
    %1612 = arith.negf %1611 : vector<2x32xf32>
    %1613 = math.exp %1612 : vector<2x32xf32>
    %cst_158 = arith.constant 1.000000e+00 : f32
    %1614 = vector.broadcast %cst_158 : f32 to vector<2x32xf32>
    %1615 = arith.addf %1614, %1613 : vector<2x32xf32>
    %1616 = arith.divf %1614, %1615 : vector<2x32xf32>
    %1617 = arith.mulf %1611, %1616 : vector<2x32xf32>
    %c69 = arith.constant 69 : index
    %1618 = memref.load %arg0[%c69] : memref<294xf32, #tpu.memory_space<smem>>
    %1619 = vector.broadcast %1618 : f32 to vector<2x32xf32>
    %1620 = arith.mulf %1578, %1619 : vector<2x32xf32>
    %c70 = arith.constant 70 : index
    %1621 = memref.load %arg0[%c70] : memref<294xf32, #tpu.memory_space<smem>>
    %1622 = vector.broadcast %1621 : f32 to vector<2x32xf32>
    %1623 = arith.mulf %1573, %1622 : vector<2x32xf32>
    %1624 = arith.addf %1620, %1623 : vector<2x32xf32>
    %c71 = arith.constant 71 : index
    %1625 = memref.load %arg0[%c71] : memref<294xf32, #tpu.memory_space<smem>>
    %1626 = vector.broadcast %1625 : f32 to vector<2x32xf32>
    %1627 = arith.mulf %1580, %1626 : vector<2x32xf32>
    %1628 = arith.addf %1624, %1627 : vector<2x32xf32>
    %c72 = arith.constant 72 : index
    %1629 = memref.load %arg0[%c72] : memref<294xf32, #tpu.memory_space<smem>>
    %1630 = vector.broadcast %1629 : f32 to vector<2x32xf32>
    %1631 = arith.mulf %1583, %1630 : vector<2x32xf32>
    %1632 = arith.addf %1628, %1631 : vector<2x32xf32>
    %c73 = arith.constant 73 : index
    %1633 = memref.load %arg0[%c73] : memref<294xf32, #tpu.memory_space<smem>>
    %1634 = vector.broadcast %1633 : f32 to vector<2x32xf32>
    %1635 = arith.mulf %1575, %1634 : vector<2x32xf32>
    %1636 = arith.addf %1632, %1635 : vector<2x32xf32>
    %c74 = arith.constant 74 : index
    %1637 = memref.load %arg0[%c74] : memref<294xf32, #tpu.memory_space<smem>>
    %1638 = vector.broadcast %1637 : f32 to vector<2x32xf32>
    %1639 = arith.mulf %1585, %1638 : vector<2x32xf32>
    %1640 = arith.addf %1636, %1639 : vector<2x32xf32>
    %c76 = arith.constant 76 : index
    %1641 = memref.load %arg0[%c76] : memref<294xf32, #tpu.memory_space<smem>>
    %1642 = vector.broadcast %1641 : f32 to vector<2x32xf32>
    %1643 = arith.addf %1640, %1642 : vector<2x32xf32>
    %1644 = arith.negf %1643 : vector<2x32xf32>
    %1645 = math.exp %1644 : vector<2x32xf32>
    %cst_159 = arith.constant 1.000000e+00 : f32
    %1646 = vector.broadcast %cst_159 : f32 to vector<2x32xf32>
    %1647 = arith.addf %1646, %1645 : vector<2x32xf32>
    %1648 = arith.divf %1646, %1647 : vector<2x32xf32>
    %1649 = arith.mulf %1643, %1648 : vector<2x32xf32>
    %cst_160 = arith.constant 0.000000e+00 : f32
    %1650 = vector.broadcast %cst_160 : f32 to vector<2x1xf32>
    %1651 = vector.extract_strided_slice %1617 {offsets = [0, 0], sizes = [2, 31], strides = [1, 1]} : vector<2x32xf32> to vector<2x31xf32>
    %1652 = tpu.concatenate %1650, %1651 in 1 : vector<2x1xf32>, vector<2x31xf32> -> vector<2x32xf32>
    %1653 = vector.extract_strided_slice %1617 {offsets = [0, 1], sizes = [2, 31], strides = [1, 1]} : vector<2x32xf32> to vector<2x31xf32>
    %1654 = tpu.concatenate %1653, %1650 in 1 : vector<2x31xf32>, vector<2x1xf32> -> vector<2x32xf32>
    %cst_161 = arith.constant 0.000000e+00 : f32
    %1655 = vector.broadcast %cst_161 : f32 to vector<2x1xf32>
    %1656 = vector.extract_strided_slice %1649 {offsets = [0, 0], sizes = [2, 31], strides = [1, 1]} : vector<2x32xf32> to vector<2x31xf32>
    %1657 = tpu.concatenate %1655, %1656 in 1 : vector<2x1xf32>, vector<2x31xf32> -> vector<2x32xf32>
    %1658 = vector.extract_strided_slice %1649 {offsets = [0, 1], sizes = [2, 31], strides = [1, 1]} : vector<2x32xf32> to vector<2x31xf32>
    %1659 = tpu.concatenate %1658, %1655 in 1 : vector<2x31xf32>, vector<2x1xf32> -> vector<2x32xf32>
    %c77 = arith.constant 77 : index
    %1660 = memref.load %arg0[%c77] : memref<294xf32, #tpu.memory_space<smem>>
    %1661 = vector.broadcast %1660 : f32 to vector<2x32xf32>
    %1662 = arith.mulf %1652, %1661 : vector<2x32xf32>
    %c78 = arith.constant 78 : index
    %1663 = memref.load %arg0[%c78] : memref<294xf32, #tpu.memory_space<smem>>
    %1664 = vector.broadcast %1663 : f32 to vector<2x32xf32>
    %1665 = arith.mulf %1617, %1664 : vector<2x32xf32>
    %1666 = arith.addf %1662, %1665 : vector<2x32xf32>
    %c79 = arith.constant 79 : index
    %1667 = memref.load %arg0[%c79] : memref<294xf32, #tpu.memory_space<smem>>
    %1668 = vector.broadcast %1667 : f32 to vector<2x32xf32>
    %1669 = arith.mulf %1654, %1668 : vector<2x32xf32>
    %1670 = arith.addf %1666, %1669 : vector<2x32xf32>
    %c80 = arith.constant 80 : index
    %1671 = memref.load %arg0[%c80] : memref<294xf32, #tpu.memory_space<smem>>
    %1672 = vector.broadcast %1671 : f32 to vector<2x32xf32>
    %1673 = arith.mulf %1657, %1672 : vector<2x32xf32>
    %1674 = arith.addf %1670, %1673 : vector<2x32xf32>
    %c81 = arith.constant 81 : index
    %1675 = memref.load %arg0[%c81] : memref<294xf32, #tpu.memory_space<smem>>
    %1676 = vector.broadcast %1675 : f32 to vector<2x32xf32>
    %1677 = arith.mulf %1649, %1676 : vector<2x32xf32>
    %1678 = arith.addf %1674, %1677 : vector<2x32xf32>
    %c82 = arith.constant 82 : index
    %1679 = memref.load %arg0[%c82] : memref<294xf32, #tpu.memory_space<smem>>
    %1680 = vector.broadcast %1679 : f32 to vector<2x32xf32>
    %1681 = arith.mulf %1659, %1680 : vector<2x32xf32>
    %1682 = arith.addf %1678, %1681 : vector<2x32xf32>
    %c83 = arith.constant 83 : index
    %1683 = memref.load %arg0[%c83] : memref<294xf32, #tpu.memory_space<smem>>
    %1684 = vector.broadcast %1683 : f32 to vector<2x32xf32>
    %1685 = arith.addf %1682, %1684 : vector<2x32xf32>
    %1686 = arith.negf %1685 : vector<2x32xf32>
    %1687 = math.exp %1686 : vector<2x32xf32>
    %cst_162 = arith.constant 1.000000e+00 : f32
    %1688 = vector.broadcast %cst_162 : f32 to vector<2x32xf32>
    %1689 = arith.addf %1688, %1687 : vector<2x32xf32>
    %1690 = arith.divf %1688, %1689 : vector<2x32xf32>
    %1691 = arith.mulf %1685, %1690 : vector<2x32xf32>
    %cst_163 = arith.constant 0.000000e+00 : f32
    %1692 = vector.broadcast %cst_163 : f32 to vector<2x1xf32>
    %1693 = vector.extract_strided_slice %1691 {offsets = [0, 0], sizes = [2, 31], strides = [1, 1]} : vector<2x32xf32> to vector<2x31xf32>
    %1694 = tpu.concatenate %1692, %1693 in 1 : vector<2x1xf32>, vector<2x31xf32> -> vector<2x32xf32>
    %1695 = vector.extract_strided_slice %1691 {offsets = [0, 1], sizes = [2, 31], strides = [1, 1]} : vector<2x32xf32> to vector<2x31xf32>
    %1696 = tpu.concatenate %1695, %1692 in 1 : vector<2x31xf32>, vector<2x1xf32> -> vector<2x32xf32>
    %c282 = arith.constant 282 : index
    %1697 = memref.load %arg0[%c282] : memref<294xf32, #tpu.memory_space<smem>>
    %1698 = vector.broadcast %1697 : f32 to vector<2x32xf32>
    %1699 = arith.mulf %1694, %1698 : vector<2x32xf32>
    %c283 = arith.constant 283 : index
    %1700 = memref.load %arg0[%c283] : memref<294xf32, #tpu.memory_space<smem>>
    %1701 = vector.broadcast %1700 : f32 to vector<2x32xf32>
    %1702 = arith.mulf %1691, %1701 : vector<2x32xf32>
    %1703 = arith.addf %1699, %1702 : vector<2x32xf32>
    %c284 = arith.constant 284 : index
    %1704 = memref.load %arg0[%c284] : memref<294xf32, #tpu.memory_space<smem>>
    %1705 = vector.broadcast %1704 : f32 to vector<2x32xf32>
    %1706 = arith.mulf %1696, %1705 : vector<2x32xf32>
    %1707 = arith.addf %1703, %1706 : vector<2x32xf32>
    %c285 = arith.constant 285 : index
    %1708 = memref.load %arg0[%c285] : memref<294xf32, #tpu.memory_space<smem>>
    %1709 = vector.broadcast %1708 : f32 to vector<2x32xf32>
    %1710 = arith.addf %1707, %1709 : vector<2x32xf32>
    %1711 = arith.negf %1710 : vector<2x32xf32>
    %1712 = math.exp %1711 : vector<2x32xf32>
    %cst_164 = arith.constant 1.000000e+00 : f32
    %1713 = vector.broadcast %cst_164 : f32 to vector<2x32xf32>
    %1714 = arith.addf %1713, %1712 : vector<2x32xf32>
    %1715 = arith.divf %1713, %1714 : vector<2x32xf32>
    %1716 = arith.mulf %1710, %1715 : vector<2x32xf32>
    %1717 = arith.addf %1691, %1716 : vector<2x32xf32>
    %cst_165 = arith.constant 0.000000e+00 : f32
    %1718 = vector.broadcast %cst_165 : f32 to vector<2x1xf32>
    %1719 = vector.extract_strided_slice %1717 {offsets = [0, 0], sizes = [2, 31], strides = [1, 1]} : vector<2x32xf32> to vector<2x31xf32>
    %1720 = tpu.concatenate %1718, %1719 in 1 : vector<2x1xf32>, vector<2x31xf32> -> vector<2x32xf32>
    %1721 = vector.extract_strided_slice %1717 {offsets = [0, 1], sizes = [2, 31], strides = [1, 1]} : vector<2x32xf32> to vector<2x31xf32>
    %1722 = tpu.concatenate %1721, %1718 in 1 : vector<2x31xf32>, vector<2x1xf32> -> vector<2x32xf32>
    %c286 = arith.constant 286 : index
    %1723 = memref.load %arg0[%c286] : memref<294xf32, #tpu.memory_space<smem>>
    %1724 = vector.broadcast %1723 : f32 to vector<2x32xf32>
    %1725 = arith.mulf %1720, %1724 : vector<2x32xf32>
    %c287 = arith.constant 287 : index
    %1726 = memref.load %arg0[%c287] : memref<294xf32, #tpu.memory_space<smem>>
    %1727 = vector.broadcast %1726 : f32 to vector<2x32xf32>
    %1728 = arith.mulf %1717, %1727 : vector<2x32xf32>
    %1729 = arith.addf %1725, %1728 : vector<2x32xf32>
    %c288 = arith.constant 288 : index
    %1730 = memref.load %arg0[%c288] : memref<294xf32, #tpu.memory_space<smem>>
    %1731 = vector.broadcast %1730 : f32 to vector<2x32xf32>
    %1732 = arith.mulf %1722, %1731 : vector<2x32xf32>
    %1733 = arith.addf %1729, %1732 : vector<2x32xf32>
    %c289 = arith.constant 289 : index
    %1734 = memref.load %arg0[%c289] : memref<294xf32, #tpu.memory_space<smem>>
    %1735 = vector.broadcast %1734 : f32 to vector<2x32xf32>
    %1736 = arith.addf %1733, %1735 : vector<2x32xf32>
    %1737 = arith.negf %1736 : vector<2x32xf32>
    %1738 = math.exp %1737 : vector<2x32xf32>
    %cst_166 = arith.constant 1.000000e+00 : f32
    %1739 = vector.broadcast %cst_166 : f32 to vector<2x32xf32>
    %1740 = arith.addf %1739, %1738 : vector<2x32xf32>
    %1741 = arith.divf %1739, %1740 : vector<2x32xf32>
    %1742 = arith.mulf %1736, %1741 : vector<2x32xf32>
    %cst_167 = arith.constant 0.000000e+00 : f32
    %1743 = vector.broadcast %cst_167 : f32 to vector<2x1xf32>
    %1744 = vector.extract_strided_slice %1742 {offsets = [0, 0], sizes = [2, 31], strides = [1, 1]} : vector<2x32xf32> to vector<2x31xf32>
    %1745 = tpu.concatenate %1743, %1744 in 1 : vector<2x1xf32>, vector<2x31xf32> -> vector<2x32xf32>
    %1746 = vector.extract_strided_slice %1742 {offsets = [0, 1], sizes = [2, 31], strides = [1, 1]} : vector<2x32xf32> to vector<2x31xf32>
    %1747 = tpu.concatenate %1746, %1743 in 1 : vector<2x31xf32>, vector<2x1xf32> -> vector<2x32xf32>
    %c290 = arith.constant 290 : index
    %1748 = memref.load %arg0[%c290] : memref<294xf32, #tpu.memory_space<smem>>
    %1749 = vector.broadcast %1748 : f32 to vector<2x32xf32>
    %1750 = arith.mulf %1745, %1749 : vector<2x32xf32>
    %c291 = arith.constant 291 : index
    %1751 = memref.load %arg0[%c291] : memref<294xf32, #tpu.memory_space<smem>>
    %1752 = vector.broadcast %1751 : f32 to vector<2x32xf32>
    %1753 = arith.mulf %1742, %1752 : vector<2x32xf32>
    %1754 = arith.addf %1750, %1753 : vector<2x32xf32>
    %c292 = arith.constant 292 : index
    %1755 = memref.load %arg0[%c292] : memref<294xf32, #tpu.memory_space<smem>>
    %1756 = vector.broadcast %1755 : f32 to vector<2x32xf32>
    %1757 = arith.mulf %1747, %1756 : vector<2x32xf32>
    %1758 = arith.addf %1754, %1757 : vector<2x32xf32>
    %c293 = arith.constant 293 : index
    %1759 = memref.load %arg0[%c293] : memref<294xf32, #tpu.memory_space<smem>>
    %1760 = vector.broadcast %1759 : f32 to vector<2x32xf32>
    %1761 = arith.addf %1758, %1760 : vector<2x32xf32>
    %c0_168 = arith.constant 0 : index
    %c0_169 = arith.constant 0 : index
    %c0_170 = arith.constant 0 : index
    %1762 = vector.load %arg8[%c0_168, %c0_169, %c0_170] : memref<1x2x32xf32, #tpu.memory_space<vmem>>, vector<1x2x32xf32>
    %1763 = vector.shape_cast %1762 : vector<1x2x32xf32> to vector<2x32xf32>
    %1764 = arith.negf %1761 : vector<2x32xf32>
    %1765 = math.exp %1764 : vector<2x32xf32>
    %cst_171 = arith.constant 1.000000e+00 : f32
    %1766 = vector.broadcast %cst_171 : f32 to vector<2x32xf32>
    %1767 = arith.addf %1766, %1765 : vector<2x32xf32>
    %1768 = arith.divf %1766, %1767 : vector<2x32xf32>
    %1769 = math.log %1768 : vector<2x32xf32>
    %cst_172 = arith.constant -1.000000e+02 : f32
    %1770 = vector.broadcast %cst_172 : f32 to vector<2x32xf32>
    %1771 = arith.maximumf %1769, %1770 : vector<2x32xf32>
    %cst_173 = arith.constant 1.000000e+00 : f32
    %1772 = vector.broadcast %cst_173 : f32 to vector<2x32xf32>
    %1773 = arith.subf %1772, %1768 : vector<2x32xf32>
    %1774 = math.log %1773 : vector<2x32xf32>
    %cst_174 = arith.constant -1.000000e+02 : f32
    %1775 = vector.broadcast %cst_174 : f32 to vector<2x32xf32>
    %1776 = arith.maximumf %1774, %1775 : vector<2x32xf32>
    %1777 = arith.mulf %1763, %1771 : vector<2x32xf32>
    %cst_175 = arith.constant 1.000000e+00 : f32
    %1778 = vector.broadcast %cst_175 : f32 to vector<2x32xf32>
    %1779 = arith.subf %1778, %1763 : vector<2x32xf32>
    %1780 = arith.mulf %1779, %1776 : vector<2x32xf32>
    %1781 = arith.addf %1777, %1780 : vector<2x32xf32>
    %cst_176 = arith.constant 0.000000e+00 : f32
    %1782 = vector.broadcast %cst_176 : f32 to vector<2x32xf32>
    %1783 = arith.subf %1782, %1781 : vector<2x32xf32>
    %cst_177 = arith.constant dense<0.000000e+00> : vector<2xf32>
    %1784 = vector.multi_reduction <add>, %1783, %cst_177 [1] : vector<2x32xf32> to vector<2xf32>
    %1785 = vector.shape_cast %1784 : vector<2xf32> to vector<2x1xf32>
    %1786 = arith.subf %1761, %1763 : vector<2x32xf32>
    %1787 = arith.mulf %1786, %1786 : vector<2x32xf32>
    %cst_178 = arith.constant dense<0.000000e+00> : vector<2xf32>
    %1788 = vector.multi_reduction <add>, %1787, %cst_178 [1] : vector<2x32xf32> to vector<2xf32>
    %1789 = vector.shape_cast %1788 : vector<2xf32> to vector<2x1xf32>
    %1790 = math.absf %1786 : vector<2x32xf32>
    %cst_179 = arith.constant dense<0.000000e+00> : vector<2xf32>
    %1791 = vector.multi_reduction <add>, %1790, %cst_179 [1] : vector<2x32xf32> to vector<2xf32>
    %1792 = vector.shape_cast %1791 : vector<2xf32> to vector<2x1xf32>
    %1793 = arith.mulf %1761, %1763 : vector<2x32xf32>
    %1794 = arith.mulf %1761, %1761 : vector<2x32xf32>
    %1795 = arith.mulf %1763, %1763 : vector<2x32xf32>
    %cst_180 = arith.constant 3.200000e+01 : f32
    %1796 = vector.broadcast %cst_180 : f32 to vector<2x1xf32>
    %1797 = arith.divf %1785, %1796 : vector<2x1xf32>
    %1798 = arith.mulf %1797, %1797 : vector<2x1xf32>
    %cst_181 = arith.constant 1.000000e+00 : f32
    %1799 = vector.broadcast %cst_181 : f32 to vector<2x1xf32>
    %1800 = arith.addf %1798, %1799 : vector<2x1xf32>
    %1801 = math.sqrt %1800 : vector<2x1xf32>
    %cst_182 = arith.constant 1.000000e+00 : f32
    %1802 = vector.broadcast %cst_182 : f32 to vector<2x1xf32>
    %1803 = arith.subf %1801, %1802 : vector<2x1xf32>
    %cst_183 = arith.constant dense<0.000000e+00> : vector<1xf32>
    %1804 = vector.multi_reduction <add>, %1803, %cst_183 [0] : vector<2x1xf32> to vector<1xf32>
    %1805 = vector.shape_cast %1804 : vector<1xf32> to vector<1x1xf32>
    %cst_184 = arith.constant 2.000000e+00 : f32
    %1806 = vector.broadcast %cst_184 : f32 to vector<1x1xf32>
    %1807 = arith.divf %1805, %1806 : vector<1x1xf32>
    %cst_185 = arith.constant dense<0.000000e+00> : vector<1xf32>
    %1808 = vector.multi_reduction <add>, %1789, %cst_185 [0] : vector<2x1xf32> to vector<1xf32>
    %1809 = vector.shape_cast %1808 : vector<1xf32> to vector<1x1xf32>
    %cst_186 = arith.constant 6.400000e+01 : f32
    %1810 = vector.broadcast %cst_186 : f32 to vector<1x1xf32>
    %1811 = arith.divf %1809, %1810 : vector<1x1xf32>
    %cst_187 = arith.constant dense<0.000000e+00> : vector<1xf32>
    %1812 = vector.multi_reduction <add>, %1792, %cst_187 [0] : vector<2x1xf32> to vector<1xf32>
    %1813 = vector.shape_cast %1812 : vector<1xf32> to vector<1x1xf32>
    %cst_188 = arith.constant 6.400000e+01 : f32
    %1814 = vector.broadcast %cst_188 : f32 to vector<1x1xf32>
    %1815 = arith.divf %1813, %1814 : vector<1x1xf32>
    %1816 = math.sqrt %1794 : vector<2x32xf32>
    %1817 = math.sqrt %1795 : vector<2x32xf32>
    %1818 = arith.mulf %1816, %1817 : vector<2x32xf32>
    %cst_189 = arith.constant 9.99999993E-9 : f32
    %1819 = vector.broadcast %cst_189 : f32 to vector<2x32xf32>
    %1820 = arith.maximumf %1818, %1819 : vector<2x32xf32>
    %1821 = arith.divf %1793, %1820 : vector<2x32xf32>
    %cst_190 = arith.constant dense<0.000000e+00> : vector<2xf32>
    %1822 = vector.multi_reduction <add>, %1821, %cst_190 [1] : vector<2x32xf32> to vector<2xf32>
    %1823 = vector.shape_cast %1822 : vector<2xf32> to vector<2x1xf32>
    %cst_191 = arith.constant dense<0.000000e+00> : vector<1xf32>
    %1824 = vector.multi_reduction <add>, %1823, %cst_191 [0] : vector<2x1xf32> to vector<1xf32>
    %1825 = vector.shape_cast %1824 : vector<1xf32> to vector<1x1xf32>
    %cst_192 = arith.constant 6.400000e+01 : f32
    %1826 = vector.broadcast %cst_192 : f32 to vector<1x1xf32>
    %1827 = arith.divf %1825, %1826 : vector<1x1xf32>
    %cst_193 = arith.constant 1.000000e-01 : f32
    %1828 = vector.broadcast %cst_193 : f32 to vector<1x1xf32>
    %1829 = arith.mulf %1828, %1815 : vector<1x1xf32>
    %cst_194 = arith.constant 1.000000e+00 : f32
    %1830 = vector.broadcast %cst_194 : f32 to vector<1x1xf32>
    %1831 = arith.addf %1829, %1830 : vector<1x1xf32>
    %1832 = arith.subf %1831, %1827 : vector<1x1xf32>
    %cst_195 = arith.constant 1.000000e-01 : f32
    %1833 = vector.broadcast %cst_195 : f32 to vector<1x1xf32>
    %1834 = arith.mulf %1833, %1811 : vector<1x1xf32>
    %1835 = arith.addf %1832, %1834 : vector<1x1xf32>
    %c0_196 = arith.constant 0 : index
    %c0_197 = arith.constant 0 : index
    %1836 = vector.load %arg9[%c0_196, %c0_197] : memref<1x1xf32, #tpu.memory_space<vmem>>, vector<1x1xf32>
    %1837 = arith.addf %1836, %516 : vector<1x1xf32>
    %1838 = arith.addf %1837, %1039 : vector<1x1xf32>
    %1839 = arith.addf %1838, %1562 : vector<1x1xf32>
    %cst_198 = arith.constant 2.500000e-01 : f32
    %1840 = vector.broadcast %cst_198 : f32 to vector<1x1xf32>
    %1841 = arith.mulf %1839, %1840 : vector<1x1xf32>
    %c0_199 = arith.constant 0 : index
    %c0_200 = arith.constant 0 : index
    %c0_201 = arith.constant 0 : index
    %1842 = vector.load %arg14[%c0_199, %c0_200, %c0_201] : memref<1x2x32xf32, #tpu.memory_space<vmem>>, vector<1x2x32xf32>
    %1843 = vector.shape_cast %1842 : vector<1x2x32xf32> to vector<2x32xf32>
    %1844 = vector.shape_cast %1761 : vector<2x32xf32> to vector<1x2x32xf32>
    tpu.vector_store %arg14[%c0_199, %c0_200, %c0_201], %1844 {strides = array<i32>} : memref<1x2x32xf32, #tpu.memory_space<vmem>>, vector<1x2x32xf32>,
    %1845 = tpu.iota {dimensions = array<i32: 1>} : vector<1x8xi32>
    %c0_i32 = arith.constant 0 : i32
    %1846 = vector.broadcast %c0_i32 : i32 to vector<1x8xi32>
    %1847 = arith.cmpi eq, %1845, %1846 : vector<1x8xi32>
    %cst_202 = arith.constant 0.000000e+00 : f32
    %1848 = vector.shape_cast %516 : vector<1x1xf32> to vector<1x1xf32>
    %1849 = vector.broadcast %1848 : vector<1x1xf32> to vector<1x8xf32>
    %1850 = vector.broadcast %cst_202 : f32 to vector<1x8xf32>
    %1851 = arith.select %1847, %1849, %1850 : vector<1x8xi1>, vector<1x8xf32>
    %c1_i32 = arith.constant 1 : i32
    %1852 = vector.broadcast %c1_i32 : i32 to vector<1x8xi32>
    %1853 = arith.cmpi eq, %1845, %1852 : vector<1x8xi32>
    %cst_203 = arith.constant 0.000000e+00 : f32
    %1854 = vector.shape_cast %1039 : vector<1x1xf32> to vector<1x1xf32>
    %1855 = vector.broadcast %1854 : vector<1x1xf32> to vector<1x8xf32>
    %1856 = vector.broadcast %cst_203 : f32 to vector<1x8xf32>
    %1857 = arith.select %1853, %1855, %1856 : vector<1x8xi1>, vector<1x8xf32>
    %1858 = arith.addf %1851, %1857 : vector<1x8xf32>
    %c2_i32 = arith.constant 2 : i32
    %1859 = vector.broadcast %c2_i32 : i32 to vector<1x8xi32>
    %1860 = arith.cmpi eq, %1845, %1859 : vector<1x8xi32>
    %cst_204 = arith.constant 0.000000e+00 : f32
    %1861 = vector.shape_cast %1562 : vector<1x1xf32> to vector<1x1xf32>
    %1862 = vector.broadcast %1861 : vector<1x1xf32> to vector<1x8xf32>
    %1863 = vector.broadcast %cst_204 : f32 to vector<1x8xf32>
    %1864 = arith.select %1860, %1862, %1863 : vector<1x8xi1>, vector<1x8xf32>
    %1865 = arith.addf %1858, %1864 : vector<1x8xf32>
    %c3_i32 = arith.constant 3 : i32
    %1866 = vector.broadcast %c3_i32 : i32 to vector<1x8xi32>
    %1867 = arith.cmpi eq, %1845, %1866 : vector<1x8xi32>
    %cst_205 = arith.constant 0.000000e+00 : f32
    %1868 = vector.shape_cast %1811 : vector<1x1xf32> to vector<1x1xf32>
    %1869 = vector.broadcast %1868 : vector<1x1xf32> to vector<1x8xf32>
    %1870 = vector.broadcast %cst_205 : f32 to vector<1x8xf32>
    %1871 = arith.select %1867, %1869, %1870 : vector<1x8xi1>, vector<1x8xf32>
    %1872 = arith.addf %1865, %1871 : vector<1x8xf32>
    %c4_i32 = arith.constant 4 : i32
    %1873 = vector.broadcast %c4_i32 : i32 to vector<1x8xi32>
    %1874 = arith.cmpi eq, %1845, %1873 : vector<1x8xi32>
    %cst_206 = arith.constant 0.000000e+00 : f32
    %1875 = vector.shape_cast %1835 : vector<1x1xf32> to vector<1x1xf32>
    %1876 = vector.broadcast %1875 : vector<1x1xf32> to vector<1x8xf32>
    %1877 = vector.broadcast %cst_206 : f32 to vector<1x8xf32>
    %1878 = arith.select %1874, %1876, %1877 : vector<1x8xi1>, vector<1x8xf32>
    %1879 = arith.addf %1872, %1878 : vector<1x8xf32>
    %c5_i32 = arith.constant 5 : i32
    %1880 = vector.broadcast %c5_i32 : i32 to vector<1x8xi32>
    %1881 = arith.cmpi eq, %1845, %1880 : vector<1x8xi32>
    %cst_207 = arith.constant 0.000000e+00 : f32
    %1882 = vector.shape_cast %1807 : vector<1x1xf32> to vector<1x1xf32>
    %1883 = vector.broadcast %1882 : vector<1x1xf32> to vector<1x8xf32>
    %1884 = vector.broadcast %cst_207 : f32 to vector<1x8xf32>
    %1885 = arith.select %1881, %1883, %1884 : vector<1x8xi1>, vector<1x8xf32>
    %1886 = arith.addf %1879, %1885 : vector<1x8xf32>
    %c6_i32 = arith.constant 6 : i32
    %1887 = vector.broadcast %c6_i32 : i32 to vector<1x8xi32>
    %1888 = arith.cmpi eq, %1845, %1887 : vector<1x8xi32>
    %cst_208 = arith.constant 0.000000e+00 : f32
    %1889 = vector.shape_cast %1841 : vector<1x1xf32> to vector<1x1xf32>
    %1890 = vector.broadcast %1889 : vector<1x1xf32> to vector<1x8xf32>
    %1891 = vector.broadcast %cst_208 : f32 to vector<1x8xf32>
    %1892 = arith.select %1888, %1890, %1891 : vector<1x8xi1>, vector<1x8xf32>
    %1893 = arith.addf %1886, %1892 : vector<1x8xf32>
    %c7_i32 = arith.constant 7 : i32
    %1894 = vector.broadcast %c7_i32 : i32 to vector<1x8xi32>
    %1895 = arith.cmpi eq, %1845, %1894 : vector<1x8xi32>
    %cst_209 = arith.constant 0.000000e+00 : f32
    %1896 = vector.shape_cast %1839 : vector<1x1xf32> to vector<1x1xf32>
    %1897 = vector.broadcast %1896 : vector<1x1xf32> to vector<1x8xf32>
    %1898 = vector.broadcast %cst_209 : f32 to vector<1x8xf32>
    %1899 = arith.select %1895, %1897, %1898 : vector<1x8xi1>, vector<1x8xf32>
    %1900 = arith.addf %1893, %1899 : vector<1x8xf32>
    %c0_210 = arith.constant 0 : index
    %c0_211 = arith.constant 0 : index
    %1901 = vector.load %arg15[%c0_210, %c0_211] : memref<1x8xf32, #tpu.memory_space<vmem>>, vector<1x8xf32>
    tpu.vector_store %arg15[%c0_210, %c0_211], %1900 {strides = array<i32>} : memref<1x8xf32, #tpu.memory_space<vmem>>, vector<1x8xf32>,
    return
  }
}

</mosaic_0001>

<llo_original>
// kernel: nvae_l4_forward.4
$region0: #{nvae_l4_forward.4}
  #allocation0 [shape = 'u32[]', space=smem, size = 0x4, offset = 0x4, fixed_abs, tag = 'smem constant byte address 0x4 - core index']
  #allocation1 [shape = 'u32[144,128]{1,0:T(1,128)}', space=vmem, size = 0x12000, scoped, tag = 'internal scratch']
  %s0 = inlined_call_operand.vmem [shape: f32[48], index: 0, kind: input, shape index: {}]
  %s1 = inlined_call_operand.vmem [shape: f32[1,2,32], index: 1, kind: input, shape index: {}]
  %s2 = inlined_call_operand.vmem [shape: f32[1,2,2], index: 2, kind: input, shape index: {}]
  %s3 = inlined_call_operand.vmem [shape: f32[32,16], index: 3, kind: input, shape index: {}]
  %s4 = inlined_call_operand.vmem [shape: f32[16,8], index: 4, kind: input, shape index: {}]
  %s5 = inlined_call_operand.vmem [shape: f32[8,4], index: 5, kind: input, shape index: {}]
  %s6 = inlined_call_operand.vmem [shape: f32[4,2], index: 6, kind: input, shape index: {}]
  %s7 = inlined_call_operand.vmem [shape: f32[1,2,2], index: 7, kind: output, shape index: {0}]
  %s8 = inlined_call_operand.vmem [shape: f32[1,2,4], index: 8, kind: output, shape index: {1}]
  %s9 = inlined_call_operand.vmem [shape: f32[1,2,8], index: 9, kind: output, shape index: {2}]
  %s10 = inlined_call_operand.vmem [shape: f32[1,2,16], index: 10, kind: output, shape index: {3}]
  %s11 = inlined_call_operand.hbm [shape: f32[1,1], index: 11, kind: output, shape index: {4}]
  %12 = xla_tuple %s7, %s8, %s9, %s10, %s11
  %s13 = sld [smem:[#allocation0]]
  $region74: #{nvae_l4_forward.4} parent=0
    _
  %s15 = ssub.s32 1, %s13
  %s16 = scalar_select 0, %s15, %s13
  $region1: #{nvae_l4_forward.4} parent=0
    #allocation2 [shape = 'u8[512]{0}', space=smem, size = 0x200, scoped, tag = 'input window, operand 0, single buffered']
    #allocation3 [shape = 's32[1]{0}', space=sflag, size = 0x4, scoped, tag = 'scoped memory for nvae_l4_forward.4']
    #allocation4 [shape = 's32[1]{0}', space=sflag, size = 0x4, scoped, tag = 'scoped memory for nvae_l4_forward.4']
    #allocation5 [shape = 'u8[512]{0}', space=vmem, size = 0x400, scoped, tag = 'output window, operand 4, single buffered']
    %17 = vsyncpa [#allocation4], 0
    %18 = vsyncpa [#allocation3], 0
    // Predicated region
    $region2: #{nvae_l4_forward.4} parent=1 // pred_check
      _
    $region3: #{nvae_l4_forward.4} parent=1 // pred_check_branch
      %20 = sbr.rel (0) target = $region5
    $region4: #{nvae_l4_forward.4} parent=1 // pred_region
      %s22 = ssub.s32 16, 16
      %23 = vsyncadd [#allocation4], %s22
      %s25 = sshll.u32 %s0, 4
      %s26 = int_to_ptr.vmem [resolvable:$true] %s25
      %28 = dma.vmem_to_smem %s26, 16, [#allocation2], [#allocation4]
    $region5: #{nvae_l4_forward.4} parent=1 // pred_fallthru
      _
    // Predicated region
    $region6: #{nvae_l4_forward.4} parent=1 // pred_check
      _
    $region7: #{nvae_l4_forward.4} parent=1 // pred_check_branch
      %30 = sbr.rel (0) target = $region9
    $region8: #{nvae_l4_forward.4} parent=1 // pred_region
      _
    $region9: #{nvae_l4_forward.4} parent=1 // pred_fallthru
      _
    // Predicated region
    $region10: #{nvae_l4_forward.4} parent=1 // pred_check
      _
    $region11: #{nvae_l4_forward.4} parent=1 // pred_check_branch
      %32 = sbr.rel (0) target = $region13
    $region12: #{nvae_l4_forward.4} parent=1 // pred_region
      _
    $region13: #{nvae_l4_forward.4} parent=1 // pred_fallthru
      _
    // Predicated region
    $region14: #{nvae_l4_forward.4} parent=1 // pred_check
      _
    $region15: #{nvae_l4_forward.4} parent=1 // pred_check_branch
      %34 = sbr.rel (0) target = $region17
    $region16: #{nvae_l4_forward.4} parent=1 // pred_region
      _
    $region17: #{nvae_l4_forward.4} parent=1 // pred_fallthru
      _
    // Predicated region
    $region18: #{nvae_l4_forward.4} parent=1 // pred_check
      _
    $region19: #{nvae_l4_forward.4} parent=1 // pred_check_branch
      %36 = sbr.rel (0) target = $region21
    $region20: #{nvae_l4_forward.4} parent=1 // pred_region
      _
    $region21: #{nvae_l4_forward.4} parent=1 // pred_fallthru
      _
    // Predicated region
    $region22: #{nvae_l4_forward.4} parent=1 // pred_check
      _
    $region23: #{nvae_l4_forward.4} parent=1 // pred_check_branch
      %38 = sbr.rel (0) target = $region25
    $region24: #{nvae_l4_forward.4} parent=1 // pred_region
      _
    $region25: #{nvae_l4_forward.4} parent=1 // pred_fallthru
      _
    // Predicated region
    $region26: #{nvae_l4_forward.4} parent=1 // pred_check
      _
    $region27: #{nvae_l4_forward.4} parent=1 // pred_check_branch
      %40 = sbr.rel (0) target = $region29
    $region28: #{nvae_l4_forward.4} parent=1 // pred_region
      _
    $region29: #{nvae_l4_forward.4} parent=1 // pred_fallthru
      _
    // Predicated region
    $region30: #{nvae_l4_forward.4} parent=1 // pred_check
      _
    $region31: #{nvae_l4_forward.4} parent=1 // pred_check_branch
      %42 = sbr.rel (0) target = $region33
    $region32: #{nvae_l4_forward.4} parent=1 // pred_region
      %43 = dma.done [#allocation4], 16
    $region33: #{nvae_l4_forward.4} parent=1 // pred_fallthru
      _
    %44 = sfence
    %v45 = vld [vmem:[%s1] sm:$0x3]
    %47 = vrot.lane.b32.xlu0 %v45, 1
    %v48 = vpop.permute.xlu0 %47
    %vm50 = vcmask 7168
    %v51 = vsel %vm50, 0.0, %v48
    %52 = vrot.lane.b32.xlu0 %v45, 127
    %v53 = vpop.permute.xlu0 %52
    %vm55 = vcmask 252928
    %v56 = vsel %vm55, %v53, 0.0
    %s57 = sld [smem:[#allocation2]]
    %v58 = vstv %s57
    %v59 = vmul.f32 %v51, %v58
    %s60 = sld [smem:[#allocation2 + $0x1]]
    %v61 = vstv %s60
    %v62 = vmul.f32 %v45, %v61
    %v63 = vadd.f32 %v59, %v62
    %s64 = sld [smem:[#allocation2 + $0x2]]
    %v65 = vstv %s64
    %v66 = vmul.f32 %v56, %v65
    %v67 = vadd.f32 %v63, %v66
    %s68 = sld [smem:[#allocation2 + $0x3]]
    %v69 = vstv %s68
    %v70 = vadd.f32 %v67, %v69
    %v71 = vld [vmem:[%s3] sm:$0xff]
    %v72 = vld [vmem:[%s3 + $0x8] sm:$0xff]
    %v73 = vld [vmem:[%s3 + $0x10] sm:$0xff]
    %v74 = vld [vmem:[%s3 + $0x18] sm:$0xff]
    %vm75 = vcmask 261120
    %v77 = vsel %vm75, %v70, 0
    %79 = vmatprep.subr.mxu0 0.0
    %80 = vmatpush1.msra.mxu0 %v71
    %81 = vmatprep.subr.mxu0 0.0
    %82 = vmatpush1.msra.mxu0 %v72
    %83 = vmatprep.subr.mxu0 0.0
    %84 = vmatpush1.msra.mxu0 %v73
    %85 = vmatprep.subr.mxu0 0.0
    %86 = vmatpush1.msra.mxu0 %v74
    %87 = vmatprep.subr.mxu0 0.0
    %88 = vmatpush1.msra.mxu0 0.0
    %89 = vmatprep.subr.mxu0 0.0
    %90 = vmatpush1.msra.mxu0 0.0
    %91 = vmatprep.subr.mxu0 0.0
    %92 = vmatpush1.msra.mxu0 0.0
    %93 = vmatprep.subr.mxu0 0.0
    %94 = vmatpush1.msra.mxu0 0.0
    %95 = vmatprep.subr.mxu0 0.0
    %96 = vmatpush1.msra.mxu0 0.0
    %97 = vmatprep.subr.mxu0 0.0
    %98 = vmatpush1.msra.mxu0 0.0
    %99 = vmatprep.subr.mxu0 0.0
    %100 = vmatpush1.msra.mxu0 0.0
    %101 = vmatprep.subr.mxu0 0.0
    %102 = vmatpush1.msra.mxu0 0.0
    %103 = vmatprep.subr.mxu0 0.0
    %104 = vmatpush1.msra.mxu0 0.0
    %105 = vmatprep.subr.mxu0 0.0
    %106 = vmatpush1.msra.mxu0 0.0
    %107 = vmatprep.subr.mxu0 0.0
    %108 = vmatpush1.msra.mxu0 0.0
    %109 = vmatprep.subr.mxu0 0.0
    %110 = vmatpush1.msra.mxu0 0.0
    %111 = vmatprep.subr.mxu0 0.0
    %112 = vmatpush1.msra.mxu0 0.0
    %113 = vmatprep.subr.mxu0 0.0
    %114 = vmatpush1.msra.mxu0 0.0
    %115 = vmatprep.subr.mxu0 0.0
    %116 = vmatpush1.msra.mxu0 0.0
    %117 = vmatprep.subr.mxu0 0.0
    %118 = vmatpush1.msra.mxu0 0.0
    %119 = vmatprep.subr.mxu0 0.0
    %120 = vmatpush1.msra.mxu0 0.0
    %121 = vmatprep.subr.mxu0 0.0
    %122 = vmatpush1.msra.mxu0 0.0
    %123 = vmatprep.subr.mxu0 0.0
    %124 = vmatpush1.msra.mxu0 0.0
    %125 = vmatprep.subr.mxu0 0.0
    %126 = vmatpush1.msra.mxu0 0.0
    %127 = vmatprep.subr.mxu0 0.0
    %128 = vmatpush1.msra.mxu0 0.0
    %129 = vmatprep.subr.mxu0 0.0
    %130 = vmatpush1.msra.mxu0 0.0
    %131 = vmatprep.subr.mxu0 0.0
    %132 = vmatpush1.msra.mxu0 0.0
    %133 = vmatprep.subr.mxu0 0.0
    %134 = vmatpush1.msra.mxu0 0.0
    %135 = vmatprep.subr.mxu0 0.0
    %136 = vmatpush1.msra.mxu0 0.0
    %137 = vmatprep.subr.mxu0 0.0
    %138 = vmatpush1.msra.mxu0 0.0
    %139 = vmatprep.subr.mxu0 0.0
    %140 = vmatpush1.msra.mxu0 0.0
    %141 = vmatprep.subr.mxu0 0.0
    %142 = vmatpush1.msra.mxu0 0.0
    %143 = vmatprep.mubr.f32.mxu0 0.0
    %144 = vmatmul.mubr.f32.gmra.mrb[0].mxu0 %v77
    %v145 = vpop.f32.mrb[0].mxu0
    %v146 = vadd.f32 0.0, %v145
    %v147 = vpop.f32.mrb[0].mxu0
    %148 = vdwg.mxu0
    %v149 = vxor.u32 %v146, 2147483648
    %v150 = vmul.f32 %v149, 1.442695
    %v151 = vpow.pop %v150
    %v152 = vadd.f32 %v151, 1.0
    %v153 = vrcp.pop %v152
    %v154 = vmul.f32 1.0, %v153
    %v155 = vmul.f32 %v146, %v154
    %157 = vrot.lane.b32.xlu0 %v155, 1
    %v158 = vpop.permute.xlu0 %157
    %v160 = vsel %vm50, 0.0, %v158
    %161 = vrot.lane.b32.xlu0 %v155, 127
    %v162 = vpop.permute.xlu0 %161
    %vm164 = vcmask 121856
    %v165 = vsel %vm164, %v162, 0.0
    %s166 = sld [smem:[#allocation2 + $0x4]]
    %v167 = vstv %s166
    %v168 = vmul.f32 %v160, %v167
    %s169 = sld [smem:[#allocation2 + $0x5]]
    %v170 = vstv %s169
    %v171 = vmul.f32 %v155, %v170
    %v172 = vadd.f32 %v168, %v171
    %s173 = sld [smem:[#allocation2 + $0x6]]
    %v174 = vstv %s173
    %v175 = vmul.f32 %v165, %v174
    %v176 = vadd.f32 %v172, %v175
    %s177 = sld [smem:[#allocation2 + $0x7]]
    %v178 = vstv %s177
    %v179 = vadd.f32 %v176, %v178
    %v180 = vxor.u32 %v179, 2147483648
    %v181 = vmul.f32 %v180, 1.442695
    %v182 = vpow.pop %v181
    %v183 = vadd.f32 %v182, 1.0
    %v184 = vrcp.pop %v183
    %v185 = vmul.f32 1.0, %v184
    %v186 = vmul.f32 %v179, %v185
    %v187 = vadd.f32 %v155, %v186
    %vm188 = vcmask 123904
    %189 = vst.msk [vmem:[%s10] sm:$0x3] %vm188, %v187
    %191 = vrot.lane.b32.xlu0 %v187, 1
    %v192 = vpop.permute.xlu0 %191
    %v194 = vsel %vm50, 0.0, %v192
    %195 = vrot.lane.b32.xlu0 %v187, 127
    %v196 = vpop.permute.xlu0 %195
    %v198 = vsel %vm164, %v196, 0.0
    %s199 = sld [smem:[#allocation2 + $0x8]]
    %v200 = vstv %s199
    %v201 = vmul.f32 %v194, %v200
    %s202 = sld [smem:[#allocation2 + $0x9]]
    %v203 = vstv %s202
    %v204 = vmul.f32 %v187, %v203
    %v205 = vadd.f32 %v201, %v204
    %s206 = sld [smem:[#allocation2 + $0xa]]
    %v207 = vstv %s206
    %v208 = vmul.f32 %v198, %v207
    %v209 = vadd.f32 %v205, %v208
    %s210 = sld [smem:[#allocation2 + $0xb]]
    %v211 = vstv %s210
    %v212 = vadd.f32 %v209, %v211
    %v213 = vld [vmem:[%s4] sm:$0xff]
    %v214 = vld [vmem:[%s4 + $0x8] sm:$0xff]
    %vm215 = vcmask 130048
    %v217 = vsel %vm215, %v212, 0
    %219 = vmatprep.subr.mxu0 0.0
    %220 = vmatpush1.msra.mxu0 %v213
    %221 = vmatprep.subr.mxu0 0.0
    %222 = vmatpush1.msra.mxu0 %v214
    %223 = vmatprep.subr.mxu0 0.0
    %224 = vmatpush1.msra.mxu0 0.0
    %225 = vmatprep.subr.mxu0 0.0
    %226 = vmatpush1.msra.mxu0 0.0
    %227 = vmatprep.subr.mxu0 0.0
    %228 = vmatpush1.msra.mxu0 0.0
    %229 = vmatprep.subr.mxu0 0.0
    %230 = vmatpush1.msra.mxu0 0.0
    %231 = vmatprep.subr.mxu0 0.0
    %232 = vmatpush1.msra.mxu0 0.0
    %233 = vmatprep.subr.mxu0 0.0
    %234 = vmatpush1.msra.mxu0 0.0
    %235 = vmatprep.subr.mxu0 0.0
    %236 = vmatpush1.msra.mxu0 0.0
    %237 = vmatprep.subr.mxu0 0.0
    %238 = vmatpush1.msra.mxu0 0.0
    %239 = vmatprep.subr.mxu0 0.0
    %240 = vmatpush1.msra.mxu0 0.0
    %241 = vmatprep.subr.mxu0 0.0
    %242 = vmatpush1.msra.mxu0 0.0
    %243 = vmatprep.subr.mxu0 0.0
    %244 = vmatpush1.msra.mxu0 0.0
    %245 = vmatprep.subr.mxu0 0.0
    %246 = vmatpush1.msra.mxu0 0.0
    %247 = vmatprep.subr.mxu0 0.0
    %248 = vmatpush1.msra.mxu0 0.0
    %249 = vmatprep.subr.mxu0 0.0
    %250 = vmatpush1.msra.mxu0 0.0
    %251 = vmatprep.subr.mxu0 0.0
    %252 = vmatpush1.msra.mxu0 0.0
    %253 = vmatprep.subr.mxu0 0.0
    %254 = vmatpush1.msra.mxu0 0.0
    %255 = vmatprep.subr.mxu0 0.0
    %256 = vmatpush1.msra.mxu0 0.0
    %257 = vmatprep.subr.mxu0 0.0
    %258 = vmatpush1.msra.mxu0 0.0
    %259 = vmatprep.subr.mxu0 0.0
    %260 = vmatpush1.msra.mxu0 0.0
    %261 = vmatprep.subr.mxu0 0.0
    %262 = vmatpush1.msra.mxu0 0.0
    %263 = vmatprep.subr.mxu0 0.0
    %264 = vmatpush1.msra.mxu0 0.0
    %265 = vmatprep.subr.mxu0 0.0
    %266 = vmatpush1.msra.mxu0 0.0
    %267 = vmatprep.subr.mxu0 0.0
    %268 = vmatpush1.msra.mxu0 0.0
    %269 = vmatprep.subr.mxu0 0.0
    %270 = vmatpush1.msra.mxu0 0.0
    %271 = vmatprep.subr.mxu0 0.0
    %272 = vmatpush1.msra.mxu0 0.0
    %273 = vmatprep.subr.mxu0 0.0
    %274 = vmatpush1.msra.mxu0 0.0
    %275 = vmatprep.subr.mxu0 0.0
    %276 = vmatpush1.msra.mxu0 0.0
    %277 = vmatprep.subr.mxu0 0.0
    %278 = vmatpush1.msra.mxu0 0.0
    %279 = vmatprep.subr.mxu0 0.0
    %280 = vmatpush1.msra.mxu0 0.0
    %281 = vmatprep.subr.mxu0 0.0
    %282 = vmatpush1.msra.mxu0 0.0
    %283 = vmatprep.mubr.f32.mxu0 0.0
    %284 = vmatmul.mubr.f32.gmra.mrb[0].mxu0 %v217
    %v285 = vpop.f32.mrb[0].mxu0
    %v286 = vadd.f32 0.0, %v285
    %v287 = vpop.f32.mrb[0].mxu0
    %288 = vdwg.mxu0
    %v289 = vxor.u32 %v286, 2147483648
    %v290 = vmul.f32 %v289, 1.442695
    %v291 = vpow.pop %v290
    %v292 = vadd.f32 %v291, 1.0
    %v293 = vrcp.pop %v292
    %v294 = vmul.f32 1.0, %v293
    %v295 = vmul.f32 %v286, %v294
    %297 = vrot.lane.b32.xlu0 %v295, 1
    %v298 = vpop.permute.xlu0 %297
    %v300 = vsel %vm50, 0.0, %v298
    %301 = vrot.lane.b32.xlu0 %v295, 127
    %v302 = vpop.permute.xlu0 %301
    %vm304 = vcmask 56320
    %v305 = vsel %vm304, %v302, 0.0
    %s306 = sld [smem:[#allocation2 + $0xc]]
    %v307 = vstv %s306
    %v308 = vmul.f32 %v300, %v307
    %s309 = sld [smem:[#allocation2 + $0xd]]
    %v310 = vstv %s309
    %v311 = vmul.f32 %v295, %v310
    %v312 = vadd.f32 %v308, %v311
    %s313 = sld [smem:[#allocation2 + $0xe]]
    %v314 = vstv %s313
    %v315 = vmul.f32 %v305, %v314
    %v316 = vadd.f32 %v312, %v315
    %s317 = sld [smem:[#allocation2 + $0xf]]
    %v318 = vstv %s317
    %v319 = vadd.f32 %v316, %v318
    %v320 = vxor.u32 %v319, 2147483648
    %v321 = vmul.f32 %v320, 1.442695
    %v322 = vpow.pop %v321
    %v323 = vadd.f32 %v322, 1.0
    %v324 = vrcp.pop %v323
    %v325 = vmul.f32 1.0, %v324
    %v326 = vmul.f32 %v319, %v325
    %v327 = vadd.f32 %v295, %v326
    %vm328 = vcmask 58368
    %329 = vst.msk [vmem:[%s9] sm:$0x3] %vm328, %v327
    %331 = vrot.lane.b32.xlu0 %v327, 1
    %v332 = vpop.permute.xlu0 %331
    %v334 = vsel %vm50, 0.0, %v332
    %335 = vrot.lane.b32.xlu0 %v327, 127
    %v336 = vpop.permute.xlu0 %335
    %v338 = vsel %vm304, %v336, 0.0
    %s339 = sld [smem:[#allocation2 + $0x10]]
    %v340 = vstv %s339
    %v341 = vmul.f32 %v334, %v340
    %s342 = sld [smem:[#allocation2 + $0x11]]
    %v343 = vstv %s342
    %v344 = vmul.f32 %v327, %v343
    %v345 = vadd.f32 %v341, %v344
    %s346 = sld [smem:[#allocation2 + $0x12]]
    %v347 = vstv %s346
    %v348 = vmul.f32 %v338, %v347
    %v349 = vadd.f32 %v345, %v348
    %s350 = sld [smem:[#allocation2 + $0x13]]
    %v351 = vstv %s350
    %v352 = vadd.f32 %v349, %v351
    %v353 = vld [vmem:[%s5] sm:$0xff]
    %vm354 = vcmask 64512
    %v356 = vsel %vm354, %v352, 0
    %358 = vmatprep.subr.mxu0 0.0
    %359 = vmatpush1.msra.mxu0 %v353
    %360 = vmatprep.subr.mxu0 0.0
    %361 = vmatpush1.msra.mxu0 0.0
    %362 = vmatprep.subr.mxu0 0.0
    %363 = vmatpush1.msra.mxu0 0.0
    %364 = vmatprep.subr.mxu0 0.0
    %365 = vmatpush1.msra.mxu0 0.0
    %366 = vmatprep.subr.mxu0 0.0
    %367 = vmatpush1.msra.mxu0 0.0
    %368 = vmatprep.subr.mxu0 0.0
    %369 = vmatpush1.msra.mxu0 0.0
    %370 = vmatprep.subr.mxu0 0.0
    %371 = vmatpush1.msra.mxu0 0.0
    %372 = vmatprep.subr.mxu0 0.0
    %373 = vmatpush1.msra.mxu0 0.0
    %374 = vmatprep.subr.mxu0 0.0
    %375 = vmatpush1.msra.mxu0 0.0
    %376 = vmatprep.subr.mxu0 0.0
    %377 = vmatpush1.msra.mxu0 0.0
    %378 = vmatprep.subr.mxu0 0.0
    %379 = vmatpush1.msra.mxu0 0.0
    %380 = vmatprep.subr.mxu0 0.0
    %381 = vmatpush1.msra.mxu0 0.0
    %382 = vmatprep.subr.mxu0 0.0
    %383 = vmatpush1.msra.mxu0 0.0
    %384 = vmatprep.subr.mxu0 0.0
    %385 = vmatpush1.msra.mxu0 0.0
    %386 = vmatprep.subr.mxu0 0.0
    %387 = vmatpush1.msra.mxu0 0.0
    %388 = vmatprep.subr.mxu0 0.0
    %389 = vmatpush1.msra.mxu0 0.0
    %390 = vmatprep.subr.mxu0 0.0
    %391 = vmatpush1.msra.mxu0 0.0
    %392 = vmatprep.subr.mxu0 0.0
    %393 = vmatpush1.msra.mxu0 0.0
    %394 = vmatprep.subr.mxu0 0.0
    %395 = vmatpush1.msra.mxu0 0.0
    %396 = vmatprep.subr.mxu0 0.0
    %397 = vmatpush1.msra.mxu0 0.0
    %398 = vmatprep.subr.mxu0 0.0
    %399 = vmatpush1.msra.mxu0 0.0
    %400 = vmatprep.subr.mxu0 0.0
    %401 = vmatpush1.msra.mxu0 0.0
    %402 = vmatprep.subr.mxu0 0.0
    %403 = vmatpush1.msra.mxu0 0.0
    %404 = vmatprep.subr.mxu0 0.0
    %405 = vmatpush1.msra.mxu0 0.0
    %406 = vmatprep.subr.mxu0 0.0
    %407 = vmatpush1.msra.mxu0 0.0
    %408 = vmatprep.subr.mxu0 0.0
    %409 = vmatpush1.msra.mxu0 0.0
    %410 = vmatprep.subr.mxu0 0.0
    %411 = vmatpush1.msra.mxu0 0.0
    %412 = vmatprep.subr.mxu0 0.0
    %413 = vmatpush1.msra.mxu0 0.0
    %414 = vmatprep.subr.mxu0 0.0
    %415 = vmatpush1.msra.mxu0 0.0
    %416 = vmatprep.subr.mxu0 0.0
    %417 = vmatpush1.msra.mxu0 0.0
    %418 = vmatprep.subr.mxu0 0.0
    %419 = vmatpush1.msra.mxu0 0.0
    %420 = vmatprep.subr.mxu0 0.0
    %421 = vmatpush1.msra.mxu0 0.0
    %422 = vmatprep.mubr.f32.mxu0 0.0
    %423 = vmatmul.mubr.f32.gmra.mrb[0].mxu0 %v356
    %v424 = vpop.f32.mrb[0].mxu0
    %v425 = vadd.f32 0.0, %v424
    %v426 = vpop.f32.mrb[0].mxu0
    %427 = vdwg.mxu0
    %v428 = vxor.u32 %v425, 2147483648
    %v429 = vmul.f32 %v428, 1.442695
    %v430 = vpow.pop %v429
    %v431 = vadd.f32 %v430, 1.0
    %v432 = vrcp.pop %v431
    %v433 = vmul.f32 1.0, %v432
    %v434 = vmul.f32 %v425, %v433
    %436 = vrot.lane.b32.xlu0 %v434, 1
    %v437 = vpop.permute.xlu0 %436
    %v439 = vsel %vm50, 0.0, %v437
    %440 = vrot.lane.b32.xlu0 %v434, 127
    %v441 = vpop.permute.xlu0 %440
    %vm443 = vcmask 23552
    %v444 = vsel %vm443, %v441, 0.0
    %s445 = sld [smem:[#allocation2 + $0x14]]
    %v446 = vstv %s445
    %v447 = vmul.f32 %v439, %v446
    %s448 = sld [smem:[#allocation2 + $0x15]]
    %v449 = vstv %s448
    %v450 = vmul.f32 %v434, %v449
    %v451 = vadd.f32 %v447, %v450
    %s452 = sld [smem:[#allocation2 + $0x16]]
    %v453 = vstv %s452
    %v454 = vmul.f32 %v444, %v453
    %v455 = vadd.f32 %v451, %v454
    %s456 = sld [smem:[#allocation2 + $0x17]]
    %v457 = vstv %s456
    %v458 = vadd.f32 %v455, %v457
    %v459 = vxor.u32 %v458, 2147483648
    %v460 = vmul.f32 %v459, 1.442695
    %v461 = vpow.pop %v460
    %v462 = vadd.f32 %v461, 1.0
    %v463 = vrcp.pop %v462
    %v464 = vmul.f32 1.0, %v463
    %v465 = vmul.f32 %v458, %v464
    %v466 = vadd.f32 %v434, %v465
    %vm467 = vcmask 25600
    %468 = vst.msk [vmem:[%s8] sm:$0x3] %vm467, %v466
    %470 = vrot.lane.b32.xlu0 %v466, 1
    %v471 = vpop.permute.xlu0 %470
    %v473 = vsel %vm50, 0.0, %v471
    %474 = vrot.lane.b32.xlu0 %v466, 127
    %v475 = vpop.permute.xlu0 %474
    %v477 = vsel %vm443, %v475, 0.0
    %s478 = sld [smem:[#allocation2 + $0x18]]
    %v479 = vstv %s478
    %v480 = vmul.f32 %v473, %v479
    %s481 = sld [smem:[#allocation2 + $0x19]]
    %v482 = vstv %s481
    %v483 = vmul.f32 %v466, %v482
    %v484 = vadd.f32 %v480, %v483
    %s485 = sld [smem:[#allocation2 + $0x1a]]
    %v486 = vstv %s485
    %v487 = vmul.f32 %v477, %v486
    %v488 = vadd.f32 %v484, %v487
    %s489 = sld [smem:[#allocation2 + $0x1b]]
    %v490 = vstv %s489
    %v491 = vadd.f32 %v488, %v490
    %v492 = vld [vmem:[%s6] sm:$0xf]
    %vm493 = vcmask 31744
    %v495 = vsel %vm493, %v491, 0
    %vm497 = vcmask 1043456
    %v499 = vsel %vm497, %v492, 0
    %501 = vmatprep.subr.mxu0 0.0
    %502 = vmatpush1.msra.mxu0 %v499
    %503 = vmatprep.subr.mxu0 0.0
    %504 = vmatpush1.msra.mxu0 0.0
    %505 = vmatprep.subr.mxu0 0.0
    %506 = vmatpush1.msra.mxu0 0.0
    %507 = vmatprep.subr.mxu0 0.0
    %508 = vmatpush1.msra.mxu0 0.0
    %509 = vmatprep.subr.mxu0 0.0
    %510 = vmatpush1.msra.mxu0 0.0
    %511 = vmatprep.subr.mxu0 0.0
    %512 = vmatpush1.msra.mxu0 0.0
    %513 = vmatprep.subr.mxu0 0.0
    %514 = vmatpush1.msra.mxu0 0.0
    %515 = vmatprep.subr.mxu0 0.0
    %516 = vmatpush1.msra.mxu0 0.0
    %517 = vmatprep.subr.mxu0 0.0
    %518 = vmatpush1.msra.mxu0 0.0
    %519 = vmatprep.subr.mxu0 0.0
    %520 = vmatpush1.msra.mxu0 0.0
    %521 = vmatprep.subr.mxu0 0.0
    %522 = vmatpush1.msra.mxu0 0.0
    %523 = vmatprep.subr.mxu0 0.0
    %524 = vmatpush1.msra.mxu0 0.0
    %525 = vmatprep.subr.mxu0 0.0
    %526 = vmatpush1.msra.mxu0 0.0
    %527 = vmatprep.subr.mxu0 0.0
    %528 = vmatpush1.msra.mxu0 0.0
    %529 = vmatprep.subr.mxu0 0.0
    %530 = vmatpush1.msra.mxu0 0.0
    %531 = vmatprep.subr.mxu0 0.0
    %532 = vmatpush1.msra.mxu0 0.0
    %533 = vmatprep.subr.mxu0 0.0
    %534 = vmatpush1.msra.mxu0 0.0
    %535 = vmatprep.subr.mxu0 0.0
    %536 = vmatpush1.msra.mxu0 0.0
    %537 = vmatprep.subr.mxu0 0.0
    %538 = vmatpush1.msra.mxu0 0.0
    %539 = vmatprep.subr.mxu0 0.0
    %540 = vmatpush1.msra.mxu0 0.0
    %541 = vmatprep.subr.mxu0 0.0
    %542 = vmatpush1.msra.mxu0 0.0
    %543 = vmatprep.subr.mxu0 0.0
    %544 = vmatpush1.msra.mxu0 0.0
    %545 = vmatprep.subr.mxu0 0.0
    %546 = vmatpush1.msra.mxu0 0.0
    %547 = vmatprep.subr.mxu0 0.0
    %548 = vmatpush1.msra.mxu0 0.0
    %549 = vmatprep.subr.mxu0 0.0
    %550 = vmatpush1.msra.mxu0 0.0
    %551 = vmatprep.subr.mxu0 0.0
    %552 = vmatpush1.msra.mxu0 0.0
    %553 = vmatprep.subr.mxu0 0.0
    %554 = vmatpush1.msra.mxu0 0.0
    %555 = vmatprep.subr.mxu0 0.0
    %556 = vmatpush1.msra.mxu0 0.0
    %557 = vmatprep.subr.mxu0 0.0
    %558 = vmatpush1.msra.mxu0 0.0
    %559 = vmatprep.subr.mxu0 0.0
    %560 = vmatpush1.msra.mxu0 0.0
    %561 = vmatprep.subr.mxu0 0.0
    %562 = vmatpush1.msra.mxu0 0.0
    %563 = vmatprep.subr.mxu0 0.0
    %564 = vmatpush1.msra.mxu0 0.0
    %565 = vmatprep.mubr.f32.mxu0 0.0
    %566 = vmatmul.mubr.f32.gmra.mrb[0].mxu0 %v495
    %v567 = vpop.f32.mrb[0].mxu0
    %v568 = vadd.f32 0.0, %v567
    %v569 = vpop.f32.mrb[0].mxu0
    %570 = vdwg.mxu0
    %v571 = vxor.u32 %v568, 2147483648
    %v572 = vmul.f32 %v571, 1.442695
    %v573 = vpow.pop %v572
    %v574 = vadd.f32 %v573, 1.0
    %v575 = vrcp.pop %v574
    %v576 = vmul.f32 1.0, %v575
    %v577 = vmul.f32 %v568, %v576
    %579 = vrot.lane.b32.xlu0 %v577, 1
    %v580 = vpop.permute.xlu0 %579
    %v582 = vsel %vm50, 0.0, %v580
    %583 = vrot.lane.b32.xlu0 %v577, 127
    %v584 = vpop.permute.xlu0 %583
    %v586 = vsel %vm50, %v584, 0.0
    %s587 = sld [smem:[#allocation2 + $0x1c]]
    %v588 = vstv %s587
    %v589 = vmul.f32 %v582, %v588
    %s590 = sld [smem:[#allocation2 + $0x1d]]
    %v591 = vstv %s590
    %v592 = vmul.f32 %v577, %v591
    %v593 = vadd.f32 %v589, %v592
    %s594 = sld [smem:[#allocation2 + $0x1e]]
    %v595 = vstv %s594
    %v596 = vmul.f32 %v586, %v595
    %v597 = vadd.f32 %v593, %v596
    %s598 = sld [smem:[#allocation2 + $0x1f]]
    %v599 = vstv %s598
    %v600 = vadd.f32 %v597, %v599
    %v601 = vxor.u32 %v600, 2147483648
    %v602 = vmul.f32 %v601, 1.442695
    %v603 = vpow.pop %v602
    %v604 = vadd.f32 %v603, 1.0
    %v605 = vrcp.pop %v604
    %v606 = vmul.f32 1.0, %v605
    %v607 = vmul.f32 %v600, %v606
    %v608 = vadd.f32 %v577, %v607
    %610 = vrot.lane.b32.xlu0 %v608, 1
    %v611 = vpop.permute.xlu0 %610
    %v613 = vsel %vm50, 0.0, %v611
    %614 = vrot.lane.b32.xlu0 %v608, 127
    %v615 = vpop.permute.xlu0 %614
    %v617 = vsel %vm50, %v615, 0.0
    %s618 = sld [smem:[#allocation2 + $0x20]]
    %v619 = vstv %s618
    %v620 = vmul.f32 %v613, %v619
    %s621 = sld [smem:[#allocation2 + $0x21]]
    %v622 = vstv %s621
    %v623 = vmul.f32 %v608, %v622
    %v624 = vadd.f32 %v620, %v623
    %s625 = sld [smem:[#allocation2 + $0x22]]
    %v626 = vstv %s625
    %v627 = vmul.f32 %v617, %v626
    %v628 = vadd.f32 %v624, %v627
    %s629 = sld [smem:[#allocation2 + $0x23]]
    %v630 = vstv %s629
    %v631 = vadd.f32 %v628, %v630
    %v632 = vxor.u32 %v631, 2147483648
    %v633 = vmul.f32 %v632, 1.442695
    %v634 = vpow.pop %v633
    %v635 = vadd.f32 %v634, 1.0
    %v636 = vrcp.pop %v635
    %v637 = vmul.f32 1.0, %v636
    %v638 = vmul.f32 %v631, %v637
    %640 = vrot.lane.b32.xlu0 %v638, 1
    %v641 = vpop.permute.xlu0 %640
    %v643 = vsel %vm50, 0.0, %v641
    %644 = vrot.lane.b32.xlu0 %v638, 127
    %v645 = vpop.permute.xlu0 %644
    %v647 = vsel %vm50, %v645, 0.0
    %s648 = sld [smem:[#allocation2 + $0x24]]
    %v649 = vstv %s648
    %v650 = vmul.f32 %v643, %v649
    %s651 = sld [smem:[#allocation2 + $0x25]]
    %v652 = vstv %s651
    %v653 = vmul.f32 %v638, %v652
    %v654 = vadd.f32 %v650, %v653
    %s655 = sld [smem:[#allocation2 + $0x26]]
    %v656 = vstv %s655
    %v657 = vmul.f32 %v647, %v656
    %v658 = vadd.f32 %v654, %v657
    %s659 = sld [smem:[#allocation2 + $0x27]]
    %v660 = vstv %s659
    %v661 = vadd.f32 %v658, %v660
    %v662 = vmax.f32 %v661, 0.0
    %s663 = sld [smem:[#allocation2 + $0x28]]
    %v664 = vstv %s663
    %v665 = vmul.f32 %v613, %v664
    %s666 = sld [smem:[#allocation2 + $0x29]]
    %v667 = vstv %s666
    %v668 = vmul.f32 %v608, %v667
    %v669 = vadd.f32 %v665, %v668
    %s670 = sld [smem:[#allocation2 + $0x2a]]
    %v671 = vstv %s670
    %v672 = vmul.f32 %v617, %v671
    %v673 = vadd.f32 %v669, %v672
    %s674 = sld [smem:[#allocation2 + $0x2b]]
    %v675 = vstv %s674
    %v676 = vadd.f32 %v673, %v675
    %v677 = vxor.u32 %v676, 2147483648
    %v678 = vmul.f32 %v677, 1.442695
    %v679 = vpow.pop %v678
    %v680 = vadd.f32 %v679, 1.0
    %v681 = vrcp.pop %v680
    %v682 = vmul.f32 1.0, %v681
    %v683 = vmul.f32 %v676, %v682
    %685 = vrot.lane.b32.xlu0 %v683, 1
    %v686 = vpop.permute.xlu0 %685
    %v688 = vsel %vm50, 0.0, %v686
    %689 = vrot.lane.b32.xlu0 %v683, 127
    %v690 = vpop.permute.xlu0 %689
    %v692 = vsel %vm50, %v690, 0.0
    %s693 = sld [smem:[#allocation2 + $0x2c]]
    %v694 = vstv %s693
    %v695 = vmul.f32 %v688, %v694
    %s696 = sld [smem:[#allocation2 + $0x2d]]
    %v697 = vstv %s696
    %v698 = vmul.f32 %v683, %v697
    %v699 = vadd.f32 %v695, %v698
    %s700 = sld [smem:[#allocation2 + $0x2e]]
    %v701 = vstv %s700
    %v702 = vmul.f32 %v692, %v701
    %v703 = vadd.f32 %v699, %v702
    %s704 = sld [smem:[#allocation2 + $0x2f]]
    %v705 = vstv %s704
    %v706 = vadd.f32 %v703, %v705
    %v707 = vmax.f32 %v706, 0.0
    %v708 = vmul.f32 %v707, 0.5
    %v709 = vmul.f32 %v708, 1.442695
    %v710 = vpow.pop %v709
    %v711 = vld [vmem:[%s2] sm:$0x3]
    %v712 = vmul.f32 %v710, %v711
    %v713 = vadd.f32 %v662, %v712
    %vm714 = vcmask 9216
    %715 = vst.msk [vmem:[%s7] sm:$0x3] %vm714, %v713
    %v716 = vadd.f32 %v707, 1.0
    %v717 = vmul.f32 %v662, %v662
    %v718 = vsub.f32 %v716, %v717
    %v719 = vmul.f32 %v707, 1.442695
    %v720 = vpow.pop %v719
    %v721 = vsub.f32 %v718, %v720
    %v722 = vsel %vm714, %v721, 0.0
    %723 = vadd.xlane.f32.xlu0 %v722
    %v724 = vpop.xlane.xlu0 %723
    %v725 = vmul.f32 %v724, -0.5
    %vm726 = vcmask 1041408
    %v727 = vsel %vm726, %v725, 0.0
    %v728 = vrot.slane %v727, 4
    %v729 = vadd.f32 %v727, %v728
    %v730 = vrot.slane %v729, 2
    %v731 = vadd.f32 %v729, %v730
    %v732 = vrot.slane %v731, 1
    %v733 = vadd.f32 %v731, %v732
    %v734 = vrcp.pop 2.0
    %v735 = vmul.f32 %v733, %v734
    %vm736 = vcmask 0
    %737 = vst.msk [vmem:[#allocation5] sm:$0x1] %vm736, %v735
    // Predicated region
    $region34: #{nvae_l4_forward.4} parent=1 // pred_check
      _
    $region35: #{nvae_l4_forward.4} parent=1 // pred_check_branch
      %739 = sbr.rel (0) target = $region37
    $region36: #{nvae_l4_forward.4} parent=1 // pred_region
      _
    $region37: #{nvae_l4_forward.4} parent=1 // pred_fallthru
      _
    // Predicated region
    $region38: #{nvae_l4_forward.4} parent=1 // pred_check
      _
    $region39: #{nvae_l4_forward.4} parent=1 // pred_check_branch
      %741 = sbr.rel (0) target = $region41
    $region40: #{nvae_l4_forward.4} parent=1 // pred_region
      _
    $region41: #{nvae_l4_forward.4} parent=1 // pred_fallthru
      _
    // Predicated region
    $region42: #{nvae_l4_forward.4} parent=1 // pred_check
      _
    $region43: #{nvae_l4_forward.4} parent=1 // pred_check_branch
      %743 = sbr.rel (0) target = $region45
    $region44: #{nvae_l4_forward.4} parent=1 // pred_region
      _
    $region45: #{nvae_l4_forward.4} parent=1 // pred_fallthru
      _
    // Predicated region
    $region46: #{nvae_l4_forward.4} parent=1 // pred_check
      _
    $region47: #{nvae_l4_forward.4} parent=1 // pred_check_branch
      %745 = sbr.rel (0) target = $region49
    $region48: #{nvae_l4_forward.4} parent=1 // pred_region
      _
    $region49: #{nvae_l4_forward.4} parent=1 // pred_fallthru
      _
    // Predicated region
    $region50: #{nvae_l4_forward.4} parent=1 // pred_check
      _
    $region51: #{nvae_l4_forward.4} parent=1 // pred_check_branch
      %747 = sbr.rel (0) target = $region53
    $region52: #{nvae_l4_forward.4} parent=1 // pred_region
      %s749 = ssub.s32 16, 16
      %750 = vsyncadd [#allocation3], %s749
      %s752 = sshll.u32 [#allocation5], 4
      %s753 = int_to_ptr.vmem [resolvable:$true] %s752
      %755 = dma.vmem_to_hbm [thread:$0]  %s753, 16, %s11, [#allocation3]
    $region53: #{nvae_l4_forward.4} parent=1 // pred_fallthru
      _
    // Predicated region
    $region54: #{nvae_l4_forward.4} parent=1 // pred_check
      _
    $region55: #{nvae_l4_forward.4} parent=1 // pred_check_branch
      %757 = sbr.rel (0) target = $region57
    $region56: #{nvae_l4_forward.4} parent=1 // pred_region
      _
    $region57: #{nvae_l4_forward.4} parent=1 // pred_fallthru
      _
    // Predicated region
    $region58: #{nvae_l4_forward.4} parent=1 // pred_check
      _
    $region59: #{nvae_l4_forward.4} parent=1 // pred_check_branch
      %759 = sbr.rel (0) target = $region61
    $region60: #{nvae_l4_forward.4} parent=1 // pred_region
      _
    $region61: #{nvae_l4_forward.4} parent=1 // pred_fallthru
      _
    // Predicated region
    $region62: #{nvae_l4_forward.4} parent=1 // pred_check
      _
    $region63: #{nvae_l4_forward.4} parent=1 // pred_check_branch
      %761 = sbr.rel (0) target = $region65
    $region64: #{nvae_l4_forward.4} parent=1 // pred_region
      _
    $region65: #{nvae_l4_forward.4} parent=1 // pred_fallthru
      _
    // Predicated region
    $region66: #{nvae_l4_forward.4} parent=1 // pred_check
      _
    $region67: #{nvae_l4_forward.4} parent=1 // pred_check_branch
      %763 = sbr.rel (0) target = $region69
    $region68: #{nvae_l4_forward.4} parent=1 // pred_region
      _
    $region69: #{nvae_l4_forward.4} parent=1 // pred_fallthru
      _
    // Predicated region
    $region70: #{nvae_l4_forward.4} parent=1 // pred_check
      _
    $region71: #{nvae_l4_forward.4} parent=1 // pred_check_branch
      %765 = sbr.rel (0) target = $region73
    $region72: #{nvae_l4_forward.4} parent=1 // pred_region
      %766 = dma.done [#allocation3], 16
    $region73: #{nvae_l4_forward.4} parent=1 // pred_fallthru
      _
    %767 = vsyncpa [#allocation3], 1
    %768 = vsyncpa [#allocation4], 1

// kernel: nvae_l4_forward.5
$region0: #{nvae_l4_forward.5}
  #allocation0 [shape = 'u32[]', space=smem, size = 0x4, offset = 0x4, fixed_abs, tag = 'smem constant byte address 0x4 - core index']
  #allocation1 [shape = 'u32[144,128]{1,0:T(1,128)}', space=vmem, size = 0x12000, scoped, tag = 'internal scratch']
  #allocation2 [shape = 'f32[1,1]{1,0:T(1,128)S(1)}', space=vmem, size = 0x200, scoped, tag = 'scoped memory for nvae_l4_forward.5']
  %s0 = inlined_call_operand.vmem [shape: f32[294], index: 0, kind: input, shape index: {}]
  %s1 = inlined_call_operand.vmem [shape: f32[1,2,2], index: 1, kind: input, shape index: {}]
  %s2 = inlined_call_operand.vmem [shape: f32[1,2,4], index: 2, kind: input, shape index: {}]
  %s3 = inlined_call_operand.vmem [shape: f32[1,2,8], index: 3, kind: input, shape index: {}]
  %s4 = inlined_call_operand.vmem [shape: f32[1,2,16], index: 4, kind: input, shape index: {}]
  %s5 = inlined_call_operand.vmem [shape: f32[1,2,4], index: 5, kind: input, shape index: {}]
  %s6 = inlined_call_operand.vmem [shape: f32[1,2,8], index: 6, kind: input, shape index: {}]
  %s7 = inlined_call_operand.vmem [shape: f32[1,2,16], index: 7, kind: input, shape index: {}]
  %s8 = inlined_call_operand.vmem [shape: f32[1,2,32], index: 8, kind: input, shape index: {}]
  %s9 = inlined_call_operand.<no memory space> [shape: f32[1,1], index: 9, kind: input, shape index: {}]
  %s10 = inlined_call_operand.vmem [shape: f32[2,4], index: 10, kind: input, shape index: {}]
  %s11 = inlined_call_operand.vmem [shape: f32[4,8], index: 11, kind: input, shape index: {}]
  %s12 = inlined_call_operand.vmem [shape: f32[8,16], index: 12, kind: input, shape index: {}]
  %s13 = inlined_call_operand.vmem [shape: f32[16,32], index: 13, kind: input, shape index: {}]
  %s14 = inlined_call_operand.hbm [shape: f32[1,2,32], index: 14, kind: output, shape index: {0}]
  %s15 = inlined_call_operand.vmem [shape: f32[1,8], index: 15, kind: output, shape index: {1}]
  %16 = xla_tuple %s14, %s15
  %s17 = sld [smem:[#allocation0]]
  $region78: #{nvae_l4_forward.5} parent=0
    _
  %s19 = ssub.s32 1, %s17
  %s20 = scalar_select 0, %s19, %s17
  %v21 = vstv %s9
  %22 = vst [vmem:[#allocation2] sm:$0x1] %v21
  $region1: #{nvae_l4_forward.5} parent=0
    #allocation3 [shape = 'u8[1536]{0}', space=smem, size = 0x600, scoped, tag = 'input window, operand 0, single buffered']
    #allocation4 [shape = 's32[1]{0}', space=sflag, size = 0x4, scoped, tag = 'scoped memory for nvae_l4_forward.5']
    #allocation5 [shape = 's32[1]{0}', space=sflag, size = 0x4, scoped, tag = 'scoped memory for nvae_l4_forward.5']
    #allocation6 [shape = 'u8[1024]{0}', space=vmem, size = 0x400, scoped, tag = 'output window, operand 0, single buffered']
    %23 = vsyncpa [#allocation5], 0
    %24 = vsyncpa [#allocation4], 0
    // Predicated region
    $region2: #{nvae_l4_forward.5} parent=1 // pred_check
      _
    $region3: #{nvae_l4_forward.5} parent=1 // pred_check_branch
      %26 = sbr.rel (0) target = $region5
    $region4: #{nvae_l4_forward.5} parent=1 // pred_region
      %s28 = ssub.s32 48, 48
      %29 = vsyncadd [#allocation5], %s28
      %s31 = sshll.u32 %s0, 4
      %s32 = int_to_ptr.vmem [resolvable:$true] %s31
      %34 = dma.vmem_to_smem %s32, 48, [#allocation3], [#allocation5]
    $region5: #{nvae_l4_forward.5} parent=1 // pred_fallthru
      _
    // Predicated region
    $region6: #{nvae_l4_forward.5} parent=1 // pred_check
      _
    $region7: #{nvae_l4_forward.5} parent=1 // pred_check_branch
      %36 = sbr.rel (0) target = $region9
    $region8: #{nvae_l4_forward.5} parent=1 // pred_region
      _
    $region9: #{nvae_l4_forward.5} parent=1 // pred_fallthru
      _
    // Predicated region
    $region10: #{nvae_l4_forward.5} parent=1 // pred_check
      _
    $region11: #{nvae_l4_forward.5} parent=1 // pred_check_branch
      %38 = sbr.rel (0) target = $region13
    $region12: #{nvae_l4_forward.5} parent=1 // pred_region
      _
    $region13: #{nvae_l4_forward.5} parent=1 // pred_fallthru
      _
    // Predicated region
    $region14: #{nvae_l4_forward.5} parent=1 // pred_check
      _
    $region15: #{nvae_l4_forward.5} parent=1 // pred_check_branch
      %40 = sbr.rel (0) target = $region17
    $region16: #{nvae_l4_forward.5} parent=1 // pred_region
      _
    $region17: #{nvae_l4_forward.5} parent=1 // pred_fallthru
      _
    // Predicated region
    $region18: #{nvae_l4_forward.5} parent=1 // pred_check
      _
    $region19: #{nvae_l4_forward.5} parent=1 // pred_check_branch
      %42 = sbr.rel (0) target = $region21
    $region20: #{nvae_l4_forward.5} parent=1 // pred_region
      _
    $region21: #{nvae_l4_forward.5} parent=1 // pred_fallthru
      _
    // Predicated region
    $region22: #{nvae_l4_forward.5} parent=1 // pred_check
      _
    $region23: #{nvae_l4_forward.5} parent=1 // pred_check_branch
      %44 = sbr.rel (0) target = $region25
    $region24: #{nvae_l4_forward.5} parent=1 // pred_region
      _
    $region25: #{nvae_l4_forward.5} parent=1 // pred_fallthru
      _
    // Predicated region
    $region26: #{nvae_l4_forward.5} parent=1 // pred_check
      _
    $region27: #{nvae_l4_forward.5} parent=1 // pred_check_branch
      %46 = sbr.rel (0) target = $region29
    $region28: #{nvae_l4_forward.5} parent=1 // pred_region
      _
    $region29: #{nvae_l4_forward.5} parent=1 // pred_fallthru
      _
    // Predicated region
    $region30: #{nvae_l4_forward.5} parent=1 // pred_check
      _
    $region31: #{nvae_l4_forward.5} parent=1 // pred_check_branch
      %48 = sbr.rel (0) target = $region33
    $region32: #{nvae_l4_forward.5} parent=1 // pred_region
      _
    $region33: #{nvae_l4_forward.5} parent=1 // pred_fallthru
      _
    // Predicated region
    $region34: #{nvae_l4_forward.5} parent=1 // pred_check
      _
    $region35: #{nvae_l4_forward.5} parent=1 // pred_check_branch
      %50 = sbr.rel (0) target = $region37
    $region36: #{nvae_l4_forward.5} parent=1 // pred_region
      _
    $region37: #{nvae_l4_forward.5} parent=1 // pred_fallthru
      _
    // Predicated region
    $region38: #{nvae_l4_forward.5} parent=1 // pred_check
      _
    $region39: #{nvae_l4_forward.5} parent=1 // pred_check_branch
      %52 = sbr.rel (0) target = $region41
    $region40: #{nvae_l4_forward.5} parent=1 // pred_region
      _
    $region41: #{nvae_l4_forward.5} parent=1 // pred_fallthru
      _
    // Predicated region
    $region42: #{nvae_l4_forward.5} parent=1 // pred_check
      _
    $region43: #{nvae_l4_forward.5} parent=1 // pred_check_branch
      %54 = sbr.rel (0) target = $region45
    $region44: #{nvae_l4_forward.5} parent=1 // pred_region
      _
    $region45: #{nvae_l4_forward.5} parent=1 // pred_fallthru
      _
    // Predicated region
    $region46: #{nvae_l4_forward.5} parent=1 // pred_check
      _
    $region47: #{nvae_l4_forward.5} parent=1 // pred_check_branch
      %56 = sbr.rel (0) target = $region49
    $region48: #{nvae_l4_forward.5} parent=1 // pred_region
      _
    $region49: #{nvae_l4_forward.5} parent=1 // pred_fallthru
      _
    // Predicated region
    $region50: #{nvae_l4_forward.5} parent=1 // pred_check
      _
    $region51: #{nvae_l4_forward.5} parent=1 // pred_check_branch
      %58 = sbr.rel (0) target = $region53
    $region52: #{nvae_l4_forward.5} parent=1 // pred_region
      _
    $region53: #{nvae_l4_forward.5} parent=1 // pred_fallthru
      _
    // Predicated region
    $region54: #{nvae_l4_forward.5} parent=1 // pred_check
      _
    $region55: #{nvae_l4_forward.5} parent=1 // pred_check_branch
      %60 = sbr.rel (0) target = $region57
    $region56: #{nvae_l4_forward.5} parent=1 // pred_region
      _
    $region57: #{nvae_l4_forward.5} parent=1 // pred_fallthru
      _
    // Predicated region
    $region58: #{nvae_l4_forward.5} parent=1 // pred_check
      _
    $region59: #{nvae_l4_forward.5} parent=1 // pred_check_branch
      %62 = sbr.rel (0) target = $region61
    $region60: #{nvae_l4_forward.5} parent=1 // pred_region
      %63 = dma.done [#allocation5], 48
    $region61: #{nvae_l4_forward.5} parent=1 // pred_fallthru
      _
    %64 = sfence
    %v65 = vld [vmem:[%s1] sm:$0x3]
    %v66 = vld [vmem:[%s10] sm:$0x3]
    %vm67 = vcmask 15360
    %v69 = vsel %vm67, 0.0, 0
    %vm71 = vcmask 1041408
    %v73 = vsel %vm71, %v66, 0
    %75 = vmatprep.subr.mxu0 0.0
    %76 = vmatpush1.msra.mxu0 %v73
    %77 = vmatprep.subr.mxu0 0.0
    %78 = vmatpush1.msra.mxu0 0.0
    %79 = vmatprep.subr.mxu0 0.0
    %80 = vmatpush1.msra.mxu0 0.0
    %81 = vmatprep.subr.mxu0 0.0
    %82 = vmatpush1.msra.mxu0 0.0
    %83 = vmatprep.subr.mxu0 0.0
    %84 = vmatpush1.msra.mxu0 0.0
    %85 = vmatprep.subr.mxu0 0.0
    %86 = vmatpush1.msra.mxu0 0.0
    %87 = vmatprep.subr.mxu0 0.0
    %88 = vmatpush1.msra.mxu0 0.0
    %89 = vmatprep.subr.mxu0 0.0
    %90 = vmatpush1.msra.mxu0 0.0
    %91 = vmatprep.subr.mxu0 0.0
    %92 = vmatpush1.msra.mxu0 0.0
    %93 = vmatprep.subr.mxu0 0.0
    %94 = vmatpush1.msra.mxu0 0.0
    %95 = vmatprep.subr.mxu0 0.0
    %96 = vmatpush1.msra.mxu0 0.0
    %97 = vmatprep.subr.mxu0 0.0
    %98 = vmatpush1.msra.mxu0 0.0
    %99 = vmatprep.subr.mxu0 0.0
    %100 = vmatpush1.msra.mxu0 0.0
    %101 = vmatprep.subr.mxu0 0.0
    %102 = vmatpush1.msra.mxu0 0.0
    %103 = vmatprep.subr.mxu0 0.0
    %104 = vmatpush1.msra.mxu0 0.0
    %105 = vmatprep.subr.mxu0 0.0
    %106 = vmatpush1.msra.mxu0 0.0
    %107 = vmatprep.subr.mxu0 0.0
    %108 = vmatpush1.msra.mxu0 0.0
    %109 = vmatprep.subr.mxu0 0.0
    %110 = vmatpush1.msra.mxu0 0.0
    %111 = vmatprep.subr.mxu0 0.0
    %112 = vmatpush1.msra.mxu0 0.0
    %113 = vmatprep.subr.mxu0 0.0
    %114 = vmatpush1.msra.mxu0 0.0
    %115 = vmatprep.subr.mxu0 0.0
    %116 = vmatpush1.msra.mxu0 0.0
    %117 = vmatprep.subr.mxu0 0.0
    %118 = vmatpush1.msra.mxu0 0.0
    %119 = vmatprep.subr.mxu0 0.0
    %120 = vmatpush1.msra.mxu0 0.0
    %121 = vmatprep.subr.mxu0 0.0
    %122 = vmatpush1.msra.mxu0 0.0
    %123 = vmatprep.subr.mxu0 0.0
    %124 = vmatpush1.msra.mxu0 0.0
    %125 = vmatprep.subr.mxu0 0.0
    %126 = vmatpush1.msra.mxu0 0.0
    %127 = vmatprep.subr.mxu0 0.0
    %128 = vmatpush1.msra.mxu0 0.0
    %129 = vmatprep.subr.mxu0 0.0
    %130 = vmatpush1.msra.mxu0 0.0
    %131 = vmatprep.subr.mxu0 0.0
    %132 = vmatpush1.msra.mxu0 0.0
    %133 = vmatprep.subr.mxu0 0.0
    %134 = vmatpush1.msra.mxu0 0.0
    %135 = vmatprep.subr.mxu0 0.0
    %136 = vmatpush1.msra.mxu0 0.0
    %137 = vmatprep.subr.mxu0 0.0
    %138 = vmatpush1.msra.mxu0 0.0
    %139 = vmatprep.mubr.f32.mxu0 0.0
    %140 = vmatmul.mubr.f32.gmra.mrb[0].mxu0 %v69
    %v141 = vpop.f32.mrb[0].mxu0
    %v142 = vadd.f32 0.0, %v141
    %v143 = vpop.f32.mrb[0].mxu0
    %144 = vdwg.mxu0
    %v146 = vsel %vm67, %v65, 0
    %148 = vmatprep.subr.mxu0 0.0
    %149 = vmatpush1.msra.mxu0 %v73
    %150 = vmatprep.subr.mxu0 0.0
    %151 = vmatpush1.msra.mxu0 0.0
    %152 = vmatprep.subr.mxu0 0.0
    %153 = vmatpush1.msra.mxu0 0.0
    %154 = vmatprep.subr.mxu0 0.0
    %155 = vmatpush1.msra.mxu0 0.0
    %156 = vmatprep.subr.mxu0 0.0
    %157 = vmatpush1.msra.mxu0 0.0
    %158 = vmatprep.subr.mxu0 0.0
    %159 = vmatpush1.msra.mxu0 0.0
    %160 = vmatprep.subr.mxu0 0.0
    %161 = vmatpush1.msra.mxu0 0.0
    %162 = vmatprep.subr.mxu0 0.0
    %163 = vmatpush1.msra.mxu0 0.0
    %164 = vmatprep.subr.mxu0 0.0
    %165 = vmatpush1.msra.mxu0 0.0
    %166 = vmatprep.subr.mxu0 0.0
    %167 = vmatpush1.msra.mxu0 0.0
    %168 = vmatprep.subr.mxu0 0.0
    %169 = vmatpush1.msra.mxu0 0.0
    %170 = vmatprep.subr.mxu0 0.0
    %171 = vmatpush1.msra.mxu0 0.0
    %172 = vmatprep.subr.mxu0 0.0
    %173 = vmatpush1.msra.mxu0 0.0
    %174 = vmatprep.subr.mxu0 0.0
    %175 = vmatpush1.msra.mxu0 0.0
    %176 = vmatprep.subr.mxu0 0.0
    %177 = vmatpush1.msra.mxu0 0.0
    %178 = vmatprep.subr.mxu0 0.0
    %179 = vmatpush1.msra.mxu0 0.0
    %180 = vmatprep.subr.mxu0 0.0
    %181 = vmatpush1.msra.mxu0 0.0
    %182 = vmatprep.subr.mxu0 0.0
    %183 = vmatpush1.msra.mxu0 0.0
    %184 = vmatprep.subr.mxu0 0.0
    %185 = vmatpush1.msra.mxu0 0.0
    %186 = vmatprep.subr.mxu0 0.0
    %187 = vmatpush1.msra.mxu0 0.0
    %188 = vmatprep.subr.mxu0 0.0
    %189 = vmatpush1.msra.mxu0 0.0
    %190 = vmatprep.subr.mxu0 0.0
    %191 = vmatpush1.msra.mxu0 0.0
    %192 = vmatprep.subr.mxu0 0.0
    %193 = vmatpush1.msra.mxu0 0.0
    %194 = vmatprep.subr.mxu0 0.0
    %195 = vmatpush1.msra.mxu0 0.0
    %196 = vmatprep.subr.mxu0 0.0
    %197 = vmatpush1.msra.mxu0 0.0
    %198 = vmatprep.subr.mxu0 0.0
    %199 = vmatpush1.msra.mxu0 0.0
    %200 = vmatprep.subr.mxu0 0.0
    %201 = vmatpush1.msra.mxu0 0.0
    %202 = vmatprep.subr.mxu0 0.0
    %203 = vmatpush1.msra.mxu0 0.0
    %204 = vmatprep.subr.mxu0 0.0
    %205 = vmatpush1.msra.mxu0 0.0
    %206 = vmatprep.subr.mxu0 0.0
    %207 = vmatpush1.msra.mxu0 0.0
    %208 = vmatprep.subr.mxu0 0.0
    %209 = vmatpush1.msra.mxu0 0.0
    %210 = vmatprep.subr.mxu0 0.0
    %211 = vmatpush1.msra.mxu0 0.0
    %212 = vmatprep.mubr.f32.mxu0 0.0
    %213 = vmatmul.mubr.f32.gmra.mrb[0].mxu0 %v146
    %v214 = vpop.f32.mrb[0].mxu0
    %v215 = vadd.f32 0.0, %v214
    %v216 = vpop.f32.mrb[0].mxu0
    %217 = vdwg.mxu0
    %219 = vrot.lane.b32.xlu0 %v142, 1
    %v220 = vpop.permute.xlu0 %219
    %vm222 = vcmask 7168
    %v223 = vsel %vm222, 0.0, %v220
    %224 = vrot.lane.b32.xlu0 %v142, 127
    %v225 = vpop.permute.xlu0 %224
    %vm227 = vcmask 23552
    %v228 = vsel %vm227, %v225, 0.0
    %230 = vrot.lane.b32.xlu0 %v215, 1
    %v231 = vpop.permute.xlu0 %230
    %v233 = vsel %vm222, 0.0, %v231
    %234 = vrot.lane.b32.xlu0 %v215, 127
    %v235 = vpop.permute.xlu0 %234
    %v237 = vsel %vm227, %v235, 0.0
    %s238 = sld [smem:[#allocation3]]
    %v239 = vstv %s238
    %v240 = vmul.f32 %v223, %v239
    %s241 = sld [smem:[#allocation3 + $0x1]]
    %v242 = vstv %s241
    %v243 = vmul.f32 %v142, %v242
    %v244 = vadd.f32 %v240, %v243
    %s245 = sld [smem:[#allocation3 + $0x2]]
    %v246 = vstv %s245
    %v247 = vmul.f32 %v228, %v246
    %v248 = vadd.f32 %v244, %v247
    %s249 = sld [smem:[#allocation3 + $0x3]]
    %v250 = vstv %s249
    %v251 = vmul.f32 %v233, %v250
    %v252 = vadd.f32 %v248, %v251
    %s253 = sld [smem:[#allocation3 + $0x4]]
    %v254 = vstv %s253
    %v255 = vmul.f32 %v215, %v254
    %v256 = vadd.f32 %v252, %v255
    %s257 = sld [smem:[#allocation3 + $0x5]]
    %v258 = vstv %s257
    %v259 = vmul.f32 %v237, %v258
    %v260 = vadd.f32 %v256, %v259
    %s261 = sld [smem:[#allocation3 + $0xc]]
    %v262 = vstv %s261
    %v263 = vadd.f32 %v260, %v262
    %v264 = vxor.u32 %v263, 2147483648
    %v265 = vmul.f32 %v264, 1.442695
    %v266 = vpow.pop %v265
    %v267 = vadd.f32 %v266, 1.0
    %v268 = vrcp.pop %v267
    %v269 = vmul.f32 1.0, %v268
    %v270 = vmul.f32 %v263, %v269
    %s271 = sld [smem:[#allocation3 + $0x6]]
    %v272 = vstv %s271
    %v273 = vmul.f32 %v223, %v272
    %s274 = sld [smem:[#allocation3 + $0x7]]
    %v275 = vstv %s274
    %v276 = vmul.f32 %v142, %v275
    %v277 = vadd.f32 %v273, %v276
    %s278 = sld [smem:[#allocation3 + $0x8]]
    %v279 = vstv %s278
    %v280 = vmul.f32 %v228, %v279
    %v281 = vadd.f32 %v277, %v280
    %s282 = sld [smem:[#allocation3 + $0x9]]
    %v283 = vstv %s282
    %v284 = vmul.f32 %v233, %v283
    %v285 = vadd.f32 %v281, %v284
    %s286 = sld [smem:[#allocation3 + $0xa]]
    %v287 = vstv %s286
    %v288 = vmul.f32 %v215, %v287
    %v289 = vadd.f32 %v285, %v288
    %s290 = sld [smem:[#allocation3 + $0xb]]
    %v291 = vstv %s290
    %v292 = vmul.f32 %v237, %v291
    %v293 = vadd.f32 %v289, %v292
    %s294 = sld [smem:[#allocation3 + $0xd]]
    %v295 = vstv %s294
    %v296 = vadd.f32 %v293, %v295
    %v297 = vxor.u32 %v296, 2147483648
    %v298 = vmul.f32 %v297, 1.442695
    %v299 = vpow.pop %v298
    %v300 = vadd.f32 %v299, 1.0
    %v301 = vrcp.pop %v300
    %v302 = vmul.f32 1.0, %v301
    %v303 = vmul.f32 %v296, %v302
    %305 = vrot.lane.b32.xlu0 %v270, 1
    %v306 = vpop.permute.xlu0 %305
    %v308 = vsel %vm222, 0.0, %v306
    %309 = vrot.lane.b32.xlu0 %v270, 127
    %v310 = vpop.permute.xlu0 %309
    %v312 = vsel %vm227, %v310, 0.0
    %314 = vrot.lane.b32.xlu0 %v303, 1
    %v315 = vpop.permute.xlu0 %314
    %v317 = vsel %vm222, 0.0, %v315
    %318 = vrot.lane.b32.xlu0 %v303, 127
    %v319 = vpop.permute.xlu0 %318
    %v321 = vsel %vm227, %v319, 0.0
    %s322 = sld [smem:[#allocation3 + $0xe]]
    %v323 = vstv %s322
    %v324 = vmul.f32 %v308, %v323
    %s325 = sld [smem:[#allocation3 + $0xf]]
    %v326 = vstv %s325
    %v327 = vmul.f32 %v270, %v326
    %v328 = vadd.f32 %v324, %v327
    %s329 = sld [smem:[#allocation3 + $0x10]]
    %v330 = vstv %s329
    %v331 = vmul.f32 %v312, %v330
    %v332 = vadd.f32 %v328, %v331
    %s333 = sld [smem:[#allocation3 + $0x11]]
    %v334 = vstv %s333
    %v335 = vmul.f32 %v317, %v334
    %v336 = vadd.f32 %v332, %v335
    %s337 = sld [smem:[#allocation3 + $0x12]]
    %v338 = vstv %s337
    %v339 = vmul.f32 %v303, %v338
    %v340 = vadd.f32 %v336, %v339
    %s341 = sld [smem:[#allocation3 + $0x13]]
    %v342 = vstv %s341
    %v343 = vmul.f32 %v321, %v342
    %v344 = vadd.f32 %v340, %v343
    %s345 = sld [smem:[#allocation3 + $0x14]]
    %v346 = vstv %s345
    %v347 = vadd.f32 %v344, %v346
    %v348 = vxor.u32 %v347, 2147483648
    %v349 = vmul.f32 %v348, 1.442695
    %v350 = vpow.pop %v349
    %v351 = vadd.f32 %v350, 1.0
    %v352 = vrcp.pop %v351
    %v353 = vmul.f32 1.0, %v352
    %v354 = vmul.f32 %v347, %v353
    %356 = vrot.lane.b32.xlu0 %v354, 1
    %v357 = vpop.permute.xlu0 %356
    %v359 = vsel %vm222, 0.0, %v357
    %360 = vrot.lane.b32.xlu0 %v354, 127
    %v361 = vpop.permute.xlu0 %360
    %v363 = vsel %vm227, %v361, 0.0
    %s364 = sld [smem:[#allocation3 + $0x54]]
    %v365 = vstv %s364
    %v366 = vmul.f32 %v359, %v365
    %s367 = sld [smem:[#allocation3 + $0x55]]
    %v368 = vstv %s367
    %v369 = vmul.f32 %v354, %v368
    %v370 = vadd.f32 %v366, %v369
    %s371 = sld [smem:[#allocation3 + $0x56]]
    %v372 = vstv %s371
    %v373 = vmul.f32 %v363, %v372
    %v374 = vadd.f32 %v370, %v373
    %s375 = sld [smem:[#allocation3 + $0x57]]
    %v376 = vstv %s375
    %v377 = vadd.f32 %v374, %v376
    %v378 = vxor.u32 %v377, 2147483648
    %v379 = vmul.f32 %v378, 1.442695
    %v380 = vpow.pop %v379
    %v381 = vadd.f32 %v380, 1.0
    %v382 = vrcp.pop %v381
    %v383 = vmul.f32 1.0, %v382
    %v384 = vmul.f32 %v377, %v383
    %v385 = vadd.f32 %v354, %v384
    %v386 = vxor.u32 %v385, 2147483648
    %v387 = vmul.f32 %v386, 1.442695
    %v388 = vpow.pop %v387
    %v389 = vadd.f32 %v388, 1.0
    %v390 = vrcp.pop %v389
    %v391 = vmul.f32 1.0, %v390
    %v392 = vmul.f32 %v385, %v391
    %394 = vrot.lane.b32.xlu0 %v392, 1
    %v395 = vpop.permute.xlu0 %394
    %v397 = vsel %vm222, 0.0, %v395
    %398 = vrot.lane.b32.xlu0 %v392, 127
    %v399 = vpop.permute.xlu0 %398
    %v401 = vsel %vm227, %v399, 0.0
    %s402 = sld [smem:[#allocation3 + $0x58]]
    %v403 = vstv %s402
    %v404 = vmul.f32 %v397, %v403
    %s405 = sld [smem:[#allocation3 + $0x59]]
    %v406 = vstv %s405
    %v407 = vmul.f32 %v392, %v406
    %v408 = vadd.f32 %v404, %v407
    %s409 = sld [smem:[#allocation3 + $0x5a]]
    %v410 = vstv %s409
    %v411 = vmul.f32 %v401, %v410
    %v412 = vadd.f32 %v408, %v411
    %s413 = sld [smem:[#allocation3 + $0x5b]]
    %v414 = vstv %s413
    %v415 = vadd.f32 %v412, %v414
    %s416 = sld [smem:[#allocation3 + $0x5c]]
    %v417 = vstv %s416
    %v418 = vmul.f32 %v359, %v417
    %s419 = sld [smem:[#allocation3 + $0x5d]]
    %v420 = vstv %s419
    %v421 = vmul.f32 %v354, %v420
    %v422 = vadd.f32 %v418, %v421
    %s423 = sld [smem:[#allocation3 + $0x5e]]
    %v424 = vstv %s423
    %v425 = vmul.f32 %v363, %v424
    %v426 = vadd.f32 %v422, %v425
    %s427 = sld [smem:[#allocation3 + $0x5f]]
    %v428 = vstv %s427
    %v429 = vadd.f32 %v426, %v428
    %v430 = vxor.u32 %v429, 2147483648
    %v431 = vmul.f32 %v430, 1.442695
    %v432 = vpow.pop %v431
    %v433 = vadd.f32 %v432, 1.0
    %v434 = vrcp.pop %v433
    %v435 = vmul.f32 1.0, %v434
    %v436 = vmul.f32 %v429, %v435
    %v437 = vadd.f32 %v354, %v436
    %v438 = vxor.u32 %v437, 2147483648
    %v439 = vmul.f32 %v438, 1.442695
    %v440 = vpow.pop %v439
    %v441 = vadd.f32 %v440, 1.0
    %v442 = vrcp.pop %v441
    %v443 = vmul.f32 1.0, %v442
    %v444 = vmul.f32 %v437, %v443
    %446 = vrot.lane.b32.xlu0 %v444, 1
    %v447 = vpop.permute.xlu0 %446
    %v449 = vsel %vm222, 0.0, %v447
    %450 = vrot.lane.b32.xlu0 %v444, 127
    %v451 = vpop.permute.xlu0 %450
    %v453 = vsel %vm227, %v451, 0.0
    %s454 = sld [smem:[#allocation3 + $0x60]]
    %v455 = vstv %s454
    %v456 = vmul.f32 %v449, %v455
    %s457 = sld [smem:[#allocation3 + $0x61]]
    %v458 = vstv %s457
    %v459 = vmul.f32 %v444, %v458
    %v460 = vadd.f32 %v456, %v459
    %s461 = sld [smem:[#allocation3 + $0x62]]
    %v462 = vstv %s461
    %v463 = vmul.f32 %v453, %v462
    %v464 = vadd.f32 %v460, %v463
    %s465 = sld [smem:[#allocation3 + $0x63]]
    %v466 = vstv %s465
    %v467 = vadd.f32 %v464, %v466
    %v468 = vld [vmem:[%s2] sm:$0x3]
    %470 = vrot.lane.b32.xlu0 %v468, 1
    %v471 = vpop.permute.xlu0 %470
    %v473 = vsel %vm222, 0.0, %v471
    %474 = vrot.lane.b32.xlu0 %v468, 127
    %v475 = vpop.permute.xlu0 %474
    %v477 = vsel %vm227, %v475, 0.0
    %s478 = sld [smem:[#allocation3 + $0x64]]
    %v479 = vstv %s478
    %v480 = vmul.f32 %v473, %v479
    %s481 = sld [smem:[#allocation3 + $0x65]]
    %v482 = vstv %s481
    %v483 = vmul.f32 %v468, %v482
    %v484 = vadd.f32 %v480, %v483
    %s485 = sld [smem:[#allocation3 + $0x66]]
    %v486 = vstv %s485
    %v487 = vmul.f32 %v477, %v486
    %v488 = vadd.f32 %v484, %v487
    %s489 = sld [smem:[#allocation3 + $0x67]]
    %v490 = vstv %s489
    %v491 = vmul.f32 %v359, %v490
    %v492 = vadd.f32 %v488, %v491
    %s493 = sld [smem:[#allocation3 + $0x68]]
    %v494 = vstv %s493
    %v495 = vmul.f32 %v354, %v494
    %v496 = vadd.f32 %v492, %v495
    %s497 = sld [smem:[#allocation3 + $0x69]]
    %v498 = vstv %s497
    %v499 = vmul.f32 %v363, %v498
    %v500 = vadd.f32 %v496, %v499
    %s501 = sld [smem:[#allocation3 + $0x70]]
    %v502 = vstv %s501
    %v503 = vadd.f32 %v500, %v502
    %v504 = vxor.u32 %v503, 2147483648
    %v505 = vmul.f32 %v504, 1.442695
    %v506 = vpow.pop %v505
    %v507 = vadd.f32 %v506, 1.0
    %v508 = vrcp.pop %v507
    %v509 = vmul.f32 1.0, %v508
    %v510 = vmul.f32 %v503, %v509
    %s511 = sld [smem:[#allocation3 + $0x6a]]
    %v512 = vstv %s511
    %v513 = vmul.f32 %v473, %v512
    %s514 = sld [smem:[#allocation3 + $0x6b]]
    %v515 = vstv %s514
    %v516 = vmul.f32 %v468, %v515
    %v517 = vadd.f32 %v513, %v516
    %s518 = sld [smem:[#allocation3 + $0x6c]]
    %v519 = vstv %s518
    %v520 = vmul.f32 %v477, %v519
    %v521 = vadd.f32 %v517, %v520
    %s522 = sld [smem:[#allocation3 + $0x6d]]
    %v523 = vstv %s522
    %v524 = vmul.f32 %v359, %v523
    %v525 = vadd.f32 %v521, %v524
    %s526 = sld [smem:[#allocation3 + $0x6e]]
    %v527 = vstv %s526
    %v528 = vmul.f32 %v354, %v527
    %v529 = vadd.f32 %v525, %v528
    %s530 = sld [smem:[#allocation3 + $0x6f]]
    %v531 = vstv %s530
    %v532 = vmul.f32 %v363, %v531
    %v533 = vadd.f32 %v529, %v532
    %s534 = sld [smem:[#allocation3 + $0x71]]
    %v535 = vstv %s534
    %v536 = vadd.f32 %v533, %v535
    %v537 = vxor.u32 %v536, 2147483648
    %v538 = vmul.f32 %v537, 1.442695
    %v539 = vpow.pop %v538
    %v540 = vadd.f32 %v539, 1.0
    %v541 = vrcp.pop %v540
    %v542 = vmul.f32 1.0, %v541
    %v543 = vmul.f32 %v536, %v542
    %v544 = vadd.f32 %v468, %v510
    %v545 = vadd.f32 %v354, %v543
    %547 = vrot.lane.b32.xlu0 %v544, 1
    %v548 = vpop.permute.xlu0 %547
    %v550 = vsel %vm222, 0.0, %v548
    %551 = vrot.lane.b32.xlu0 %v544, 127
    %v552 = vpop.permute.xlu0 %551
    %v554 = vsel %vm227, %v552, 0.0
    %556 = vrot.lane.b32.xlu0 %v545, 1
    %v557 = vpop.permute.xlu0 %556
    %v559 = vsel %vm222, 0.0, %v557
    %560 = vrot.lane.b32.xlu0 %v545, 127
    %v561 = vpop.permute.xlu0 %560
    %v563 = vsel %vm227, %v561, 0.0
    %s564 = sld [smem:[#allocation3 + $0x72]]
    %v565 = vstv %s564
    %v566 = vmul.f32 %v550, %v565
    %s567 = sld [smem:[#allocation3 + $0x73]]
    %v568 = vstv %s567
    %v569 = vmul.f32 %v544, %v568
    %v570 = vadd.f32 %v566, %v569
    %s571 = sld [smem:[#allocation3 + $0x74]]
    %v572 = vstv %s571
    %v573 = vmul.f32 %v554, %v572
    %v574 = vadd.f32 %v570, %v573
    %s575 = sld [smem:[#allocation3 + $0x75]]
    %v576 = vstv %s575
    %v577 = vmul.f32 %v559, %v576
    %v578 = vadd.f32 %v574, %v577
    %s579 = sld [smem:[#allocation3 + $0x76]]
    %v580 = vstv %s579
    %v581 = vmul.f32 %v545, %v580
    %v582 = vadd.f32 %v578, %v581
    %s583 = sld [smem:[#allocation3 + $0x77]]
    %v584 = vstv %s583
    %v585 = vmul.f32 %v563, %v584
    %v586 = vadd.f32 %v582, %v585
    %s587 = sld [smem:[#allocation3 + $0x78]]
    %v588 = vstv %s587
    %v589 = vadd.f32 %v586, %v588
    %v590 = vxor.u32 %v589, 2147483648
    %v591 = vmul.f32 %v590, 1.442695
    %v592 = vpow.pop %v591
    %v593 = vadd.f32 %v592, 1.0
    %v594 = vrcp.pop %v593
    %v595 = vmul.f32 1.0, %v594
    %v596 = vmul.f32 %v589, %v595
    %598 = vrot.lane.b32.xlu0 %v596, 1
    %v599 = vpop.permute.xlu0 %598
    %v601 = vsel %vm222, 0.0, %v599
    %602 = vrot.lane.b32.xlu0 %v596, 127
    %v603 = vpop.permute.xlu0 %602
    %v605 = vsel %vm227, %v603, 0.0
    %s606 = sld [smem:[#allocation3 + $0x79]]
    %v607 = vstv %s606
    %v608 = vmul.f32 %v601, %v607
    %s609 = sld [smem:[#allocation3 + $0x7a]]
    %v610 = vstv %s609
    %v611 = vmul.f32 %v596, %v610
    %v612 = vadd.f32 %v608, %v611
    %s613 = sld [smem:[#allocation3 + $0x7b]]
    %v614 = vstv %s613
    %v615 = vmul.f32 %v605, %v614
    %v616 = vadd.f32 %v612, %v615
    %s617 = sld [smem:[#allocation3 + $0x7c]]
    %v618 = vstv %s617
    %v619 = vadd.f32 %v616, %v618
    %s620 = sld [smem:[#allocation3 + $0x7d]]
    %v621 = vstv %s620
    %v622 = vmul.f32 %v473, %v621
    %s623 = sld [smem:[#allocation3 + $0x7e]]
    %v624 = vstv %s623
    %v625 = vmul.f32 %v468, %v624
    %v626 = vadd.f32 %v622, %v625
    %s627 = sld [smem:[#allocation3 + $0x7f]]
    %v628 = vstv %s627
    %v629 = vmul.f32 %v477, %v628
    %v630 = vadd.f32 %v626, %v629
    %s631 = sld [smem:[#allocation3 + $0x80]]
    %v632 = vstv %s631
    %v633 = vmul.f32 %v359, %v632
    %v634 = vadd.f32 %v630, %v633
    %s635 = sld [smem:[#allocation3 + $0x81]]
    %v636 = vstv %s635
    %v637 = vmul.f32 %v354, %v636
    %v638 = vadd.f32 %v634, %v637
    %s639 = sld [smem:[#allocation3 + $0x82]]
    %v640 = vstv %s639
    %v641 = vmul.f32 %v363, %v640
    %v642 = vadd.f32 %v638, %v641
    %s643 = sld [smem:[#allocation3 + $0x89]]
    %v644 = vstv %s643
    %v645 = vadd.f32 %v642, %v644
    %v646 = vxor.u32 %v645, 2147483648
    %v647 = vmul.f32 %v646, 1.442695
    %v648 = vpow.pop %v647
    %v649 = vadd.f32 %v648, 1.0
    %v650 = vrcp.pop %v649
    %v651 = vmul.f32 1.0, %v650
    %v652 = vmul.f32 %v645, %v651
    %s653 = sld [smem:[#allocation3 + $0x83]]
    %v654 = vstv %s653
    %v655 = vmul.f32 %v473, %v654
    %s656 = sld [smem:[#allocation3 + $0x84]]
    %v657 = vstv %s656
    %v658 = vmul.f32 %v468, %v657
    %v659 = vadd.f32 %v655, %v658
    %s660 = sld [smem:[#allocation3 + $0x85]]
    %v661 = vstv %s660
    %v662 = vmul.f32 %v477, %v661
    %v663 = vadd.f32 %v659, %v662
    %s664 = sld [smem:[#allocation3 + $0x86]]
    %v665 = vstv %s664
    %v666 = vmul.f32 %v359, %v665
    %v667 = vadd.f32 %v663, %v666
    %s668 = sld [smem:[#allocation3 + $0x87]]
    %v669 = vstv %s668
    %v670 = vmul.f32 %v354, %v669
    %v671 = vadd.f32 %v667, %v670
    %s672 = sld [smem:[#allocation3 + $0x88]]
    %v673 = vstv %s672
    %v674 = vmul.f32 %v363, %v673
    %v675 = vadd.f32 %v671, %v674
    %s676 = sld [smem:[#allocation3 + $0x8a]]
    %v677 = vstv %s676
    %v678 = vadd.f32 %v675, %v677
    %v679 = vxor.u32 %v678, 2147483648
    %v680 = vmul.f32 %v679, 1.442695
    %v681 = vpow.pop %v680
    %v682 = vadd.f32 %v681, 1.0
    %v683 = vrcp.pop %v682
    %v684 = vmul.f32 1.0, %v683
    %v685 = vmul.f32 %v678, %v684
    %v686 = vadd.f32 %v468, %v652
    %v687 = vadd.f32 %v354, %v685
    %689 = vrot.lane.b32.xlu0 %v686, 1
    %v690 = vpop.permute.xlu0 %689
    %v692 = vsel %vm222, 0.0, %v690
    %693 = vrot.lane.b32.xlu0 %v686, 127
    %v694 = vpop.permute.xlu0 %693
    %v696 = vsel %vm227, %v694, 0.0
    %698 = vrot.lane.b32.xlu0 %v687, 1
    %v699 = vpop.permute.xlu0 %698
    %v701 = vsel %vm222, 0.0, %v699
    %702 = vrot.lane.b32.xlu0 %v687, 127
    %v703 = vpop.permute.xlu0 %702
    %v705 = vsel %vm227, %v703, 0.0
    %s706 = sld [smem:[#allocation3 + $0x8b]]
    %v707 = vstv %s706
    %v708 = vmul.f32 %v692, %v707
    %s709 = sld [smem:[#allocation3 + $0x8c]]
    %v710 = vstv %s709
    %v711 = vmul.f32 %v686, %v710
    %v712 = vadd.f32 %v708, %v711
    %s713 = sld [smem:[#allocation3 + $0x8d]]
    %v714 = vstv %s713
    %v715 = vmul.f32 %v696, %v714
    %v716 = vadd.f32 %v712, %v715
    %s717 = sld [smem:[#allocation3 + $0x8e]]
    %v718 = vstv %s717
    %v719 = vmul.f32 %v701, %v718
    %v720 = vadd.f32 %v716, %v719
    %s721 = sld [smem:[#allocation3 + $0x8f]]
    %v722 = vstv %s721
    %v723 = vmul.f32 %v687, %v722
    %v724 = vadd.f32 %v720, %v723
    %s725 = sld [smem:[#allocation3 + $0x90]]
    %v726 = vstv %s725
    %v727 = vmul.f32 %v705, %v726
    %v728 = vadd.f32 %v724, %v727
    %s729 = sld [smem:[#allocation3 + $0x91]]
    %v730 = vstv %s729
    %v731 = vadd.f32 %v728, %v730
    %v732 = vxor.u32 %v731, 2147483648
    %v733 = vmul.f32 %v732, 1.442695
    %v734 = vpow.pop %v733
    %v735 = vadd.f32 %v734, 1.0
    %v736 = vrcp.pop %v735
    %v737 = vmul.f32 1.0, %v736
    %v738 = vmul.f32 %v731, %v737
    %740 = vrot.lane.b32.xlu0 %v738, 1
    %v741 = vpop.permute.xlu0 %740
    %v743 = vsel %vm222, 0.0, %v741
    %744 = vrot.lane.b32.xlu0 %v738, 127
    %v745 = vpop.permute.xlu0 %744
    %v747 = vsel %vm227, %v745, 0.0
    %s748 = sld [smem:[#allocation3 + $0x92]]
    %v749 = vstv %s748
    %v750 = vmul.f32 %v743, %v749
    %s751 = sld [smem:[#allocation3 + $0x93]]
    %v752 = vstv %s751
    %v753 = vmul.f32 %v738, %v752
    %v754 = vadd.f32 %v750, %v753
    %s755 = sld [smem:[#allocation3 + $0x94]]
    %v756 = vstv %s755
    %v757 = vmul.f32 %v747, %v756
    %v758 = vadd.f32 %v754, %v757
    %s759 = sld [smem:[#allocation3 + $0x95]]
    %v760 = vstv %s759
    %v761 = vadd.f32 %v758, %v760
    %v762 = vmul.f32 %v467, 1.442695
    %v763 = vpow.pop %v762
    %v764 = vadd.f32 %v761, 1.0
    %v765 = vmul.f32 %v619, %v619
    %v766 = vrcp.pop %v763
    %v767 = vmul.f32 %v765, %v766
    %v768 = vsub.f32 %v764, %v767
    %v769 = vmul.f32 %v761, 1.442695
    %v770 = vpow.pop %v769
    %v771 = vsub.f32 %v768, %v770
    %vm772 = vcmask 25600
    %v773 = vsel %vm772, %v771, 0.0
    %774 = vadd.xlane.f32.xlu0 %v773
    %v775 = vpop.xlane.xlu0 %774
    %v776 = vmul.f32 %v775, -0.5
    %v777 = vsel %vm71, %v776, 0.0
    %v778 = vrot.slane %v777, 4
    %v779 = vadd.f32 %v777, %v778
    %v780 = vrot.slane %v779, 2
    %v781 = vadd.f32 %v779, %v780
    %v782 = vrot.slane %v781, 1
    %v783 = vadd.f32 %v781, %v782
    %v784 = vrcp.pop 2.0
    %v785 = vmul.f32 %v783, %v784
    %v786 = vadd.f32 %v415, %v619
    %v787 = vadd.f32 %v467, %v761
    %v788 = vmul.f32 %v787, 0.5
    %v789 = vmul.f32 %v788, 1.442695
    %v790 = vpow.pop %v789
    %v791 = vld [vmem:[%s5] sm:$0x3]
    %v792 = vmul.f32 %v790, %v791
    %v793 = vadd.f32 %v786, %v792
    %v794 = vld [vmem:[%s11] sm:$0xf]
    %vm795 = vcmask 31744
    %v796 = vsel %vm795, %v354, 0
    %vm798 = vcmask 1043456
    %v800 = vsel %vm798, %v794, 0
    %802 = vmatprep.subr.mxu0 0.0
    %803 = vmatpush1.msra.mxu0 %v800
    %804 = vmatprep.subr.mxu0 0.0
    %805 = vmatpush1.msra.mxu0 0.0
    %806 = vmatprep.subr.mxu0 0.0
    %807 = vmatpush1.msra.mxu0 0.0
    %808 = vmatprep.subr.mxu0 0.0
    %809 = vmatpush1.msra.mxu0 0.0
    %810 = vmatprep.subr.mxu0 0.0
    %811 = vmatpush1.msra.mxu0 0.0
    %812 = vmatprep.subr.mxu0 0.0
    %813 = vmatpush1.msra.mxu0 0.0
    %814 = vmatprep.subr.mxu0 0.0
    %815 = vmatpush1.msra.mxu0 0.0
    %816 = vmatprep.subr.mxu0 0.0
    %817 = vmatpush1.msra.mxu0 0.0
    %818 = vmatprep.subr.mxu0 0.0
    %819 = vmatpush1.msra.mxu0 0.0
    %820 = vmatprep.subr.mxu0 0.0
    %821 = vmatpush1.msra.mxu0 0.0
    %822 = vmatprep.subr.mxu0 0.0
    %823 = vmatpush1.msra.mxu0 0.0
    %824 = vmatprep.subr.mxu0 0.0
    %825 = vmatpush1.msra.mxu0 0.0
    %826 = vmatprep.subr.mxu0 0.0
    %827 = vmatpush1.msra.mxu0 0.0
    %828 = vmatprep.subr.mxu0 0.0
    %829 = vmatpush1.msra.mxu0 0.0
    %830 = vmatprep.subr.mxu0 0.0
    %831 = vmatpush1.msra.mxu0 0.0
    %832 = vmatprep.subr.mxu0 0.0
    %833 = vmatpush1.msra.mxu0 0.0
    %834 = vmatprep.subr.mxu0 0.0
    %835 = vmatpush1.msra.mxu0 0.0
    %836 = vmatprep.subr.mxu0 0.0
    %837 = vmatpush1.msra.mxu0 0.0
    %838 = vmatprep.subr.mxu0 0.0
    %839 = vmatpush1.msra.mxu0 0.0
    %840 = vmatprep.subr.mxu0 0.0
    %841 = vmatpush1.msra.mxu0 0.0
    %842 = vmatprep.subr.mxu0 0.0
    %843 = vmatpush1.msra.mxu0 0.0
    %844 = vmatprep.subr.mxu0 0.0
    %845 = vmatpush1.msra.mxu0 0.0
    %846 = vmatprep.subr.mxu0 0.0
    %847 = vmatpush1.msra.mxu0 0.0
    %848 = vmatprep.subr.mxu0 0.0
    %849 = vmatpush1.msra.mxu0 0.0
    %850 = vmatprep.subr.mxu0 0.0
    %851 = vmatpush1.msra.mxu0 0.0
    %852 = vmatprep.subr.mxu0 0.0
    %853 = vmatpush1.msra.mxu0 0.0
    %854 = vmatprep.subr.mxu0 0.0
    %855 = vmatpush1.msra.mxu0 0.0
    %856 = vmatprep.subr.mxu0 0.0
    %857 = vmatpush1.msra.mxu0 0.0
    %858 = vmatprep.subr.mxu0 0.0
    %859 = vmatpush1.msra.mxu0 0.0
    %860 = vmatprep.subr.mxu0 0.0
    %861 = vmatpush1.msra.mxu0 0.0
    %862 = vmatprep.subr.mxu0 0.0
    %863 = vmatpush1.msra.mxu0 0.0
    %864 = vmatprep.subr.mxu0 0.0
    %865 = vmatpush1.msra.mxu0 0.0
    %866 = vmatprep.mubr.f32.mxu0 0.0
    %867 = vmatmul.mubr.f32.gmra.mrb[0].mxu0 %v796
    %v868 = vpop.f32.mrb[0].mxu0
    %v869 = vadd.f32 0.0, %v868
    %v870 = vpop.f32.mrb[0].mxu0
    %871 = vdwg.mxu0
    %v873 = vsel %vm795, %v793, 0
    %875 = vmatprep.subr.mxu0 0.0
    %876 = vmatpush1.msra.mxu0 %v800
    %877 = vmatprep.subr.mxu0 0.0
    %878 = vmatpush1.msra.mxu0 0.0
    %879 = vmatprep.subr.mxu0 0.0
    %880 = vmatpush1.msra.mxu0 0.0
    %881 = vmatprep.subr.mxu0 0.0
    %882 = vmatpush1.msra.mxu0 0.0
    %883 = vmatprep.subr.mxu0 0.0
    %884 = vmatpush1.msra.mxu0 0.0
    %885 = vmatprep.subr.mxu0 0.0
    %886 = vmatpush1.msra.mxu0 0.0
    %887 = vmatprep.subr.mxu0 0.0
    %888 = vmatpush1.msra.mxu0 0.0
    %889 = vmatprep.subr.mxu0 0.0
    %890 = vmatpush1.msra.mxu0 0.0
    %891 = vmatprep.subr.mxu0 0.0
    %892 = vmatpush1.msra.mxu0 0.0
    %893 = vmatprep.subr.mxu0 0.0
    %894 = vmatpush1.msra.mxu0 0.0
    %895 = vmatprep.subr.mxu0 0.0
    %896 = vmatpush1.msra.mxu0 0.0
    %897 = vmatprep.subr.mxu0 0.0
    %898 = vmatpush1.msra.mxu0 0.0
    %899 = vmatprep.subr.mxu0 0.0
    %900 = vmatpush1.msra.mxu0 0.0
    %901 = vmatprep.subr.mxu0 0.0
    %902 = vmatpush1.msra.mxu0 0.0
    %903 = vmatprep.subr.mxu0 0.0
    %904 = vmatpush1.msra.mxu0 0.0
    %905 = vmatprep.subr.mxu0 0.0
    %906 = vmatpush1.msra.mxu0 0.0
    %907 = vmatprep.subr.mxu0 0.0
    %908 = vmatpush1.msra.mxu0 0.0
    %909 = vmatprep.subr.mxu0 0.0
    %910 = vmatpush1.msra.mxu0 0.0
    %911 = vmatprep.subr.mxu0 0.0
    %912 = vmatpush1.msra.mxu0 0.0
    %913 = vmatprep.subr.mxu0 0.0
    %914 = vmatpush1.msra.mxu0 0.0
    %915 = vmatprep.subr.mxu0 0.0
    %916 = vmatpush1.msra.mxu0 0.0
    %917 = vmatprep.subr.mxu0 0.0
    %918 = vmatpush1.msra.mxu0 0.0
    %919 = vmatprep.subr.mxu0 0.0
    %920 = vmatpush1.msra.mxu0 0.0
    %921 = vmatprep.subr.mxu0 0.0
    %922 = vmatpush1.msra.mxu0 0.0
    %923 = vmatprep.subr.mxu0 0.0
    %924 = vmatpush1.msra.mxu0 0.0
    %925 = vmatprep.subr.mxu0 0.0
    %926 = vmatpush1.msra.mxu0 0.0
    %927 = vmatprep.subr.mxu0 0.0
    %928 = vmatpush1.msra.mxu0 0.0
    %929 = vmatprep.subr.mxu0 0.0
    %930 = vmatpush1.msra.mxu0 0.0
    %931 = vmatprep.subr.mxu0 0.0
    %932 = vmatpush1.msra.mxu0 0.0
    %933 = vmatprep.subr.mxu0 0.0
    %934 = vmatpush1.msra.mxu0 0.0
    %935 = vmatprep.subr.mxu0 0.0
    %936 = vmatpush1.msra.mxu0 0.0
    %937 = vmatprep.subr.mxu0 0.0
    %938 = vmatpush1.msra.mxu0 0.0
    %939 = vmatprep.mubr.f32.mxu0 0.0
    %940 = vmatmul.mubr.f32.gmra.mrb[0].mxu0 %v873
    %v941 = vpop.f32.mrb[0].mxu0
    %v942 = vadd.f32 0.0, %v941
    %v943 = vpop.f32.mrb[0].mxu0
    %944 = vdwg.mxu0
    %946 = vrot.lane.b32.xlu0 %v869, 1
    %v947 = vpop.permute.xlu0 %946
    %v949 = vsel %vm222, 0.0, %v947
    %950 = vrot.lane.b32.xlu0 %v869, 127
    %v951 = vpop.permute.xlu0 %950
    %vm953 = vcmask 56320
    %v954 = vsel %vm953, %v951, 0.0
    %956 = vrot.lane.b32.xlu0 %v942, 1
    %v957 = vpop.permute.xlu0 %956
    %v959 = vsel %vm222, 0.0, %v957
    %960 = vrot.lane.b32.xlu0 %v942, 127
    %v961 = vpop.permute.xlu0 %960
    %v963 = vsel %vm953, %v961, 0.0
    %s964 = sld [smem:[#allocation3 + $0x15]]
    %v965 = vstv %s964
    %v966 = vmul.f32 %v949, %v965
    %s967 = sld [smem:[#allocation3 + $0x16]]
    %v968 = vstv %s967
    %v969 = vmul.f32 %v869, %v968
    %v970 = vadd.f32 %v966, %v969
    %s971 = sld [smem:[#allocation3 + $0x17]]
    %v972 = vstv %s971
    %v973 = vmul.f32 %v954, %v972
    %v974 = vadd.f32 %v970, %v973
    %s975 = sld [smem:[#allocation3 + $0x18]]
    %v976 = vstv %s975
    %v977 = vmul.f32 %v959, %v976
    %v978 = vadd.f32 %v974, %v977
    %s979 = sld [smem:[#allocation3 + $0x19]]
    %v980 = vstv %s979
    %v981 = vmul.f32 %v942, %v980
    %v982 = vadd.f32 %v978, %v981
    %s983 = sld [smem:[#allocation3 + $0x1a]]
    %v984 = vstv %s983
    %v985 = vmul.f32 %v963, %v984
    %v986 = vadd.f32 %v982, %v985
    %s987 = sld [smem:[#allocation3 + $0x21]]
    %v988 = vstv %s987
    %v989 = vadd.f32 %v986, %v988
    %v990 = vxor.u32 %v989, 2147483648
    %v991 = vmul.f32 %v990, 1.442695
    %v992 = vpow.pop %v991
    %v993 = vadd.f32 %v992, 1.0
    %v994 = vrcp.pop %v993
    %v995 = vmul.f32 1.0, %v994
    %v996 = vmul.f32 %v989, %v995
    %s997 = sld [smem:[#allocation3 + $0x1b]]
    %v998 = vstv %s997
    %v999 = vmul.f32 %v949, %v998
    %s1000 = sld [smem:[#allocation3 + $0x1c]]
    %v1001 = vstv %s1000
    %v1002 = vmul.f32 %v869, %v1001
    %v1003 = vadd.f32 %v999, %v1002
    %s1004 = sld [smem:[#allocation3 + $0x1d]]
    %v1005 = vstv %s1004
    %v1006 = vmul.f32 %v954, %v1005
    %v1007 = vadd.f32 %v1003, %v1006
    %s1008 = sld [smem:[#allocation3 + $0x1e]]
    %v1009 = vstv %s1008
    %v1010 = vmul.f32 %v959, %v1009
    %v1011 = vadd.f32 %v1007, %v1010
    %s1012 = sld [smem:[#allocation3 + $0x1f]]
    %v1013 = vstv %s1012
    %v1014 = vmul.f32 %v942, %v1013
    %v1015 = vadd.f32 %v1011, %v1014
    %s1016 = sld [smem:[#allocation3 + $0x20]]
    %v1017 = vstv %s1016
    %v1018 = vmul.f32 %v963, %v1017
    %v1019 = vadd.f32 %v1015, %v1018
    %s1020 = sld [smem:[#allocation3 + $0x22]]
    %v1021 = vstv %s1020
    %v1022 = vadd.f32 %v1019, %v1021
    %v1023 = vxor.u32 %v1022, 2147483648
    %v1024 = vmul.f32 %v1023, 1.442695
    %v1025 = vpow.pop %v1024
    %v1026 = vadd.f32 %v1025, 1.0
    %v1027 = vrcp.pop %v1026
    %v1028 = vmul.f32 1.0, %v1027
    %v1029 = vmul.f32 %v1022, %v1028
    %1031 = vrot.lane.b32.xlu0 %v996, 1
    %v1032 = vpop.permute.xlu0 %1031
    %v1034 = vsel %vm222, 0.0, %v1032
    %1035 = vrot.lane.b32.xlu0 %v996, 127
    %v1036 = vpop.permute.xlu0 %1035
    %v1038 = vsel %vm953, %v1036, 0.0
    %1040 = vrot.lane.b32.xlu0 %v1029, 1
    %v1041 = vpop.permute.xlu0 %1040
    %v1043 = vsel %vm222, 0.0, %v1041
    %1044 = vrot.lane.b32.xlu0 %v1029, 127
    %v1045 = vpop.permute.xlu0 %1044
    %v1047 = vsel %vm953, %v1045, 0.0
    %s1048 = sld [smem:[#allocation3 + $0x23]]
    %v1049 = vstv %s1048
    %v1050 = vmul.f32 %v1034, %v1049
    %s1051 = sld [smem:[#allocation3 + $0x24]]
    %v1052 = vstv %s1051
    %v1053 = vmul.f32 %v996, %v1052
    %v1054 = vadd.f32 %v1050, %v1053
    %s1055 = sld [smem:[#allocation3 + $0x25]]
    %v1056 = vstv %s1055
    %v1057 = vmul.f32 %v1038, %v1056
    %v1058 = vadd.f32 %v1054, %v1057
    %s1059 = sld [smem:[#allocation3 + $0x26]]
    %v1060 = vstv %s1059
    %v1061 = vmul.f32 %v1043, %v1060
    %v1062 = vadd.f32 %v1058, %v1061
    %s1063 = sld [smem:[#allocation3 + $0x27]]
    %v1064 = vstv %s1063
    %v1065 = vmul.f32 %v1029, %v1064
    %v1066 = vadd.f32 %v1062, %v1065
    %s1067 = sld [smem:[#allocation3 + $0x28]]
    %v1068 = vstv %s1067
    %v1069 = vmul.f32 %v1047, %v1068
    %v1070 = vadd.f32 %v1066, %v1069
    %s1071 = sld [smem:[#allocation3 + $0x29]]
    %v1072 = vstv %s1071
    %v1073 = vadd.f32 %v1070, %v1072
    %v1074 = vxor.u32 %v1073, 2147483648
    %v1075 = vmul.f32 %v1074, 1.442695
    %v1076 = vpow.pop %v1075
    %v1077 = vadd.f32 %v1076, 1.0
    %v1078 = vrcp.pop %v1077
    %v1079 = vmul.f32 1.0, %v1078
    %v1080 = vmul.f32 %v1073, %v1079
    %1082 = vrot.lane.b32.xlu0 %v1080, 1
    %v1083 = vpop.permute.xlu0 %1082
    %v1085 = vsel %vm222, 0.0, %v1083
    %1086 = vrot.lane.b32.xlu0 %v1080, 127
    %v1087 = vpop.permute.xlu0 %1086
    %v1089 = vsel %vm953, %v1087, 0.0
    %s1090 = sld [smem:[#allocation3 + $0x96]]
    %v1091 = vstv %s1090
    %v1092 = vmul.f32 %v1085, %v1091
    %s1093 = sld [smem:[#allocation3 + $0x97]]
    %v1094 = vstv %s1093
    %v1095 = vmul.f32 %v1080, %v1094
    %v1096 = vadd.f32 %v1092, %v1095
    %s1097 = sld [smem:[#allocation3 + $0x98]]
    %v1098 = vstv %s1097
    %v1099 = vmul.f32 %v1089, %v1098
    %v1100 = vadd.f32 %v1096, %v1099
    %s1101 = sld [smem:[#allocation3 + $0x99]]
    %v1102 = vstv %s1101
    %v1103 = vadd.f32 %v1100, %v1102
    %v1104 = vxor.u32 %v1103, 2147483648
    %v1105 = vmul.f32 %v1104, 1.442695
    %v1106 = vpow.pop %v1105
    %v1107 = vadd.f32 %v1106, 1.0
    %v1108 = vrcp.pop %v1107
    %v1109 = vmul.f32 1.0, %v1108
    %v1110 = vmul.f32 %v1103, %v1109
    %v1111 = vadd.f32 %v1080, %v1110
    %v1112 = vxor.u32 %v1111, 2147483648
    %v1113 = vmul.f32 %v1112, 1.442695
    %v1114 = vpow.pop %v1113
    %v1115 = vadd.f32 %v1114, 1.0
    %v1116 = vrcp.pop %v1115
    %v1117 = vmul.f32 1.0, %v1116
    %v1118 = vmul.f32 %v1111, %v1117
    %1120 = vrot.lane.b32.xlu0 %v1118, 1
    %v1121 = vpop.permute.xlu0 %1120
    %v1123 = vsel %vm222, 0.0, %v1121
    %1124 = vrot.lane.b32.xlu0 %v1118, 127
    %v1125 = vpop.permute.xlu0 %1124
    %v1127 = vsel %vm953, %v1125, 0.0
    %s1128 = sld [smem:[#allocation3 + $0x9a]]
    %v1129 = vstv %s1128
    %v1130 = vmul.f32 %v1123, %v1129
    %s1131 = sld [smem:[#allocation3 + $0x9b]]
    %v1132 = vstv %s1131
    %v1133 = vmul.f32 %v1118, %v1132
    %v1134 = vadd.f32 %v1130, %v1133
    %s1135 = sld [smem:[#allocation3 + $0x9c]]
    %v1136 = vstv %s1135
    %v1137 = vmul.f32 %v1127, %v1136
    %v1138 = vadd.f32 %v1134, %v1137
    %s1139 = sld [smem:[#allocation3 + $0x9d]]
    %v1140 = vstv %s1139
    %v1141 = vadd.f32 %v1138, %v1140
    %s1142 = sld [smem:[#allocation3 + $0x9e]]
    %v1143 = vstv %s1142
    %v1144 = vmul.f32 %v1085, %v1143
    %s1145 = sld [smem:[#allocation3 + $0x9f]]
    %v1146 = vstv %s1145
    %v1147 = vmul.f32 %v1080, %v1146
    %v1148 = vadd.f32 %v1144, %v1147
    %s1149 = sld [smem:[#allocation3 + $0xa0]]
    %v1150 = vstv %s1149
    %v1151 = vmul.f32 %v1089, %v1150
    %v1152 = vadd.f32 %v1148, %v1151
    %s1153 = sld [smem:[#allocation3 + $0xa1]]
    %v1154 = vstv %s1153
    %v1155 = vadd.f32 %v1152, %v1154
    %v1156 = vxor.u32 %v1155, 2147483648
    %v1157 = vmul.f32 %v1156, 1.442695
    %v1158 = vpow.pop %v1157
    %v1159 = vadd.f32 %v1158, 1.0
    %v1160 = vrcp.pop %v1159
    %v1161 = vmul.f32 1.0, %v1160
    %v1162 = vmul.f32 %v1155, %v1161
    %v1163 = vadd.f32 %v1080, %v1162
    %v1164 = vxor.u32 %v1163, 2147483648
    %v1165 = vmul.f32 %v1164, 1.442695
    %v1166 = vpow.pop %v1165
    %v1167 = vadd.f32 %v1166, 1.0
    %v1168 = vrcp.pop %v1167
    %v1169 = vmul.f32 1.0, %v1168
    %v1170 = vmul.f32 %v1163, %v1169
    %1172 = vrot.lane.b32.xlu0 %v1170, 1
    %v1173 = vpop.permute.xlu0 %1172
    %v1175 = vsel %vm222, 0.0, %v1173
    %1176 = vrot.lane.b32.xlu0 %v1170, 127
    %v1177 = vpop.permute.xlu0 %1176
    %v1179 = vsel %vm953, %v1177, 0.0
    %s1180 = sld [smem:[#allocation3 + $0xa2]]
    %v1181 = vstv %s1180
    %v1182 = vmul.f32 %v1175, %v1181
    %s1183 = sld [smem:[#allocation3 + $0xa3]]
    %v1184 = vstv %s1183
    %v1185 = vmul.f32 %v1170, %v1184
    %v1186 = vadd.f32 %v1182, %v1185
    %s1187 = sld [smem:[#allocation3 + $0xa4]]
    %v1188 = vstv %s1187
    %v1189 = vmul.f32 %v1179, %v1188
    %v1190 = vadd.f32 %v1186, %v1189
    %s1191 = sld [smem:[#allocation3 + $0xa5]]
    %v1192 = vstv %s1191
    %v1193 = vadd.f32 %v1190, %v1192
    %v1194 = vld [vmem:[%s3] sm:$0x3]
    %1196 = vrot.lane.b32.xlu0 %v1194, 1
    %v1197 = vpop.permute.xlu0 %1196
    %v1199 = vsel %vm222, 0.0, %v1197
    %1200 = vrot.lane.b32.xlu0 %v1194, 127
    %v1201 = vpop.permute.xlu0 %1200
    %v1203 = vsel %vm953, %v1201, 0.0
    %s1204 = sld [smem:[#allocation3 + $0xa6]]
    %v1205 = vstv %s1204
    %v1206 = vmul.f32 %v1199, %v1205
    %s1207 = sld [smem:[#allocation3 + $0xa7]]
    %v1208 = vstv %s1207
    %v1209 = vmul.f32 %v1194, %v1208
    %v1210 = vadd.f32 %v1206, %v1209
    %s1211 = sld [smem:[#allocation3 + $0xa8]]
    %v1212 = vstv %s1211
    %v1213 = vmul.f32 %v1203, %v1212
    %v1214 = vadd.f32 %v1210, %v1213
    %s1215 = sld [smem:[#allocation3 + $0xa9]]
    %v1216 = vstv %s1215
    %v1217 = vmul.f32 %v1085, %v1216
    %v1218 = vadd.f32 %v1214, %v1217
    %s1219 = sld [smem:[#allocation3 + $0xaa]]
    %v1220 = vstv %s1219
    %v1221 = vmul.f32 %v1080, %v1220
    %v1222 = vadd.f32 %v1218, %v1221
    %s1223 = sld [smem:[#allocation3 + $0xab]]
    %v1224 = vstv %s1223
    %v1225 = vmul.f32 %v1089, %v1224
    %v1226 = vadd.f32 %v1222, %v1225
    %s1227 = sld [smem:[#allocation3 + $0xb2]]
    %v1228 = vstv %s1227
    %v1229 = vadd.f32 %v1226, %v1228
    %v1230 = vxor.u32 %v1229, 2147483648
    %v1231 = vmul.f32 %v1230, 1.442695
    %v1232 = vpow.pop %v1231
    %v1233 = vadd.f32 %v1232, 1.0
    %v1234 = vrcp.pop %v1233
    %v1235 = vmul.f32 1.0, %v1234
    %v1236 = vmul.f32 %v1229, %v1235
    %s1237 = sld [smem:[#allocation3 + $0xac]]
    %v1238 = vstv %s1237
    %v1239 = vmul.f32 %v1199, %v1238
    %s1240 = sld [smem:[#allocation3 + $0xad]]
    %v1241 = vstv %s1240
    %v1242 = vmul.f32 %v1194, %v1241
    %v1243 = vadd.f32 %v1239, %v1242
    %s1244 = sld [smem:[#allocation3 + $0xae]]
    %v1245 = vstv %s1244
    %v1246 = vmul.f32 %v1203, %v1245
    %v1247 = vadd.f32 %v1243, %v1246
    %s1248 = sld [smem:[#allocation3 + $0xaf]]
    %v1249 = vstv %s1248
    %v1250 = vmul.f32 %v1085, %v1249
    %v1251 = vadd.f32 %v1247, %v1250
    %s1252 = sld [smem:[#allocation3 + $0xb0]]
    %v1253 = vstv %s1252
    %v1254 = vmul.f32 %v1080, %v1253
    %v1255 = vadd.f32 %v1251, %v1254
    %s1256 = sld [smem:[#allocation3 + $0xb1]]
    %v1257 = vstv %s1256
    %v1258 = vmul.f32 %v1089, %v1257
    %v1259 = vadd.f32 %v1255, %v1258
    %s1260 = sld [smem:[#allocation3 + $0xb3]]
    %v1261 = vstv %s1260
    %v1262 = vadd.f32 %v1259, %v1261
    %v1263 = vxor.u32 %v1262, 2147483648
    %v1264 = vmul.f32 %v1263, 1.442695
    %v1265 = vpow.pop %v1264
    %v1266 = vadd.f32 %v1265, 1.0
    %v1267 = vrcp.pop %v1266
    %v1268 = vmul.f32 1.0, %v1267
    %v1269 = vmul.f32 %v1262, %v1268
    %v1270 = vadd.f32 %v1194, %v1236
    %v1271 = vadd.f32 %v1080, %v1269
    %1273 = vrot.lane.b32.xlu0 %v1270, 1
    %v1274 = vpop.permute.xlu0 %1273
    %v1276 = vsel %vm222, 0.0, %v1274
    %1277 = vrot.lane.b32.xlu0 %v1270, 127
    %v1278 = vpop.permute.xlu0 %1277
    %v1280 = vsel %vm953, %v1278, 0.0
    %1282 = vrot.lane.b32.xlu0 %v1271, 1
    %v1283 = vpop.permute.xlu0 %1282
    %v1285 = vsel %vm222, 0.0, %v1283
    %1286 = vrot.lane.b32.xlu0 %v1271, 127
    %v1287 = vpop.permute.xlu0 %1286
    %v1289 = vsel %vm953, %v1287, 0.0
    %s1290 = sld [smem:[#allocation3 + $0xb4]]
    %v1291 = vstv %s1290
    %v1292 = vmul.f32 %v1276, %v1291
    %s1293 = sld [smem:[#allocation3 + $0xb5]]
    %v1294 = vstv %s1293
    %v1295 = vmul.f32 %v1270, %v1294
    %v1296 = vadd.f32 %v1292, %v1295
    %s1297 = sld [smem:[#allocation3 + $0xb6]]
    %v1298 = vstv %s1297
    %v1299 = vmul.f32 %v1280, %v1298
    %v1300 = vadd.f32 %v1296, %v1299
    %s1301 = sld [smem:[#allocation3 + $0xb7]]
    %v1302 = vstv %s1301
    %v1303 = vmul.f32 %v1285, %v1302
    %v1304 = vadd.f32 %v1300, %v1303
    %s1305 = sld [smem:[#allocation3 + $0xb8]]
    %v1306 = vstv %s1305
    %v1307 = vmul.f32 %v1271, %v1306
    %v1308 = vadd.f32 %v1304, %v1307
    %s1309 = sld [smem:[#allocation3 + $0xb9]]
    %v1310 = vstv %s1309
    %v1311 = vmul.f32 %v1289, %v1310
    %v1312 = vadd.f32 %v1308, %v1311
    %s1313 = sld [smem:[#allocation3 + $0xba]]
    %v1314 = vstv %s1313
    %v1315 = vadd.f32 %v1312, %v1314
    %v1316 = vxor.u32 %v1315, 2147483648
    %v1317 = vmul.f32 %v1316, 1.442695
    %v1318 = vpow.pop %v1317
    %v1319 = vadd.f32 %v1318, 1.0
    %v1320 = vrcp.pop %v1319
    %v1321 = vmul.f32 1.0, %v1320
    %v1322 = vmul.f32 %v1315, %v1321
    %1324 = vrot.lane.b32.xlu0 %v1322, 1
    %v1325 = vpop.permute.xlu0 %1324
    %v1327 = vsel %vm222, 0.0, %v1325
    %1328 = vrot.lane.b32.xlu0 %v1322, 127
    %v1329 = vpop.permute.xlu0 %1328
    %v1331 = vsel %vm953, %v1329, 0.0
    %s1332 = sld [smem:[#allocation3 + $0xbb]]
    %v1333 = vstv %s1332
    %v1334 = vmul.f32 %v1327, %v1333
    %s1335 = sld [smem:[#allocation3 + $0xbc]]
    %v1336 = vstv %s1335
    %v1337 = vmul.f32 %v1322, %v1336
    %v1338 = vadd.f32 %v1334, %v1337
    %s1339 = sld [smem:[#allocation3 + $0xbd]]
    %v1340 = vstv %s1339
    %v1341 = vmul.f32 %v1331, %v1340
    %v1342 = vadd.f32 %v1338, %v1341
    %s1343 = sld [smem:[#allocation3 + $0xbe]]
    %v1344 = vstv %s1343
    %v1345 = vadd.f32 %v1342, %v1344
    %s1346 = sld [smem:[#allocation3 + $0xbf]]
    %v1347 = vstv %s1346
    %v1348 = vmul.f32 %v1199, %v1347
    %s1349 = sld [smem:[#allocation3 + $0xc0]]
    %v1350 = vstv %s1349
    %v1351 = vmul.f32 %v1194, %v1350
    %v1352 = vadd.f32 %v1348, %v1351
    %s1353 = sld [smem:[#allocation3 + $0xc1]]
    %v1354 = vstv %s1353
    %v1355 = vmul.f32 %v1203, %v1354
    %v1356 = vadd.f32 %v1352, %v1355
    %s1357 = sld [smem:[#allocation3 + $0xc2]]
    %v1358 = vstv %s1357
    %v1359 = vmul.f32 %v1085, %v1358
    %v1360 = vadd.f32 %v1356, %v1359
    %s1361 = sld [smem:[#allocation3 + $0xc3]]
    %v1362 = vstv %s1361
    %v1363 = vmul.f32 %v1080, %v1362
    %v1364 = vadd.f32 %v1360, %v1363
    %s1365 = sld [smem:[#allocation3 + $0xc4]]
    %v1366 = vstv %s1365
    %v1367 = vmul.f32 %v1089, %v1366
    %v1368 = vadd.f32 %v1364, %v1367
    %s1369 = sld [smem:[#allocation3 + $0xcb]]
    %v1370 = vstv %s1369
    %v1371 = vadd.f32 %v1368, %v1370
    %v1372 = vxor.u32 %v1371, 2147483648
    %v1373 = vmul.f32 %v1372, 1.442695
    %v1374 = vpow.pop %v1373
    %v1375 = vadd.f32 %v1374, 1.0
    %v1376 = vrcp.pop %v1375
    %v1377 = vmul.f32 1.0, %v1376
    %v1378 = vmul.f32 %v1371, %v1377
    %s1379 = sld [smem:[#allocation3 + $0xc5]]
    %v1380 = vstv %s1379
    %v1381 = vmul.f32 %v1199, %v1380
    %s1382 = sld [smem:[#allocation3 + $0xc6]]
    %v1383 = vstv %s1382
    %v1384 = vmul.f32 %v1194, %v1383
    %v1385 = vadd.f32 %v1381, %v1384
    %s1386 = sld [smem:[#allocation3 + $0xc7]]
    %v1387 = vstv %s1386
    %v1388 = vmul.f32 %v1203, %v1387
    %v1389 = vadd.f32 %v1385, %v1388
    %s1390 = sld [smem:[#allocation3 + $0xc8]]
    %v1391 = vstv %s1390
    %v1392 = vmul.f32 %v1085, %v1391
    %v1393 = vadd.f32 %v1389, %v1392
    %s1394 = sld [smem:[#allocation3 + $0xc9]]
    %v1395 = vstv %s1394
    %v1396 = vmul.f32 %v1080, %v1395
    %v1397 = vadd.f32 %v1393, %v1396
    %s1398 = sld [smem:[#allocation3 + $0xca]]
    %v1399 = vstv %s1398
    %v1400 = vmul.f32 %v1089, %v1399
    %v1401 = vadd.f32 %v1397, %v1400
    %s1402 = sld [smem:[#allocation3 + $0xcc]]
    %v1403 = vstv %s1402
    %v1404 = vadd.f32 %v1401, %v1403
    %v1405 = vxor.u32 %v1404, 2147483648
    %v1406 = vmul.f32 %v1405, 1.442695
    %v1407 = vpow.pop %v1406
    %v1408 = vadd.f32 %v1407, 1.0
    %v1409 = vrcp.pop %v1408
    %v1410 = vmul.f32 1.0, %v1409
    %v1411 = vmul.f32 %v1404, %v1410
    %v1412 = vadd.f32 %v1194, %v1378
    %v1413 = vadd.f32 %v1080, %v1411
    %1415 = vrot.lane.b32.xlu0 %v1412, 1
    %v1416 = vpop.permute.xlu0 %1415
    %v1418 = vsel %vm222, 0.0, %v1416
    %1419 = vrot.lane.b32.xlu0 %v1412, 127
    %v1420 = vpop.permute.xlu0 %1419
    %v1422 = vsel %vm953, %v1420, 0.0
    %1424 = vrot.lane.b32.xlu0 %v1413, 1
    %v1425 = vpop.permute.xlu0 %1424
    %v1427 = vsel %vm222, 0.0, %v1425
    %1428 = vrot.lane.b32.xlu0 %v1413, 127
    %v1429 = vpop.permute.xlu0 %1428
    %v1431 = vsel %vm953, %v1429, 0.0
    %s1432 = sld [smem:[#allocation3 + $0xcd]]
    %v1433 = vstv %s1432
    %v1434 = vmul.f32 %v1418, %v1433
    %s1435 = sld [smem:[#allocation3 + $0xce]]
    %v1436 = vstv %s1435
    %v1437 = vmul.f32 %v1412, %v1436
    %v1438 = vadd.f32 %v1434, %v1437
    %s1439 = sld [smem:[#allocation3 + $0xcf]]
    %v1440 = vstv %s1439
    %v1441 = vmul.f32 %v1422, %v1440
    %v1442 = vadd.f32 %v1438, %v1441
    %s1443 = sld [smem:[#allocation3 + $0xd0]]
    %v1444 = vstv %s1443
    %v1445 = vmul.f32 %v1427, %v1444
    %v1446 = vadd.f32 %v1442, %v1445
    %s1447 = sld [smem:[#allocation3 + $0xd1]]
    %v1448 = vstv %s1447
    %v1449 = vmul.f32 %v1413, %v1448
    %v1450 = vadd.f32 %v1446, %v1449
    %s1451 = sld [smem:[#allocation3 + $0xd2]]
    %v1452 = vstv %s1451
    %v1453 = vmul.f32 %v1431, %v1452
    %v1454 = vadd.f32 %v1450, %v1453
    %s1455 = sld [smem:[#allocation3 + $0xd3]]
    %v1456 = vstv %s1455
    %v1457 = vadd.f32 %v1454, %v1456
    %v1458 = vxor.u32 %v1457, 2147483648
    %v1459 = vmul.f32 %v1458, 1.442695
    %v1460 = vpow.pop %v1459
    %v1461 = vadd.f32 %v1460, 1.0
    %v1462 = vrcp.pop %v1461
    %v1463 = vmul.f32 1.0, %v1462
    %v1464 = vmul.f32 %v1457, %v1463
    %1466 = vrot.lane.b32.xlu0 %v1464, 1
    %v1467 = vpop.permute.xlu0 %1466
    %v1469 = vsel %vm222, 0.0, %v1467
    %1470 = vrot.lane.b32.xlu0 %v1464, 127
    %v1471 = vpop.permute.xlu0 %1470
    %v1473 = vsel %vm953, %v1471, 0.0
    %s1474 = sld [smem:[#allocation3 + $0xd4]]
    %v1475 = vstv %s1474
    %v1476 = vmul.f32 %v1469, %v1475
    %s1477 = sld [smem:[#allocation3 + $0xd5]]
    %v1478 = vstv %s1477
    %v1479 = vmul.f32 %v1464, %v1478
    %v1480 = vadd.f32 %v1476, %v1479
    %s1481 = sld [smem:[#allocation3 + $0xd6]]
    %v1482 = vstv %s1481
    %v1483 = vmul.f32 %v1473, %v1482
    %v1484 = vadd.f32 %v1480, %v1483
    %s1485 = sld [smem:[#allocation3 + $0xd7]]
    %v1486 = vstv %s1485
    %v1487 = vadd.f32 %v1484, %v1486
    %v1488 = vmul.f32 %v1193, 1.442695
    %v1489 = vpow.pop %v1488
    %v1490 = vadd.f32 %v1487, 1.0
    %v1491 = vmul.f32 %v1345, %v1345
    %v1492 = vrcp.pop %v1489
    %v1493 = vmul.f32 %v1491, %v1492
    %v1494 = vsub.f32 %v1490, %v1493
    %v1495 = vmul.f32 %v1487, 1.442695
    %v1496 = vpow.pop %v1495
    %v1497 = vsub.f32 %v1494, %v1496
    %vm1498 = vcmask 58368
    %v1499 = vsel %vm1498, %v1497, 0.0
    %1500 = vadd.xlane.f32.xlu0 %v1499
    %v1501 = vpop.xlane.xlu0 %1500
    %v1502 = vmul.f32 %v1501, -0.5
    %v1503 = vsel %vm71, %v1502, 0.0
    %v1504 = vrot.slane %v1503, 4
    %v1505 = vadd.f32 %v1503, %v1504
    %v1506 = vrot.slane %v1505, 2
    %v1507 = vadd.f32 %v1505, %v1506
    %v1508 = vrot.slane %v1507, 1
    %v1509 = vadd.f32 %v1507, %v1508
    %v1510 = vmul.f32 %v1509, %v784
    %v1511 = vadd.f32 %v1141, %v1345
    %v1512 = vadd.f32 %v1193, %v1487
    %v1513 = vmul.f32 %v1512, 0.5
    %v1514 = vmul.f32 %v1513, 1.442695
    %v1515 = vpow.pop %v1514
    %v1516 = vld [vmem:[%s6] sm:$0x3]
    %v1517 = vmul.f32 %v1515, %v1516
    %v1518 = vadd.f32 %v1511, %v1517
    %v1519 = vld [vmem:[%s12] sm:$0xff]
    %vm1520 = vcmask 64512
    %v1521 = vsel %vm1520, %v1080, 0
    %1523 = vmatprep.subr.mxu0 0.0
    %1524 = vmatpush1.msra.mxu0 %v1519
    %1525 = vmatprep.subr.mxu0 0.0
    %1526 = vmatpush1.msra.mxu0 0.0
    %1527 = vmatprep.subr.mxu0 0.0
    %1528 = vmatpush1.msra.mxu0 0.0
    %1529 = vmatprep.subr.mxu0 0.0
    %1530 = vmatpush1.msra.mxu0 0.0
    %1531 = vmatprep.subr.mxu0 0.0
    %1532 = vmatpush1.msra.mxu0 0.0
    %1533 = vmatprep.subr.mxu0 0.0
    %1534 = vmatpush1.msra.mxu0 0.0
    %1535 = vmatprep.subr.mxu0 0.0
    %1536 = vmatpush1.msra.mxu0 0.0
    %1537 = vmatprep.subr.mxu0 0.0
    %1538 = vmatpush1.msra.mxu0 0.0
    %1539 = vmatprep.subr.mxu0 0.0
    %1540 = vmatpush1.msra.mxu0 0.0
    %1541 = vmatprep.subr.mxu0 0.0
    %1542 = vmatpush1.msra.mxu0 0.0
    %1543 = vmatprep.subr.mxu0 0.0
    %1544 = vmatpush1.msra.mxu0 0.0
    %1545 = vmatprep.subr.mxu0 0.0
    %1546 = vmatpush1.msra.mxu0 0.0
    %1547 = vmatprep.subr.mxu0 0.0
    %1548 = vmatpush1.msra.mxu0 0.0
    %1549 = vmatprep.subr.mxu0 0.0
    %1550 = vmatpush1.msra.mxu0 0.0
    %1551 = vmatprep.subr.mxu0 0.0
    %1552 = vmatpush1.msra.mxu0 0.0
    %1553 = vmatprep.subr.mxu0 0.0
    %1554 = vmatpush1.msra.mxu0 0.0
    %1555 = vmatprep.subr.mxu0 0.0
    %1556 = vmatpush1.msra.mxu0 0.0
    %1557 = vmatprep.subr.mxu0 0.0
    %1558 = vmatpush1.msra.mxu0 0.0
    %1559 = vmatprep.subr.mxu0 0.0
    %1560 = vmatpush1.msra.mxu0 0.0
    %1561 = vmatprep.subr.mxu0 0.0
    %1562 = vmatpush1.msra.mxu0 0.0
    %1563 = vmatprep.subr.mxu0 0.0
    %1564 = vmatpush1.msra.mxu0 0.0
    %1565 = vmatprep.subr.mxu0 0.0
    %1566 = vmatpush1.msra.mxu0 0.0
    %1567 = vmatprep.subr.mxu0 0.0
    %1568 = vmatpush1.msra.mxu0 0.0
    %1569 = vmatprep.subr.mxu0 0.0
    %1570 = vmatpush1.msra.mxu0 0.0
    %1571 = vmatprep.subr.mxu0 0.0
    %1572 = vmatpush1.msra.mxu0 0.0
    %1573 = vmatprep.subr.mxu0 0.0
    %1574 = vmatpush1.msra.mxu0 0.0
    %1575 = vmatprep.subr.mxu0 0.0
    %1576 = vmatpush1.msra.mxu0 0.0
    %1577 = vmatprep.subr.mxu0 0.0
    %1578 = vmatpush1.msra.mxu0 0.0
    %1579 = vmatprep.subr.mxu0 0.0
    %1580 = vmatpush1.msra.mxu0 0.0
    %1581 = vmatprep.subr.mxu0 0.0
    %1582 = vmatpush1.msra.mxu0 0.0
    %1583 = vmatprep.subr.mxu0 0.0
    %1584 = vmatpush1.msra.mxu0 0.0
    %1585 = vmatprep.subr.mxu0 0.0
    %1586 = vmatpush1.msra.mxu0 0.0
    %1587 = vmatprep.mubr.f32.mxu0 0.0
    %1588 = vmatmul.mubr.f32.gmra.mrb[0].mxu0 %v1521
    %v1589 = vpop.f32.mrb[0].mxu0
    %v1590 = vadd.f32 0.0, %v1589
    %v1591 = vpop.f32.mrb[0].mxu0
    %1592 = vdwg.mxu0
    %v1594 = vsel %vm1520, %v1518, 0
    %1596 = vmatprep.subr.mxu0 0.0
    %1597 = vmatpush1.msra.mxu0 %v1519
    %1598 = vmatprep.subr.mxu0 0.0
    %1599 = vmatpush1.msra.mxu0 0.0
    %1600 = vmatprep.subr.mxu0 0.0
    %1601 = vmatpush1.msra.mxu0 0.0
    %1602 = vmatprep.subr.mxu0 0.0
    %1603 = vmatpush1.msra.mxu0 0.0
    %1604 = vmatprep.subr.mxu0 0.0
    %1605 = vmatpush1.msra.mxu0 0.0
    %1606 = vmatprep.subr.mxu0 0.0
    %1607 = vmatpush1.msra.mxu0 0.0
    %1608 = vmatprep.subr.mxu0 0.0
    %1609 = vmatpush1.msra.mxu0 0.0
    %1610 = vmatprep.subr.mxu0 0.0
    %1611 = vmatpush1.msra.mxu0 0.0
    %1612 = vmatprep.subr.mxu0 0.0
    %1613 = vmatpush1.msra.mxu0 0.0
    %1614 = vmatprep.subr.mxu0 0.0
    %1615 = vmatpush1.msra.mxu0 0.0
    %1616 = vmatprep.subr.mxu0 0.0
    %1617 = vmatpush1.msra.mxu0 0.0
    %1618 = vmatprep.subr.mxu0 0.0
    %1619 = vmatpush1.msra.mxu0 0.0
    %1620 = vmatprep.subr.mxu0 0.0
    %1621 = vmatpush1.msra.mxu0 0.0
    %1622 = vmatprep.subr.mxu0 0.0
    %1623 = vmatpush1.msra.mxu0 0.0
    %1624 = vmatprep.subr.mxu0 0.0
    %1625 = vmatpush1.msra.mxu0 0.0
    %1626 = vmatprep.subr.mxu0 0.0
    %1627 = vmatpush1.msra.mxu0 0.0
    %1628 = vmatprep.subr.mxu0 0.0
    %1629 = vmatpush1.msra.mxu0 0.0
    %1630 = vmatprep.subr.mxu0 0.0
    %1631 = vmatpush1.msra.mxu0 0.0
    %1632 = vmatprep.subr.mxu0 0.0
    %1633 = vmatpush1.msra.mxu0 0.0
    %1634 = vmatprep.subr.mxu0 0.0
    %1635 = vmatpush1.msra.mxu0 0.0
    %1636 = vmatprep.subr.mxu0 0.0
    %1637 = vmatpush1.msra.mxu0 0.0
    %1638 = vmatprep.subr.mxu0 0.0
    %1639 = vmatpush1.msra.mxu0 0.0
    %1640 = vmatprep.subr.mxu0 0.0
    %1641 = vmatpush1.msra.mxu0 0.0
    %1642 = vmatprep.subr.mxu0 0.0
    %1643 = vmatpush1.msra.mxu0 0.0
    %1644 = vmatprep.subr.mxu0 0.0
    %1645 = vmatpush1.msra.mxu0 0.0
    %1646 = vmatprep.subr.mxu0 0.0
    %1647 = vmatpush1.msra.mxu0 0.0
    %1648 = vmatprep.subr.mxu0 0.0
    %1649 = vmatpush1.msra.mxu0 0.0
    %1650 = vmatprep.subr.mxu0 0.0
    %1651 = vmatpush1.msra.mxu0 0.0
    %1652 = vmatprep.subr.mxu0 0.0
    %1653 = vmatpush1.msra.mxu0 0.0
    %1654 = vmatprep.subr.mxu0 0.0
    %1655 = vmatpush1.msra.mxu0 0.0
    %1656 = vmatprep.subr.mxu0 0.0
    %1657 = vmatpush1.msra.mxu0 0.0
    %1658 = vmatprep.subr.mxu0 0.0
    %1659 = vmatpush1.msra.mxu0 0.0
    %1660 = vmatprep.mubr.f32.mxu0 0.0
    %1661 = vmatmul.mubr.f32.gmra.mrb[0].mxu0 %v1594
    %v1662 = vpop.f32.mrb[0].mxu0
    %v1663 = vadd.f32 0.0, %v1662
    %v1664 = vpop.f32.mrb[0].mxu0
    %1665 = vdwg.mxu0
    %1667 = vrot.lane.b32.xlu0 %v1590, 1
    %v1668 = vpop.permute.xlu0 %1667
    %v1670 = vsel %vm222, 0.0, %v1668
    %1671 = vrot.lane.b32.xlu0 %v1590, 127
    %v1672 = vpop.permute.xlu0 %1671
    %vm1674 = vcmask 121856
    %v1675 = vsel %vm1674, %v1672, 0.0
    %1677 = vrot.lane.b32.xlu0 %v1663, 1
    %v1678 = vpop.permute.xlu0 %1677
    %v1680 = vsel %vm222, 0.0, %v1678
    %1681 = vrot.lane.b32.xlu0 %v1663, 127
    %v1682 = vpop.permute.xlu0 %1681
    %v1684 = vsel %vm1674, %v1682, 0.0
    %s1685 = sld [smem:[#allocation3 + $0x2a]]
    %v1686 = vstv %s1685
    %v1687 = vmul.f32 %v1670, %v1686
    %s1688 = sld [smem:[#allocation3 + $0x2b]]
    %v1689 = vstv %s1688
    %v1690 = vmul.f32 %v1590, %v1689
    %v1691 = vadd.f32 %v1687, %v1690
    %s1692 = sld [smem:[#allocation3 + $0x2c]]
    %v1693 = vstv %s1692
    %v1694 = vmul.f32 %v1675, %v1693
    %v1695 = vadd.f32 %v1691, %v1694
    %s1696 = sld [smem:[#allocation3 + $0x2d]]
    %v1697 = vstv %s1696
    %v1698 = vmul.f32 %v1680, %v1697
    %v1699 = vadd.f32 %v1695, %v1698
    %s1700 = sld [smem:[#allocation3 + $0x2e]]
    %v1701 = vstv %s1700
    %v1702 = vmul.f32 %v1663, %v1701
    %v1703 = vadd.f32 %v1699, %v1702
    %s1704 = sld [smem:[#allocation3 + $0x2f]]
    %v1705 = vstv %s1704
    %v1706 = vmul.f32 %v1684, %v1705
    %v1707 = vadd.f32 %v1703, %v1706
    %s1708 = sld [smem:[#allocation3 + $0x36]]
    %v1709 = vstv %s1708
    %v1710 = vadd.f32 %v1707, %v1709
    %v1711 = vxor.u32 %v1710, 2147483648
    %v1712 = vmul.f32 %v1711, 1.442695
    %v1713 = vpow.pop %v1712
    %v1714 = vadd.f32 %v1713, 1.0
    %v1715 = vrcp.pop %v1714
    %v1716 = vmul.f32 1.0, %v1715
    %v1717 = vmul.f32 %v1710, %v1716
    %s1718 = sld [smem:[#allocation3 + $0x30]]
    %v1719 = vstv %s1718
    %v1720 = vmul.f32 %v1670, %v1719
    %s1721 = sld [smem:[#allocation3 + $0x31]]
    %v1722 = vstv %s1721
    %v1723 = vmul.f32 %v1590, %v1722
    %v1724 = vadd.f32 %v1720, %v1723
    %s1725 = sld [smem:[#allocation3 + $0x32]]
    %v1726 = vstv %s1725
    %v1727 = vmul.f32 %v1675, %v1726
    %v1728 = vadd.f32 %v1724, %v1727
    %s1729 = sld [smem:[#allocation3 + $0x33]]
    %v1730 = vstv %s1729
    %v1731 = vmul.f32 %v1680, %v1730
    %v1732 = vadd.f32 %v1728, %v1731
    %s1733 = sld [smem:[#allocation3 + $0x34]]
    %v1734 = vstv %s1733
    %v1735 = vmul.f32 %v1663, %v1734
    %v1736 = vadd.f32 %v1732, %v1735
    %s1737 = sld [smem:[#allocation3 + $0x35]]
    %v1738 = vstv %s1737
    %v1739 = vmul.f32 %v1684, %v1738
    %v1740 = vadd.f32 %v1736, %v1739
    %s1741 = sld [smem:[#allocation3 + $0x37]]
    %v1742 = vstv %s1741
    %v1743 = vadd.f32 %v1740, %v1742
    %v1744 = vxor.u32 %v1743, 2147483648
    %v1745 = vmul.f32 %v1744, 1.442695
    %v1746 = vpow.pop %v1745
    %v1747 = vadd.f32 %v1746, 1.0
    %v1748 = vrcp.pop %v1747
    %v1749 = vmul.f32 1.0, %v1748
    %v1750 = vmul.f32 %v1743, %v1749
    %1752 = vrot.lane.b32.xlu0 %v1717, 1
    %v1753 = vpop.permute.xlu0 %1752
    %v1755 = vsel %vm222, 0.0, %v1753
    %1756 = vrot.lane.b32.xlu0 %v1717, 127
    %v1757 = vpop.permute.xlu0 %1756
    %v1759 = vsel %vm1674, %v1757, 0.0
    %1761 = vrot.lane.b32.xlu0 %v1750, 1
    %v1762 = vpop.permute.xlu0 %1761
    %v1764 = vsel %vm222, 0.0, %v1762
    %1765 = vrot.lane.b32.xlu0 %v1750, 127
    %v1766 = vpop.permute.xlu0 %1765
    %v1768 = vsel %vm1674, %v1766, 0.0
    %s1769 = sld [smem:[#allocation3 + $0x38]]
    %v1770 = vstv %s1769
    %v1771 = vmul.f32 %v1755, %v1770
    %s1772 = sld [smem:[#allocation3 + $0x39]]
    %v1773 = vstv %s1772
    %v1774 = vmul.f32 %v1717, %v1773
    %v1775 = vadd.f32 %v1771, %v1774
    %s1776 = sld [smem:[#allocation3 + $0x3a]]
    %v1777 = vstv %s1776
    %v1778 = vmul.f32 %v1759, %v1777
    %v1779 = vadd.f32 %v1775, %v1778
    %s1780 = sld [smem:[#allocation3 + $0x3b]]
    %v1781 = vstv %s1780
    %v1782 = vmul.f32 %v1764, %v1781
    %v1783 = vadd.f32 %v1779, %v1782
    %s1784 = sld [smem:[#allocation3 + $0x3c]]
    %v1785 = vstv %s1784
    %v1786 = vmul.f32 %v1750, %v1785
    %v1787 = vadd.f32 %v1783, %v1786
    %s1788 = sld [smem:[#allocation3 + $0x3d]]
    %v1789 = vstv %s1788
    %v1790 = vmul.f32 %v1768, %v1789
    %v1791 = vadd.f32 %v1787, %v1790
    %s1792 = sld [smem:[#allocation3 + $0x3e]]
    %v1793 = vstv %s1792
    %v1794 = vadd.f32 %v1791, %v1793
    %v1795 = vxor.u32 %v1794, 2147483648
    %v1796 = vmul.f32 %v1795, 1.442695
    %v1797 = vpow.pop %v1796
    %v1798 = vadd.f32 %v1797, 1.0
    %v1799 = vrcp.pop %v1798
    %v1800 = vmul.f32 1.0, %v1799
    %v1801 = vmul.f32 %v1794, %v1800
    %1803 = vrot.lane.b32.xlu0 %v1801, 1
    %v1804 = vpop.permute.xlu0 %1803
    %v1806 = vsel %vm222, 0.0, %v1804
    %1807 = vrot.lane.b32.xlu0 %v1801, 127
    %v1808 = vpop.permute.xlu0 %1807
    %v1810 = vsel %vm1674, %v1808, 0.0
    %s1811 = sld [smem:[#allocation3 + $0xd8]]
    %v1812 = vstv %s1811
    %v1813 = vmul.f32 %v1806, %v1812
    %s1814 = sld [smem:[#allocation3 + $0xd9]]
    %v1815 = vstv %s1814
    %v1816 = vmul.f32 %v1801, %v1815
    %v1817 = vadd.f32 %v1813, %v1816
    %s1818 = sld [smem:[#allocation3 + $0xda]]
    %v1819 = vstv %s1818
    %v1820 = vmul.f32 %v1810, %v1819
    %v1821 = vadd.f32 %v1817, %v1820
    %s1822 = sld [smem:[#allocation3 + $0xdb]]
    %v1823 = vstv %s1822
    %v1824 = vadd.f32 %v1821, %v1823
    %v1825 = vxor.u32 %v1824, 2147483648
    %v1826 = vmul.f32 %v1825, 1.442695
    %v1827 = vpow.pop %v1826
    %v1828 = vadd.f32 %v1827, 1.0
    %v1829 = vrcp.pop %v1828
    %v1830 = vmul.f32 1.0, %v1829
    %v1831 = vmul.f32 %v1824, %v1830
    %v1832 = vadd.f32 %v1801, %v1831
    %v1833 = vxor.u32 %v1832, 2147483648
    %v1834 = vmul.f32 %v1833, 1.442695
    %v1835 = vpow.pop %v1834
    %v1836 = vadd.f32 %v1835, 1.0
    %v1837 = vrcp.pop %v1836
    %v1838 = vmul.f32 1.0, %v1837
    %v1839 = vmul.f32 %v1832, %v1838
    %1841 = vrot.lane.b32.xlu0 %v1839, 1
    %v1842 = vpop.permute.xlu0 %1841
    %v1844 = vsel %vm222, 0.0, %v1842
    %1845 = vrot.lane.b32.xlu0 %v1839, 127
    %v1846 = vpop.permute.xlu0 %1845
    %v1848 = vsel %vm1674, %v1846, 0.0
    %s1849 = sld [smem:[#allocation3 + $0xdc]]
    %v1850 = vstv %s1849
    %v1851 = vmul.f32 %v1844, %v1850
    %s1852 = sld [smem:[#allocation3 + $0xdd]]
    %v1853 = vstv %s1852
    %v1854 = vmul.f32 %v1839, %v1853
    %v1855 = vadd.f32 %v1851, %v1854
    %s1856 = sld [smem:[#allocation3 + $0xde]]
    %v1857 = vstv %s1856
    %v1858 = vmul.f32 %v1848, %v1857
    %v1859 = vadd.f32 %v1855, %v1858
    %s1860 = sld [smem:[#allocation3 + $0xdf]]
    %v1861 = vstv %s1860
    %v1862 = vadd.f32 %v1859, %v1861
    %s1863 = sld [smem:[#allocation3 + $0xe0]]
    %v1864 = vstv %s1863
    %v1865 = vmul.f32 %v1806, %v1864
    %s1866 = sld [smem:[#allocation3 + $0xe1]]
    %v1867 = vstv %s1866
    %v1868 = vmul.f32 %v1801, %v1867
    %v1869 = vadd.f32 %v1865, %v1868
    %s1870 = sld [smem:[#allocation3 + $0xe2]]
    %v1871 = vstv %s1870
    %v1872 = vmul.f32 %v1810, %v1871
    %v1873 = vadd.f32 %v1869, %v1872
    %s1874 = sld [smem:[#allocation3 + $0xe3]]
    %v1875 = vstv %s1874
    %v1876 = vadd.f32 %v1873, %v1875
    %v1877 = vxor.u32 %v1876, 2147483648
    %v1878 = vmul.f32 %v1877, 1.442695
    %v1879 = vpow.pop %v1878
    %v1880 = vadd.f32 %v1879, 1.0
    %v1881 = vrcp.pop %v1880
    %v1882 = vmul.f32 1.0, %v1881
    %v1883 = vmul.f32 %v1876, %v1882
    %v1884 = vadd.f32 %v1801, %v1883
    %v1885 = vxor.u32 %v1884, 2147483648
    %v1886 = vmul.f32 %v1885, 1.442695
    %v1887 = vpow.pop %v1886
    %v1888 = vadd.f32 %v1887, 1.0
    %v1889 = vrcp.pop %v1888
    %v1890 = vmul.f32 1.0, %v1889
    %v1891 = vmul.f32 %v1884, %v1890
    %1893 = vrot.lane.b32.xlu0 %v1891, 1
    %v1894 = vpop.permute.xlu0 %1893
    %v1896 = vsel %vm222, 0.0, %v1894
    %1897 = vrot.lane.b32.xlu0 %v1891, 127
    %v1898 = vpop.permute.xlu0 %1897
    %v1900 = vsel %vm1674, %v1898, 0.0
    %s1901 = sld [smem:[#allocation3 + $0xe4]]
    %v1902 = vstv %s1901
    %v1903 = vmul.f32 %v1896, %v1902
    %s1904 = sld [smem:[#allocation3 + $0xe5]]
    %v1905 = vstv %s1904
    %v1906 = vmul.f32 %v1891, %v1905
    %v1907 = vadd.f32 %v1903, %v1906
    %s1908 = sld [smem:[#allocation3 + $0xe6]]
    %v1909 = vstv %s1908
    %v1910 = vmul.f32 %v1900, %v1909
    %v1911 = vadd.f32 %v1907, %v1910
    %s1912 = sld [smem:[#allocation3 + $0xe7]]
    %v1913 = vstv %s1912
    %v1914 = vadd.f32 %v1911, %v1913
    %v1915 = vld [vmem:[%s4] sm:$0x3]
    %1917 = vrot.lane.b32.xlu0 %v1915, 1
    %v1918 = vpop.permute.xlu0 %1917
    %v1920 = vsel %vm222, 0.0, %v1918
    %1921 = vrot.lane.b32.xlu0 %v1915, 127
    %v1922 = vpop.permute.xlu0 %1921
    %v1924 = vsel %vm1674, %v1922, 0.0
    %s1925 = sld [smem:[#allocation3 + $0xe8]]
    %v1926 = vstv %s1925
    %v1927 = vmul.f32 %v1920, %v1926
    %s1928 = sld [smem:[#allocation3 + $0xe9]]
    %v1929 = vstv %s1928
    %v1930 = vmul.f32 %v1915, %v1929
    %v1931 = vadd.f32 %v1927, %v1930
    %s1932 = sld [smem:[#allocation3 + $0xea]]
    %v1933 = vstv %s1932
    %v1934 = vmul.f32 %v1924, %v1933
    %v1935 = vadd.f32 %v1931, %v1934
    %s1936 = sld [smem:[#allocation3 + $0xeb]]
    %v1937 = vstv %s1936
    %v1938 = vmul.f32 %v1806, %v1937
    %v1939 = vadd.f32 %v1935, %v1938
    %s1940 = sld [smem:[#allocation3 + $0xec]]
    %v1941 = vstv %s1940
    %v1942 = vmul.f32 %v1801, %v1941
    %v1943 = vadd.f32 %v1939, %v1942
    %s1944 = sld [smem:[#allocation3 + $0xed]]
    %v1945 = vstv %s1944
    %v1946 = vmul.f32 %v1810, %v1945
    %v1947 = vadd.f32 %v1943, %v1946
    %s1948 = sld [smem:[#allocation3 + $0xf4]]
    %v1949 = vstv %s1948
    %v1950 = vadd.f32 %v1947, %v1949
    %v1951 = vxor.u32 %v1950, 2147483648
    %v1952 = vmul.f32 %v1951, 1.442695
    %v1953 = vpow.pop %v1952
    %v1954 = vadd.f32 %v1953, 1.0
    %v1955 = vrcp.pop %v1954
    %v1956 = vmul.f32 1.0, %v1955
    %v1957 = vmul.f32 %v1950, %v1956
    %s1958 = sld [smem:[#allocation3 + $0xee]]
    %v1959 = vstv %s1958
    %v1960 = vmul.f32 %v1920, %v1959
    %s1961 = sld [smem:[#allocation3 + $0xef]]
    %v1962 = vstv %s1961
    %v1963 = vmul.f32 %v1915, %v1962
    %v1964 = vadd.f32 %v1960, %v1963
    %s1965 = sld [smem:[#allocation3 + $0xf0]]
    %v1966 = vstv %s1965
    %v1967 = vmul.f32 %v1924, %v1966
    %v1968 = vadd.f32 %v1964, %v1967
    %s1969 = sld [smem:[#allocation3 + $0xf1]]
    %v1970 = vstv %s1969
    %v1971 = vmul.f32 %v1806, %v1970
    %v1972 = vadd.f32 %v1968, %v1971
    %s1973 = sld [smem:[#allocation3 + $0xf2]]
    %v1974 = vstv %s1973
    %v1975 = vmul.f32 %v1801, %v1974
    %v1976 = vadd.f32 %v1972, %v1975
    %s1977 = sld [smem:[#allocation3 + $0xf3]]
    %v1978 = vstv %s1977
    %v1979 = vmul.f32 %v1810, %v1978
    %v1980 = vadd.f32 %v1976, %v1979
    %s1981 = sld [smem:[#allocation3 + $0xf5]]
    %v1982 = vstv %s1981
    %v1983 = vadd.f32 %v1980, %v1982
    %v1984 = vxor.u32 %v1983, 2147483648
    %v1985 = vmul.f32 %v1984, 1.442695
    %v1986 = vpow.pop %v1985
    %v1987 = vadd.f32 %v1986, 1.0
    %v1988 = vrcp.pop %v1987
    %v1989 = vmul.f32 1.0, %v1988
    %v1990 = vmul.f32 %v1983, %v1989
    %v1991 = vadd.f32 %v1915, %v1957
    %v1992 = vadd.f32 %v1801, %v1990
    %1994 = vrot.lane.b32.xlu0 %v1991, 1
    %v1995 = vpop.permute.xlu0 %1994
    %v1997 = vsel %vm222, 0.0, %v1995
    %1998 = vrot.lane.b32.xlu0 %v1991, 127
    %v1999 = vpop.permute.xlu0 %1998
    %v2001 = vsel %vm1674, %v1999, 0.0
    %2003 = vrot.lane.b32.xlu0 %v1992, 1
    %v2004 = vpop.permute.xlu0 %2003
    %v2006 = vsel %vm222, 0.0, %v2004
    %2007 = vrot.lane.b32.xlu0 %v1992, 127
    %v2008 = vpop.permute.xlu0 %2007
    %v2010 = vsel %vm1674, %v2008, 0.0
    %s2011 = sld [smem:[#allocation3 + $0xf6]]
    %v2012 = vstv %s2011
    %v2013 = vmul.f32 %v1997, %v2012
    %s2014 = sld [smem:[#allocation3 + $0xf7]]
    %v2015 = vstv %s2014
    %v2016 = vmul.f32 %v1991, %v2015
    %v2017 = vadd.f32 %v2013, %v2016
    %s2018 = sld [smem:[#allocation3 + $0xf8]]
    %v2019 = vstv %s2018
    %v2020 = vmul.f32 %v2001, %v2019
    %v2021 = vadd.f32 %v2017, %v2020
    %s2022 = sld [smem:[#allocation3 + $0xf9]]
    %v2023 = vstv %s2022
    %v2024 = vmul.f32 %v2006, %v2023
    %v2025 = vadd.f32 %v2021, %v2024
    %s2026 = sld [smem:[#allocation3 + $0xfa]]
    %v2027 = vstv %s2026
    %v2028 = vmul.f32 %v1992, %v2027
    %v2029 = vadd.f32 %v2025, %v2028
    %s2030 = sld [smem:[#allocation3 + $0xfb]]
    %v2031 = vstv %s2030
    %v2032 = vmul.f32 %v2010, %v2031
    %v2033 = vadd.f32 %v2029, %v2032
    %s2034 = sld [smem:[#allocation3 + $0xfc]]
    %v2035 = vstv %s2034
    %v2036 = vadd.f32 %v2033, %v2035
    %v2037 = vxor.u32 %v2036, 2147483648
    %v2038 = vmul.f32 %v2037, 1.442695
    %v2039 = vpow.pop %v2038
    %v2040 = vadd.f32 %v2039, 1.0
    %v2041 = vrcp.pop %v2040
    %v2042 = vmul.f32 1.0, %v2041
    %v2043 = vmul.f32 %v2036, %v2042
    %2045 = vrot.lane.b32.xlu0 %v2043, 1
    %v2046 = vpop.permute.xlu0 %2045
    %v2048 = vsel %vm222, 0.0, %v2046
    %2049 = vrot.lane.b32.xlu0 %v2043, 127
    %v2050 = vpop.permute.xlu0 %2049
    %v2052 = vsel %vm1674, %v2050, 0.0
    %s2053 = sld [smem:[#allocation3 + $0xfd]]
    %v2054 = vstv %s2053
    %v2055 = vmul.f32 %v2048, %v2054
    %s2056 = sld [smem:[#allocation3 + $0xfe]]
    %v2057 = vstv %s2056
    %v2058 = vmul.f32 %v2043, %v2057
    %v2059 = vadd.f32 %v2055, %v2058
    %s2060 = sld [smem:[#allocation3 + $0xff]]
    %v2061 = vstv %s2060
    %v2062 = vmul.f32 %v2052, %v2061
    %v2063 = vadd.f32 %v2059, %v2062
    %s2064 = sld [smem:[#allocation3 + $0x100]]
    %v2065 = vstv %s2064
    %v2066 = vadd.f32 %v2063, %v2065
    %s2067 = sld [smem:[#allocation3 + $0x101]]
    %v2068 = vstv %s2067
    %v2069 = vmul.f32 %v1920, %v2068
    %s2070 = sld [smem:[#allocation3 + $0x102]]
    %v2071 = vstv %s2070
    %v2072 = vmul.f32 %v1915, %v2071
    %v2073 = vadd.f32 %v2069, %v2072
    %s2074 = sld [smem:[#allocation3 + $0x103]]
    %v2075 = vstv %s2074
    %v2076 = vmul.f32 %v1924, %v2075
    %v2077 = vadd.f32 %v2073, %v2076
    %s2078 = sld [smem:[#allocation3 + $0x104]]
    %v2079 = vstv %s2078
    %v2080 = vmul.f32 %v1806, %v2079
    %v2081 = vadd.f32 %v2077, %v2080
    %s2082 = sld [smem:[#allocation3 + $0x105]]
    %v2083 = vstv %s2082
    %v2084 = vmul.f32 %v1801, %v2083
    %v2085 = vadd.f32 %v2081, %v2084
    %s2086 = sld [smem:[#allocation3 + $0x106]]
    %v2087 = vstv %s2086
    %v2088 = vmul.f32 %v1810, %v2087
    %v2089 = vadd.f32 %v2085, %v2088
    %s2090 = sld [smem:[#allocation3 + $0x10d]]
    %v2091 = vstv %s2090
    %v2092 = vadd.f32 %v2089, %v2091
    %v2093 = vxor.u32 %v2092, 2147483648
    %v2094 = vmul.f32 %v2093, 1.442695
    %v2095 = vpow.pop %v2094
    %v2096 = vadd.f32 %v2095, 1.0
    %v2097 = vrcp.pop %v2096
    %v2098 = vmul.f32 1.0, %v2097
    %v2099 = vmul.f32 %v2092, %v2098
    %s2100 = sld [smem:[#allocation3 + $0x107]]
    %v2101 = vstv %s2100
    %v2102 = vmul.f32 %v1920, %v2101
    %s2103 = sld [smem:[#allocation3 + $0x108]]
    %v2104 = vstv %s2103
    %v2105 = vmul.f32 %v1915, %v2104
    %v2106 = vadd.f32 %v2102, %v2105
    %s2107 = sld [smem:[#allocation3 + $0x109]]
    %v2108 = vstv %s2107
    %v2109 = vmul.f32 %v1924, %v2108
    %v2110 = vadd.f32 %v2106, %v2109
    %s2111 = sld [smem:[#allocation3 + $0x10a]]
    %v2112 = vstv %s2111
    %v2113 = vmul.f32 %v1806, %v2112
    %v2114 = vadd.f32 %v2110, %v2113
    %s2115 = sld [smem:[#allocation3 + $0x10b]]
    %v2116 = vstv %s2115
    %v2117 = vmul.f32 %v1801, %v2116
    %v2118 = vadd.f32 %v2114, %v2117
    %s2119 = sld [smem:[#allocation3 + $0x10c]]
    %v2120 = vstv %s2119
    %v2121 = vmul.f32 %v1810, %v2120
    %v2122 = vadd.f32 %v2118, %v2121
    %s2123 = sld [smem:[#allocation3 + $0x10e]]
    %v2124 = vstv %s2123
    %v2125 = vadd.f32 %v2122, %v2124
    %v2126 = vxor.u32 %v2125, 2147483648
    %v2127 = vmul.f32 %v2126, 1.442695
    %v2128 = vpow.pop %v2127
    %v2129 = vadd.f32 %v2128, 1.0
    %v2130 = vrcp.pop %v2129
    %v2131 = vmul.f32 1.0, %v2130
    %v2132 = vmul.f32 %v2125, %v2131
    %v2133 = vadd.f32 %v1915, %v2099
    %v2134 = vadd.f32 %v1801, %v2132
    %2136 = vrot.lane.b32.xlu0 %v2133, 1
    %v2137 = vpop.permute.xlu0 %2136
    %v2139 = vsel %vm222, 0.0, %v2137
    %2140 = vrot.lane.b32.xlu0 %v2133, 127
    %v2141 = vpop.permute.xlu0 %2140
    %v2143 = vsel %vm1674, %v2141, 0.0
    %2145 = vrot.lane.b32.xlu0 %v2134, 1
    %v2146 = vpop.permute.xlu0 %2145
    %v2148 = vsel %vm222, 0.0, %v2146
    %2149 = vrot.lane.b32.xlu0 %v2134, 127
    %v2150 = vpop.permute.xlu0 %2149
    %v2152 = vsel %vm1674, %v2150, 0.0
    %s2153 = sld [smem:[#allocation3 + $0x10f]]
    %v2154 = vstv %s2153
    %v2155 = vmul.f32 %v2139, %v2154
    %s2156 = sld [smem:[#allocation3 + $0x110]]
    %v2157 = vstv %s2156
    %v2158 = vmul.f32 %v2133, %v2157
    %v2159 = vadd.f32 %v2155, %v2158
    %s2160 = sld [smem:[#allocation3 + $0x111]]
    %v2161 = vstv %s2160
    %v2162 = vmul.f32 %v2143, %v2161
    %v2163 = vadd.f32 %v2159, %v2162
    %s2164 = sld [smem:[#allocation3 + $0x112]]
    %v2165 = vstv %s2164
    %v2166 = vmul.f32 %v2148, %v2165
    %v2167 = vadd.f32 %v2163, %v2166
    %s2168 = sld [smem:[#allocation3 + $0x113]]
    %v2169 = vstv %s2168
    %v2170 = vmul.f32 %v2134, %v2169
    %v2171 = vadd.f32 %v2167, %v2170
    %s2172 = sld [smem:[#allocation3 + $0x114]]
    %v2173 = vstv %s2172
    %v2174 = vmul.f32 %v2152, %v2173
    %v2175 = vadd.f32 %v2171, %v2174
    %s2176 = sld [smem:[#allocation3 + $0x115]]
    %v2177 = vstv %s2176
    %v2178 = vadd.f32 %v2175, %v2177
    %v2179 = vxor.u32 %v2178, 2147483648
    %v2180 = vmul.f32 %v2179, 1.442695
    %v2181 = vpow.pop %v2180
    %v2182 = vadd.f32 %v2181, 1.0
    %v2183 = vrcp.pop %v2182
    %v2184 = vmul.f32 1.0, %v2183
    %v2185 = vmul.f32 %v2178, %v2184
    %2187 = vrot.lane.b32.xlu0 %v2185, 1
    %v2188 = vpop.permute.xlu0 %2187
    %v2190 = vsel %vm222, 0.0, %v2188
    %2191 = vrot.lane.b32.xlu0 %v2185, 127
    %v2192 = vpop.permute.xlu0 %2191
    %v2194 = vsel %vm1674, %v2192, 0.0
    %s2195 = sld [smem:[#allocation3 + $0x116]]
    %v2196 = vstv %s2195
    %v2197 = vmul.f32 %v2190, %v2196
    %s2198 = sld [smem:[#allocation3 + $0x117]]
    %v2199 = vstv %s2198
    %v2200 = vmul.f32 %v2185, %v2199
    %v2201 = vadd.f32 %v2197, %v2200
    %s2202 = sld [smem:[#allocation3 + $0x118]]
    %v2203 = vstv %s2202
    %v2204 = vmul.f32 %v2194, %v2203
    %v2205 = vadd.f32 %v2201, %v2204
    %s2206 = sld [smem:[#allocation3 + $0x119]]
    %v2207 = vstv %s2206
    %v2208 = vadd.f32 %v2205, %v2207
    %v2209 = vmul.f32 %v1914, 1.442695
    %v2210 = vpow.pop %v2209
    %v2211 = vadd.f32 %v2208, 1.0
    %v2212 = vmul.f32 %v2066, %v2066
    %v2213 = vrcp.pop %v2210
    %v2214 = vmul.f32 %v2212, %v2213
    %v2215 = vsub.f32 %v2211, %v2214
    %v2216 = vmul.f32 %v2208, 1.442695
    %v2217 = vpow.pop %v2216
    %v2218 = vsub.f32 %v2215, %v2217
    %vm2219 = vcmask 123904
    %v2220 = vsel %vm2219, %v2218, 0.0
    %2221 = vadd.xlane.f32.xlu0 %v2220
    %v2222 = vpop.xlane.xlu0 %2221
    %v2223 = vmul.f32 %v2222, -0.5
    %v2224 = vsel %vm71, %v2223, 0.0
    %v2225 = vrot.slane %v2224, 4
    %v2226 = vadd.f32 %v2224, %v2225
    %v2227 = vrot.slane %v2226, 2
    %v2228 = vadd.f32 %v2226, %v2227
    %v2229 = vrot.slane %v2228, 1
    %v2230 = vadd.f32 %v2228, %v2229
    %v2231 = vmul.f32 %v2230, %v784
    %v2232 = vadd.f32 %v1862, %v2066
    %v2233 = vadd.f32 %v1914, %v2208
    %v2234 = vmul.f32 %v2233, 0.5
    %v2235 = vmul.f32 %v2234, 1.442695
    %v2236 = vpow.pop %v2235
    %v2237 = vld [vmem:[%s7] sm:$0x3]
    %v2238 = vmul.f32 %v2236, %v2237
    %v2239 = vadd.f32 %v2232, %v2238
    %v2240 = vld [vmem:[%s13] sm:$0xff]
    %v2241 = vld [vmem:[%s13 + $0x8] sm:$0xff]
    %vm2242 = vcmask 130048
    %v2243 = vsel %vm2242, %v1801, 0
    %2245 = vmatprep.subr.mxu0 0.0
    %2246 = vmatpush1.msra.mxu0 %v2240
    %2247 = vmatprep.subr.mxu0 0.0
    %2248 = vmatpush1.msra.mxu0 %v2241
    %2249 = vmatprep.subr.mxu0 0.0
    %2250 = vmatpush1.msra.mxu0 0.0
    %2251 = vmatprep.subr.mxu0 0.0
    %2252 = vmatpush1.msra.mxu0 0.0
    %2253 = vmatprep.subr.mxu0 0.0
    %2254 = vmatpush1.msra.mxu0 0.0
    %2255 = vmatprep.subr.mxu0 0.0
    %2256 = vmatpush1.msra.mxu0 0.0
    %2257 = vmatprep.subr.mxu0 0.0
    %2258 = vmatpush1.msra.mxu0 0.0
    %2259 = vmatprep.subr.mxu0 0.0
    %2260 = vmatpush1.msra.mxu0 0.0
    %2261 = vmatprep.subr.mxu0 0.0
    %2262 = vmatpush1.msra.mxu0 0.0
    %2263 = vmatprep.subr.mxu0 0.0
    %2264 = vmatpush1.msra.mxu0 0.0
    %2265 = vmatprep.subr.mxu0 0.0
    %2266 = vmatpush1.msra.mxu0 0.0
    %2267 = vmatprep.subr.mxu0 0.0
    %2268 = vmatpush1.msra.mxu0 0.0
    %2269 = vmatprep.subr.mxu0 0.0
    %2270 = vmatpush1.msra.mxu0 0.0
    %2271 = vmatprep.subr.mxu0 0.0
    %2272 = vmatpush1.msra.mxu0 0.0
    %2273 = vmatprep.subr.mxu0 0.0
    %2274 = vmatpush1.msra.mxu0 0.0
    %2275 = vmatprep.subr.mxu0 0.0
    %2276 = vmatpush1.msra.mxu0 0.0
    %2277 = vmatprep.subr.mxu0 0.0
    %2278 = vmatpush1.msra.mxu0 0.0
    %2279 = vmatprep.subr.mxu0 0.0
    %2280 = vmatpush1.msra.mxu0 0.0
    %2281 = vmatprep.subr.mxu0 0.0
    %2282 = vmatpush1.msra.mxu0 0.0
    %2283 = vmatprep.subr.mxu0 0.0
    %2284 = vmatpush1.msra.mxu0 0.0
    %2285 = vmatprep.subr.mxu0 0.0
    %2286 = vmatpush1.msra.mxu0 0.0
    %2287 = vmatprep.subr.mxu0 0.0
    %2288 = vmatpush1.msra.mxu0 0.0
    %2289 = vmatprep.subr.mxu0 0.0
    %2290 = vmatpush1.msra.mxu0 0.0
    %2291 = vmatprep.subr.mxu0 0.0
    %2292 = vmatpush1.msra.mxu0 0.0
    %2293 = vmatprep.subr.mxu0 0.0
    %2294 = vmatpush1.msra.mxu0 0.0
    %2295 = vmatprep.subr.mxu0 0.0
    %2296 = vmatpush1.msra.mxu0 0.0
    %2297 = vmatprep.subr.mxu0 0.0
    %2298 = vmatpush1.msra.mxu0 0.0
    %2299 = vmatprep.subr.mxu0 0.0
    %2300 = vmatpush1.msra.mxu0 0.0
    %2301 = vmatprep.subr.mxu0 0.0
    %2302 = vmatpush1.msra.mxu0 0.0
    %2303 = vmatprep.subr.mxu0 0.0
    %2304 = vmatpush1.msra.mxu0 0.0
    %2305 = vmatprep.subr.mxu0 0.0
    %2306 = vmatpush1.msra.mxu0 0.0
    %2307 = vmatprep.subr.mxu0 0.0
    %2308 = vmatpush1.msra.mxu0 0.0
    %2309 = vmatprep.mubr.f32.mxu0 0.0
    %2310 = vmatmul.mubr.f32.gmra.mrb[0].mxu0 %v2243
    %v2311 = vpop.f32.mrb[0].mxu0
    %v2312 = vadd.f32 0.0, %v2311
    %v2313 = vpop.f32.mrb[0].mxu0
    %2314 = vdwg.mxu0
    %v2316 = vsel %vm2242, %v2239, 0
    %2318 = vmatprep.subr.mxu0 0.0
    %2319 = vmatpush1.msra.mxu0 %v2240
    %2320 = vmatprep.subr.mxu0 0.0
    %2321 = vmatpush1.msra.mxu0 %v2241
    %2322 = vmatprep.subr.mxu0 0.0
    %2323 = vmatpush1.msra.mxu0 0.0
    %2324 = vmatprep.subr.mxu0 0.0
    %2325 = vmatpush1.msra.mxu0 0.0
    %2326 = vmatprep.subr.mxu0 0.0
    %2327 = vmatpush1.msra.mxu0 0.0
    %2328 = vmatprep.subr.mxu0 0.0
    %2329 = vmatpush1.msra.mxu0 0.0
    %2330 = vmatprep.subr.mxu0 0.0
    %2331 = vmatpush1.msra.mxu0 0.0
    %2332 = vmatprep.subr.mxu0 0.0
    %2333 = vmatpush1.msra.mxu0 0.0
    %2334 = vmatprep.subr.mxu0 0.0
    %2335 = vmatpush1.msra.mxu0 0.0
    %2336 = vmatprep.subr.mxu0 0.0
    %2337 = vmatpush1.msra.mxu0 0.0
    %2338 = vmatprep.subr.mxu0 0.0
    %2339 = vmatpush1.msra.mxu0 0.0
    %2340 = vmatprep.subr.mxu0 0.0
    %2341 = vmatpush1.msra.mxu0 0.0
    %2342 = vmatprep.subr.mxu0 0.0
    %2343 = vmatpush1.msra.mxu0 0.0
    %2344 = vmatprep.subr.mxu0 0.0
    %2345 = vmatpush1.msra.mxu0 0.0
    %2346 = vmatprep.subr.mxu0 0.0
    %2347 = vmatpush1.msra.mxu0 0.0
    %2348 = vmatprep.subr.mxu0 0.0
    %2349 = vmatpush1.msra.mxu0 0.0
    %2350 = vmatprep.subr.mxu0 0.0
    %2351 = vmatpush1.msra.mxu0 0.0
    %2352 = vmatprep.subr.mxu0 0.0
    %2353 = vmatpush1.msra.mxu0 0.0
    %2354 = vmatprep.subr.mxu0 0.0
    %2355 = vmatpush1.msra.mxu0 0.0
    %2356 = vmatprep.subr.mxu0 0.0
    %2357 = vmatpush1.msra.mxu0 0.0
    %2358 = vmatprep.subr.mxu0 0.0
    %2359 = vmatpush1.msra.mxu0 0.0
    %2360 = vmatprep.subr.mxu0 0.0
    %2361 = vmatpush1.msra.mxu0 0.0
    %2362 = vmatprep.subr.mxu0 0.0
    %2363 = vmatpush1.msra.mxu0 0.0
    %2364 = vmatprep.subr.mxu0 0.0
    %2365 = vmatpush1.msra.mxu0 0.0
    %2366 = vmatprep.subr.mxu0 0.0
    %2367 = vmatpush1.msra.mxu0 0.0
    %2368 = vmatprep.subr.mxu0 0.0
    %2369 = vmatpush1.msra.mxu0 0.0
    %2370 = vmatprep.subr.mxu0 0.0
    %2371 = vmatpush1.msra.mxu0 0.0
    %2372 = vmatprep.subr.mxu0 0.0
    %2373 = vmatpush1.msra.mxu0 0.0
    %2374 = vmatprep.subr.mxu0 0.0
    %2375 = vmatpush1.msra.mxu0 0.0
    %2376 = vmatprep.subr.mxu0 0.0
    %2377 = vmatpush1.msra.mxu0 0.0
    %2378 = vmatprep.subr.mxu0 0.0
    %2379 = vmatpush1.msra.mxu0 0.0
    %2380 = vmatprep.subr.mxu0 0.0
    %2381 = vmatpush1.msra.mxu0 0.0
    %2382 = vmatprep.mubr.f32.mxu0 0.0
    %2383 = vmatmul.mubr.f32.gmra.mrb[0].mxu0 %v2316
    %v2384 = vpop.f32.mrb[0].mxu0
    %v2385 = vadd.f32 0.0, %v2384
    %v2386 = vpop.f32.mrb[0].mxu0
    %2387 = vdwg.mxu0
    %2389 = vrot.lane.b32.xlu0 %v2312, 1
    %v2390 = vpop.permute.xlu0 %2389
    %v2392 = vsel %vm222, 0.0, %v2390
    %2393 = vrot.lane.b32.xlu0 %v2312, 127
    %v2394 = vpop.permute.xlu0 %2393
    %vm2396 = vcmask 252928
    %v2397 = vsel %vm2396, %v2394, 0.0
    %2399 = vrot.lane.b32.xlu0 %v2385, 1
    %v2400 = vpop.permute.xlu0 %2399
    %v2402 = vsel %vm222, 0.0, %v2400
    %2403 = vrot.lane.b32.xlu0 %v2385, 127
    %v2404 = vpop.permute.xlu0 %2403
    %v2406 = vsel %vm2396, %v2404, 0.0
    %s2407 = sld [smem:[#allocation3 + $0x3f]]
    %v2408 = vstv %s2407
    %v2409 = vmul.f32 %v2392, %v2408
    %s2410 = sld [smem:[#allocation3 + $0x40]]
    %v2411 = vstv %s2410
    %v2412 = vmul.f32 %v2312, %v2411
    %v2413 = vadd.f32 %v2409, %v2412
    %s2414 = sld [smem:[#allocation3 + $0x41]]
    %v2415 = vstv %s2414
    %v2416 = vmul.f32 %v2397, %v2415
    %v2417 = vadd.f32 %v2413, %v2416
    %s2418 = sld [smem:[#allocation3 + $0x42]]
    %v2419 = vstv %s2418
    %v2420 = vmul.f32 %v2402, %v2419
    %v2421 = vadd.f32 %v2417, %v2420
    %s2422 = sld [smem:[#allocation3 + $0x43]]
    %v2423 = vstv %s2422
    %v2424 = vmul.f32 %v2385, %v2423
    %v2425 = vadd.f32 %v2421, %v2424
    %s2426 = sld [smem:[#allocation3 + $0x44]]
    %v2427 = vstv %s2426
    %v2428 = vmul.f32 %v2406, %v2427
    %v2429 = vadd.f32 %v2425, %v2428
    %s2430 = sld [smem:[#allocation3 + $0x4b]]
    %v2431 = vstv %s2430
    %v2432 = vadd.f32 %v2429, %v2431
    %v2433 = vxor.u32 %v2432, 2147483648
    %v2434 = vmul.f32 %v2433, 1.442695
    %v2435 = vpow.pop %v2434
    %v2436 = vadd.f32 %v2435, 1.0
    %v2437 = vrcp.pop %v2436
    %v2438 = vmul.f32 1.0, %v2437
    %v2439 = vmul.f32 %v2432, %v2438
    %s2440 = sld [smem:[#allocation3 + $0x45]]
    %v2441 = vstv %s2440
    %v2442 = vmul.f32 %v2392, %v2441
    %s2443 = sld [smem:[#allocation3 + $0x46]]
    %v2444 = vstv %s2443
    %v2445 = vmul.f32 %v2312, %v2444
    %v2446 = vadd.f32 %v2442, %v2445
    %s2447 = sld [smem:[#allocation3 + $0x47]]
    %v2448 = vstv %s2447
    %v2449 = vmul.f32 %v2397, %v2448
    %v2450 = vadd.f32 %v2446, %v2449
    %s2451 = sld [smem:[#allocation3 + $0x48]]
    %v2452 = vstv %s2451
    %v2453 = vmul.f32 %v2402, %v2452
    %v2454 = vadd.f32 %v2450, %v2453
    %s2455 = sld [smem:[#allocation3 + $0x49]]
    %v2456 = vstv %s2455
    %v2457 = vmul.f32 %v2385, %v2456
    %v2458 = vadd.f32 %v2454, %v2457
    %s2459 = sld [smem:[#allocation3 + $0x4a]]
    %v2460 = vstv %s2459
    %v2461 = vmul.f32 %v2406, %v2460
    %v2462 = vadd.f32 %v2458, %v2461
    %s2463 = sld [smem:[#allocation3 + $0x4c]]
    %v2464 = vstv %s2463
    %v2465 = vadd.f32 %v2462, %v2464
    %v2466 = vxor.u32 %v2465, 2147483648
    %v2467 = vmul.f32 %v2466, 1.442695
    %v2468 = vpow.pop %v2467
    %v2469 = vadd.f32 %v2468, 1.0
    %v2470 = vrcp.pop %v2469
    %v2471 = vmul.f32 1.0, %v2470
    %v2472 = vmul.f32 %v2465, %v2471
    %2474 = vrot.lane.b32.xlu0 %v2439, 1
    %v2475 = vpop.permute.xlu0 %2474
    %v2477 = vsel %vm222, 0.0, %v2475
    %2478 = vrot.lane.b32.xlu0 %v2439, 127
    %v2479 = vpop.permute.xlu0 %2478
    %v2481 = vsel %vm2396, %v2479, 0.0
    %2483 = vrot.lane.b32.xlu0 %v2472, 1
    %v2484 = vpop.permute.xlu0 %2483
    %v2486 = vsel %vm222, 0.0, %v2484
    %2487 = vrot.lane.b32.xlu0 %v2472, 127
    %v2488 = vpop.permute.xlu0 %2487
    %v2490 = vsel %vm2396, %v2488, 0.0
    %s2491 = sld [smem:[#allocation3 + $0x4d]]
    %v2492 = vstv %s2491
    %v2493 = vmul.f32 %v2477, %v2492
    %s2494 = sld [smem:[#allocation3 + $0x4e]]
    %v2495 = vstv %s2494
    %v2496 = vmul.f32 %v2439, %v2495
    %v2497 = vadd.f32 %v2493, %v2496
    %s2498 = sld [smem:[#allocation3 + $0x4f]]
    %v2499 = vstv %s2498
    %v2500 = vmul.f32 %v2481, %v2499
    %v2501 = vadd.f32 %v2497, %v2500
    %s2502 = sld [smem:[#allocation3 + $0x50]]
    %v2503 = vstv %s2502
    %v2504 = vmul.f32 %v2486, %v2503
    %v2505 = vadd.f32 %v2501, %v2504
    %s2506 = sld [smem:[#allocation3 + $0x51]]
    %v2507 = vstv %s2506
    %v2508 = vmul.f32 %v2472, %v2507
    %v2509 = vadd.f32 %v2505, %v2508
    %s2510 = sld [smem:[#allocation3 + $0x52]]
    %v2511 = vstv %s2510
    %v2512 = vmul.f32 %v2490, %v2511
    %v2513 = vadd.f32 %v2509, %v2512
    %s2514 = sld [smem:[#allocation3 + $0x53]]
    %v2515 = vstv %s2514
    %v2516 = vadd.f32 %v2513, %v2515
    %v2517 = vxor.u32 %v2516, 2147483648
    %v2518 = vmul.f32 %v2517, 1.442695
    %v2519 = vpow.pop %v2518
    %v2520 = vadd.f32 %v2519, 1.0
    %v2521 = vrcp.pop %v2520
    %v2522 = vmul.f32 1.0, %v2521
    %v2523 = vmul.f32 %v2516, %v2522
    %2525 = vrot.lane.b32.xlu0 %v2523, 1
    %v2526 = vpop.permute.xlu0 %2525
    %v2528 = vsel %vm222, 0.0, %v2526
    %2529 = vrot.lane.b32.xlu0 %v2523, 127
    %v2530 = vpop.permute.xlu0 %2529
    %v2532 = vsel %vm2396, %v2530, 0.0
    %s2533 = sld [smem:[#allocation3 + $0x11a]]
    %v2534 = vstv %s2533
    %v2535 = vmul.f32 %v2528, %v2534
    %s2536 = sld [smem:[#allocation3 + $0x11b]]
    %v2537 = vstv %s2536
    %v2538 = vmul.f32 %v2523, %v2537
    %v2539 = vadd.f32 %v2535, %v2538
    %s2540 = sld [smem:[#allocation3 + $0x11c]]
    %v2541 = vstv %s2540
    %v2542 = vmul.f32 %v2532, %v2541
    %v2543 = vadd.f32 %v2539, %v2542
    %s2544 = sld [smem:[#allocation3 + $0x11d]]
    %v2545 = vstv %s2544
    %v2546 = vadd.f32 %v2543, %v2545
    %v2547 = vxor.u32 %v2546, 2147483648
    %v2548 = vmul.f32 %v2547, 1.442695
    %v2549 = vpow.pop %v2548
    %v2550 = vadd.f32 %v2549, 1.0
    %v2551 = vrcp.pop %v2550
    %v2552 = vmul.f32 1.0, %v2551
    %v2553 = vmul.f32 %v2546, %v2552
    %v2554 = vadd.f32 %v2523, %v2553
    %2556 = vrot.lane.b32.xlu0 %v2554, 1
    %v2557 = vpop.permute.xlu0 %2556
    %v2559 = vsel %vm222, 0.0, %v2557
    %2560 = vrot.lane.b32.xlu0 %v2554, 127
    %v2561 = vpop.permute.xlu0 %2560
    %v2563 = vsel %vm2396, %v2561, 0.0
    %s2564 = sld [smem:[#allocation3 + $0x11e]]
    %v2565 = vstv %s2564
    %v2566 = vmul.f32 %v2559, %v2565
    %s2567 = sld [smem:[#allocation3 + $0x11f]]
    %v2568 = vstv %s2567
    %v2569 = vmul.f32 %v2554, %v2568
    %v2570 = vadd.f32 %v2566, %v2569
    %s2571 = sld [smem:[#allocation3 + $0x120]]
    %v2572 = vstv %s2571
    %v2573 = vmul.f32 %v2563, %v2572
    %v2574 = vadd.f32 %v2570, %v2573
    %s2575 = sld [smem:[#allocation3 + $0x121]]
    %v2576 = vstv %s2575
    %v2577 = vadd.f32 %v2574, %v2576
    %v2578 = vxor.u32 %v2577, 2147483648
    %v2579 = vmul.f32 %v2578, 1.442695
    %v2580 = vpow.pop %v2579
    %v2581 = vadd.f32 %v2580, 1.0
    %v2582 = vrcp.pop %v2581
    %v2583 = vmul.f32 1.0, %v2582
    %v2584 = vmul.f32 %v2577, %v2583
    %2586 = vrot.lane.b32.xlu0 %v2584, 1
    %v2587 = vpop.permute.xlu0 %2586
    %v2589 = vsel %vm222, 0.0, %v2587
    %2590 = vrot.lane.b32.xlu0 %v2584, 127
    %v2591 = vpop.permute.xlu0 %2590
    %v2593 = vsel %vm2396, %v2591, 0.0
    %s2594 = sld [smem:[#allocation3 + $0x122]]
    %v2595 = vstv %s2594
    %v2596 = vmul.f32 %v2589, %v2595
    %s2597 = sld [smem:[#allocation3 + $0x123]]
    %v2598 = vstv %s2597
    %v2599 = vmul.f32 %v2584, %v2598
    %v2600 = vadd.f32 %v2596, %v2599
    %s2601 = sld [smem:[#allocation3 + $0x124]]
    %v2602 = vstv %s2601
    %v2603 = vmul.f32 %v2593, %v2602
    %v2604 = vadd.f32 %v2600, %v2603
    %s2605 = sld [smem:[#allocation3 + $0x125]]
    %v2606 = vstv %s2605
    %v2607 = vadd.f32 %v2604, %v2606
    %v2608 = vld [vmem:[%s8] sm:$0x3]
    %v2609 = vxor.u32 %v2607, 2147483648
    %v2610 = vmul.f32 %v2609, 1.442695
    %v2611 = vpow.pop %v2610
    %v2612 = vadd.f32 %v2611, 1.0
    %v2613 = vrcp.pop %v2612
    %v2614 = vmul.f32 1.0, %v2613
    %v2615 = vlog2.pop %v2614
    %v2616 = vmul.f32 %v2615, 0.6931472
    %v2617 = vmax.f32 %v2616, -100.0
    %v2618 = vsub.f32 1.0, %v2614
    %v2619 = vlog2.pop %v2618
    %v2620 = vmul.f32 %v2619, 0.6931472
    %v2621 = vmax.f32 %v2620, -100.0
    %v2622 = vmul.f32 %v2608, %v2617
    %v2623 = vsub.f32 1.0, %v2608
    %v2624 = vmul.f32 %v2623, %v2621
    %v2625 = vadd.f32 %v2622, %v2624
    %v2626 = vsub.f32 0.0, %v2625
    %vm2627 = vcmask 254976
    %v2628 = vsel %vm2627, %v2626, 0.0
    %2629 = vadd.xlane.f32.xlu0 %v2628
    %v2630 = vpop.xlane.xlu0 %2629
    %v2631 = vsub.f32 %v2607, %v2608
    %v2632 = vmul.f32 %v2631, %v2631
    %v2633 = vsel %vm2627, %v2632, 0.0
    %2634 = vadd.xlane.f32.xlu0 %v2633
    %v2635 = vpop.xlane.xlu0 %2634
    %v2636 = vand.u32 2147483647, %v2631
    %v2637 = vsel %vm2627, %v2636, 0.0
    %2638 = vadd.xlane.f32.xlu0 %v2637
    %v2639 = vpop.xlane.xlu0 %2638
    %v2640 = vmul.f32 %v2607, %v2608
    %v2641 = vmul.f32 %v2607, %v2607
    %v2642 = vmul.f32 %v2608, %v2608
    %v2643 = vrcp.pop 32.0
    %v2644 = vmul.f32 %v2630, %v2643
    %v2645 = vmul.f32 %v2644, %v2644
    %v2646 = vadd.f32 %v2645, 1.0
    %v2647 = vrsqrt.pop %v2646
    %v2648 = vmul.f32 %v2646, %v2647
    %vm2649 = vcmp.eq.f32.partialorder %v2646, inf
    %v2650 = vsel %vm2649, %v2646, %v2648
    %vm2651 = vcmp.eq.f32.partialorder %v2646, 0.0
    %v2652 = vand.u32 %v2646, 2147483648
    %v2653 = vsel %vm2651, %v2652, %v2650
    %v2654 = vsub.f32 %v2653, 1.0
    %v2655 = vsel %vm71, %v2654, 0.0
    %v2656 = vrot.slane %v2655, 4
    %v2657 = vadd.f32 %v2655, %v2656
    %v2658 = vrot.slane %v2657, 2
    %v2659 = vadd.f32 %v2657, %v2658
    %v2660 = vrot.slane %v2659, 1
    %v2661 = vadd.f32 %v2659, %v2660
    %v2662 = vmul.f32 %v2661, %v784
    %v2663 = vsel %vm71, %v2635, 0.0
    %v2664 = vrot.slane %v2663, 4
    %v2665 = vadd.f32 %v2663, %v2664
    %v2666 = vrot.slane %v2665, 2
    %v2667 = vadd.f32 %v2665, %v2666
    %v2668 = vrot.slane %v2667, 1
    %v2669 = vadd.f32 %v2667, %v2668
    %v2670 = vrcp.pop 64.0
    %v2671 = vmul.f32 %v2669, %v2670
    %v2672 = vsel %vm71, %v2639, 0.0
    %v2673 = vrot.slane %v2672, 4
    %v2674 = vadd.f32 %v2672, %v2673
    %v2675 = vrot.slane %v2674, 2
    %v2676 = vadd.f32 %v2674, %v2675
    %v2677 = vrot.slane %v2676, 1
    %v2678 = vadd.f32 %v2676, %v2677
    %v2679 = vmul.f32 %v2678, %v2670
    %v2680 = vrsqrt.pop %v2641
    %v2681 = vmul.f32 %v2641, %v2680
    %vm2682 = vcmp.eq.f32.partialorder %v2641, inf
    %v2683 = vsel %vm2682, %v2641, %v2681
    %vm2684 = vcmp.eq.f32.partialorder %v2641, 0.0
    %v2685 = vand.u32 %v2641, 2147483648
    %v2686 = vsel %vm2684, %v2685, %v2683
    %v2687 = vrsqrt.pop %v2642
    %v2688 = vmul.f32 %v2642, %v2687
    %vm2689 = vcmp.eq.f32.partialorder %v2642, inf
    %v2690 = vsel %vm2689, %v2642, %v2688
    %vm2691 = vcmp.eq.f32.partialorder %v2642, 0.0
    %v2692 = vand.u32 %v2642, 2147483648
    %v2693 = vsel %vm2691, %v2692, %v2690
    %v2694 = vmul.f32 %v2686, %v2693
    %v2695 = vmax.f32 %v2694, 1e-08
    %v2696 = vrcp.pop %v2695
    %v2697 = vmul.f32 %v2640, %v2696
    %v2698 = vsel %vm2627, %v2697, 0.0
    %2699 = vadd.xlane.f32.xlu0 %v2698
    %v2700 = vpop.xlane.xlu0 %2699
    %v2701 = vsel %vm71, %v2700, 0.0
    %v2702 = vrot.slane %v2701, 4
    %v2703 = vadd.f32 %v2701, %v2702
    %v2704 = vrot.slane %v2703, 2
    %v2705 = vadd.f32 %v2703, %v2704
    %v2706 = vrot.slane %v2705, 1
    %v2707 = vadd.f32 %v2705, %v2706
    %v2708 = vmul.f32 %v2707, %v2670
    %v2709 = vmul.f32 %v2679, 0.1
    %v2710 = vadd.f32 %v2709, 1.0
    %v2711 = vsub.f32 %v2710, %v2708
    %v2712 = vmul.f32 %v2671, 0.1
    %v2713 = vadd.f32 %v2711, %v2712
    %v2714 = vld [vmem:[#allocation2] sm:$0x1]
    %v2715 = vadd.f32 %v2714, %v785
    %v2716 = vadd.f32 %v2715, %v1510
    %v2717 = vadd.f32 %v2716, %v2231
    %v2718 = vmul.f32 %v2717, 0.25
    %2719 = vst.msk [vmem:[#allocation6] sm:$0x3] %vm2627, %v2607
    %v2720 = vlaneseq
    %v2721 = vand.u32 %v2720, 127
    %vm2722 = vcmp.eq.s32.totalorder %v2721, 0
    %v2723 = vsel %vm2722, %v785, 0.0
    %vm2724 = vcmp.eq.s32.totalorder %v2721, 1
    %v2725 = vsel %vm2724, %v1510, 0.0
    %v2726 = vadd.f32 %v2723, %v2725
    %vm2727 = vcmp.eq.s32.totalorder %v2721, 2
    %v2728 = vsel %vm2727, %v2231, 0.0
    %v2729 = vadd.f32 %v2726, %v2728
    %vm2730 = vcmp.eq.s32.totalorder %v2721, 3
    %v2731 = vsel %vm2730, %v2671, 0.0
    %v2732 = vadd.f32 %v2729, %v2731
    %vm2733 = vcmp.eq.s32.totalorder %v2721, 4
    %v2734 = vsel %vm2733, %v2713, 0.0
    %v2735 = vadd.f32 %v2732, %v2734
    %vm2736 = vcmp.eq.s32.totalorder %v2721, 5
    %v2737 = vsel %vm2736, %v2662, 0.0
    %v2738 = vadd.f32 %v2735, %v2737
    %vm2739 = vcmp.eq.s32.totalorder %v2721, 6
    %2741 = vset.pattern.permute.xlu0 0
    %2742 = vperm.xlu0 %2741, %v2718
    %v2743 = vpop.permute.xlu0 %2742
    %v2745 = vlaneseq
    %v2746 = vshrl.u32 %v2745, 7
    %v2747 = vsub.s32 0, %v2746
    %v2748 = vrot.slane %v2743, %v2747
    %v2749 = vsel %vm2739, %v2748, 0.0
    %v2750 = vadd.f32 %v2738, %v2749
    %vm2751 = vcmp.eq.s32.totalorder %v2721, 7
    %2753 = vset.pattern.permute.xlu0 0
    %2754 = vperm.xlu0 %2753, %v2717
    %v2755 = vpop.permute.xlu0 %2754
    %v2757 = vlaneseq
    %v2758 = vshrl.u32 %v2757, 7
    %v2759 = vsub.s32 0, %v2758
    %v2760 = vrot.slane %v2755, %v2759
    %v2761 = vsel %vm2751, %v2760, 0.0
    %v2762 = vadd.f32 %v2750, %v2761
    %vm2763 = vcmask 57344
    %2764 = vst.msk [vmem:[%s15] sm:$0x1] %vm2763, %v2762
    // Predicated region
    $region62: #{nvae_l4_forward.5} parent=1 // pred_check
      _
    $region63: #{nvae_l4_forward.5} parent=1 // pred_check_branch
      %2766 = sbr.rel (0) target = $region65
    $region64: #{nvae_l4_forward.5} parent=1 // pred_region
      %s2768 = ssub.s32 32, 32
      %2769 = vsyncadd [#allocation4], %s2768
      %s2771 = sshll.u32 [#allocation6], 4
      %s2772 = int_to_ptr.vmem [resolvable:$true] %s2771
      %2774 = dma.vmem_to_hbm [thread:$0]  %s2772, 32, %s14, [#allocation4]
    $region65: #{nvae_l4_forward.5} parent=1 // pred_fallthru
      _
    // Predicated region
    $region66: #{nvae_l4_forward.5} parent=1 // pred_check
      _
    $region67: #{nvae_l4_forward.5} parent=1 // pred_check_branch
      %2776 = sbr.rel (0) target = $region69
    $region68: #{nvae_l4_forward.5} parent=1 // pred_region
      _
    $region69: #{nvae_l4_forward.5} parent=1 // pred_fallthru
      _
    // Predicated region
    $region70: #{nvae_l4_forward.5} parent=1 // pred_check
      _
    $region71: #{nvae_l4_forward.5} parent=1 // pred_check_branch
      %2778 = sbr.rel (0) target = $region73
    $region72: #{nvae_l4_forward.5} parent=1 // pred_region
      %2779 = dma.done [#allocation4], 32
    $region73: #{nvae_l4_forward.5} parent=1 // pred_fallthru
      _
    // Predicated region
    $region74: #{nvae_l4_forward.5} parent=1 // pred_check
      _
    $region75: #{nvae_l4_forward.5} parent=1 // pred_check_branch
      %2781 = sbr.rel (0) target = $region77
    $region76: #{nvae_l4_forward.5} parent=1 // pred_region
      _
    $region77: #{nvae_l4_forward.5} parent=1 // pred_fallthru
      _
    %2782 = vsyncpa [#allocation4], 1
    %2783 = vsyncpa [#allocation5], 1

</llo_original>
